<compile_context>
chip_gen: v5e
topology: v5e:2x2
jax: 0.10.0
libtpu: 0.0.40
codegen_flags: <defaults>
</compile_context>

<pallas_src>
import functools

import jax
import jax.numpy as jnp
from jax.experimental import pallas as pl
from jax.experimental.pallas import tpu as pltpu


def _round_up(x, m):
    return ((x + m - 1) // m) * m


# ----------------------------------------------------------------------------
# Capability probe: single-buffered grid-invariant operands
# ----------------------------------------------------------------------------
@functools.lru_cache(maxsize=None)
def _single_buffered_weights_supported():
    """Probe (once) whether this JAX supports pl.Buffered(1) single-buffering
    of grid-invariant pallas_call operands.  Saves ~3.4 MiB of weight
    double-buffer VMEM (matters most on v7x's 64 MiB VMEM per TensorCore);
    falls back to default double buffering if unsupported."""
    try:
        def _k(x_ref, w_ref, o_ref):
            o_ref[...] = x_ref[...] + w_ref[...]

        f = pl.pallas_call(
            _k,
            out_shape=jax.ShapeDtypeStruct((16, 128), jnp.float32),
            grid=(2,),
            in_specs=[
                pl.BlockSpec((8, 128), lambda i: (i, 0)),
                pl.BlockSpec((8, 128), lambda i: (0, 0),
                             pipeline_mode=pl.Buffered(1)),
            ],
            out_specs=pl.BlockSpec((8, 128), lambda i: (i, 0)),
        )
        jax.block_until_ready(f(jnp.zeros((16, 128), jnp.float32),
                                jnp.zeros((8, 128), jnp.float32)))
        return True
    except Exception:  # version-dependent feature; fall back safely
        return False


# ----------------------------------------------------------------------------
# Pallas kernels
# ----------------------------------------------------------------------------
def _pointwise_relu_kernel(x_ref, w_ref, b_ref, o_ref):
    """1x1 conv (= per-row linear) + ReLU on a [tile, Cin] row tile.

    Cin is tiny (3 or 6), so the conv is done as Cin VPU broadcast-FMAs
    instead of a K-padded MXU matmul; the stage is HBM-store-bound anyway.
    """
    x = x_ref[...]                       # [tile, Cin] f32
    w = w_ref[...]                       # [Cin, Cout] f32
    h = b_ref[...]                       # [1, Cout]
    for c in range(x.shape[1]):          # static unroll (Cin = 3 or 6)
        h = h + x[:, c:c + 1] * w[c:c + 1, :]
    o_ref[...] = jnp.maximum(h, 0.0).astype(o_ref.dtype)


def pointwise_conv_relu(x, w, b, tile_p=1024, out_dtype=jnp.bfloat16):
    """x: [P, Cin] f32 (Cin tiny), w: [Cin, Cout], b: [1, Cout] -> [P, Cout]."""
    P, Cin = x.shape
    Cout = w.shape[1]
    P16 = _round_up(max(P, 16), 16)      # bf16 output: rows in multiples of 16
    tile = min(tile_p, P16)
    P_pad = _round_up(P16, tile)
    if P_pad != P:
        x = jnp.pad(x, ((0, P_pad - P), (0, 0)))
    out = pl.pallas_call(
        _pointwise_relu_kernel,
        out_shape=jax.ShapeDtypeStruct((P_pad, Cout), out_dtype),
        grid=(P_pad // tile,),
        in_specs=[
            pl.BlockSpec((tile, Cin), lambda i: (i, 0)),
            pl.BlockSpec((Cin, Cout), lambda i: (0, 0)),
            pl.BlockSpec((1, Cout), lambda i: (0, 0)),
        ],
        out_specs=pl.BlockSpec((tile, Cout), lambda i: (i, 0)),
        compiler_params=pltpu.CompilerParams(
            dimension_semantics=("parallel",),
            vmem_limit_bytes=32 << 20),
    )(x, w, b)
    return out[:P]


def _mlp_kernel(x2d_ref, x3d_ref,
                w2d_ref, w3d_ref, ball_ref,
                w1h_ref, w2h_ref, w3h_ref, w4_ref, b4_ref,
                o_ref):
    """Fused MLP of 1x1 convs with skip-concat inputs.

    torch.cat([x2d, x3d, h], dim=1) @ W  is computed as
    x2d @ W[:512] + x3d @ W[512:544] + h @ W[544:], so no concat is ever
    materialized.  The four skip matmuls of layers 0..3 are further fused
    into two long-N matmuls against weights concatenated along Cout; each
    layer reads a 128-lane-aligned slice of the fused result.  Weights and
    activations are bf16, accumulation f32.
    """
    dot = functools.partial(jnp.dot, preferred_element_type=jnp.float32)

    def lrelu(h):                        # nn.LeakyReLU(0.2) as in the torch MLP
        return jnp.where(h > 0, h, 0.2 * h)

    x2d = x2d_ref[...]                   # bf16 [TM, 512]
    x3d = x3d_ref[...]                   # bf16 [TM, 32]

    # Two fused skip matmuls (replaces 8 small ones, four of them K=32).
    s = dot(x2d, w2d_ref[...]) + dot(x3d, w3d_ref[...]) + ball_ref[...]  # [TM, 1920] f32

    n0 = w1h_ref.shape[0]                # 1024
    n1 = w2h_ref.shape[0]                # 512
    n2 = w3h_ref.shape[0]                # 256
    n3 = w4_ref.shape[0]                 # 128
    o1, o2, o3 = n0, n0 + n1, n0 + n1 + n2   # 128-lane-aligned offsets

    h0 = lrelu(s[:, :o1]).astype(jnp.bfloat16)                              # [TM, 1024]
    h1 = lrelu(s[:, o1:o2] + dot(h0, w1h_ref[...])).astype(jnp.bfloat16)   # [TM, 512]
    h2 = lrelu(s[:, o2:o3] + dot(h1, w2h_ref[...])).astype(jnp.bfloat16)   # [TM, 256]
    h3 = lrelu(s[:, o3:o3 + n3] + dot(h2, w3h_ref[...])).astype(jnp.bfloat16)  # [TM, 128]
    h4 = dot(h3, w4_ref[...]) + b4_ref[...]                                # [TM, 128]
    o_ref[...] = jax.nn.sigmoid(h4)      # padded cols sliced off in the wrapper


_MLP_WEIGHT_KEYS = ('w2d_all', 'w3d_all', 'b_all',
                    'w1h', 'w2h', 'w3h', 'w4', 'b4')


def mlp_pallas(x2d, x3d, params, out_channel=3, tile_m=512):
    """x2d: [P, 512], x3d: [P, 32] -> [P, out_channel] f32, tiled over rows.

    tile_m=512 fits every chip (incl. v7x's 64 MiB VMEM per TensorCore with
    the 48 MiB scoped limit below); on v5e/v6e (128 MiB VMEM) callers can
    pass tile_m=1024 for lower per-step pipeline overhead.
    """
    P = x2d.shape[0]
    C2d, C3d = x2d.shape[1], x3d.shape[1]

    # bf16 inputs: halves the dominant per-step DMA and input double buffers.
    x2d = x2d.astype(jnp.bfloat16)
    x3d = x3d.astype(jnp.bfloat16)

    P16 = _round_up(max(P, 16), 16)      # bf16 sublane packing: 16-row multiples
    tile = min(tile_m, P16)
    # v7x has 2 TensorCores: keep >= 2 grid steps (when the problem is large
    # enough) so the "parallel" row axis can shard across both cores.
    if P16 // tile < 2 and P16 >= 32:
        tile = _round_up(P16 // 2, 16)
    P_pad = _round_up(P16, tile)
    if P_pad != P:
        x2d = jnp.pad(x2d, ((0, P_pad - P), (0, 0)))
        x3d = jnp.pad(x3d, ((0, P_pad - P), (0, 0)))

    w_args = [params[k] for k in _MLP_WEIGHT_KEYS]
    if _single_buffered_weights_supported():
        # Grid-invariant weights: single-buffered (no double-buffer VMEM).
        w_specs = [pl.BlockSpec(a.shape, lambda i: (0, 0),
                                pipeline_mode=pl.Buffered(1)) for a in w_args]
    else:
        w_specs = [pl.BlockSpec(a.shape, lambda i: (0, 0)) for a in w_args]

    out_pad = params['w4'].shape[1]      # 128 lane-dense padded output

    out = pl.pallas_call(
        _mlp_kernel,
        out_shape=jax.ShapeDtypeStruct((P_pad, out_pad), jnp.float32),
        grid=(P_pad // tile,),
        in_specs=[pl.BlockSpec((tile, C2d), lambda i: (i, 0)),
                  pl.BlockSpec((tile, C3d), lambda i: (i, 0))] + w_specs,
        out_specs=pl.BlockSpec((tile, out_pad), lambda i: (i, 0)),
        compiler_params=pltpu.CompilerParams(
            dimension_semantics=("parallel",),
            vmem_limit_bytes=48 << 20),  # fits v7x's 64 MiB physical VMEM
    )(x2d, x3d, *w_args)
    return out[:P, :out_channel]


# ----------------------------------------------------------------------------
# grid_sample (bilinear / trilinear, align_corners=False, padding_mode=border)
# Channel-last, kept in plain JAX glue: data-dependent gather.
# TODO(synk): fuse as a Pallas DMA gather (scalar-prefetched corner indices)
# feeding the MLP kernel directly to remove the [B*N, 512] HBM round trip.
# ----------------------------------------------------------------------------
def grid_sample_2d_border_cl(feat, gx, gy):
    """feat: [B,H,W,C], gx/gy: [B,N] (x,y in [-1,1]) -> [B,N,C] (feat dtype)."""
    B, H, W, C = feat.shape
    ix = jnp.clip(((gx + 1.0) * W - 1.0) * 0.5, 0.0, W - 1.0)
    iy = jnp.clip(((gy + 1.0) * H - 1.0) * 0.5, 0.0, H - 1.0)
    x0 = jnp.floor(ix)
    y0 = jnp.floor(iy)
    wx1, wy1 = ix - x0, iy - y0
    wx0, wy0 = 1.0 - wx1, 1.0 - wy1
    x0i = x0.astype(jnp.int32)
    x1i = jnp.minimum(x0i + 1, W - 1)
    y0i = y0.astype(jnp.int32)
    y1i = jnp.minimum(y0i + 1, H - 1)

    def gather(img, yi, xi):             # img [H,W,C], yi/xi [N] -> [N,C]
        return img[yi, xi, :]            # contiguous channel vectors

    g = jax.vmap(gather)
    out = (g(feat, y0i, x0i).astype(jnp.float32) * (wy0 * wx0)[..., None]
           + g(feat, y0i, x1i).astype(jnp.float32) * (wy0 * wx1)[..., None]
           + g(feat, y1i, x0i).astype(jnp.float32) * (wy1 * wx0)[..., None]
           + g(feat, y1i, x1i).astype(jnp.float32) * (wy1 * wx1)[..., None])
    return out.astype(feat.dtype)


def grid_sample_3d_border_cl(feat, gx, gy, gz):
    """feat: [B,D,H,W,C], gx/gy/gz: [B,N] (x,y,z in [-1,1]) -> [B,N,C]."""
    B, D, H, W, C = feat.shape
    ix = jnp.clip(((gx + 1.0) * W - 1.0) * 0.5, 0.0, W - 1.0)
    iy = jnp.clip(((gy + 1.0) * H - 1.0) * 0.5, 0.0, H - 1.0)
    iz = jnp.clip(((gz + 1.0) * D - 1.0) * 0.5, 0.0, D - 1.0)
    x0, y0, z0 = jnp.floor(ix), jnp.floor(iy), jnp.floor(iz)
    wx1, wy1, wz1 = ix - x0, iy - y0, iz - z0
    wx0, wy0, wz0 = 1.0 - wx1, 1.0 - wy1, 1.0 - wz1
    x0i = x0.astype(jnp.int32)
    x1i = jnp.minimum(x0i + 1, W - 1)
    y0i = y0.astype(jnp.int32)
    y1i = jnp.minimum(y0i + 1, H - 1)
    z0i = z0.astype(jnp.int32)
    z1i = jnp.minimum(z0i + 1, D - 1)

    def gather(v, zi, yi, xi):           # v [D,H,W,C], idx [N] -> [N,C]
        return v[zi, yi, xi, :]

    g = jax.vmap(gather)
    out = jnp.zeros(gx.shape + (C,), jnp.float32)
    for zi, wz in ((z0i, wz0), (z1i, wz1)):
        for yi, wy in ((y0i, wy0), (y1i, wy1)):
            for xi, wx in ((x0i, wx0), (x1i, wx1)):
                out = out + g(feat, zi, yi, xi).astype(jnp.float32) * (wz * wy * wx)[..., None]
    return out.astype(feat.dtype)


# ----------------------------------------------------------------------------
# Parameter init (deterministic, xavier-normal style like MLP.init_weights)
# ----------------------------------------------------------------------------
def _xavier_normal(key, shape, gain=0.02):
    fan_in, fan_out = shape
    std = gain * (2.0 / (fan_in + fan_out)) ** 0.5
    return std * jax.random.normal(key, shape, dtype=jnp.float32)


def init_params(key, out_channel=3):
    feat2d, feat3d = 256, 32
    in2d = 256 + feat2d                  # tex(256) + geo(256) = 512
    in3d = feat3d                        # 32
    in_ch = in2d + in3d                  # 544 = MLP input channels
    inter = (1024, 512, 256, 128)
    out_pad = 128                        # lane-dense padded output width
    bf16 = jnp.bfloat16
    ks = jax.random.split(key, 8)
    p = {}
    # stand-in encoders (f32 weights)
    p['cg_w'] = _xavier_normal(ks[0], (3, feat2d))
    p['cg_b'] = jnp.zeros((1, feat2d), jnp.float32)
    p['ve_w'] = _xavier_normal(ks[1], (6, feat3d))
    p['ve_b'] = jnp.zeros((1, feat3d), jnp.float32)

    # MLP weights stored [Cin, Cout]; each concat layer is split into a
    # 2D-part (first 512 rows), 3D-part (next 32 rows) and a hidden part,
    # matching torch.cat([x, out], dim=1) row ordering (x first).
    w0 = _xavier_normal(ks[2], (in_ch, inter[0]))
    w1 = _xavier_normal(ks[3], (in_ch + inter[0], inter[1]))
    w2 = _xavier_normal(ks[4], (in_ch + inter[1], inter[2]))
    w3 = _xavier_normal(ks[5], (in_ch + inter[2], inter[3]))
    w4 = _xavier_normal(ks[6], (inter[3], out_channel))

    # Fuse the four skip matmuls: concatenate the x-parts of layers 0..3 along
    # Cout -> [512, 1920] and [32, 1920]; slice offsets are all 128-aligned.
    p['w2d_all'] = jnp.concatenate(
        [w0[:in2d], w1[:in2d], w2[:in2d], w3[:in2d]], axis=1).astype(bf16)
    p['w3d_all'] = jnp.concatenate(
        [w0[in2d:in_ch], w1[in2d:in_ch], w2[in2d:in_ch], w3[in2d:in_ch]],
        axis=1).astype(bf16)
    p['b_all'] = jnp.zeros((1, sum(inter)), jnp.float32)   # fused biases (zero init)

    p['w1h'] = w1[in_ch:].astype(bf16)   # [1024, 512]
    p['w2h'] = w2[in_ch:].astype(bf16)   # [512, 256]
    p['w3h'] = w3[in_ch:].astype(bf16)   # [256, 128]
    # zero-pad last layer to 128 output lanes -> unmasked stores in-kernel
    w4p = jnp.zeros((inter[3], out_pad), jnp.float32).at[:, :out_channel].set(w4)
    p['w4'] = w4p.astype(bf16)
    p['b4'] = jnp.zeros((1, out_pad), jnp.float32)
    return p


# ----------------------------------------------------------------------------
# TexPamirNet forward
# ----------------------------------------------------------------------------
def tex_pamir_net_forward(params, img, vol, pts, pts_proj, img_feat_geo,
                          out_channel=3):
    B, _, H, W = img.shape
    N = pts.shape[1]

    # --- cg: image texture encoder (channel-last output, bf16) ---
    # TODO(synk): real cg2.CycleGANEncoder(3, 256) is an external module not
    # provided; replaced by a single 1x1-conv+ReLU stand-in (Pallas kernel).
    x_img = img.transpose(0, 2, 3, 1).reshape(B * H * W, 3)
    feat_tex = pointwise_conv_relu(x_img, params['cg_w'], params['cg_b'])
    img_feat_tex = feat_tex.reshape(B, H, W, 256)               # [B,H,W,256] bf16

    # --- ve: volume encoder (channel-last output, bf16) ---
    # TODO(synk): real ve2.VolumeEncoder(6, 32) is an external module not
    # provided; replaced by a single 1x1x1-conv+ReLU stand-in (Pallas kernel).
    _, _, Dv, Hv, Wv = vol.shape
    x_vol = vol.transpose(0, 2, 3, 4, 1).reshape(B * Dv * Hv * Wv, 6)
    feat_vol = pointwise_conv_relu(x_vol, params['ve_w'], params['ve_b'])
    vol_feat = feat_vol.reshape(B, Dv, Hv, Wv, 32)              # [B,D,H,W,32] bf16

    # geo features arrive NCHW (module interface): one relayout to NHWC + bf16.
    feat_geo = img_feat_geo.transpose(0, 2, 3, 1).astype(jnp.bfloat16)

    # sampling coordinates (same ordering as the torch grid construction)
    gx2, gy2 = pts_proj[..., 0], pts_proj[..., 1]
    pts2 = pts * 2.0
    gx3, gy3, gz3 = pts2[..., 0], pts2[..., 1], pts2[..., 2]

    # Sample tex / geo features separately: avoids materializing the
    # [B,512,H,W] concat.  Channel order (tex, geo, vol) matches
    # torch.cat([img_feat_tex, img_feat_geo]) then cat([pt_feat_2D, pt_feat_3D]).
    pt_feat_tex = grid_sample_2d_border_cl(img_feat_tex, gx2, gy2)   # [B,N,256]
    pt_feat_geo = grid_sample_2d_border_cl(feat_geo, gx2, gy2)       # [B,N,256]
    pt_feat_3d = grid_sample_3d_border_cl(vol_feat, gx3, gy3, gz3)   # [B,N,32]

    x_2d = jnp.concatenate([pt_feat_tex, pt_feat_geo], axis=-1).reshape(B * N, -1)
    x_3d = pt_feat_3d.reshape(B * N, -1)

    # fused MLP of 1x1 convs over points (Pallas hot path)
    pt_tex = mlp_pallas(x_2d, x_3d, params, out_channel=out_channel)
    pt_tex = pt_tex.reshape(B, N, out_channel)

    # torch returns pt_feat_3D.squeeze() from [B,32,N,1]; explicit transpose
    # keeps the [B,32,N] layout without dropping B/N == 1 dims.
    pt_feat_3d_out = pt_feat_3d.transpose(0, 2, 1).astype(jnp.float32)
    return pt_tex, pt_feat_3d_out


# ----------------------------------------------------------------------------
if __name__ == "__main__":
    key = jax.random.PRNGKey(0)
    ks = jax.random.split(key, 6)

    B, N = 2, 8
    H = W = 16
    Dv = Hv = Wv = 8

    img = jax.random.normal(ks[0], (B, 3, H, W), jnp.float32)
    vol = jax.random.normal(ks[1], (B, 6, Dv, Hv, Wv), jnp.float32)
    pts = jax.random.uniform(ks[2], (B, N, 3), jnp.float32, -0.5, 0.5)
    pts_proj = jax.random.uniform(ks[3], (B, N, 2), jnp.float32, -1.0, 1.0)
    img_feat_geo = jax.random.normal(ks[4], (B, 256, H, W), jnp.float32)

    params = init_params(ks[5], out_channel=3)

    fwd = jax.jit(tex_pamir_net_forward)
    pt_tex, pt_feat_3d = fwd(params, img, vol, pts, pts_proj, img_feat_geo)
    jax.block_until_ready((pt_tex, pt_feat_3d))

    assert pt_tex.shape == (B, N, 3), pt_tex.shape
    assert pt_feat_3d.shape == (B, 32, N), pt_feat_3d.shape
    assert bool(jnp.all(jnp.isfinite(pt_tex)))
    assert bool(jnp.all((pt_tex >= 0.0) & (pt_tex <= 1.0)))     # sigmoid range
    print("KERNEL_OK")
</pallas_src>

<mosaic_0001>
module attributes {stable_mosaic.version = 11 : i64} {
  func.func @_pointwise_relu_kernel(%arg0: i32, %arg1: memref<1024x6xf32, #tpu.memory_space<vmem>>, %arg2: memref<6x32xf32, #tpu.memory_space<vmem>>, %arg3: memref<1x32xf32, #tpu.memory_space<vmem>>, %arg4: memref<1024x32xbf16, #tpu.memory_space<vmem>>) attributes {dimension_semantics = [#tpu.dimension_semantics<parallel>], iteration_bounds = array<i64: 1>, scalar_prefetch = 0 : i64, scratch_operands = 0 : i64, tpu.core_type = #tpu.core_type<tc>, window_params = [{transform_indices = @transform_0, window_bounds = array<i64: 1024, 6>}, {pipeline_mode = #tpu.pipeline_mode<synchronous>, transform_indices = @transform_1, window_bounds = array<i64: 6, 32>}, {pipeline_mode = #tpu.pipeline_mode<synchronous>, transform_indices = @transform_2, window_bounds = array<i64: 1, 32>}, {transform_indices = @transform_3, window_bounds = array<i64: 1024, 32>}]} {
    %c0 = arith.constant 0 : index
    %c0_0 = arith.constant 0 : index
    %0 = vector.load %arg1[%c0, %c0_0] : memref<1024x6xf32, #tpu.memory_space<vmem>>, vector<1024x6xf32>
    %c0_1 = arith.constant 0 : index
    %c0_2 = arith.constant 0 : index
    %1 = vector.load %arg2[%c0_1, %c0_2] : memref<6x32xf32, #tpu.memory_space<vmem>>, vector<6x32xf32>
    %c0_3 = arith.constant 0 : index
    %c0_4 = arith.constant 0 : index
    %2 = vector.load %arg3[%c0_3, %c0_4] : memref<1x32xf32, #tpu.memory_space<vmem>>, vector<1x32xf32>
    %3 = vector.extract_strided_slice %0 {offsets = [0, 0], sizes = [1024, 1], strides = [1, 1]} : vector<1024x6xf32> to vector<1024x1xf32>
    %4 = vector.extract_strided_slice %1 {offsets = [0, 0], sizes = [1, 32], strides = [1, 1]} : vector<6x32xf32> to vector<1x32xf32>
    %5 = vector.broadcast %3 : vector<1024x1xf32> to vector<1024x32xf32>
    %6 = vector.broadcast %4 : vector<1x32xf32> to vector<1024x32xf32>
    %7 = arith.mulf %5, %6 : vector<1024x32xf32>
    %8 = vector.broadcast %2 : vector<1x32xf32> to vector<1024x32xf32>
    %9 = arith.addf %8, %7 : vector<1024x32xf32>
    %10 = vector.extract_strided_slice %0 {offsets = [0, 1], sizes = [1024, 1], strides = [1, 1]} : vector<1024x6xf32> to vector<1024x1xf32>
    %11 = vector.extract_strided_slice %1 {offsets = [1, 0], sizes = [1, 32], strides = [1, 1]} : vector<6x32xf32> to vector<1x32xf32>
    %12 = vector.broadcast %10 : vector<1024x1xf32> to vector<1024x32xf32>
    %13 = vector.broadcast %11 : vector<1x32xf32> to vector<1024x32xf32>
    %14 = arith.mulf %12, %13 : vector<1024x32xf32>
    %15 = arith.addf %9, %14 : vector<1024x32xf32>
    %16 = vector.extract_strided_slice %0 {offsets = [0, 2], sizes = [1024, 1], strides = [1, 1]} : vector<1024x6xf32> to vector<1024x1xf32>
    %17 = vector.extract_strided_slice %1 {offsets = [2, 0], sizes = [1, 32], strides = [1, 1]} : vector<6x32xf32> to vector<1x32xf32>
    %18 = vector.broadcast %16 : vector<1024x1xf32> to vector<1024x32xf32>
    %19 = vector.broadcast %17 : vector<1x32xf32> to vector<1024x32xf32>
    %20 = arith.mulf %18, %19 : vector<1024x32xf32>
    %21 = arith.addf %15, %20 : vector<1024x32xf32>
    %22 = vector.extract_strided_slice %0 {offsets = [0, 3], sizes = [1024, 1], strides = [1, 1]} : vector<1024x6xf32> to vector<1024x1xf32>
    %23 = vector.extract_strided_slice %1 {offsets = [3, 0], sizes = [1, 32], strides = [1, 1]} : vector<6x32xf32> to vector<1x32xf32>
    %24 = vector.broadcast %22 : vector<1024x1xf32> to vector<1024x32xf32>
    %25 = vector.broadcast %23 : vector<1x32xf32> to vector<1024x32xf32>
    %26 = arith.mulf %24, %25 : vector<1024x32xf32>
    %27 = arith.addf %21, %26 : vector<1024x32xf32>
    %28 = vector.extract_strided_slice %0 {offsets = [0, 4], sizes = [1024, 1], strides = [1, 1]} : vector<1024x6xf32> to vector<1024x1xf32>
    %29 = vector.extract_strided_slice %1 {offsets = [4, 0], sizes = [1, 32], strides = [1, 1]} : vector<6x32xf32> to vector<1x32xf32>
    %30 = vector.broadcast %28 : vector<1024x1xf32> to vector<1024x32xf32>
    %31 = vector.broadcast %29 : vector<1x32xf32> to vector<1024x32xf32>
    %32 = arith.mulf %30, %31 : vector<1024x32xf32>
    %33 = arith.addf %27, %32 : vector<1024x32xf32>
    %34 = vector.extract_strided_slice %0 {offsets = [0, 5], sizes = [1024, 1], strides = [1, 1]} : vector<1024x6xf32> to vector<1024x1xf32>
    %35 = vector.extract_strided_slice %1 {offsets = [5, 0], sizes = [1, 32], strides = [1, 1]} : vector<6x32xf32> to vector<1x32xf32>
    %36 = vector.broadcast %34 : vector<1024x1xf32> to vector<1024x32xf32>
    %37 = vector.broadcast %35 : vector<1x32xf32> to vector<1024x32xf32>
    %38 = arith.mulf %36, %37 : vector<1024x32xf32>
    %39 = arith.addf %33, %38 : vector<1024x32xf32>
    %cst = arith.constant 0.000000e+00 : f32
    %40 = vector.broadcast %cst : f32 to vector<1024x32xf32>
    %41 = arith.maximumf %39, %40 : vector<1024x32xf32>
    %42 = arith.truncf %41 : vector<1024x32xf32> to vector<1024x32xbf16>
    %c0_5 = arith.constant 0 : index
    %c0_6 = arith.constant 0 : index
    %43 = vector.load %arg4[%c0_5, %c0_6] : memref<1024x32xbf16, #tpu.memory_space<vmem>>, vector<1024x32xbf16>
    tpu.vector_store %arg4[%c0_5, %c0_6], %42 {strides = array<i32>} : memref<1024x32xbf16, #tpu.memory_space<vmem>>, vector<1024x32xbf16>,
    return
  }
  func.func @transform_0(%arg0: i32) -> (i32, i32) {
    %c0_i32 = arith.constant 0 : i32
    %c0_i32_0 = arith.constant 0 : i32
    return %arg0, %c0_i32 : i32, i32
  }
  func.func @transform_1(%arg0: i32) -> (i32, i32) {
    %c0_i32 = arith.constant 0 : i32
    %c0_i32_0 = arith.constant 0 : i32
    %c0_i32_1 = arith.constant 0 : i32
    return %c0_i32, %c0_i32_0 : i32, i32
  }
  func.func @transform_2(%arg0: i32) -> (i32, i32) {
    %c0_i32 = arith.constant 0 : i32
    %c0_i32_0 = arith.constant 0 : i32
    %c0_i32_1 = arith.constant 0 : i32
    return %c0_i32, %c0_i32_0 : i32, i32
  }
  func.func @transform_3(%arg0: i32) -> (i32, i32) {
    %c0_i32 = arith.constant 0 : i32
    %c0_i32_0 = arith.constant 0 : i32
    return %arg0, %c0_i32 : i32, i32
  }
}

module attributes {stable_mosaic.version = 11 : i64} {
  func.func @_pointwise_relu_kernel(%arg0: i32, %arg1: memref<512x3xf32, #tpu.memory_space<vmem>>, %arg2: memref<3x256xf32, #tpu.memory_space<vmem>>, %arg3: memref<1x256xf32, #tpu.memory_space<vmem>>, %arg4: memref<512x256xbf16, #tpu.memory_space<vmem>>) attributes {dimension_semantics = [#tpu.dimension_semantics<parallel>], iteration_bounds = array<i64: 1>, scalar_prefetch = 0 : i64, scratch_operands = 0 : i64, tpu.core_type = #tpu.core_type<tc>, window_params = [{transform_indices = @transform_0, window_bounds = array<i64: 512, 3>}, {pipeline_mode = #tpu.pipeline_mode<synchronous>, transform_indices = @transform_1, window_bounds = array<i64: 3, 256>}, {pipeline_mode = #tpu.pipeline_mode<synchronous>, transform_indices = @transform_2, window_bounds = array<i64: 1, 256>}, {transform_indices = @transform_3, window_bounds = array<i64: 512, 256>}]} {
    %c0 = arith.constant 0 : index
    %c0_0 = arith.constant 0 : index
    %0 = vector.load %arg1[%c0, %c0_0] : memref<512x3xf32, #tpu.memory_space<vmem>>, vector<512x3xf32>
    %c0_1 = arith.constant 0 : index
    %c0_2 = arith.constant 0 : index
    %1 = vector.load %arg2[%c0_1, %c0_2] : memref<3x256xf32, #tpu.memory_space<vmem>>, vector<3x256xf32>
    %c0_3 = arith.constant 0 : index
    %c0_4 = arith.constant 0 : index
    %2 = vector.load %arg3[%c0_3, %c0_4] : memref<1x256xf32, #tpu.memory_space<vmem>>, vector<1x256xf32>
    %3 = vector.extract_strided_slice %0 {offsets = [0, 0], sizes = [512, 1], strides = [1, 1]} : vector<512x3xf32> to vector<512x1xf32>
    %4 = vector.extract_strided_slice %1 {offsets = [0, 0], sizes = [1, 256], strides = [1, 1]} : vector<3x256xf32> to vector<1x256xf32>
    %5 = vector.broadcast %3 : vector<512x1xf32> to vector<512x256xf32>
    %6 = vector.broadcast %4 : vector<1x256xf32> to vector<512x256xf32>
    %7 = arith.mulf %5, %6 : vector<512x256xf32>
    %8 = vector.broadcast %2 : vector<1x256xf32> to vector<512x256xf32>
    %9 = arith.addf %8, %7 : vector<512x256xf32>
    %10 = vector.extract_strided_slice %0 {offsets = [0, 1], sizes = [512, 1], strides = [1, 1]} : vector<512x3xf32> to vector<512x1xf32>
    %11 = vector.extract_strided_slice %1 {offsets = [1, 0], sizes = [1, 256], strides = [1, 1]} : vector<3x256xf32> to vector<1x256xf32>
    %12 = vector.broadcast %10 : vector<512x1xf32> to vector<512x256xf32>
    %13 = vector.broadcast %11 : vector<1x256xf32> to vector<512x256xf32>
    %14 = arith.mulf %12, %13 : vector<512x256xf32>
    %15 = arith.addf %9, %14 : vector<512x256xf32>
    %16 = vector.extract_strided_slice %0 {offsets = [0, 2], sizes = [512, 1], strides = [1, 1]} : vector<512x3xf32> to vector<512x1xf32>
    %17 = vector.extract_strided_slice %1 {offsets = [2, 0], sizes = [1, 256], strides = [1, 1]} : vector<3x256xf32> to vector<1x256xf32>
    %18 = vector.broadcast %16 : vector<512x1xf32> to vector<512x256xf32>
    %19 = vector.broadcast %17 : vector<1x256xf32> to vector<512x256xf32>
    %20 = arith.mulf %18, %19 : vector<512x256xf32>
    %21 = arith.addf %15, %20 : vector<512x256xf32>
    %cst = arith.constant 0.000000e+00 : f32
    %22 = vector.broadcast %cst : f32 to vector<512x256xf32>
    %23 = arith.maximumf %21, %22 : vector<512x256xf32>
    %24 = arith.truncf %23 : vector<512x256xf32> to vector<512x256xbf16>
    %c0_5 = arith.constant 0 : index
    %c0_6 = arith.constant 0 : index
    %25 = vector.load %arg4[%c0_5, %c0_6] : memref<512x256xbf16, #tpu.memory_space<vmem>>, vector<512x256xbf16>
    tpu.vector_store %arg4[%c0_5, %c0_6], %24 {strides = array<i32>} : memref<512x256xbf16, #tpu.memory_space<vmem>>, vector<512x256xbf16>,
    return
  }
  func.func @transform_0(%arg0: i32) -> (i32, i32) {
    %c0_i32 = arith.constant 0 : i32
    %c0_i32_0 = arith.constant 0 : i32
    return %arg0, %c0_i32 : i32, i32
  }
  func.func @transform_1(%arg0: i32) -> (i32, i32) {
    %c0_i32 = arith.constant 0 : i32
    %c0_i32_0 = arith.constant 0 : i32
    %c0_i32_1 = arith.constant 0 : i32
    return %c0_i32, %c0_i32_0 : i32, i32
  }
  func.func @transform_2(%arg0: i32) -> (i32, i32) {
    %c0_i32 = arith.constant 0 : i32
    %c0_i32_0 = arith.constant 0 : i32
    %c0_i32_1 = arith.constant 0 : i32
    return %c0_i32, %c0_i32_0 : i32, i32
  }
  func.func @transform_3(%arg0: i32) -> (i32, i32) {
    %c0_i32 = arith.constant 0 : i32
    %c0_i32_0 = arith.constant 0 : i32
    return %arg0, %c0_i32 : i32, i32
  }
}

module attributes {stable_mosaic.version = 11 : i64} {
  func.func @_mlp_kernel(%arg0: i32, %arg1: memref<16x512xbf16, #tpu.memory_space<vmem>>, %arg2: memref<16x32xbf16, #tpu.memory_space<vmem>>, %arg3: memref<512x1920xbf16, #tpu.memory_space<vmem>>, %arg4: memref<32x1920xbf16, #tpu.memory_space<vmem>>, %arg5: memref<1x1920xf32, #tpu.memory_space<vmem>>, %arg6: memref<1024x512xbf16, #tpu.memory_space<vmem>>, %arg7: memref<512x256xbf16, #tpu.memory_space<vmem>>, %arg8: memref<256x128xbf16, #tpu.memory_space<vmem>>, %arg9: memref<128x128xbf16, #tpu.memory_space<vmem>>, %arg10: memref<1x128xf32, #tpu.memory_space<vmem>>, %arg11: memref<16x128xf32, #tpu.memory_space<vmem>>) attributes {dimension_semantics = [#tpu.dimension_semantics<parallel>], iteration_bounds = array<i64: 1>, scalar_prefetch = 0 : i64, scratch_operands = 0 : i64, tpu.core_type = #tpu.core_type<tc>, window_params = [{transform_indices = @transform_0, window_bounds = array<i64: 16, 512>}, {transform_indices = @transform_1, window_bounds = array<i64: 16, 32>}, {pipeline_mode = #tpu.pipeline_mode<synchronous>, transform_indices = @transform_2, window_bounds = array<i64: 512, 1920>}, {pipeline_mode = #tpu.pipeline_mode<synchronous>, transform_indices = @transform_3, window_bounds = array<i64: 32, 1920>}, {pipeline_mode = #tpu.pipeline_mode<synchronous>, transform_indices = @transform_4, window_bounds = array<i64: 1, 1920>}, {pipeline_mode = #tpu.pipeline_mode<synchronous>, transform_indices = @transform_5, window_bounds = array<i64: 1024, 512>}, {pipeline_mode = #tpu.pipeline_mode<synchronous>, transform_indices = @transform_6, window_bounds = array<i64: 512, 256>}, {pipeline_mode = #tpu.pipeline_mode<synchronous>, transform_indices = @transform_7, window_bounds = array<i64: 256, 128>}, {pipeline_mode = #tpu.pipeline_mode<synchronous>, transform_indices = @transform_8, window_bounds = array<i64: 128, 128>}, {pipeline_mode = #tpu.pipeline_mode<synchronous>, transform_indices = @transform_9, window_bounds = array<i64: 1, 128>}, {transform_indices = @transform_10, window_bounds = array<i64: 16, 128>}]} {
    %c0 = arith.constant 0 : index
    %c0_0 = arith.constant 0 : index
    %0 = vector.load %arg1[%c0, %c0_0] : memref<16x512xbf16, #tpu.memory_space<vmem>>, vector<16x512xbf16>
    %c0_1 = arith.constant 0 : index
    %c0_2 = arith.constant 0 : index
    %1 = vector.load %arg2[%c0_1, %c0_2] : memref<16x32xbf16, #tpu.memory_space<vmem>>, vector<16x32xbf16>
    %c0_3 = arith.constant 0 : index
    %c0_4 = arith.constant 0 : index
    %2 = vector.load %arg3[%c0_3, %c0_4] : memref<512x1920xbf16, #tpu.memory_space<vmem>>, vector<512x1920xbf16>
    %cst = arith.constant dense<0.000000e+00> : vector<16x1920xf32>
    %3 = tpu.matmul %0, %2, %cst {dimension_numbers = #tpu.dot_dimension_numbers<[1], [0], [0], [1], [0, 0, 1, 1], [], []>} : vector<16x512xbf16>, vector<512x1920xbf16>, vector<16x1920xf32> -> vector<16x1920xf32>
    %c0_5 = arith.constant 0 : index
    %c0_6 = arith.constant 0 : index
    %4 = vector.load %arg4[%c0_5, %c0_6] : memref<32x1920xbf16, #tpu.memory_space<vmem>>, vector<32x1920xbf16>
    %cst_7 = arith.constant dense<0.000000e+00> : vector<16x1920xf32>
    %5 = tpu.matmul %1, %4, %cst_7 {dimension_numbers = #tpu.dot_dimension_numbers<[1], [0], [0], [1], [0, 0, 1, 1], [], []>} : vector<16x32xbf16>, vector<32x1920xbf16>, vector<16x1920xf32> -> vector<16x1920xf32>
    %6 = arith.addf %3, %5 : vector<16x1920xf32>
    %c0_8 = arith.constant 0 : index
    %c0_9 = arith.constant 0 : index
    %7 = vector.load %arg5[%c0_8, %c0_9] : memref<1x1920xf32, #tpu.memory_space<vmem>>, vector<1x1920xf32>
    %8 = vector.broadcast %7 : vector<1x1920xf32> to vector<16x1920xf32>
    %9 = arith.addf %6, %8 : vector<16x1920xf32>
    %10 = vector.extract_strided_slice %9 {offsets = [0, 0], sizes = [16, 1024], strides = [1, 1]} : vector<16x1920xf32> to vector<16x1024xf32>
    %cst_10 = arith.constant 0.000000e+00 : f32
    %11 = vector.broadcast %cst_10 : f32 to vector<16x1024xf32>
    %12 = arith.cmpf ogt, %10, %11 : vector<16x1024xf32>
    %cst_11 = arith.constant 2.000000e-01 : f32
    %13 = vector.broadcast %cst_11 : f32 to vector<16x1024xf32>
    %14 = arith.mulf %13, %10 : vector<16x1024xf32>
    %15 = arith.select %12, %10, %14 : vector<16x1024xi1>, vector<16x1024xf32>
    %16 = arith.truncf %15 : vector<16x1024xf32> to vector<16x1024xbf16>
    %17 = vector.extract_strided_slice %9 {offsets = [0, 1024], sizes = [16, 512], strides = [1, 1]} : vector<16x1920xf32> to vector<16x512xf32>
    %c0_12 = arith.constant 0 : index
    %c0_13 = arith.constant 0 : index
    %18 = vector.load %arg6[%c0_12, %c0_13] : memref<1024x512xbf16, #tpu.memory_space<vmem>>, vector<1024x512xbf16>
    %cst_14 = arith.constant dense<0.000000e+00> : vector<16x512xf32>
    %19 = tpu.matmul %16, %18, %cst_14 {dimension_numbers = #tpu.dot_dimension_numbers<[1], [0], [0], [1], [0, 0, 1, 1], [], []>} : vector<16x1024xbf16>, vector<1024x512xbf16>, vector<16x512xf32> -> vector<16x512xf32>
    %20 = arith.addf %17, %19 : vector<16x512xf32>
    %cst_15 = arith.constant 0.000000e+00 : f32
    %21 = vector.broadcast %cst_15 : f32 to vector<16x512xf32>
    %22 = arith.cmpf ogt, %20, %21 : vector<16x512xf32>
    %cst_16 = arith.constant 2.000000e-01 : f32
    %23 = vector.broadcast %cst_16 : f32 to vector<16x512xf32>
    %24 = arith.mulf %23, %20 : vector<16x512xf32>
    %25 = arith.select %22, %20, %24 : vector<16x512xi1>, vector<16x512xf32>
    %26 = arith.truncf %25 : vector<16x512xf32> to vector<16x512xbf16>
    %27 = vector.extract_strided_slice %9 {offsets = [0, 1536], sizes = [16, 256], strides = [1, 1]} : vector<16x1920xf32> to vector<16x256xf32>
    %c0_17 = arith.constant 0 : index
    %c0_18 = arith.constant 0 : index
    %28 = vector.load %arg7[%c0_17, %c0_18] : memref<512x256xbf16, #tpu.memory_space<vmem>>, vector<512x256xbf16>
    %cst_19 = arith.constant dense<0.000000e+00> : vector<16x256xf32>
    %29 = tpu.matmul %26, %28, %cst_19 {dimension_numbers = #tpu.dot_dimension_numbers<[1], [0], [0], [1], [0, 0, 1, 1], [], []>} : vector<16x512xbf16>, vector<512x256xbf16>, vector<16x256xf32> -> vector<16x256xf32>
    %30 = arith.addf %27, %29 : vector<16x256xf32>
    %cst_20 = arith.constant 0.000000e+00 : f32
    %31 = vector.broadcast %cst_20 : f32 to vector<16x256xf32>
    %32 = arith.cmpf ogt, %30, %31 : vector<16x256xf32>
    %cst_21 = arith.constant 2.000000e-01 : f32
    %33 = vector.broadcast %cst_21 : f32 to vector<16x256xf32>
    %34 = arith.mulf %33, %30 : vector<16x256xf32>
    %35 = arith.select %32, %30, %34 : vector<16x256xi1>, vector<16x256xf32>
    %36 = arith.truncf %35 : vector<16x256xf32> to vector<16x256xbf16>
    %37 = vector.extract_strided_slice %9 {offsets = [0, 1792], sizes = [16, 128], strides = [1, 1]} : vector<16x1920xf32> to vector<16x128xf32>
    %c0_22 = arith.constant 0 : index
    %c0_23 = arith.constant 0 : index
    %38 = vector.load %arg8[%c0_22, %c0_23] : memref<256x128xbf16, #tpu.memory_space<vmem>>, vector<256x128xbf16>
    %cst_24 = arith.constant dense<0.000000e+00> : vector<16x128xf32>
    %39 = tpu.matmul %36, %38, %cst_24 {dimension_numbers = #tpu.dot_dimension_numbers<[1], [0], [0], [1], [0, 0, 1, 1], [], []>} : vector<16x256xbf16>, vector<256x128xbf16>, vector<16x128xf32> -> vector<16x128xf32>
    %40 = arith.addf %37, %39 : vector<16x128xf32>
    %cst_25 = arith.constant 0.000000e+00 : f32
    %41 = vector.broadcast %cst_25 : f32 to vector<16x128xf32>
    %42 = arith.cmpf ogt, %40, %41 : vector<16x128xf32>
    %cst_26 = arith.constant 2.000000e-01 : f32
    %43 = vector.broadcast %cst_26 : f32 to vector<16x128xf32>
    %44 = arith.mulf %43, %40 : vector<16x128xf32>
    %45 = arith.select %42, %40, %44 : vector<16x128xi1>, vector<16x128xf32>
    %46 = arith.truncf %45 : vector<16x128xf32> to vector<16x128xbf16>
    %c0_27 = arith.constant 0 : index
    %c0_28 = arith.constant 0 : index
    %47 = vector.load %arg9[%c0_27, %c0_28] : memref<128x128xbf16, #tpu.memory_space<vmem>>, vector<128x128xbf16>
    %cst_29 = arith.constant dense<0.000000e+00> : vector<16x128xf32>
    %48 = tpu.matmul %46, %47, %cst_29 {dimension_numbers = #tpu.dot_dimension_numbers<[1], [0], [0], [1], [0, 0, 1, 1], [], []>} : vector<16x128xbf16>, vector<128x128xbf16>, vector<16x128xf32> -> vector<16x128xf32>
    %c0_30 = arith.constant 0 : index
    %c0_31 = arith.constant 0 : index
    %49 = vector.load %arg10[%c0_30, %c0_31] : memref<1x128xf32, #tpu.memory_space<vmem>>, vector<1x128xf32>
    %50 = vector.broadcast %49 : vector<1x128xf32> to vector<16x128xf32>
    %51 = arith.addf %48, %50 : vector<16x128xf32>
    %52 = arith.negf %51 : vector<16x128xf32>
    %53 = math.exp %52 : vector<16x128xf32>
    %cst_32 = arith.constant 1.000000e+00 : f32
    %54 = vector.broadcast %cst_32 : f32 to vector<16x128xf32>
    %55 = arith.addf %54, %53 : vector<16x128xf32>
    %56 = arith.divf %54, %55 : vector<16x128xf32>
    %c0_33 = arith.constant 0 : index
    %c0_34 = arith.constant 0 : index
    %57 = vector.load %arg11[%c0_33, %c0_34] : memref<16x128xf32, #tpu.memory_space<vmem>>, vector<16x128xf32>
    tpu.vector_store %arg11[%c0_33, %c0_34], %56 {strides = array<i32>} : memref<16x128xf32, #tpu.memory_space<vmem>>, vector<16x128xf32>,
    return
  }
  func.func @transform_0(%arg0: i32) -> (i32, i32) {
    %c0_i32 = arith.constant 0 : i32
    %c0_i32_0 = arith.constant 0 : i32
    return %arg0, %c0_i32 : i32, i32
  }
  func.func @transform_1(%arg0: i32) -> (i32, i32) {
    %c0_i32 = arith.constant 0 : i32
    %c0_i32_0 = arith.constant 0 : i32
    return %arg0, %c0_i32 : i32, i32
  }
  func.func @transform_2(%arg0: i32) -> (i32, i32) {
    %c0_i32 = arith.constant 0 : i32
    %c0_i32_0 = arith.constant 0 : i32
    %c0_i32_1 = arith.constant 0 : i32
    return %c0_i32, %c0_i32_0 : i32, i32
  }
  func.func @transform_3(%arg0: i32) -> (i32, i32) {
    %c0_i32 = arith.constant 0 : i32
    %c0_i32_0 = arith.constant 0 : i32
    %c0_i32_1 = arith.constant 0 : i32
    return %c0_i32, %c0_i32_0 : i32, i32
  }
  func.func @transform_4(%arg0: i32) -> (i32, i32) {
    %c0_i32 = arith.constant 0 : i32
    %c0_i32_0 = arith.constant 0 : i32
    %c0_i32_1 = arith.constant 0 : i32
    return %c0_i32, %c0_i32_0 : i32, i32
  }
  func.func @transform_5(%arg0: i32) -> (i32, i32) {
    %c0_i32 = arith.constant 0 : i32
    %c0_i32_0 = arith.constant 0 : i32
    %c0_i32_1 = arith.constant 0 : i32
    return %c0_i32, %c0_i32_0 : i32, i32
  }
  func.func @transform_6(%arg0: i32) -> (i32, i32) {
    %c0_i32 = arith.constant 0 : i32
    %c0_i32_0 = arith.constant 0 : i32
    %c0_i32_1 = arith.constant 0 : i32
    return %c0_i32, %c0_i32_0 : i32, i32
  }
  func.func @transform_7(%arg0: i32) -> (i32, i32) {
    %c0_i32 = arith.constant 0 : i32
    %c0_i32_0 = arith.constant 0 : i32
    %c0_i32_1 = arith.constant 0 : i32
    return %c0_i32, %c0_i32_0 : i32, i32
  }
  func.func @transform_8(%arg0: i32) -> (i32, i32) {
    %c0_i32 = arith.constant 0 : i32
    %c0_i32_0 = arith.constant 0 : i32
    %c0_i32_1 = arith.constant 0 : i32
    return %c0_i32, %c0_i32_0 : i32, i32
  }
  func.func @transform_9(%arg0: i32) -> (i32, i32) {
    %c0_i32 = arith.constant 0 : i32
    %c0_i32_0 = arith.constant 0 : i32
    %c0_i32_1 = arith.constant 0 : i32
    return %c0_i32, %c0_i32_0 : i32, i32
  }
  func.func @transform_10(%arg0: i32) -> (i32, i32) {
    %c0_i32 = arith.constant 0 : i32
    %c0_i32_0 = arith.constant 0 : i32
    return %arg0, %c0_i32 : i32, i32
  }
}

</mosaic_0001>

<llo_original>
// kernel: tex_pamir_net_forward.4
$region0: #{tex_pamir_net_forward.4}
  #allocation0 [shape = 'u32[]', space=smem, size = 0x4, offset = 0x4, fixed_abs, tag = 'smem constant byte address 0x4 - core index']
  #allocation1 [shape = 'u32[72,128]{1,0:T(1,128)}', space=vmem, size = 0x9000, scoped, tag = 'internal scratch']
  %s0 = inlined_call_operand.vmem [shape: f32[1024,6], index: 0, kind: input, shape index: {}]
  %s1 = inlined_call_operand.hbm [shape: f32[6,32], index: 1, kind: input, shape index: {}]
  %s2 = inlined_call_operand.hbm [shape: f32[1,32], index: 2, kind: input, shape index: {}]
  %s3 = inlined_call_operand.vmem [shape: bf16[1024,32], index: 3, kind: output, shape index: {}]
  %s4 = sld [smem:[#allocation0]]
  $region30: #{tex_pamir_net_forward.4} parent=0
    _
  %s6 = ssub.s32 1, %s4
  %s7 = scalar_select 0, %s6, %s4
  $region1: #{tex_pamir_net_forward.4} parent=0
    #allocation2 [shape = 'u8[4096]{0}', space=vmem, size = 0x1000, scoped, tag = 'input window, operand 1, single buffered']
    #allocation3 [shape = 's32[1]{0}', space=sflag, size = 0x4, scoped, tag = 'scoped memory for tex_pamir_net_forward.4']
    #allocation4 [shape = 'u8[512]{0}', space=vmem, size = 0x400, scoped, tag = 'input window, operand 2, single buffered']
    #allocation5 [shape = 's32[1]{0}', space=sflag, size = 0x4, scoped, tag = 'scoped memory for tex_pamir_net_forward.4']
    %8 = vsyncpa [#allocation3], 0
    %9 = vsyncpa [#allocation5], 0
    // Predicated region
    $region2: #{tex_pamir_net_forward.4} parent=1 // pred_check
      _
    $region3: #{tex_pamir_net_forward.4} parent=1 // pred_check_branch
      %11 = sbr.rel (0) target = $region5
    $region4: #{tex_pamir_net_forward.4} parent=1 // pred_region
      _
    $region5: #{tex_pamir_net_forward.4} parent=1 // pred_fallthru
      _
    // Predicated region
    $region6: #{tex_pamir_net_forward.4} parent=1 // pred_check
      _
    $region7: #{tex_pamir_net_forward.4} parent=1 // pred_check_branch
      %13 = sbr.rel (0) target = $region9
    $region8: #{tex_pamir_net_forward.4} parent=1 // pred_region
      %15 = vsyncadd [#allocation3], 0
      %s17 = sshll.u32 %s1, 4
      %s18 = int_to_ptr.hbm [resolvable:$true] %s17
      %s19 = sshll.u32 [#allocation2], 4
      %s20 = int_to_ptr.vmem [resolvable:$true] %s19
      %22 = dma.hbm_to_vmem [thread:$0]  %s18, 128, %s20, [#allocation3]
    $region9: #{tex_pamir_net_forward.4} parent=1 // pred_fallthru
      _
    // Predicated region
    $region10: #{tex_pamir_net_forward.4} parent=1 // pred_check
      _
    $region11: #{tex_pamir_net_forward.4} parent=1 // pred_check_branch
      %24 = sbr.rel (0) target = $region13
    $region12: #{tex_pamir_net_forward.4} parent=1 // pred_region
      %26 = vsyncadd [#allocation5], 0
      %s28 = sshll.u32 %s2, 4
      %s29 = int_to_ptr.hbm [resolvable:$true] %s28
      %s30 = sshll.u32 [#allocation4], 4
      %s31 = int_to_ptr.vmem [resolvable:$true] %s30
      %33 = dma.hbm_to_vmem [thread:$0]  %s29, 16, %s31, [#allocation5]
    $region13: #{tex_pamir_net_forward.4} parent=1 // pred_fallthru
      _
    // Predicated region
    $region14: #{tex_pamir_net_forward.4} parent=1 // pred_check
      _
    $region15: #{tex_pamir_net_forward.4} parent=1 // pred_check_branch
      %35 = sbr.rel (0) target = $region17
    $region16: #{tex_pamir_net_forward.4} parent=1 // pred_region
      %37 = dma.done [#allocation3], 128
    $region17: #{tex_pamir_net_forward.4} parent=1 // pred_fallthru
      _
    // Predicated region
    $region18: #{tex_pamir_net_forward.4} parent=1 // pred_check
      _
    $region19: #{tex_pamir_net_forward.4} parent=1 // pred_check_branch
      %39 = sbr.rel (0) target = $region21
    $region20: #{tex_pamir_net_forward.4} parent=1 // pred_region
      %41 = dma.done [#allocation5], 16
    $region21: #{tex_pamir_net_forward.4} parent=1 // pred_fallthru
      _
    %v42 = vld [vmem:[%s0] sm:$0xff]
    %v43 = vld [vmem:[%s0 + $0x8] sm:$0xff]
    %v44 = vld [vmem:[%s0 + $0x10] sm:$0xff]
    %v45 = vld [vmem:[%s0 + $0x18] sm:$0xff]
    %v46 = vld [vmem:[%s0 + $0x20] sm:$0xff]
    %v47 = vld [vmem:[%s0 + $0x28] sm:$0xff]
    %v48 = vld [vmem:[%s0 + $0x30] sm:$0xff]
    %v49 = vld [vmem:[%s0 + $0x38] sm:$0xff]
    %v50 = vld [vmem:[%s0 + $0x40] sm:$0xff]
    %v51 = vld [vmem:[%s0 + $0x48] sm:$0xff]
    %v52 = vld [vmem:[%s0 + $0x50] sm:$0xff]
    %v53 = vld [vmem:[%s0 + $0x58] sm:$0xff]
    %v54 = vld [vmem:[%s0 + $0x60] sm:$0xff]
    %v55 = vld [vmem:[%s0 + $0x68] sm:$0xff]
    %v56 = vld [vmem:[%s0 + $0x70] sm:$0xff]
    %v57 = vld [vmem:[%s0 + $0x78] sm:$0xff]
    %v58 = vld [vmem:[%s0 + $0x80] sm:$0xff]
    %v59 = vld [vmem:[%s0 + $0x88] sm:$0xff]
    %v60 = vld [vmem:[%s0 + $0x90] sm:$0xff]
    %v61 = vld [vmem:[%s0 + $0x98] sm:$0xff]
    %v62 = vld [vmem:[%s0 + $0xa0] sm:$0xff]
    %v63 = vld [vmem:[%s0 + $0xa8] sm:$0xff]
    %v64 = vld [vmem:[%s0 + $0xb0] sm:$0xff]
    %v65 = vld [vmem:[%s0 + $0xb8] sm:$0xff]
    %v66 = vld [vmem:[%s0 + $0xc0] sm:$0xff]
    %v67 = vld [vmem:[%s0 + $0xc8] sm:$0xff]
    %v68 = vld [vmem:[%s0 + $0xd0] sm:$0xff]
    %v69 = vld [vmem:[%s0 + $0xd8] sm:$0xff]
    %v70 = vld [vmem:[%s0 + $0xe0] sm:$0xff]
    %v71 = vld [vmem:[%s0 + $0xe8] sm:$0xff]
    %v72 = vld [vmem:[%s0 + $0xf0] sm:$0xff]
    %v73 = vld [vmem:[%s0 + $0xf8] sm:$0xff]
    %v74 = vld [vmem:[%s0 + $0x100] sm:$0xff]
    %v75 = vld [vmem:[%s0 + $0x108] sm:$0xff]
    %v76 = vld [vmem:[%s0 + $0x110] sm:$0xff]
    %v77 = vld [vmem:[%s0 + $0x118] sm:$0xff]
    %v78 = vld [vmem:[%s0 + $0x120] sm:$0xff]
    %v79 = vld [vmem:[%s0 + $0x128] sm:$0xff]
    %v80 = vld [vmem:[%s0 + $0x130] sm:$0xff]
    %v81 = vld [vmem:[%s0 + $0x138] sm:$0xff]
    %v82 = vld [vmem:[%s0 + $0x140] sm:$0xff]
    %v83 = vld [vmem:[%s0 + $0x148] sm:$0xff]
    %v84 = vld [vmem:[%s0 + $0x150] sm:$0xff]
    %v85 = vld [vmem:[%s0 + $0x158] sm:$0xff]
    %v86 = vld [vmem:[%s0 + $0x160] sm:$0xff]
    %v87 = vld [vmem:[%s0 + $0x168] sm:$0xff]
    %v88 = vld [vmem:[%s0 + $0x170] sm:$0xff]
    %v89 = vld [vmem:[%s0 + $0x178] sm:$0xff]
    %v90 = vld [vmem:[%s0 + $0x180] sm:$0xff]
    %v91 = vld [vmem:[%s0 + $0x188] sm:$0xff]
    %v92 = vld [vmem:[%s0 + $0x190] sm:$0xff]
    %v93 = vld [vmem:[%s0 + $0x198] sm:$0xff]
    %v94 = vld [vmem:[%s0 + $0x1a0] sm:$0xff]
    %v95 = vld [vmem:[%s0 + $0x1a8] sm:$0xff]
    %v96 = vld [vmem:[%s0 + $0x1b0] sm:$0xff]
    %v97 = vld [vmem:[%s0 + $0x1b8] sm:$0xff]
    %v98 = vld [vmem:[%s0 + $0x1c0] sm:$0xff]
    %v99 = vld [vmem:[%s0 + $0x1c8] sm:$0xff]
    %v100 = vld [vmem:[%s0 + $0x1d0] sm:$0xff]
    %v101 = vld [vmem:[%s0 + $0x1d8] sm:$0xff]
    %v102 = vld [vmem:[%s0 + $0x1e0] sm:$0xff]
    %v103 = vld [vmem:[%s0 + $0x1e8] sm:$0xff]
    %v104 = vld [vmem:[%s0 + $0x1f0] sm:$0xff]
    %v105 = vld [vmem:[%s0 + $0x1f8] sm:$0xff]
    %v106 = vld [vmem:[%s0 + $0x200] sm:$0xff]
    %v107 = vld [vmem:[%s0 + $0x208] sm:$0xff]
    %v108 = vld [vmem:[%s0 + $0x210] sm:$0xff]
    %v109 = vld [vmem:[%s0 + $0x218] sm:$0xff]
    %v110 = vld [vmem:[%s0 + $0x220] sm:$0xff]
    %v111 = vld [vmem:[%s0 + $0x228] sm:$0xff]
    %v112 = vld [vmem:[%s0 + $0x230] sm:$0xff]
    %v113 = vld [vmem:[%s0 + $0x238] sm:$0xff]
    %v114 = vld [vmem:[%s0 + $0x240] sm:$0xff]
    %v115 = vld [vmem:[%s0 + $0x248] sm:$0xff]
    %v116 = vld [vmem:[%s0 + $0x250] sm:$0xff]
    %v117 = vld [vmem:[%s0 + $0x258] sm:$0xff]
    %v118 = vld [vmem:[%s0 + $0x260] sm:$0xff]
    %v119 = vld [vmem:[%s0 + $0x268] sm:$0xff]
    %v120 = vld [vmem:[%s0 + $0x270] sm:$0xff]
    %v121 = vld [vmem:[%s0 + $0x278] sm:$0xff]
    %v122 = vld [vmem:[%s0 + $0x280] sm:$0xff]
    %v123 = vld [vmem:[%s0 + $0x288] sm:$0xff]
    %v124 = vld [vmem:[%s0 + $0x290] sm:$0xff]
    %v125 = vld [vmem:[%s0 + $0x298] sm:$0xff]
    %v126 = vld [vmem:[%s0 + $0x2a0] sm:$0xff]
    %v127 = vld [vmem:[%s0 + $0x2a8] sm:$0xff]
    %v128 = vld [vmem:[%s0 + $0x2b0] sm:$0xff]
    %v129 = vld [vmem:[%s0 + $0x2b8] sm:$0xff]
    %v130 = vld [vmem:[%s0 + $0x2c0] sm:$0xff]
    %v131 = vld [vmem:[%s0 + $0x2c8] sm:$0xff]
    %v132 = vld [vmem:[%s0 + $0x2d0] sm:$0xff]
    %v133 = vld [vmem:[%s0 + $0x2d8] sm:$0xff]
    %v134 = vld [vmem:[%s0 + $0x2e0] sm:$0xff]
    %v135 = vld [vmem:[%s0 + $0x2e8] sm:$0xff]
    %v136 = vld [vmem:[%s0 + $0x2f0] sm:$0xff]
    %v137 = vld [vmem:[%s0 + $0x2f8] sm:$0xff]
    %v138 = vld [vmem:[%s0 + $0x300] sm:$0xff]
    %v139 = vld [vmem:[%s0 + $0x308] sm:$0xff]
    %v140 = vld [vmem:[%s0 + $0x310] sm:$0xff]
    %v141 = vld [vmem:[%s0 + $0x318] sm:$0xff]
    %v142 = vld [vmem:[%s0 + $0x320] sm:$0xff]
    %v143 = vld [vmem:[%s0 + $0x328] sm:$0xff]
    %v144 = vld [vmem:[%s0 + $0x330] sm:$0xff]
    %v145 = vld [vmem:[%s0 + $0x338] sm:$0xff]
    %v146 = vld [vmem:[%s0 + $0x340] sm:$0xff]
    %v147 = vld [vmem:[%s0 + $0x348] sm:$0xff]
    %v148 = vld [vmem:[%s0 + $0x350] sm:$0xff]
    %v149 = vld [vmem:[%s0 + $0x358] sm:$0xff]
    %v150 = vld [vmem:[%s0 + $0x360] sm:$0xff]
    %v151 = vld [vmem:[%s0 + $0x368] sm:$0xff]
    %v152 = vld [vmem:[%s0 + $0x370] sm:$0xff]
    %v153 = vld [vmem:[%s0 + $0x378] sm:$0xff]
    %v154 = vld [vmem:[%s0 + $0x380] sm:$0xff]
    %v155 = vld [vmem:[%s0 + $0x388] sm:$0xff]
    %v156 = vld [vmem:[%s0 + $0x390] sm:$0xff]
    %v157 = vld [vmem:[%s0 + $0x398] sm:$0xff]
    %v158 = vld [vmem:[%s0 + $0x3a0] sm:$0xff]
    %v159 = vld [vmem:[%s0 + $0x3a8] sm:$0xff]
    %v160 = vld [vmem:[%s0 + $0x3b0] sm:$0xff]
    %v161 = vld [vmem:[%s0 + $0x3b8] sm:$0xff]
    %v162 = vld [vmem:[%s0 + $0x3c0] sm:$0xff]
    %v163 = vld [vmem:[%s0 + $0x3c8] sm:$0xff]
    %v164 = vld [vmem:[%s0 + $0x3d0] sm:$0xff]
    %v165 = vld [vmem:[%s0 + $0x3d8] sm:$0xff]
    %v166 = vld [vmem:[%s0 + $0x3e0] sm:$0xff]
    %v167 = vld [vmem:[%s0 + $0x3e8] sm:$0xff]
    %v168 = vld [vmem:[%s0 + $0x3f0] sm:$0xff]
    %v169 = vld [vmem:[%s0 + $0x3f8] sm:$0xff]
    %v170 = vld [vmem:[#allocation2] sm:$0x3f]
    %v171 = vld [vmem:[#allocation4] sm:$0x1]
    %173 = vset.pattern.permute.xlu0 0
    %174 = vperm.xlu0 %173, %v42
    %v175 = vpop.permute.xlu0 %174
    %178 = vset.pattern.permute.xlu0 0
    %179 = vperm.xlu0 %178, %v43
    %v180 = vpop.permute.xlu0 %179
    %183 = vset.pattern.permute.xlu0 0
    %184 = vperm.xlu0 %183, %v44
    %v185 = vpop.permute.xlu0 %184
    %188 = vset.pattern.permute.xlu0 0
    %189 = vperm.xlu0 %188, %v45
    %v190 = vpop.permute.xlu0 %189
    %193 = vset.pattern.permute.xlu0 0
    %194 = vperm.xlu0 %193, %v46
    %v195 = vpop.permute.xlu0 %194
    %198 = vset.pattern.permute.xlu0 0
    %199 = vperm.xlu0 %198, %v47
    %v200 = vpop.permute.xlu0 %199
    %203 = vset.pattern.permute.xlu0 0
    %204 = vperm.xlu0 %203, %v48
    %v205 = vpop.permute.xlu0 %204
    %208 = vset.pattern.permute.xlu0 0
    %209 = vperm.xlu0 %208, %v49
    %v210 = vpop.permute.xlu0 %209
    %213 = vset.pattern.permute.xlu0 0
    %214 = vperm.xlu0 %213, %v50
    %v215 = vpop.permute.xlu0 %214
    %218 = vset.pattern.permute.xlu0 0
    %219 = vperm.xlu0 %218, %v51
    %v220 = vpop.permute.xlu0 %219
    %223 = vset.pattern.permute.xlu0 0
    %224 = vperm.xlu0 %223, %v52
    %v225 = vpop.permute.xlu0 %224
    %228 = vset.pattern.permute.xlu0 0
    %229 = vperm.xlu0 %228, %v53
    %v230 = vpop.permute.xlu0 %229
    %233 = vset.pattern.permute.xlu0 0
    %234 = vperm.xlu0 %233, %v54
    %v235 = vpop.permute.xlu0 %234
    %238 = vset.pattern.permute.xlu0 0
    %239 = vperm.xlu0 %238, %v55
    %v240 = vpop.permute.xlu0 %239
    %243 = vset.pattern.permute.xlu0 0
    %244 = vperm.xlu0 %243, %v56
    %v245 = vpop.permute.xlu0 %244
    %248 = vset.pattern.permute.xlu0 0
    %249 = vperm.xlu0 %248, %v57
    %v250 = vpop.permute.xlu0 %249
    %253 = vset.pattern.permute.xlu0 0
    %254 = vperm.xlu0 %253, %v58
    %v255 = vpop.permute.xlu0 %254
    %258 = vset.pattern.permute.xlu0 0
    %259 = vperm.xlu0 %258, %v59
    %v260 = vpop.permute.xlu0 %259
    %263 = vset.pattern.permute.xlu0 0
    %264 = vperm.xlu0 %263, %v60
    %v265 = vpop.permute.xlu0 %264
    %268 = vset.pattern.permute.xlu0 0
    %269 = vperm.xlu0 %268, %v61
    %v270 = vpop.permute.xlu0 %269
    %273 = vset.pattern.permute.xlu0 0
    %274 = vperm.xlu0 %273, %v62
    %v275 = vpop.permute.xlu0 %274
    %278 = vset.pattern.permute.xlu0 0
    %279 = vperm.xlu0 %278, %v63
    %v280 = vpop.permute.xlu0 %279
    %283 = vset.pattern.permute.xlu0 0
    %284 = vperm.xlu0 %283, %v64
    %v285 = vpop.permute.xlu0 %284
    %288 = vset.pattern.permute.xlu0 0
    %289 = vperm.xlu0 %288, %v65
    %v290 = vpop.permute.xlu0 %289
    %293 = vset.pattern.permute.xlu0 0
    %294 = vperm.xlu0 %293, %v66
    %v295 = vpop.permute.xlu0 %294
    %298 = vset.pattern.permute.xlu0 0
    %299 = vperm.xlu0 %298, %v67
    %v300 = vpop.permute.xlu0 %299
    %303 = vset.pattern.permute.xlu0 0
    %304 = vperm.xlu0 %303, %v68
    %v305 = vpop.permute.xlu0 %304
    %308 = vset.pattern.permute.xlu0 0
    %309 = vperm.xlu0 %308, %v69
    %v310 = vpop.permute.xlu0 %309
    %313 = vset.pattern.permute.xlu0 0
    %314 = vperm.xlu0 %313, %v70
    %v315 = vpop.permute.xlu0 %314
    %318 = vset.pattern.permute.xlu0 0
    %319 = vperm.xlu0 %318, %v71
    %v320 = vpop.permute.xlu0 %319
    %323 = vset.pattern.permute.xlu0 0
    %324 = vperm.xlu0 %323, %v72
    %v325 = vpop.permute.xlu0 %324
    %328 = vset.pattern.permute.xlu0 0
    %329 = vperm.xlu0 %328, %v73
    %v330 = vpop.permute.xlu0 %329
    %333 = vset.pattern.permute.xlu0 0
    %334 = vperm.xlu0 %333, %v74
    %v335 = vpop.permute.xlu0 %334
    %338 = vset.pattern.permute.xlu0 0
    %339 = vperm.xlu0 %338, %v75
    %v340 = vpop.permute.xlu0 %339
    %343 = vset.pattern.permute.xlu0 0
    %344 = vperm.xlu0 %343, %v76
    %v345 = vpop.permute.xlu0 %344
    %348 = vset.pattern.permute.xlu0 0
    %349 = vperm.xlu0 %348, %v77
    %v350 = vpop.permute.xlu0 %349
    %353 = vset.pattern.permute.xlu0 0
    %354 = vperm.xlu0 %353, %v78
    %v355 = vpop.permute.xlu0 %354
    %358 = vset.pattern.permute.xlu0 0
    %359 = vperm.xlu0 %358, %v79
    %v360 = vpop.permute.xlu0 %359
    %363 = vset.pattern.permute.xlu0 0
    %364 = vperm.xlu0 %363, %v80
    %v365 = vpop.permute.xlu0 %364
    %368 = vset.pattern.permute.xlu0 0
    %369 = vperm.xlu0 %368, %v81
    %v370 = vpop.permute.xlu0 %369
    %373 = vset.pattern.permute.xlu0 0
    %374 = vperm.xlu0 %373, %v82
    %v375 = vpop.permute.xlu0 %374
    %378 = vset.pattern.permute.xlu0 0
    %379 = vperm.xlu0 %378, %v83
    %v380 = vpop.permute.xlu0 %379
    %383 = vset.pattern.permute.xlu0 0
    %384 = vperm.xlu0 %383, %v84
    %v385 = vpop.permute.xlu0 %384
    %388 = vset.pattern.permute.xlu0 0
    %389 = vperm.xlu0 %388, %v85
    %v390 = vpop.permute.xlu0 %389
    %393 = vset.pattern.permute.xlu0 0
    %394 = vperm.xlu0 %393, %v86
    %v395 = vpop.permute.xlu0 %394
    %398 = vset.pattern.permute.xlu0 0
    %399 = vperm.xlu0 %398, %v87
    %v400 = vpop.permute.xlu0 %399
    %403 = vset.pattern.permute.xlu0 0
    %404 = vperm.xlu0 %403, %v88
    %v405 = vpop.permute.xlu0 %404
    %408 = vset.pattern.permute.xlu0 0
    %409 = vperm.xlu0 %408, %v89
    %v410 = vpop.permute.xlu0 %409
    %413 = vset.pattern.permute.xlu0 0
    %414 = vperm.xlu0 %413, %v90
    %v415 = vpop.permute.xlu0 %414
    %418 = vset.pattern.permute.xlu0 0
    %419 = vperm.xlu0 %418, %v91
    %v420 = vpop.permute.xlu0 %419
    %423 = vset.pattern.permute.xlu0 0
    %424 = vperm.xlu0 %423, %v92
    %v425 = vpop.permute.xlu0 %424
    %428 = vset.pattern.permute.xlu0 0
    %429 = vperm.xlu0 %428, %v93
    %v430 = vpop.permute.xlu0 %429
    %433 = vset.pattern.permute.xlu0 0
    %434 = vperm.xlu0 %433, %v94
    %v435 = vpop.permute.xlu0 %434
    %438 = vset.pattern.permute.xlu0 0
    %439 = vperm.xlu0 %438, %v95
    %v440 = vpop.permute.xlu0 %439
    %443 = vset.pattern.permute.xlu0 0
    %444 = vperm.xlu0 %443, %v96
    %v445 = vpop.permute.xlu0 %444
    %448 = vset.pattern.permute.xlu0 0
    %449 = vperm.xlu0 %448, %v97
    %v450 = vpop.permute.xlu0 %449
    %453 = vset.pattern.permute.xlu0 0
    %454 = vperm.xlu0 %453, %v98
    %v455 = vpop.permute.xlu0 %454
    %458 = vset.pattern.permute.xlu0 0
    %459 = vperm.xlu0 %458, %v99
    %v460 = vpop.permute.xlu0 %459
    %463 = vset.pattern.permute.xlu0 0
    %464 = vperm.xlu0 %463, %v100
    %v465 = vpop.permute.xlu0 %464
    %468 = vset.pattern.permute.xlu0 0
    %469 = vperm.xlu0 %468, %v101
    %v470 = vpop.permute.xlu0 %469
    %473 = vset.pattern.permute.xlu0 0
    %474 = vperm.xlu0 %473, %v102
    %v475 = vpop.permute.xlu0 %474
    %478 = vset.pattern.permute.xlu0 0
    %479 = vperm.xlu0 %478, %v103
    %v480 = vpop.permute.xlu0 %479
    %483 = vset.pattern.permute.xlu0 0
    %484 = vperm.xlu0 %483, %v104
    %v485 = vpop.permute.xlu0 %484
    %488 = vset.pattern.permute.xlu0 0
    %489 = vperm.xlu0 %488, %v105
    %v490 = vpop.permute.xlu0 %489
    %493 = vset.pattern.permute.xlu0 0
    %494 = vperm.xlu0 %493, %v106
    %v495 = vpop.permute.xlu0 %494
    %498 = vset.pattern.permute.xlu0 0
    %499 = vperm.xlu0 %498, %v107
    %v500 = vpop.permute.xlu0 %499
    %503 = vset.pattern.permute.xlu0 0
    %504 = vperm.xlu0 %503, %v108
    %v505 = vpop.permute.xlu0 %504
    %508 = vset.pattern.permute.xlu0 0
    %509 = vperm.xlu0 %508, %v109
    %v510 = vpop.permute.xlu0 %509
    %513 = vset.pattern.permute.xlu0 0
    %514 = vperm.xlu0 %513, %v110
    %v515 = vpop.permute.xlu0 %514
    %518 = vset.pattern.permute.xlu0 0
    %519 = vperm.xlu0 %518, %v111
    %v520 = vpop.permute.xlu0 %519
    %523 = vset.pattern.permute.xlu0 0
    %524 = vperm.xlu0 %523, %v112
    %v525 = vpop.permute.xlu0 %524
    %528 = vset.pattern.permute.xlu0 0
    %529 = vperm.xlu0 %528, %v113
    %v530 = vpop.permute.xlu0 %529
    %533 = vset.pattern.permute.xlu0 0
    %534 = vperm.xlu0 %533, %v114
    %v535 = vpop.permute.xlu0 %534
    %538 = vset.pattern.permute.xlu0 0
    %539 = vperm.xlu0 %538, %v115
    %v540 = vpop.permute.xlu0 %539
    %543 = vset.pattern.permute.xlu0 0
    %544 = vperm.xlu0 %543, %v116
    %v545 = vpop.permute.xlu0 %544
    %548 = vset.pattern.permute.xlu0 0
    %549 = vperm.xlu0 %548, %v117
    %v550 = vpop.permute.xlu0 %549
    %553 = vset.pattern.permute.xlu0 0
    %554 = vperm.xlu0 %553, %v118
    %v555 = vpop.permute.xlu0 %554
    %558 = vset.pattern.permute.xlu0 0
    %559 = vperm.xlu0 %558, %v119
    %v560 = vpop.permute.xlu0 %559
    %563 = vset.pattern.permute.xlu0 0
    %564 = vperm.xlu0 %563, %v120
    %v565 = vpop.permute.xlu0 %564
    %568 = vset.pattern.permute.xlu0 0
    %569 = vperm.xlu0 %568, %v121
    %v570 = vpop.permute.xlu0 %569
    %573 = vset.pattern.permute.xlu0 0
    %574 = vperm.xlu0 %573, %v122
    %v575 = vpop.permute.xlu0 %574
    %578 = vset.pattern.permute.xlu0 0
    %579 = vperm.xlu0 %578, %v123
    %v580 = vpop.permute.xlu0 %579
    %583 = vset.pattern.permute.xlu0 0
    %584 = vperm.xlu0 %583, %v124
    %v585 = vpop.permute.xlu0 %584
    %588 = vset.pattern.permute.xlu0 0
    %589 = vperm.xlu0 %588, %v125
    %v590 = vpop.permute.xlu0 %589
    %593 = vset.pattern.permute.xlu0 0
    %594 = vperm.xlu0 %593, %v126
    %v595 = vpop.permute.xlu0 %594
    %598 = vset.pattern.permute.xlu0 0
    %599 = vperm.xlu0 %598, %v127
    %v600 = vpop.permute.xlu0 %599
    %603 = vset.pattern.permute.xlu0 0
    %604 = vperm.xlu0 %603, %v128
    %v605 = vpop.permute.xlu0 %604
    %608 = vset.pattern.permute.xlu0 0
    %609 = vperm.xlu0 %608, %v129
    %v610 = vpop.permute.xlu0 %609
    %613 = vset.pattern.permute.xlu0 0
    %614 = vperm.xlu0 %613, %v130
    %v615 = vpop.permute.xlu0 %614
    %618 = vset.pattern.permute.xlu0 0
    %619 = vperm.xlu0 %618, %v131
    %v620 = vpop.permute.xlu0 %619
    %623 = vset.pattern.permute.xlu0 0
    %624 = vperm.xlu0 %623, %v132
    %v625 = vpop.permute.xlu0 %624
    %628 = vset.pattern.permute.xlu0 0
    %629 = vperm.xlu0 %628, %v133
    %v630 = vpop.permute.xlu0 %629
    %633 = vset.pattern.permute.xlu0 0
    %634 = vperm.xlu0 %633, %v134
    %v635 = vpop.permute.xlu0 %634
    %638 = vset.pattern.permute.xlu0 0
    %639 = vperm.xlu0 %638, %v135
    %v640 = vpop.permute.xlu0 %639
    %643 = vset.pattern.permute.xlu0 0
    %644 = vperm.xlu0 %643, %v136
    %v645 = vpop.permute.xlu0 %644
    %648 = vset.pattern.permute.xlu0 0
    %649 = vperm.xlu0 %648, %v137
    %v650 = vpop.permute.xlu0 %649
    %653 = vset.pattern.permute.xlu0 0
    %654 = vperm.xlu0 %653, %v138
    %v655 = vpop.permute.xlu0 %654
    %658 = vset.pattern.permute.xlu0 0
    %659 = vperm.xlu0 %658, %v139
    %v660 = vpop.permute.xlu0 %659
    %663 = vset.pattern.permute.xlu0 0
    %664 = vperm.xlu0 %663, %v140
    %v665 = vpop.permute.xlu0 %664
    %668 = vset.pattern.permute.xlu0 0
    %669 = vperm.xlu0 %668, %v141
    %v670 = vpop.permute.xlu0 %669
    %673 = vset.pattern.permute.xlu0 0
    %674 = vperm.xlu0 %673, %v142
    %v675 = vpop.permute.xlu0 %674
    %678 = vset.pattern.permute.xlu0 0
    %679 = vperm.xlu0 %678, %v143
    %v680 = vpop.permute.xlu0 %679
    %683 = vset.pattern.permute.xlu0 0
    %684 = vperm.xlu0 %683, %v144
    %v685 = vpop.permute.xlu0 %684
    %688 = vset.pattern.permute.xlu0 0
    %689 = vperm.xlu0 %688, %v145
    %v690 = vpop.permute.xlu0 %689
    %693 = vset.pattern.permute.xlu0 0
    %694 = vperm.xlu0 %693, %v146
    %v695 = vpop.permute.xlu0 %694
    %698 = vset.pattern.permute.xlu0 0
    %699 = vperm.xlu0 %698, %v147
    %v700 = vpop.permute.xlu0 %699
    %703 = vset.pattern.permute.xlu0 0
    %704 = vperm.xlu0 %703, %v148
    %v705 = vpop.permute.xlu0 %704
    %708 = vset.pattern.permute.xlu0 0
    %709 = vperm.xlu0 %708, %v149
    %v710 = vpop.permute.xlu0 %709
    %713 = vset.pattern.permute.xlu0 0
    %714 = vperm.xlu0 %713, %v150
    %v715 = vpop.permute.xlu0 %714
    %718 = vset.pattern.permute.xlu0 0
    %719 = vperm.xlu0 %718, %v151
    %v720 = vpop.permute.xlu0 %719
    %723 = vset.pattern.permute.xlu0 0
    %724 = vperm.xlu0 %723, %v152
    %v725 = vpop.permute.xlu0 %724
    %728 = vset.pattern.permute.xlu0 0
    %729 = vperm.xlu0 %728, %v153
    %v730 = vpop.permute.xlu0 %729
    %733 = vset.pattern.permute.xlu0 0
    %734 = vperm.xlu0 %733, %v154
    %v735 = vpop.permute.xlu0 %734
    %738 = vset.pattern.permute.xlu0 0
    %739 = vperm.xlu0 %738, %v155
    %v740 = vpop.permute.xlu0 %739
    %743 = vset.pattern.permute.xlu0 0
    %744 = vperm.xlu0 %743, %v156
    %v745 = vpop.permute.xlu0 %744
    %748 = vset.pattern.permute.xlu0 0
    %749 = vperm.xlu0 %748, %v157
    %v750 = vpop.permute.xlu0 %749
    %753 = vset.pattern.permute.xlu0 0
    %754 = vperm.xlu0 %753, %v158
    %v755 = vpop.permute.xlu0 %754
    %758 = vset.pattern.permute.xlu0 0
    %759 = vperm.xlu0 %758, %v159
    %v760 = vpop.permute.xlu0 %759
    %763 = vset.pattern.permute.xlu0 0
    %764 = vperm.xlu0 %763, %v160
    %v765 = vpop.permute.xlu0 %764
    %768 = vset.pattern.permute.xlu0 0
    %769 = vperm.xlu0 %768, %v161
    %v770 = vpop.permute.xlu0 %769
    %773 = vset.pattern.permute.xlu0 0
    %774 = vperm.xlu0 %773, %v162
    %v775 = vpop.permute.xlu0 %774
    %778 = vset.pattern.permute.xlu0 0
    %779 = vperm.xlu0 %778, %v163
    %v780 = vpop.permute.xlu0 %779
    %783 = vset.pattern.permute.xlu0 0
    %784 = vperm.xlu0 %783, %v164
    %v785 = vpop.permute.xlu0 %784
    %788 = vset.pattern.permute.xlu0 0
    %789 = vperm.xlu0 %788, %v165
    %v790 = vpop.permute.xlu0 %789
    %793 = vset.pattern.permute.xlu0 0
    %794 = vperm.xlu0 %793, %v166
    %v795 = vpop.permute.xlu0 %794
    %798 = vset.pattern.permute.xlu0 0
    %799 = vperm.xlu0 %798, %v167
    %v800 = vpop.permute.xlu0 %799
    %803 = vset.pattern.permute.xlu0 0
    %804 = vperm.xlu0 %803, %v168
    %v805 = vpop.permute.xlu0 %804
    %808 = vset.pattern.permute.xlu0 0
    %809 = vperm.xlu0 %808, %v169
    %v810 = vpop.permute.xlu0 %809
    %v812 = vperm.slane %v170, 0
    %v813 = vmul.f32 %v175, %v812
    %v814 = vmul.f32 %v180, %v812
    %v815 = vmul.f32 %v185, %v812
    %v816 = vmul.f32 %v190, %v812
    %v817 = vmul.f32 %v195, %v812
    %v818 = vmul.f32 %v200, %v812
    %v819 = vmul.f32 %v205, %v812
    %v820 = vmul.f32 %v210, %v812
    %v821 = vmul.f32 %v215, %v812
    %v822 = vmul.f32 %v220, %v812
    %v823 = vmul.f32 %v225, %v812
    %v824 = vmul.f32 %v230, %v812
    %v825 = vmul.f32 %v235, %v812
    %v826 = vmul.f32 %v240, %v812
    %v827 = vmul.f32 %v245, %v812
    %v828 = vmul.f32 %v250, %v812
    %v829 = vmul.f32 %v255, %v812
    %v830 = vmul.f32 %v260, %v812
    %v831 = vmul.f32 %v265, %v812
    %v832 = vmul.f32 %v270, %v812
    %v833 = vmul.f32 %v275, %v812
    %v834 = vmul.f32 %v280, %v812
    %v835 = vmul.f32 %v285, %v812
    %v836 = vmul.f32 %v290, %v812
    %v837 = vmul.f32 %v295, %v812
    %v838 = vmul.f32 %v300, %v812
    %v839 = vmul.f32 %v305, %v812
    %v840 = vmul.f32 %v310, %v812
    %v841 = vmul.f32 %v315, %v812
    %v842 = vmul.f32 %v320, %v812
    %v843 = vmul.f32 %v325, %v812
    %v844 = vmul.f32 %v330, %v812
    %v845 = vmul.f32 %v335, %v812
    %v846 = vmul.f32 %v340, %v812
    %v847 = vmul.f32 %v345, %v812
    %v848 = vmul.f32 %v350, %v812
    %v849 = vmul.f32 %v355, %v812
    %v850 = vmul.f32 %v360, %v812
    %v851 = vmul.f32 %v365, %v812
    %v852 = vmul.f32 %v370, %v812
    %v853 = vmul.f32 %v375, %v812
    %v854 = vmul.f32 %v380, %v812
    %v855 = vmul.f32 %v385, %v812
    %v856 = vmul.f32 %v390, %v812
    %v857 = vmul.f32 %v395, %v812
    %v858 = vmul.f32 %v400, %v812
    %v859 = vmul.f32 %v405, %v812
    %v860 = vmul.f32 %v410, %v812
    %v861 = vmul.f32 %v415, %v812
    %v862 = vmul.f32 %v420, %v812
    %v863 = vmul.f32 %v425, %v812
    %v864 = vmul.f32 %v430, %v812
    %v865 = vmul.f32 %v435, %v812
    %v866 = vmul.f32 %v440, %v812
    %v867 = vmul.f32 %v445, %v812
    %v868 = vmul.f32 %v450, %v812
    %v869 = vmul.f32 %v455, %v812
    %v870 = vmul.f32 %v460, %v812
    %v871 = vmul.f32 %v465, %v812
    %v872 = vmul.f32 %v470, %v812
    %v873 = vmul.f32 %v475, %v812
    %v874 = vmul.f32 %v480, %v812
    %v875 = vmul.f32 %v485, %v812
    %v876 = vmul.f32 %v490, %v812
    %v877 = vmul.f32 %v495, %v812
    %v878 = vmul.f32 %v500, %v812
    %v879 = vmul.f32 %v505, %v812
    %v880 = vmul.f32 %v510, %v812
    %v881 = vmul.f32 %v515, %v812
    %v882 = vmul.f32 %v520, %v812
    %v883 = vmul.f32 %v525, %v812
    %v884 = vmul.f32 %v530, %v812
    %v885 = vmul.f32 %v535, %v812
    %v886 = vmul.f32 %v540, %v812
    %v887 = vmul.f32 %v545, %v812
    %v888 = vmul.f32 %v550, %v812
    %v889 = vmul.f32 %v555, %v812
    %v890 = vmul.f32 %v560, %v812
    %v891 = vmul.f32 %v565, %v812
    %v892 = vmul.f32 %v570, %v812
    %v893 = vmul.f32 %v575, %v812
    %v894 = vmul.f32 %v580, %v812
    %v895 = vmul.f32 %v585, %v812
    %v896 = vmul.f32 %v590, %v812
    %v897 = vmul.f32 %v595, %v812
    %v898 = vmul.f32 %v600, %v812
    %v899 = vmul.f32 %v605, %v812
    %v900 = vmul.f32 %v610, %v812
    %v901 = vmul.f32 %v615, %v812
    %v902 = vmul.f32 %v620, %v812
    %v903 = vmul.f32 %v625, %v812
    %v904 = vmul.f32 %v630, %v812
    %v905 = vmul.f32 %v635, %v812
    %v906 = vmul.f32 %v640, %v812
    %v907 = vmul.f32 %v645, %v812
    %v908 = vmul.f32 %v650, %v812
    %v909 = vmul.f32 %v655, %v812
    %v910 = vmul.f32 %v660, %v812
    %v911 = vmul.f32 %v665, %v812
    %v912 = vmul.f32 %v670, %v812
    %v913 = vmul.f32 %v675, %v812
    %v914 = vmul.f32 %v680, %v812
    %v915 = vmul.f32 %v685, %v812
    %v916 = vmul.f32 %v690, %v812
    %v917 = vmul.f32 %v695, %v812
    %v918 = vmul.f32 %v700, %v812
    %v919 = vmul.f32 %v705, %v812
    %v920 = vmul.f32 %v710, %v812
    %v921 = vmul.f32 %v715, %v812
    %v922 = vmul.f32 %v720, %v812
    %v923 = vmul.f32 %v725, %v812
    %v924 = vmul.f32 %v730, %v812
    %v925 = vmul.f32 %v735, %v812
    %v926 = vmul.f32 %v740, %v812
    %v927 = vmul.f32 %v745, %v812
    %v928 = vmul.f32 %v750, %v812
    %v929 = vmul.f32 %v755, %v812
    %v930 = vmul.f32 %v760, %v812
    %v931 = vmul.f32 %v765, %v812
    %v932 = vmul.f32 %v770, %v812
    %v933 = vmul.f32 %v775, %v812
    %v934 = vmul.f32 %v780, %v812
    %v935 = vmul.f32 %v785, %v812
    %v936 = vmul.f32 %v790, %v812
    %v937 = vmul.f32 %v795, %v812
    %v938 = vmul.f32 %v800, %v812
    %v939 = vmul.f32 %v805, %v812
    %v940 = vmul.f32 %v810, %v812
    %v942 = vperm.slane %v171, 0
    %v944 = vadd.f32 %v942, %v813
    %v945 = vadd.f32 %v942, %v814
    %v946 = vadd.f32 %v942, %v815
    %v947 = vadd.f32 %v942, %v816
    %v948 = vadd.f32 %v942, %v817
    %v949 = vadd.f32 %v942, %v818
    %v950 = vadd.f32 %v942, %v819
    %v951 = vadd.f32 %v942, %v820
    %v952 = vadd.f32 %v942, %v821
    %v953 = vadd.f32 %v942, %v822
    %v954 = vadd.f32 %v942, %v823
    %v955 = vadd.f32 %v942, %v824
    %v956 = vadd.f32 %v942, %v825
    %v957 = vadd.f32 %v942, %v826
    %v958 = vadd.f32 %v942, %v827
    %v959 = vadd.f32 %v942, %v828
    %v960 = vadd.f32 %v942, %v829
    %v961 = vadd.f32 %v942, %v830
    %v962 = vadd.f32 %v942, %v831
    %v963 = vadd.f32 %v942, %v832
    %v964 = vadd.f32 %v942, %v833
    %v965 = vadd.f32 %v942, %v834
    %v966 = vadd.f32 %v942, %v835
    %v967 = vadd.f32 %v942, %v836
    %v968 = vadd.f32 %v942, %v837
    %v969 = vadd.f32 %v942, %v838
    %v970 = vadd.f32 %v942, %v839
    %v971 = vadd.f32 %v942, %v840
    %v972 = vadd.f32 %v942, %v841
    %v973 = vadd.f32 %v942, %v842
    %v974 = vadd.f32 %v942, %v843
    %v975 = vadd.f32 %v942, %v844
    %v976 = vadd.f32 %v942, %v845
    %v977 = vadd.f32 %v942, %v846
    %v978 = vadd.f32 %v942, %v847
    %v979 = vadd.f32 %v942, %v848
    %v980 = vadd.f32 %v942, %v849
    %v981 = vadd.f32 %v942, %v850
    %v982 = vadd.f32 %v942, %v851
    %v983 = vadd.f32 %v942, %v852
    %v984 = vadd.f32 %v942, %v853
    %v985 = vadd.f32 %v942, %v854
    %v986 = vadd.f32 %v942, %v855
    %v987 = vadd.f32 %v942, %v856
    %v988 = vadd.f32 %v942, %v857
    %v989 = vadd.f32 %v942, %v858
    %v990 = vadd.f32 %v942, %v859
    %v991 = vadd.f32 %v942, %v860
    %v992 = vadd.f32 %v942, %v861
    %v993 = vadd.f32 %v942, %v862
    %v994 = vadd.f32 %v942, %v863
    %v995 = vadd.f32 %v942, %v864
    %v996 = vadd.f32 %v942, %v865
    %v997 = vadd.f32 %v942, %v866
    %v998 = vadd.f32 %v942, %v867
    %v999 = vadd.f32 %v942, %v868
    %v1000 = vadd.f32 %v942, %v869
    %v1001 = vadd.f32 %v942, %v870
    %v1002 = vadd.f32 %v942, %v871
    %v1003 = vadd.f32 %v942, %v872
    %v1004 = vadd.f32 %v942, %v873
    %v1005 = vadd.f32 %v942, %v874
    %v1006 = vadd.f32 %v942, %v875
    %v1007 = vadd.f32 %v942, %v876
    %v1008 = vadd.f32 %v942, %v877
    %v1009 = vadd.f32 %v942, %v878
    %v1010 = vadd.f32 %v942, %v879
    %v1011 = vadd.f32 %v942, %v880
    %v1012 = vadd.f32 %v942, %v881
    %v1013 = vadd.f32 %v942, %v882
    %v1014 = vadd.f32 %v942, %v883
    %v1015 = vadd.f32 %v942, %v884
    %v1016 = vadd.f32 %v942, %v885
    %v1017 = vadd.f32 %v942, %v886
    %v1018 = vadd.f32 %v942, %v887
    %v1019 = vadd.f32 %v942, %v888
    %v1020 = vadd.f32 %v942, %v889
    %v1021 = vadd.f32 %v942, %v890
    %v1022 = vadd.f32 %v942, %v891
    %v1023 = vadd.f32 %v942, %v892
    %v1024 = vadd.f32 %v942, %v893
    %v1025 = vadd.f32 %v942, %v894
    %v1026 = vadd.f32 %v942, %v895
    %v1027 = vadd.f32 %v942, %v896
    %v1028 = vadd.f32 %v942, %v897
    %v1029 = vadd.f32 %v942, %v898
    %v1030 = vadd.f32 %v942, %v899
    %v1031 = vadd.f32 %v942, %v900
    %v1032 = vadd.f32 %v942, %v901
    %v1033 = vadd.f32 %v942, %v902
    %v1034 = vadd.f32 %v942, %v903
    %v1035 = vadd.f32 %v942, %v904
    %v1036 = vadd.f32 %v942, %v905
    %v1037 = vadd.f32 %v942, %v906
    %v1038 = vadd.f32 %v942, %v907
    %v1039 = vadd.f32 %v942, %v908
    %v1040 = vadd.f32 %v942, %v909
    %v1041 = vadd.f32 %v942, %v910
    %v1042 = vadd.f32 %v942, %v911
    %v1043 = vadd.f32 %v942, %v912
    %v1044 = vadd.f32 %v942, %v913
    %v1045 = vadd.f32 %v942, %v914
    %v1046 = vadd.f32 %v942, %v915
    %v1047 = vadd.f32 %v942, %v916
    %v1048 = vadd.f32 %v942, %v917
    %v1049 = vadd.f32 %v942, %v918
    %v1050 = vadd.f32 %v942, %v919
    %v1051 = vadd.f32 %v942, %v920
    %v1052 = vadd.f32 %v942, %v921
    %v1053 = vadd.f32 %v942, %v922
    %v1054 = vadd.f32 %v942, %v923
    %v1055 = vadd.f32 %v942, %v924
    %v1056 = vadd.f32 %v942, %v925
    %v1057 = vadd.f32 %v942, %v926
    %v1058 = vadd.f32 %v942, %v927
    %v1059 = vadd.f32 %v942, %v928
    %v1060 = vadd.f32 %v942, %v929
    %v1061 = vadd.f32 %v942, %v930
    %v1062 = vadd.f32 %v942, %v931
    %v1063 = vadd.f32 %v942, %v932
    %v1064 = vadd.f32 %v942, %v933
    %v1065 = vadd.f32 %v942, %v934
    %v1066 = vadd.f32 %v942, %v935
    %v1067 = vadd.f32 %v942, %v936
    %v1068 = vadd.f32 %v942, %v937
    %v1069 = vadd.f32 %v942, %v938
    %v1070 = vadd.f32 %v942, %v939
    %v1071 = vadd.f32 %v942, %v940
    %1072 = vset.pattern.permute.xlu0 1
    %1073 = vperm.xlu0 %1072, %v42
    %v1074 = vpop.permute.xlu0 %1073
    %1076 = vset.pattern.permute.xlu0 1
    %1077 = vperm.xlu0 %1076, %v43
    %v1078 = vpop.permute.xlu0 %1077
    %1080 = vset.pattern.permute.xlu0 1
    %1081 = vperm.xlu0 %1080, %v44
    %v1082 = vpop.permute.xlu0 %1081
    %1084 = vset.pattern.permute.xlu0 1
    %1085 = vperm.xlu0 %1084, %v45
    %v1086 = vpop.permute.xlu0 %1085
    %1088 = vset.pattern.permute.xlu0 1
    %1089 = vperm.xlu0 %1088, %v46
    %v1090 = vpop.permute.xlu0 %1089
    %1092 = vset.pattern.permute.xlu0 1
    %1093 = vperm.xlu0 %1092, %v47
    %v1094 = vpop.permute.xlu0 %1093
    %1096 = vset.pattern.permute.xlu0 1
    %1097 = vperm.xlu0 %1096, %v48
    %v1098 = vpop.permute.xlu0 %1097
    %1100 = vset.pattern.permute.xlu0 1
    %1101 = vperm.xlu0 %1100, %v49
    %v1102 = vpop.permute.xlu0 %1101
    %1104 = vset.pattern.permute.xlu0 1
    %1105 = vperm.xlu0 %1104, %v50
    %v1106 = vpop.permute.xlu0 %1105
    %1108 = vset.pattern.permute.xlu0 1
    %1109 = vperm.xlu0 %1108, %v51
    %v1110 = vpop.permute.xlu0 %1109
    %1112 = vset.pattern.permute.xlu0 1
    %1113 = vperm.xlu0 %1112, %v52
    %v1114 = vpop.permute.xlu0 %1113
    %1116 = vset.pattern.permute.xlu0 1
    %1117 = vperm.xlu0 %1116, %v53
    %v1118 = vpop.permute.xlu0 %1117
    %1120 = vset.pattern.permute.xlu0 1
    %1121 = vperm.xlu0 %1120, %v54
    %v1122 = vpop.permute.xlu0 %1121
    %1124 = vset.pattern.permute.xlu0 1
    %1125 = vperm.xlu0 %1124, %v55
    %v1126 = vpop.permute.xlu0 %1125
    %1128 = vset.pattern.permute.xlu0 1
    %1129 = vperm.xlu0 %1128, %v56
    %v1130 = vpop.permute.xlu0 %1129
    %1132 = vset.pattern.permute.xlu0 1
    %1133 = vperm.xlu0 %1132, %v57
    %v1134 = vpop.permute.xlu0 %1133
    %1136 = vset.pattern.permute.xlu0 1
    %1137 = vperm.xlu0 %1136, %v58
    %v1138 = vpop.permute.xlu0 %1137
    %1140 = vset.pattern.permute.xlu0 1
    %1141 = vperm.xlu0 %1140, %v59
    %v1142 = vpop.permute.xlu0 %1141
    %1144 = vset.pattern.permute.xlu0 1
    %1145 = vperm.xlu0 %1144, %v60
    %v1146 = vpop.permute.xlu0 %1145
    %1148 = vset.pattern.permute.xlu0 1
    %1149 = vperm.xlu0 %1148, %v61
    %v1150 = vpop.permute.xlu0 %1149
    %1152 = vset.pattern.permute.xlu0 1
    %1153 = vperm.xlu0 %1152, %v62
    %v1154 = vpop.permute.xlu0 %1153
    %1156 = vset.pattern.permute.xlu0 1
    %1157 = vperm.xlu0 %1156, %v63
    %v1158 = vpop.permute.xlu0 %1157
    %1160 = vset.pattern.permute.xlu0 1
    %1161 = vperm.xlu0 %1160, %v64
    %v1162 = vpop.permute.xlu0 %1161
    %1164 = vset.pattern.permute.xlu0 1
    %1165 = vperm.xlu0 %1164, %v65
    %v1166 = vpop.permute.xlu0 %1165
    %1168 = vset.pattern.permute.xlu0 1
    %1169 = vperm.xlu0 %1168, %v66
    %v1170 = vpop.permute.xlu0 %1169
    %1172 = vset.pattern.permute.xlu0 1
    %1173 = vperm.xlu0 %1172, %v67
    %v1174 = vpop.permute.xlu0 %1173
    %1176 = vset.pattern.permute.xlu0 1
    %1177 = vperm.xlu0 %1176, %v68
    %v1178 = vpop.permute.xlu0 %1177
    %1180 = vset.pattern.permute.xlu0 1
    %1181 = vperm.xlu0 %1180, %v69
    %v1182 = vpop.permute.xlu0 %1181
    %1184 = vset.pattern.permute.xlu0 1
    %1185 = vperm.xlu0 %1184, %v70
    %v1186 = vpop.permute.xlu0 %1185
    %1188 = vset.pattern.permute.xlu0 1
    %1189 = vperm.xlu0 %1188, %v71
    %v1190 = vpop.permute.xlu0 %1189
    %1192 = vset.pattern.permute.xlu0 1
    %1193 = vperm.xlu0 %1192, %v72
    %v1194 = vpop.permute.xlu0 %1193
    %1196 = vset.pattern.permute.xlu0 1
    %1197 = vperm.xlu0 %1196, %v73
    %v1198 = vpop.permute.xlu0 %1197
    %1200 = vset.pattern.permute.xlu0 1
    %1201 = vperm.xlu0 %1200, %v74
    %v1202 = vpop.permute.xlu0 %1201
    %1204 = vset.pattern.permute.xlu0 1
    %1205 = vperm.xlu0 %1204, %v75
    %v1206 = vpop.permute.xlu0 %1205
    %1208 = vset.pattern.permute.xlu0 1
    %1209 = vperm.xlu0 %1208, %v76
    %v1210 = vpop.permute.xlu0 %1209
    %1212 = vset.pattern.permute.xlu0 1
    %1213 = vperm.xlu0 %1212, %v77
    %v1214 = vpop.permute.xlu0 %1213
    %1216 = vset.pattern.permute.xlu0 1
    %1217 = vperm.xlu0 %1216, %v78
    %v1218 = vpop.permute.xlu0 %1217
    %1220 = vset.pattern.permute.xlu0 1
    %1221 = vperm.xlu0 %1220, %v79
    %v1222 = vpop.permute.xlu0 %1221
    %1224 = vset.pattern.permute.xlu0 1
    %1225 = vperm.xlu0 %1224, %v80
    %v1226 = vpop.permute.xlu0 %1225
    %1228 = vset.pattern.permute.xlu0 1
    %1229 = vperm.xlu0 %1228, %v81
    %v1230 = vpop.permute.xlu0 %1229
    %1232 = vset.pattern.permute.xlu0 1
    %1233 = vperm.xlu0 %1232, %v82
    %v1234 = vpop.permute.xlu0 %1233
    %1236 = vset.pattern.permute.xlu0 1
    %1237 = vperm.xlu0 %1236, %v83
    %v1238 = vpop.permute.xlu0 %1237
    %1240 = vset.pattern.permute.xlu0 1
    %1241 = vperm.xlu0 %1240, %v84
    %v1242 = vpop.permute.xlu0 %1241
    %1244 = vset.pattern.permute.xlu0 1
    %1245 = vperm.xlu0 %1244, %v85
    %v1246 = vpop.permute.xlu0 %1245
    %1248 = vset.pattern.permute.xlu0 1
    %1249 = vperm.xlu0 %1248, %v86
    %v1250 = vpop.permute.xlu0 %1249
    %1252 = vset.pattern.permute.xlu0 1
    %1253 = vperm.xlu0 %1252, %v87
    %v1254 = vpop.permute.xlu0 %1253
    %1256 = vset.pattern.permute.xlu0 1
    %1257 = vperm.xlu0 %1256, %v88
    %v1258 = vpop.permute.xlu0 %1257
    %1260 = vset.pattern.permute.xlu0 1
    %1261 = vperm.xlu0 %1260, %v89
    %v1262 = vpop.permute.xlu0 %1261
    %1264 = vset.pattern.permute.xlu0 1
    %1265 = vperm.xlu0 %1264, %v90
    %v1266 = vpop.permute.xlu0 %1265
    %1268 = vset.pattern.permute.xlu0 1
    %1269 = vperm.xlu0 %1268, %v91
    %v1270 = vpop.permute.xlu0 %1269
    %1272 = vset.pattern.permute.xlu0 1
    %1273 = vperm.xlu0 %1272, %v92
    %v1274 = vpop.permute.xlu0 %1273
    %1276 = vset.pattern.permute.xlu0 1
    %1277 = vperm.xlu0 %1276, %v93
    %v1278 = vpop.permute.xlu0 %1277
    %1280 = vset.pattern.permute.xlu0 1
    %1281 = vperm.xlu0 %1280, %v94
    %v1282 = vpop.permute.xlu0 %1281
    %1284 = vset.pattern.permute.xlu0 1
    %1285 = vperm.xlu0 %1284, %v95
    %v1286 = vpop.permute.xlu0 %1285
    %1288 = vset.pattern.permute.xlu0 1
    %1289 = vperm.xlu0 %1288, %v96
    %v1290 = vpop.permute.xlu0 %1289
    %1292 = vset.pattern.permute.xlu0 1
    %1293 = vperm.xlu0 %1292, %v97
    %v1294 = vpop.permute.xlu0 %1293
    %1296 = vset.pattern.permute.xlu0 1
    %1297 = vperm.xlu0 %1296, %v98
    %v1298 = vpop.permute.xlu0 %1297
    %1300 = vset.pattern.permute.xlu0 1
    %1301 = vperm.xlu0 %1300, %v99
    %v1302 = vpop.permute.xlu0 %1301
    %1304 = vset.pattern.permute.xlu0 1
    %1305 = vperm.xlu0 %1304, %v100
    %v1306 = vpop.permute.xlu0 %1305
    %1308 = vset.pattern.permute.xlu0 1
    %1309 = vperm.xlu0 %1308, %v101
    %v1310 = vpop.permute.xlu0 %1309
    %1312 = vset.pattern.permute.xlu0 1
    %1313 = vperm.xlu0 %1312, %v102
    %v1314 = vpop.permute.xlu0 %1313
    %1316 = vset.pattern.permute.xlu0 1
    %1317 = vperm.xlu0 %1316, %v103
    %v1318 = vpop.permute.xlu0 %1317
    %1320 = vset.pattern.permute.xlu0 1
    %1321 = vperm.xlu0 %1320, %v104
    %v1322 = vpop.permute.xlu0 %1321
    %1324 = vset.pattern.permute.xlu0 1
    %1325 = vperm.xlu0 %1324, %v105
    %v1326 = vpop.permute.xlu0 %1325
    %1328 = vset.pattern.permute.xlu0 1
    %1329 = vperm.xlu0 %1328, %v106
    %v1330 = vpop.permute.xlu0 %1329
    %1332 = vset.pattern.permute.xlu0 1
    %1333 = vperm.xlu0 %1332, %v107
    %v1334 = vpop.permute.xlu0 %1333
    %1336 = vset.pattern.permute.xlu0 1
    %1337 = vperm.xlu0 %1336, %v108
    %v1338 = vpop.permute.xlu0 %1337
    %1340 = vset.pattern.permute.xlu0 1
    %1341 = vperm.xlu0 %1340, %v109
    %v1342 = vpop.permute.xlu0 %1341
    %1344 = vset.pattern.permute.xlu0 1
    %1345 = vperm.xlu0 %1344, %v110
    %v1346 = vpop.permute.xlu0 %1345
    %1348 = vset.pattern.permute.xlu0 1
    %1349 = vperm.xlu0 %1348, %v111
    %v1350 = vpop.permute.xlu0 %1349
    %1352 = vset.pattern.permute.xlu0 1
    %1353 = vperm.xlu0 %1352, %v112
    %v1354 = vpop.permute.xlu0 %1353
    %1356 = vset.pattern.permute.xlu0 1
    %1357 = vperm.xlu0 %1356, %v113
    %v1358 = vpop.permute.xlu0 %1357
    %1360 = vset.pattern.permute.xlu0 1
    %1361 = vperm.xlu0 %1360, %v114
    %v1362 = vpop.permute.xlu0 %1361
    %1364 = vset.pattern.permute.xlu0 1
    %1365 = vperm.xlu0 %1364, %v115
    %v1366 = vpop.permute.xlu0 %1365
    %1368 = vset.pattern.permute.xlu0 1
    %1369 = vperm.xlu0 %1368, %v116
    %v1370 = vpop.permute.xlu0 %1369
    %1372 = vset.pattern.permute.xlu0 1
    %1373 = vperm.xlu0 %1372, %v117
    %v1374 = vpop.permute.xlu0 %1373
    %1376 = vset.pattern.permute.xlu0 1
    %1377 = vperm.xlu0 %1376, %v118
    %v1378 = vpop.permute.xlu0 %1377
    %1380 = vset.pattern.permute.xlu0 1
    %1381 = vperm.xlu0 %1380, %v119
    %v1382 = vpop.permute.xlu0 %1381
    %1384 = vset.pattern.permute.xlu0 1
    %1385 = vperm.xlu0 %1384, %v120
    %v1386 = vpop.permute.xlu0 %1385
    %1388 = vset.pattern.permute.xlu0 1
    %1389 = vperm.xlu0 %1388, %v121
    %v1390 = vpop.permute.xlu0 %1389
    %1392 = vset.pattern.permute.xlu0 1
    %1393 = vperm.xlu0 %1392, %v122
    %v1394 = vpop.permute.xlu0 %1393
    %1396 = vset.pattern.permute.xlu0 1
    %1397 = vperm.xlu0 %1396, %v123
    %v1398 = vpop.permute.xlu0 %1397
    %1400 = vset.pattern.permute.xlu0 1
    %1401 = vperm.xlu0 %1400, %v124
    %v1402 = vpop.permute.xlu0 %1401
    %1404 = vset.pattern.permute.xlu0 1
    %1405 = vperm.xlu0 %1404, %v125
    %v1406 = vpop.permute.xlu0 %1405
    %1408 = vset.pattern.permute.xlu0 1
    %1409 = vperm.xlu0 %1408, %v126
    %v1410 = vpop.permute.xlu0 %1409
    %1412 = vset.pattern.permute.xlu0 1
    %1413 = vperm.xlu0 %1412, %v127
    %v1414 = vpop.permute.xlu0 %1413
    %1416 = vset.pattern.permute.xlu0 1
    %1417 = vperm.xlu0 %1416, %v128
    %v1418 = vpop.permute.xlu0 %1417
    %1420 = vset.pattern.permute.xlu0 1
    %1421 = vperm.xlu0 %1420, %v129
    %v1422 = vpop.permute.xlu0 %1421
    %1424 = vset.pattern.permute.xlu0 1
    %1425 = vperm.xlu0 %1424, %v130
    %v1426 = vpop.permute.xlu0 %1425
    %1428 = vset.pattern.permute.xlu0 1
    %1429 = vperm.xlu0 %1428, %v131
    %v1430 = vpop.permute.xlu0 %1429
    %1432 = vset.pattern.permute.xlu0 1
    %1433 = vperm.xlu0 %1432, %v132
    %v1434 = vpop.permute.xlu0 %1433
    %1436 = vset.pattern.permute.xlu0 1
    %1437 = vperm.xlu0 %1436, %v133
    %v1438 = vpop.permute.xlu0 %1437
    %1440 = vset.pattern.permute.xlu0 1
    %1441 = vperm.xlu0 %1440, %v134
    %v1442 = vpop.permute.xlu0 %1441
    %1444 = vset.pattern.permute.xlu0 1
    %1445 = vperm.xlu0 %1444, %v135
    %v1446 = vpop.permute.xlu0 %1445
    %1448 = vset.pattern.permute.xlu0 1
    %1449 = vperm.xlu0 %1448, %v136
    %v1450 = vpop.permute.xlu0 %1449
    %1452 = vset.pattern.permute.xlu0 1
    %1453 = vperm.xlu0 %1452, %v137
    %v1454 = vpop.permute.xlu0 %1453
    %1456 = vset.pattern.permute.xlu0 1
    %1457 = vperm.xlu0 %1456, %v138
    %v1458 = vpop.permute.xlu0 %1457
    %1460 = vset.pattern.permute.xlu0 1
    %1461 = vperm.xlu0 %1460, %v139
    %v1462 = vpop.permute.xlu0 %1461
    %1464 = vset.pattern.permute.xlu0 1
    %1465 = vperm.xlu0 %1464, %v140
    %v1466 = vpop.permute.xlu0 %1465
    %1468 = vset.pattern.permute.xlu0 1
    %1469 = vperm.xlu0 %1468, %v141
    %v1470 = vpop.permute.xlu0 %1469
    %1472 = vset.pattern.permute.xlu0 1
    %1473 = vperm.xlu0 %1472, %v142
    %v1474 = vpop.permute.xlu0 %1473
    %1476 = vset.pattern.permute.xlu0 1
    %1477 = vperm.xlu0 %1476, %v143
    %v1478 = vpop.permute.xlu0 %1477
    %1480 = vset.pattern.permute.xlu0 1
    %1481 = vperm.xlu0 %1480, %v144
    %v1482 = vpop.permute.xlu0 %1481
    %1484 = vset.pattern.permute.xlu0 1
    %1485 = vperm.xlu0 %1484, %v145
    %v1486 = vpop.permute.xlu0 %1485
    %1488 = vset.pattern.permute.xlu0 1
    %1489 = vperm.xlu0 %1488, %v146
    %v1490 = vpop.permute.xlu0 %1489
    %1492 = vset.pattern.permute.xlu0 1
    %1493 = vperm.xlu0 %1492, %v147
    %v1494 = vpop.permute.xlu0 %1493
    %1496 = vset.pattern.permute.xlu0 1
    %1497 = vperm.xlu0 %1496, %v148
    %v1498 = vpop.permute.xlu0 %1497
    %1500 = vset.pattern.permute.xlu0 1
    %1501 = vperm.xlu0 %1500, %v149
    %v1502 = vpop.permute.xlu0 %1501
    %1504 = vset.pattern.permute.xlu0 1
    %1505 = vperm.xlu0 %1504, %v150
    %v1506 = vpop.permute.xlu0 %1505
    %1508 = vset.pattern.permute.xlu0 1
    %1509 = vperm.xlu0 %1508, %v151
    %v1510 = vpop.permute.xlu0 %1509
    %1512 = vset.pattern.permute.xlu0 1
    %1513 = vperm.xlu0 %1512, %v152
    %v1514 = vpop.permute.xlu0 %1513
    %1516 = vset.pattern.permute.xlu0 1
    %1517 = vperm.xlu0 %1516, %v153
    %v1518 = vpop.permute.xlu0 %1517
    %1520 = vset.pattern.permute.xlu0 1
    %1521 = vperm.xlu0 %1520, %v154
    %v1522 = vpop.permute.xlu0 %1521
    %1524 = vset.pattern.permute.xlu0 1
    %1525 = vperm.xlu0 %1524, %v155
    %v1526 = vpop.permute.xlu0 %1525
    %1528 = vset.pattern.permute.xlu0 1
    %1529 = vperm.xlu0 %1528, %v156
    %v1530 = vpop.permute.xlu0 %1529
    %1532 = vset.pattern.permute.xlu0 1
    %1533 = vperm.xlu0 %1532, %v157
    %v1534 = vpop.permute.xlu0 %1533
    %1536 = vset.pattern.permute.xlu0 1
    %1537 = vperm.xlu0 %1536, %v158
    %v1538 = vpop.permute.xlu0 %1537
    %1540 = vset.pattern.permute.xlu0 1
    %1541 = vperm.xlu0 %1540, %v159
    %v1542 = vpop.permute.xlu0 %1541
    %1544 = vset.pattern.permute.xlu0 1
    %1545 = vperm.xlu0 %1544, %v160
    %v1546 = vpop.permute.xlu0 %1545
    %1548 = vset.pattern.permute.xlu0 1
    %1549 = vperm.xlu0 %1548, %v161
    %v1550 = vpop.permute.xlu0 %1549
    %1552 = vset.pattern.permute.xlu0 1
    %1553 = vperm.xlu0 %1552, %v162
    %v1554 = vpop.permute.xlu0 %1553
    %1556 = vset.pattern.permute.xlu0 1
    %1557 = vperm.xlu0 %1556, %v163
    %v1558 = vpop.permute.xlu0 %1557
    %1560 = vset.pattern.permute.xlu0 1
    %1561 = vperm.xlu0 %1560, %v164
    %v1562 = vpop.permute.xlu0 %1561
    %1564 = vset.pattern.permute.xlu0 1
    %1565 = vperm.xlu0 %1564, %v165
    %v1566 = vpop.permute.xlu0 %1565
    %1568 = vset.pattern.permute.xlu0 1
    %1569 = vperm.xlu0 %1568, %v166
    %v1570 = vpop.permute.xlu0 %1569
    %1572 = vset.pattern.permute.xlu0 1
    %1573 = vperm.xlu0 %1572, %v167
    %v1574 = vpop.permute.xlu0 %1573
    %1576 = vset.pattern.permute.xlu0 1
    %1577 = vperm.xlu0 %1576, %v168
    %v1578 = vpop.permute.xlu0 %1577
    %1580 = vset.pattern.permute.xlu0 1
    %1581 = vperm.xlu0 %1580, %v169
    %v1582 = vpop.permute.xlu0 %1581
    %v1584 = vperm.slane %v170, 1
    %v1585 = vmul.f32 %v1074, %v1584
    %v1586 = vmul.f32 %v1078, %v1584
    %v1587 = vmul.f32 %v1082, %v1584
    %v1588 = vmul.f32 %v1086, %v1584
    %v1589 = vmul.f32 %v1090, %v1584
    %v1590 = vmul.f32 %v1094, %v1584
    %v1591 = vmul.f32 %v1098, %v1584
    %v1592 = vmul.f32 %v1102, %v1584
    %v1593 = vmul.f32 %v1106, %v1584
    %v1594 = vmul.f32 %v1110, %v1584
    %v1595 = vmul.f32 %v1114, %v1584
    %v1596 = vmul.f32 %v1118, %v1584
    %v1597 = vmul.f32 %v1122, %v1584
    %v1598 = vmul.f32 %v1126, %v1584
    %v1599 = vmul.f32 %v1130, %v1584
    %v1600 = vmul.f32 %v1134, %v1584
    %v1601 = vmul.f32 %v1138, %v1584
    %v1602 = vmul.f32 %v1142, %v1584
    %v1603 = vmul.f32 %v1146, %v1584
    %v1604 = vmul.f32 %v1150, %v1584
    %v1605 = vmul.f32 %v1154, %v1584
    %v1606 = vmul.f32 %v1158, %v1584
    %v1607 = vmul.f32 %v1162, %v1584
    %v1608 = vmul.f32 %v1166, %v1584
    %v1609 = vmul.f32 %v1170, %v1584
    %v1610 = vmul.f32 %v1174, %v1584
    %v1611 = vmul.f32 %v1178, %v1584
    %v1612 = vmul.f32 %v1182, %v1584
    %v1613 = vmul.f32 %v1186, %v1584
    %v1614 = vmul.f32 %v1190, %v1584
    %v1615 = vmul.f32 %v1194, %v1584
    %v1616 = vmul.f32 %v1198, %v1584
    %v1617 = vmul.f32 %v1202, %v1584
    %v1618 = vmul.f32 %v1206, %v1584
    %v1619 = vmul.f32 %v1210, %v1584
    %v1620 = vmul.f32 %v1214, %v1584
    %v1621 = vmul.f32 %v1218, %v1584
    %v1622 = vmul.f32 %v1222, %v1584
    %v1623 = vmul.f32 %v1226, %v1584
    %v1624 = vmul.f32 %v1230, %v1584
    %v1625 = vmul.f32 %v1234, %v1584
    %v1626 = vmul.f32 %v1238, %v1584
    %v1627 = vmul.f32 %v1242, %v1584
    %v1628 = vmul.f32 %v1246, %v1584
    %v1629 = vmul.f32 %v1250, %v1584
    %v1630 = vmul.f32 %v1254, %v1584
    %v1631 = vmul.f32 %v1258, %v1584
    %v1632 = vmul.f32 %v1262, %v1584
    %v1633 = vmul.f32 %v1266, %v1584
    %v1634 = vmul.f32 %v1270, %v1584
    %v1635 = vmul.f32 %v1274, %v1584
    %v1636 = vmul.f32 %v1278, %v1584
    %v1637 = vmul.f32 %v1282, %v1584
    %v1638 = vmul.f32 %v1286, %v1584
    %v1639 = vmul.f32 %v1290, %v1584
    %v1640 = vmul.f32 %v1294, %v1584
    %v1641 = vmul.f32 %v1298, %v1584
    %v1642 = vmul.f32 %v1302, %v1584
    %v1643 = vmul.f32 %v1306, %v1584
    %v1644 = vmul.f32 %v1310, %v1584
    %v1645 = vmul.f32 %v1314, %v1584
    %v1646 = vmul.f32 %v1318, %v1584
    %v1647 = vmul.f32 %v1322, %v1584
    %v1648 = vmul.f32 %v1326, %v1584
    %v1649 = vmul.f32 %v1330, %v1584
    %v1650 = vmul.f32 %v1334, %v1584
    %v1651 = vmul.f32 %v1338, %v1584
    %v1652 = vmul.f32 %v1342, %v1584
    %v1653 = vmul.f32 %v1346, %v1584
    %v1654 = vmul.f32 %v1350, %v1584
    %v1655 = vmul.f32 %v1354, %v1584
    %v1656 = vmul.f32 %v1358, %v1584
    %v1657 = vmul.f32 %v1362, %v1584
    %v1658 = vmul.f32 %v1366, %v1584
    %v1659 = vmul.f32 %v1370, %v1584
    %v1660 = vmul.f32 %v1374, %v1584
    %v1661 = vmul.f32 %v1378, %v1584
    %v1662 = vmul.f32 %v1382, %v1584
    %v1663 = vmul.f32 %v1386, %v1584
    %v1664 = vmul.f32 %v1390, %v1584
    %v1665 = vmul.f32 %v1394, %v1584
    %v1666 = vmul.f32 %v1398, %v1584
    %v1667 = vmul.f32 %v1402, %v1584
    %v1668 = vmul.f32 %v1406, %v1584
    %v1669 = vmul.f32 %v1410, %v1584
    %v1670 = vmul.f32 %v1414, %v1584
    %v1671 = vmul.f32 %v1418, %v1584
    %v1672 = vmul.f32 %v1422, %v1584
    %v1673 = vmul.f32 %v1426, %v1584
    %v1674 = vmul.f32 %v1430, %v1584
    %v1675 = vmul.f32 %v1434, %v1584
    %v1676 = vmul.f32 %v1438, %v1584
    %v1677 = vmul.f32 %v1442, %v1584
    %v1678 = vmul.f32 %v1446, %v1584
    %v1679 = vmul.f32 %v1450, %v1584
    %v1680 = vmul.f32 %v1454, %v1584
    %v1681 = vmul.f32 %v1458, %v1584
    %v1682 = vmul.f32 %v1462, %v1584
    %v1683 = vmul.f32 %v1466, %v1584
    %v1684 = vmul.f32 %v1470, %v1584
    %v1685 = vmul.f32 %v1474, %v1584
    %v1686 = vmul.f32 %v1478, %v1584
    %v1687 = vmul.f32 %v1482, %v1584
    %v1688 = vmul.f32 %v1486, %v1584
    %v1689 = vmul.f32 %v1490, %v1584
    %v1690 = vmul.f32 %v1494, %v1584
    %v1691 = vmul.f32 %v1498, %v1584
    %v1692 = vmul.f32 %v1502, %v1584
    %v1693 = vmul.f32 %v1506, %v1584
    %v1694 = vmul.f32 %v1510, %v1584
    %v1695 = vmul.f32 %v1514, %v1584
    %v1696 = vmul.f32 %v1518, %v1584
    %v1697 = vmul.f32 %v1522, %v1584
    %v1698 = vmul.f32 %v1526, %v1584
    %v1699 = vmul.f32 %v1530, %v1584
    %v1700 = vmul.f32 %v1534, %v1584
    %v1701 = vmul.f32 %v1538, %v1584
    %v1702 = vmul.f32 %v1542, %v1584
    %v1703 = vmul.f32 %v1546, %v1584
    %v1704 = vmul.f32 %v1550, %v1584
    %v1705 = vmul.f32 %v1554, %v1584
    %v1706 = vmul.f32 %v1558, %v1584
    %v1707 = vmul.f32 %v1562, %v1584
    %v1708 = vmul.f32 %v1566, %v1584
    %v1709 = vmul.f32 %v1570, %v1584
    %v1710 = vmul.f32 %v1574, %v1584
    %v1711 = vmul.f32 %v1578, %v1584
    %v1712 = vmul.f32 %v1582, %v1584
    %v1713 = vadd.f32 %v944, %v1585
    %v1714 = vadd.f32 %v945, %v1586
    %v1715 = vadd.f32 %v946, %v1587
    %v1716 = vadd.f32 %v947, %v1588
    %v1717 = vadd.f32 %v948, %v1589
    %v1718 = vadd.f32 %v949, %v1590
    %v1719 = vadd.f32 %v950, %v1591
    %v1720 = vadd.f32 %v951, %v1592
    %v1721 = vadd.f32 %v952, %v1593
    %v1722 = vadd.f32 %v953, %v1594
    %v1723 = vadd.f32 %v954, %v1595
    %v1724 = vadd.f32 %v955, %v1596
    %v1725 = vadd.f32 %v956, %v1597
    %v1726 = vadd.f32 %v957, %v1598
    %v1727 = vadd.f32 %v958, %v1599
    %v1728 = vadd.f32 %v959, %v1600
    %v1729 = vadd.f32 %v960, %v1601
    %v1730 = vadd.f32 %v961, %v1602
    %v1731 = vadd.f32 %v962, %v1603
    %v1732 = vadd.f32 %v963, %v1604
    %v1733 = vadd.f32 %v964, %v1605
    %v1734 = vadd.f32 %v965, %v1606
    %v1735 = vadd.f32 %v966, %v1607
    %v1736 = vadd.f32 %v967, %v1608
    %v1737 = vadd.f32 %v968, %v1609
    %v1738 = vadd.f32 %v969, %v1610
    %v1739 = vadd.f32 %v970, %v1611
    %v1740 = vadd.f32 %v971, %v1612
    %v1741 = vadd.f32 %v972, %v1613
    %v1742 = vadd.f32 %v973, %v1614
    %v1743 = vadd.f32 %v974, %v1615
    %v1744 = vadd.f32 %v975, %v1616
    %v1745 = vadd.f32 %v976, %v1617
    %v1746 = vadd.f32 %v977, %v1618
    %v1747 = vadd.f32 %v978, %v1619
    %v1748 = vadd.f32 %v979, %v1620
    %v1749 = vadd.f32 %v980, %v1621
    %v1750 = vadd.f32 %v981, %v1622
    %v1751 = vadd.f32 %v982, %v1623
    %v1752 = vadd.f32 %v983, %v1624
    %v1753 = vadd.f32 %v984, %v1625
    %v1754 = vadd.f32 %v985, %v1626
    %v1755 = vadd.f32 %v986, %v1627
    %v1756 = vadd.f32 %v987, %v1628
    %v1757 = vadd.f32 %v988, %v1629
    %v1758 = vadd.f32 %v989, %v1630
    %v1759 = vadd.f32 %v990, %v1631
    %v1760 = vadd.f32 %v991, %v1632
    %v1761 = vadd.f32 %v992, %v1633
    %v1762 = vadd.f32 %v993, %v1634
    %v1763 = vadd.f32 %v994, %v1635
    %v1764 = vadd.f32 %v995, %v1636
    %v1765 = vadd.f32 %v996, %v1637
    %v1766 = vadd.f32 %v997, %v1638
    %v1767 = vadd.f32 %v998, %v1639
    %v1768 = vadd.f32 %v999, %v1640
    %v1769 = vadd.f32 %v1000, %v1641
    %v1770 = vadd.f32 %v1001, %v1642
    %v1771 = vadd.f32 %v1002, %v1643
    %v1772 = vadd.f32 %v1003, %v1644
    %v1773 = vadd.f32 %v1004, %v1645
    %v1774 = vadd.f32 %v1005, %v1646
    %v1775 = vadd.f32 %v1006, %v1647
    %v1776 = vadd.f32 %v1007, %v1648
    %v1777 = vadd.f32 %v1008, %v1649
    %v1778 = vadd.f32 %v1009, %v1650
    %v1779 = vadd.f32 %v1010, %v1651
    %v1780 = vadd.f32 %v1011, %v1652
    %v1781 = vadd.f32 %v1012, %v1653
    %v1782 = vadd.f32 %v1013, %v1654
    %v1783 = vadd.f32 %v1014, %v1655
    %v1784 = vadd.f32 %v1015, %v1656
    %v1785 = vadd.f32 %v1016, %v1657
    %v1786 = vadd.f32 %v1017, %v1658
    %v1787 = vadd.f32 %v1018, %v1659
    %v1788 = vadd.f32 %v1019, %v1660
    %v1789 = vadd.f32 %v1020, %v1661
    %v1790 = vadd.f32 %v1021, %v1662
    %v1791 = vadd.f32 %v1022, %v1663
    %v1792 = vadd.f32 %v1023, %v1664
    %v1793 = vadd.f32 %v1024, %v1665
    %v1794 = vadd.f32 %v1025, %v1666
    %v1795 = vadd.f32 %v1026, %v1667
    %v1796 = vadd.f32 %v1027, %v1668
    %v1797 = vadd.f32 %v1028, %v1669
    %v1798 = vadd.f32 %v1029, %v1670
    %v1799 = vadd.f32 %v1030, %v1671
    %v1800 = vadd.f32 %v1031, %v1672
    %v1801 = vadd.f32 %v1032, %v1673
    %v1802 = vadd.f32 %v1033, %v1674
    %v1803 = vadd.f32 %v1034, %v1675
    %v1804 = vadd.f32 %v1035, %v1676
    %v1805 = vadd.f32 %v1036, %v1677
    %v1806 = vadd.f32 %v1037, %v1678
    %v1807 = vadd.f32 %v1038, %v1679
    %v1808 = vadd.f32 %v1039, %v1680
    %v1809 = vadd.f32 %v1040, %v1681
    %v1810 = vadd.f32 %v1041, %v1682
    %v1811 = vadd.f32 %v1042, %v1683
    %v1812 = vadd.f32 %v1043, %v1684
    %v1813 = vadd.f32 %v1044, %v1685
    %v1814 = vadd.f32 %v1045, %v1686
    %v1815 = vadd.f32 %v1046, %v1687
    %v1816 = vadd.f32 %v1047, %v1688
    %v1817 = vadd.f32 %v1048, %v1689
    %v1818 = vadd.f32 %v1049, %v1690
    %v1819 = vadd.f32 %v1050, %v1691
    %v1820 = vadd.f32 %v1051, %v1692
    %v1821 = vadd.f32 %v1052, %v1693
    %v1822 = vadd.f32 %v1053, %v1694
    %v1823 = vadd.f32 %v1054, %v1695
    %v1824 = vadd.f32 %v1055, %v1696
    %v1825 = vadd.f32 %v1056, %v1697
    %v1826 = vadd.f32 %v1057, %v1698
    %v1827 = vadd.f32 %v1058, %v1699
    %v1828 = vadd.f32 %v1059, %v1700
    %v1829 = vadd.f32 %v1060, %v1701
    %v1830 = vadd.f32 %v1061, %v1702
    %v1831 = vadd.f32 %v1062, %v1703
    %v1832 = vadd.f32 %v1063, %v1704
    %v1833 = vadd.f32 %v1064, %v1705
    %v1834 = vadd.f32 %v1065, %v1706
    %v1835 = vadd.f32 %v1066, %v1707
    %v1836 = vadd.f32 %v1067, %v1708
    %v1837 = vadd.f32 %v1068, %v1709
    %v1838 = vadd.f32 %v1069, %v1710
    %v1839 = vadd.f32 %v1070, %v1711
    %v1840 = vadd.f32 %v1071, %v1712
    %1841 = vset.pattern.permute.xlu0 2
    %1842 = vperm.xlu0 %1841, %v42
    %v1843 = vpop.permute.xlu0 %1842
    %1845 = vset.pattern.permute.xlu0 2
    %1846 = vperm.xlu0 %1845, %v43
    %v1847 = vpop.permute.xlu0 %1846
    %1849 = vset.pattern.permute.xlu0 2
    %1850 = vperm.xlu0 %1849, %v44
    %v1851 = vpop.permute.xlu0 %1850
    %1853 = vset.pattern.permute.xlu0 2
    %1854 = vperm.xlu0 %1853, %v45
    %v1855 = vpop.permute.xlu0 %1854
    %1857 = vset.pattern.permute.xlu0 2
    %1858 = vperm.xlu0 %1857, %v46
    %v1859 = vpop.permute.xlu0 %1858
    %1861 = vset.pattern.permute.xlu0 2
    %1862 = vperm.xlu0 %1861, %v47
    %v1863 = vpop.permute.xlu0 %1862
    %1865 = vset.pattern.permute.xlu0 2
    %1866 = vperm.xlu0 %1865, %v48
    %v1867 = vpop.permute.xlu0 %1866
    %1869 = vset.pattern.permute.xlu0 2
    %1870 = vperm.xlu0 %1869, %v49
    %v1871 = vpop.permute.xlu0 %1870
    %1873 = vset.pattern.permute.xlu0 2
    %1874 = vperm.xlu0 %1873, %v50
    %v1875 = vpop.permute.xlu0 %1874
    %1877 = vset.pattern.permute.xlu0 2
    %1878 = vperm.xlu0 %1877, %v51
    %v1879 = vpop.permute.xlu0 %1878
    %1881 = vset.pattern.permute.xlu0 2
    %1882 = vperm.xlu0 %1881, %v52
    %v1883 = vpop.permute.xlu0 %1882
    %1885 = vset.pattern.permute.xlu0 2
    %1886 = vperm.xlu0 %1885, %v53
    %v1887 = vpop.permute.xlu0 %1886
    %1889 = vset.pattern.permute.xlu0 2
    %1890 = vperm.xlu0 %1889, %v54
    %v1891 = vpop.permute.xlu0 %1890
    %1893 = vset.pattern.permute.xlu0 2
    %1894 = vperm.xlu0 %1893, %v55
    %v1895 = vpop.permute.xlu0 %1894
    %1897 = vset.pattern.permute.xlu0 2
    %1898 = vperm.xlu0 %1897, %v56
    %v1899 = vpop.permute.xlu0 %1898
    %1901 = vset.pattern.permute.xlu0 2
    %1902 = vperm.xlu0 %1901, %v57
    %v1903 = vpop.permute.xlu0 %1902
    %1905 = vset.pattern.permute.xlu0 2
    %1906 = vperm.xlu0 %1905, %v58
    %v1907 = vpop.permute.xlu0 %1906
    %1909 = vset.pattern.permute.xlu0 2
    %1910 = vperm.xlu0 %1909, %v59
    %v1911 = vpop.permute.xlu0 %1910
    %1913 = vset.pattern.permute.xlu0 2
    %1914 = vperm.xlu0 %1913, %v60
    %v1915 = vpop.permute.xlu0 %1914
    %1917 = vset.pattern.permute.xlu0 2
    %1918 = vperm.xlu0 %1917, %v61
    %v1919 = vpop.permute.xlu0 %1918
    %1921 = vset.pattern.permute.xlu0 2
    %1922 = vperm.xlu0 %1921, %v62
    %v1923 = vpop.permute.xlu0 %1922
    %1925 = vset.pattern.permute.xlu0 2
    %1926 = vperm.xlu0 %1925, %v63
    %v1927 = vpop.permute.xlu0 %1926
    %1929 = vset.pattern.permute.xlu0 2
    %1930 = vperm.xlu0 %1929, %v64
    %v1931 = vpop.permute.xlu0 %1930
    %1933 = vset.pattern.permute.xlu0 2
    %1934 = vperm.xlu0 %1933, %v65
    %v1935 = vpop.permute.xlu0 %1934
    %1937 = vset.pattern.permute.xlu0 2
    %1938 = vperm.xlu0 %1937, %v66
    %v1939 = vpop.permute.xlu0 %1938
    %1941 = vset.pattern.permute.xlu0 2
    %1942 = vperm.xlu0 %1941, %v67
    %v1943 = vpop.permute.xlu0 %1942
    %1945 = vset.pattern.permute.xlu0 2
    %1946 = vperm.xlu0 %1945, %v68
    %v1947 = vpop.permute.xlu0 %1946
    %1949 = vset.pattern.permute.xlu0 2
    %1950 = vperm.xlu0 %1949, %v69
    %v1951 = vpop.permute.xlu0 %1950
    %1953 = vset.pattern.permute.xlu0 2
    %1954 = vperm.xlu0 %1953, %v70
    %v1955 = vpop.permute.xlu0 %1954
    %1957 = vset.pattern.permute.xlu0 2
    %1958 = vperm.xlu0 %1957, %v71
    %v1959 = vpop.permute.xlu0 %1958
    %1961 = vset.pattern.permute.xlu0 2
    %1962 = vperm.xlu0 %1961, %v72
    %v1963 = vpop.permute.xlu0 %1962
    %1965 = vset.pattern.permute.xlu0 2
    %1966 = vperm.xlu0 %1965, %v73
    %v1967 = vpop.permute.xlu0 %1966
    %1969 = vset.pattern.permute.xlu0 2
    %1970 = vperm.xlu0 %1969, %v74
    %v1971 = vpop.permute.xlu0 %1970
    %1973 = vset.pattern.permute.xlu0 2
    %1974 = vperm.xlu0 %1973, %v75
    %v1975 = vpop.permute.xlu0 %1974
    %1977 = vset.pattern.permute.xlu0 2
    %1978 = vperm.xlu0 %1977, %v76
    %v1979 = vpop.permute.xlu0 %1978
    %1981 = vset.pattern.permute.xlu0 2
    %1982 = vperm.xlu0 %1981, %v77
    %v1983 = vpop.permute.xlu0 %1982
    %1985 = vset.pattern.permute.xlu0 2
    %1986 = vperm.xlu0 %1985, %v78
    %v1987 = vpop.permute.xlu0 %1986
    %1989 = vset.pattern.permute.xlu0 2
    %1990 = vperm.xlu0 %1989, %v79
    %v1991 = vpop.permute.xlu0 %1990
    %1993 = vset.pattern.permute.xlu0 2
    %1994 = vperm.xlu0 %1993, %v80
    %v1995 = vpop.permute.xlu0 %1994
    %1997 = vset.pattern.permute.xlu0 2
    %1998 = vperm.xlu0 %1997, %v81
    %v1999 = vpop.permute.xlu0 %1998
    %2001 = vset.pattern.permute.xlu0 2
    %2002 = vperm.xlu0 %2001, %v82
    %v2003 = vpop.permute.xlu0 %2002
    %2005 = vset.pattern.permute.xlu0 2
    %2006 = vperm.xlu0 %2005, %v83
    %v2007 = vpop.permute.xlu0 %2006
    %2009 = vset.pattern.permute.xlu0 2
    %2010 = vperm.xlu0 %2009, %v84
    %v2011 = vpop.permute.xlu0 %2010
    %2013 = vset.pattern.permute.xlu0 2
    %2014 = vperm.xlu0 %2013, %v85
    %v2015 = vpop.permute.xlu0 %2014
    %2017 = vset.pattern.permute.xlu0 2
    %2018 = vperm.xlu0 %2017, %v86
    %v2019 = vpop.permute.xlu0 %2018
    %2021 = vset.pattern.permute.xlu0 2
    %2022 = vperm.xlu0 %2021, %v87
    %v2023 = vpop.permute.xlu0 %2022
    %2025 = vset.pattern.permute.xlu0 2
    %2026 = vperm.xlu0 %2025, %v88
    %v2027 = vpop.permute.xlu0 %2026
    %2029 = vset.pattern.permute.xlu0 2
    %2030 = vperm.xlu0 %2029, %v89
    %v2031 = vpop.permute.xlu0 %2030
    %2033 = vset.pattern.permute.xlu0 2
    %2034 = vperm.xlu0 %2033, %v90
    %v2035 = vpop.permute.xlu0 %2034
    %2037 = vset.pattern.permute.xlu0 2
    %2038 = vperm.xlu0 %2037, %v91
    %v2039 = vpop.permute.xlu0 %2038
    %2041 = vset.pattern.permute.xlu0 2
    %2042 = vperm.xlu0 %2041, %v92
    %v2043 = vpop.permute.xlu0 %2042
    %2045 = vset.pattern.permute.xlu0 2
    %2046 = vperm.xlu0 %2045, %v93
    %v2047 = vpop.permute.xlu0 %2046
    %2049 = vset.pattern.permute.xlu0 2
    %2050 = vperm.xlu0 %2049, %v94
    %v2051 = vpop.permute.xlu0 %2050
    %2053 = vset.pattern.permute.xlu0 2
    %2054 = vperm.xlu0 %2053, %v95
    %v2055 = vpop.permute.xlu0 %2054
    %2057 = vset.pattern.permute.xlu0 2
    %2058 = vperm.xlu0 %2057, %v96
    %v2059 = vpop.permute.xlu0 %2058
    %2061 = vset.pattern.permute.xlu0 2
    %2062 = vperm.xlu0 %2061, %v97
    %v2063 = vpop.permute.xlu0 %2062
    %2065 = vset.pattern.permute.xlu0 2
    %2066 = vperm.xlu0 %2065, %v98
    %v2067 = vpop.permute.xlu0 %2066
    %2069 = vset.pattern.permute.xlu0 2
    %2070 = vperm.xlu0 %2069, %v99
    %v2071 = vpop.permute.xlu0 %2070
    %2073 = vset.pattern.permute.xlu0 2
    %2074 = vperm.xlu0 %2073, %v100
    %v2075 = vpop.permute.xlu0 %2074
    %2077 = vset.pattern.permute.xlu0 2
    %2078 = vperm.xlu0 %2077, %v101
    %v2079 = vpop.permute.xlu0 %2078
    %2081 = vset.pattern.permute.xlu0 2
    %2082 = vperm.xlu0 %2081, %v102
    %v2083 = vpop.permute.xlu0 %2082
    %2085 = vset.pattern.permute.xlu0 2
    %2086 = vperm.xlu0 %2085, %v103
    %v2087 = vpop.permute.xlu0 %2086
    %2089 = vset.pattern.permute.xlu0 2
    %2090 = vperm.xlu0 %2089, %v104
    %v2091 = vpop.permute.xlu0 %2090
    %2093 = vset.pattern.permute.xlu0 2
    %2094 = vperm.xlu0 %2093, %v105
    %v2095 = vpop.permute.xlu0 %2094
    %2097 = vset.pattern.permute.xlu0 2
    %2098 = vperm.xlu0 %2097, %v106
    %v2099 = vpop.permute.xlu0 %2098
    %2101 = vset.pattern.permute.xlu0 2
    %2102 = vperm.xlu0 %2101, %v107
    %v2103 = vpop.permute.xlu0 %2102
    %2105 = vset.pattern.permute.xlu0 2
    %2106 = vperm.xlu0 %2105, %v108
    %v2107 = vpop.permute.xlu0 %2106
    %2109 = vset.pattern.permute.xlu0 2
    %2110 = vperm.xlu0 %2109, %v109
    %v2111 = vpop.permute.xlu0 %2110
    %2113 = vset.pattern.permute.xlu0 2
    %2114 = vperm.xlu0 %2113, %v110
    %v2115 = vpop.permute.xlu0 %2114
    %2117 = vset.pattern.permute.xlu0 2
    %2118 = vperm.xlu0 %2117, %v111
    %v2119 = vpop.permute.xlu0 %2118
    %2121 = vset.pattern.permute.xlu0 2
    %2122 = vperm.xlu0 %2121, %v112
    %v2123 = vpop.permute.xlu0 %2122
    %2125 = vset.pattern.permute.xlu0 2
    %2126 = vperm.xlu0 %2125, %v113
    %v2127 = vpop.permute.xlu0 %2126
    %2129 = vset.pattern.permute.xlu0 2
    %2130 = vperm.xlu0 %2129, %v114
    %v2131 = vpop.permute.xlu0 %2130
    %2133 = vset.pattern.permute.xlu0 2
    %2134 = vperm.xlu0 %2133, %v115
    %v2135 = vpop.permute.xlu0 %2134
    %2137 = vset.pattern.permute.xlu0 2
    %2138 = vperm.xlu0 %2137, %v116
    %v2139 = vpop.permute.xlu0 %2138
    %2141 = vset.pattern.permute.xlu0 2
    %2142 = vperm.xlu0 %2141, %v117
    %v2143 = vpop.permute.xlu0 %2142
    %2145 = vset.pattern.permute.xlu0 2
    %2146 = vperm.xlu0 %2145, %v118
    %v2147 = vpop.permute.xlu0 %2146
    %2149 = vset.pattern.permute.xlu0 2
    %2150 = vperm.xlu0 %2149, %v119
    %v2151 = vpop.permute.xlu0 %2150
    %2153 = vset.pattern.permute.xlu0 2
    %2154 = vperm.xlu0 %2153, %v120
    %v2155 = vpop.permute.xlu0 %2154
    %2157 = vset.pattern.permute.xlu0 2
    %2158 = vperm.xlu0 %2157, %v121
    %v2159 = vpop.permute.xlu0 %2158
    %2161 = vset.pattern.permute.xlu0 2
    %2162 = vperm.xlu0 %2161, %v122
    %v2163 = vpop.permute.xlu0 %2162
    %2165 = vset.pattern.permute.xlu0 2
    %2166 = vperm.xlu0 %2165, %v123
    %v2167 = vpop.permute.xlu0 %2166
    %2169 = vset.pattern.permute.xlu0 2
    %2170 = vperm.xlu0 %2169, %v124
    %v2171 = vpop.permute.xlu0 %2170
    %2173 = vset.pattern.permute.xlu0 2
    %2174 = vperm.xlu0 %2173, %v125
    %v2175 = vpop.permute.xlu0 %2174
    %2177 = vset.pattern.permute.xlu0 2
    %2178 = vperm.xlu0 %2177, %v126
    %v2179 = vpop.permute.xlu0 %2178
    %2181 = vset.pattern.permute.xlu0 2
    %2182 = vperm.xlu0 %2181, %v127
    %v2183 = vpop.permute.xlu0 %2182
    %2185 = vset.pattern.permute.xlu0 2
    %2186 = vperm.xlu0 %2185, %v128
    %v2187 = vpop.permute.xlu0 %2186
    %2189 = vset.pattern.permute.xlu0 2
    %2190 = vperm.xlu0 %2189, %v129
    %v2191 = vpop.permute.xlu0 %2190
    %2193 = vset.pattern.permute.xlu0 2
    %2194 = vperm.xlu0 %2193, %v130
    %v2195 = vpop.permute.xlu0 %2194
    %2197 = vset.pattern.permute.xlu0 2
    %2198 = vperm.xlu0 %2197, %v131
    %v2199 = vpop.permute.xlu0 %2198
    %2201 = vset.pattern.permute.xlu0 2
    %2202 = vperm.xlu0 %2201, %v132
    %v2203 = vpop.permute.xlu0 %2202
    %2205 = vset.pattern.permute.xlu0 2
    %2206 = vperm.xlu0 %2205, %v133
    %v2207 = vpop.permute.xlu0 %2206
    %2209 = vset.pattern.permute.xlu0 2
    %2210 = vperm.xlu0 %2209, %v134
    %v2211 = vpop.permute.xlu0 %2210
    %2213 = vset.pattern.permute.xlu0 2
    %2214 = vperm.xlu0 %2213, %v135
    %v2215 = vpop.permute.xlu0 %2214
    %2217 = vset.pattern.permute.xlu0 2
    %2218 = vperm.xlu0 %2217, %v136
    %v2219 = vpop.permute.xlu0 %2218
    %2221 = vset.pattern.permute.xlu0 2
    %2222 = vperm.xlu0 %2221, %v137
    %v2223 = vpop.permute.xlu0 %2222
    %2225 = vset.pattern.permute.xlu0 2
    %2226 = vperm.xlu0 %2225, %v138
    %v2227 = vpop.permute.xlu0 %2226
    %2229 = vset.pattern.permute.xlu0 2
    %2230 = vperm.xlu0 %2229, %v139
    %v2231 = vpop.permute.xlu0 %2230
    %2233 = vset.pattern.permute.xlu0 2
    %2234 = vperm.xlu0 %2233, %v140
    %v2235 = vpop.permute.xlu0 %2234
    %2237 = vset.pattern.permute.xlu0 2
    %2238 = vperm.xlu0 %2237, %v141
    %v2239 = vpop.permute.xlu0 %2238
    %2241 = vset.pattern.permute.xlu0 2
    %2242 = vperm.xlu0 %2241, %v142
    %v2243 = vpop.permute.xlu0 %2242
    %2245 = vset.pattern.permute.xlu0 2
    %2246 = vperm.xlu0 %2245, %v143
    %v2247 = vpop.permute.xlu0 %2246
    %2249 = vset.pattern.permute.xlu0 2
    %2250 = vperm.xlu0 %2249, %v144
    %v2251 = vpop.permute.xlu0 %2250
    %2253 = vset.pattern.permute.xlu0 2
    %2254 = vperm.xlu0 %2253, %v145
    %v2255 = vpop.permute.xlu0 %2254
    %2257 = vset.pattern.permute.xlu0 2
    %2258 = vperm.xlu0 %2257, %v146
    %v2259 = vpop.permute.xlu0 %2258
    %2261 = vset.pattern.permute.xlu0 2
    %2262 = vperm.xlu0 %2261, %v147
    %v2263 = vpop.permute.xlu0 %2262
    %2265 = vset.pattern.permute.xlu0 2
    %2266 = vperm.xlu0 %2265, %v148
    %v2267 = vpop.permute.xlu0 %2266
    %2269 = vset.pattern.permute.xlu0 2
    %2270 = vperm.xlu0 %2269, %v149
    %v2271 = vpop.permute.xlu0 %2270
    %2273 = vset.pattern.permute.xlu0 2
    %2274 = vperm.xlu0 %2273, %v150
    %v2275 = vpop.permute.xlu0 %2274
    %2277 = vset.pattern.permute.xlu0 2
    %2278 = vperm.xlu0 %2277, %v151
    %v2279 = vpop.permute.xlu0 %2278
    %2281 = vset.pattern.permute.xlu0 2
    %2282 = vperm.xlu0 %2281, %v152
    %v2283 = vpop.permute.xlu0 %2282
    %2285 = vset.pattern.permute.xlu0 2
    %2286 = vperm.xlu0 %2285, %v153
    %v2287 = vpop.permute.xlu0 %2286
    %2289 = vset.pattern.permute.xlu0 2
    %2290 = vperm.xlu0 %2289, %v154
    %v2291 = vpop.permute.xlu0 %2290
    %2293 = vset.pattern.permute.xlu0 2
    %2294 = vperm.xlu0 %2293, %v155
    %v2295 = vpop.permute.xlu0 %2294
    %2297 = vset.pattern.permute.xlu0 2
    %2298 = vperm.xlu0 %2297, %v156
    %v2299 = vpop.permute.xlu0 %2298
    %2301 = vset.pattern.permute.xlu0 2
    %2302 = vperm.xlu0 %2301, %v157
    %v2303 = vpop.permute.xlu0 %2302
    %2305 = vset.pattern.permute.xlu0 2
    %2306 = vperm.xlu0 %2305, %v158
    %v2307 = vpop.permute.xlu0 %2306
    %2309 = vset.pattern.permute.xlu0 2
    %2310 = vperm.xlu0 %2309, %v159
    %v2311 = vpop.permute.xlu0 %2310
    %2313 = vset.pattern.permute.xlu0 2
    %2314 = vperm.xlu0 %2313, %v160
    %v2315 = vpop.permute.xlu0 %2314
    %2317 = vset.pattern.permute.xlu0 2
    %2318 = vperm.xlu0 %2317, %v161
    %v2319 = vpop.permute.xlu0 %2318
    %2321 = vset.pattern.permute.xlu0 2
    %2322 = vperm.xlu0 %2321, %v162
    %v2323 = vpop.permute.xlu0 %2322
    %2325 = vset.pattern.permute.xlu0 2
    %2326 = vperm.xlu0 %2325, %v163
    %v2327 = vpop.permute.xlu0 %2326
    %2329 = vset.pattern.permute.xlu0 2
    %2330 = vperm.xlu0 %2329, %v164
    %v2331 = vpop.permute.xlu0 %2330
    %2333 = vset.pattern.permute.xlu0 2
    %2334 = vperm.xlu0 %2333, %v165
    %v2335 = vpop.permute.xlu0 %2334
    %2337 = vset.pattern.permute.xlu0 2
    %2338 = vperm.xlu0 %2337, %v166
    %v2339 = vpop.permute.xlu0 %2338
    %2341 = vset.pattern.permute.xlu0 2
    %2342 = vperm.xlu0 %2341, %v167
    %v2343 = vpop.permute.xlu0 %2342
    %2345 = vset.pattern.permute.xlu0 2
    %2346 = vperm.xlu0 %2345, %v168
    %v2347 = vpop.permute.xlu0 %2346
    %2349 = vset.pattern.permute.xlu0 2
    %2350 = vperm.xlu0 %2349, %v169
    %v2351 = vpop.permute.xlu0 %2350
    %v2353 = vperm.slane %v170, 2
    %v2354 = vmul.f32 %v1843, %v2353
    %v2355 = vmul.f32 %v1847, %v2353
    %v2356 = vmul.f32 %v1851, %v2353
    %v2357 = vmul.f32 %v1855, %v2353
    %v2358 = vmul.f32 %v1859, %v2353
    %v2359 = vmul.f32 %v1863, %v2353
    %v2360 = vmul.f32 %v1867, %v2353
    %v2361 = vmul.f32 %v1871, %v2353
    %v2362 = vmul.f32 %v1875, %v2353
    %v2363 = vmul.f32 %v1879, %v2353
    %v2364 = vmul.f32 %v1883, %v2353
    %v2365 = vmul.f32 %v1887, %v2353
    %v2366 = vmul.f32 %v1891, %v2353
    %v2367 = vmul.f32 %v1895, %v2353
    %v2368 = vmul.f32 %v1899, %v2353
    %v2369 = vmul.f32 %v1903, %v2353
    %v2370 = vmul.f32 %v1907, %v2353
    %v2371 = vmul.f32 %v1911, %v2353
    %v2372 = vmul.f32 %v1915, %v2353
    %v2373 = vmul.f32 %v1919, %v2353
    %v2374 = vmul.f32 %v1923, %v2353
    %v2375 = vmul.f32 %v1927, %v2353
    %v2376 = vmul.f32 %v1931, %v2353
    %v2377 = vmul.f32 %v1935, %v2353
    %v2378 = vmul.f32 %v1939, %v2353
    %v2379 = vmul.f32 %v1943, %v2353
    %v2380 = vmul.f32 %v1947, %v2353
    %v2381 = vmul.f32 %v1951, %v2353
    %v2382 = vmul.f32 %v1955, %v2353
    %v2383 = vmul.f32 %v1959, %v2353
    %v2384 = vmul.f32 %v1963, %v2353
    %v2385 = vmul.f32 %v1967, %v2353
    %v2386 = vmul.f32 %v1971, %v2353
    %v2387 = vmul.f32 %v1975, %v2353
    %v2388 = vmul.f32 %v1979, %v2353
    %v2389 = vmul.f32 %v1983, %v2353
    %v2390 = vmul.f32 %v1987, %v2353
    %v2391 = vmul.f32 %v1991, %v2353
    %v2392 = vmul.f32 %v1995, %v2353
    %v2393 = vmul.f32 %v1999, %v2353
    %v2394 = vmul.f32 %v2003, %v2353
    %v2395 = vmul.f32 %v2007, %v2353
    %v2396 = vmul.f32 %v2011, %v2353
    %v2397 = vmul.f32 %v2015, %v2353
    %v2398 = vmul.f32 %v2019, %v2353
    %v2399 = vmul.f32 %v2023, %v2353
    %v2400 = vmul.f32 %v2027, %v2353
    %v2401 = vmul.f32 %v2031, %v2353
    %v2402 = vmul.f32 %v2035, %v2353
    %v2403 = vmul.f32 %v2039, %v2353
    %v2404 = vmul.f32 %v2043, %v2353
    %v2405 = vmul.f32 %v2047, %v2353
    %v2406 = vmul.f32 %v2051, %v2353
    %v2407 = vmul.f32 %v2055, %v2353
    %v2408 = vmul.f32 %v2059, %v2353
    %v2409 = vmul.f32 %v2063, %v2353
    %v2410 = vmul.f32 %v2067, %v2353
    %v2411 = vmul.f32 %v2071, %v2353
    %v2412 = vmul.f32 %v2075, %v2353
    %v2413 = vmul.f32 %v2079, %v2353
    %v2414 = vmul.f32 %v2083, %v2353
    %v2415 = vmul.f32 %v2087, %v2353
    %v2416 = vmul.f32 %v2091, %v2353
    %v2417 = vmul.f32 %v2095, %v2353
    %v2418 = vmul.f32 %v2099, %v2353
    %v2419 = vmul.f32 %v2103, %v2353
    %v2420 = vmul.f32 %v2107, %v2353
    %v2421 = vmul.f32 %v2111, %v2353
    %v2422 = vmul.f32 %v2115, %v2353
    %v2423 = vmul.f32 %v2119, %v2353
    %v2424 = vmul.f32 %v2123, %v2353
    %v2425 = vmul.f32 %v2127, %v2353
    %v2426 = vmul.f32 %v2131, %v2353
    %v2427 = vmul.f32 %v2135, %v2353
    %v2428 = vmul.f32 %v2139, %v2353
    %v2429 = vmul.f32 %v2143, %v2353
    %v2430 = vmul.f32 %v2147, %v2353
    %v2431 = vmul.f32 %v2151, %v2353
    %v2432 = vmul.f32 %v2155, %v2353
    %v2433 = vmul.f32 %v2159, %v2353
    %v2434 = vmul.f32 %v2163, %v2353
    %v2435 = vmul.f32 %v2167, %v2353
    %v2436 = vmul.f32 %v2171, %v2353
    %v2437 = vmul.f32 %v2175, %v2353
    %v2438 = vmul.f32 %v2179, %v2353
    %v2439 = vmul.f32 %v2183, %v2353
    %v2440 = vmul.f32 %v2187, %v2353
    %v2441 = vmul.f32 %v2191, %v2353
    %v2442 = vmul.f32 %v2195, %v2353
    %v2443 = vmul.f32 %v2199, %v2353
    %v2444 = vmul.f32 %v2203, %v2353
    %v2445 = vmul.f32 %v2207, %v2353
    %v2446 = vmul.f32 %v2211, %v2353
    %v2447 = vmul.f32 %v2215, %v2353
    %v2448 = vmul.f32 %v2219, %v2353
    %v2449 = vmul.f32 %v2223, %v2353
    %v2450 = vmul.f32 %v2227, %v2353
    %v2451 = vmul.f32 %v2231, %v2353
    %v2452 = vmul.f32 %v2235, %v2353
    %v2453 = vmul.f32 %v2239, %v2353
    %v2454 = vmul.f32 %v2243, %v2353
    %v2455 = vmul.f32 %v2247, %v2353
    %v2456 = vmul.f32 %v2251, %v2353
    %v2457 = vmul.f32 %v2255, %v2353
    %v2458 = vmul.f32 %v2259, %v2353
    %v2459 = vmul.f32 %v2263, %v2353
    %v2460 = vmul.f32 %v2267, %v2353
    %v2461 = vmul.f32 %v2271, %v2353
    %v2462 = vmul.f32 %v2275, %v2353
    %v2463 = vmul.f32 %v2279, %v2353
    %v2464 = vmul.f32 %v2283, %v2353
    %v2465 = vmul.f32 %v2287, %v2353
    %v2466 = vmul.f32 %v2291, %v2353
    %v2467 = vmul.f32 %v2295, %v2353
    %v2468 = vmul.f32 %v2299, %v2353
    %v2469 = vmul.f32 %v2303, %v2353
    %v2470 = vmul.f32 %v2307, %v2353
    %v2471 = vmul.f32 %v2311, %v2353
    %v2472 = vmul.f32 %v2315, %v2353
    %v2473 = vmul.f32 %v2319, %v2353
    %v2474 = vmul.f32 %v2323, %v2353
    %v2475 = vmul.f32 %v2327, %v2353
    %v2476 = vmul.f32 %v2331, %v2353
    %v2477 = vmul.f32 %v2335, %v2353
    %v2478 = vmul.f32 %v2339, %v2353
    %v2479 = vmul.f32 %v2343, %v2353
    %v2480 = vmul.f32 %v2347, %v2353
    %v2481 = vmul.f32 %v2351, %v2353
    %v2482 = vadd.f32 %v1713, %v2354
    %v2483 = vadd.f32 %v1714, %v2355
    %v2484 = vadd.f32 %v1715, %v2356
    %v2485 = vadd.f32 %v1716, %v2357
    %v2486 = vadd.f32 %v1717, %v2358
    %v2487 = vadd.f32 %v1718, %v2359
    %v2488 = vadd.f32 %v1719, %v2360
    %v2489 = vadd.f32 %v1720, %v2361
    %v2490 = vadd.f32 %v1721, %v2362
    %v2491 = vadd.f32 %v1722, %v2363
    %v2492 = vadd.f32 %v1723, %v2364
    %v2493 = vadd.f32 %v1724, %v2365
    %v2494 = vadd.f32 %v1725, %v2366
    %v2495 = vadd.f32 %v1726, %v2367
    %v2496 = vadd.f32 %v1727, %v2368
    %v2497 = vadd.f32 %v1728, %v2369
    %v2498 = vadd.f32 %v1729, %v2370
    %v2499 = vadd.f32 %v1730, %v2371
    %v2500 = vadd.f32 %v1731, %v2372
    %v2501 = vadd.f32 %v1732, %v2373
    %v2502 = vadd.f32 %v1733, %v2374
    %v2503 = vadd.f32 %v1734, %v2375
    %v2504 = vadd.f32 %v1735, %v2376
    %v2505 = vadd.f32 %v1736, %v2377
    %v2506 = vadd.f32 %v1737, %v2378
    %v2507 = vadd.f32 %v1738, %v2379
    %v2508 = vadd.f32 %v1739, %v2380
    %v2509 = vadd.f32 %v1740, %v2381
    %v2510 = vadd.f32 %v1741, %v2382
    %v2511 = vadd.f32 %v1742, %v2383
    %v2512 = vadd.f32 %v1743, %v2384
    %v2513 = vadd.f32 %v1744, %v2385
    %v2514 = vadd.f32 %v1745, %v2386
    %v2515 = vadd.f32 %v1746, %v2387
    %v2516 = vadd.f32 %v1747, %v2388
    %v2517 = vadd.f32 %v1748, %v2389
    %v2518 = vadd.f32 %v1749, %v2390
    %v2519 = vadd.f32 %v1750, %v2391
    %v2520 = vadd.f32 %v1751, %v2392
    %v2521 = vadd.f32 %v1752, %v2393
    %v2522 = vadd.f32 %v1753, %v2394
    %v2523 = vadd.f32 %v1754, %v2395
    %v2524 = vadd.f32 %v1755, %v2396
    %v2525 = vadd.f32 %v1756, %v2397
    %v2526 = vadd.f32 %v1757, %v2398
    %v2527 = vadd.f32 %v1758, %v2399
    %v2528 = vadd.f32 %v1759, %v2400
    %v2529 = vadd.f32 %v1760, %v2401
    %v2530 = vadd.f32 %v1761, %v2402
    %v2531 = vadd.f32 %v1762, %v2403
    %v2532 = vadd.f32 %v1763, %v2404
    %v2533 = vadd.f32 %v1764, %v2405
    %v2534 = vadd.f32 %v1765, %v2406
    %v2535 = vadd.f32 %v1766, %v2407
    %v2536 = vadd.f32 %v1767, %v2408
    %v2537 = vadd.f32 %v1768, %v2409
    %v2538 = vadd.f32 %v1769, %v2410
    %v2539 = vadd.f32 %v1770, %v2411
    %v2540 = vadd.f32 %v1771, %v2412
    %v2541 = vadd.f32 %v1772, %v2413
    %v2542 = vadd.f32 %v1773, %v2414
    %v2543 = vadd.f32 %v1774, %v2415
    %v2544 = vadd.f32 %v1775, %v2416
    %v2545 = vadd.f32 %v1776, %v2417
    %v2546 = vadd.f32 %v1777, %v2418
    %v2547 = vadd.f32 %v1778, %v2419
    %v2548 = vadd.f32 %v1779, %v2420
    %v2549 = vadd.f32 %v1780, %v2421
    %v2550 = vadd.f32 %v1781, %v2422
    %v2551 = vadd.f32 %v1782, %v2423
    %v2552 = vadd.f32 %v1783, %v2424
    %v2553 = vadd.f32 %v1784, %v2425
    %v2554 = vadd.f32 %v1785, %v2426
    %v2555 = vadd.f32 %v1786, %v2427
    %v2556 = vadd.f32 %v1787, %v2428
    %v2557 = vadd.f32 %v1788, %v2429
    %v2558 = vadd.f32 %v1789, %v2430
    %v2559 = vadd.f32 %v1790, %v2431
    %v2560 = vadd.f32 %v1791, %v2432
    %v2561 = vadd.f32 %v1792, %v2433
    %v2562 = vadd.f32 %v1793, %v2434
    %v2563 = vadd.f32 %v1794, %v2435
    %v2564 = vadd.f32 %v1795, %v2436
    %v2565 = vadd.f32 %v1796, %v2437
    %v2566 = vadd.f32 %v1797, %v2438
    %v2567 = vadd.f32 %v1798, %v2439
    %v2568 = vadd.f32 %v1799, %v2440
    %v2569 = vadd.f32 %v1800, %v2441
    %v2570 = vadd.f32 %v1801, %v2442
    %v2571 = vadd.f32 %v1802, %v2443
    %v2572 = vadd.f32 %v1803, %v2444
    %v2573 = vadd.f32 %v1804, %v2445
    %v2574 = vadd.f32 %v1805, %v2446
    %v2575 = vadd.f32 %v1806, %v2447
    %v2576 = vadd.f32 %v1807, %v2448
    %v2577 = vadd.f32 %v1808, %v2449
    %v2578 = vadd.f32 %v1809, %v2450
    %v2579 = vadd.f32 %v1810, %v2451
    %v2580 = vadd.f32 %v1811, %v2452
    %v2581 = vadd.f32 %v1812, %v2453
    %v2582 = vadd.f32 %v1813, %v2454
    %v2583 = vadd.f32 %v1814, %v2455
    %v2584 = vadd.f32 %v1815, %v2456
    %v2585 = vadd.f32 %v1816, %v2457
    %v2586 = vadd.f32 %v1817, %v2458
    %v2587 = vadd.f32 %v1818, %v2459
    %v2588 = vadd.f32 %v1819, %v2460
    %v2589 = vadd.f32 %v1820, %v2461
    %v2590 = vadd.f32 %v1821, %v2462
    %v2591 = vadd.f32 %v1822, %v2463
    %v2592 = vadd.f32 %v1823, %v2464
    %v2593 = vadd.f32 %v1824, %v2465
    %v2594 = vadd.f32 %v1825, %v2466
    %v2595 = vadd.f32 %v1826, %v2467
    %v2596 = vadd.f32 %v1827, %v2468
    %v2597 = vadd.f32 %v1828, %v2469
    %v2598 = vadd.f32 %v1829, %v2470
    %v2599 = vadd.f32 %v1830, %v2471
    %v2600 = vadd.f32 %v1831, %v2472
    %v2601 = vadd.f32 %v1832, %v2473
    %v2602 = vadd.f32 %v1833, %v2474
    %v2603 = vadd.f32 %v1834, %v2475
    %v2604 = vadd.f32 %v1835, %v2476
    %v2605 = vadd.f32 %v1836, %v2477
    %v2606 = vadd.f32 %v1837, %v2478
    %v2607 = vadd.f32 %v1838, %v2479
    %v2608 = vadd.f32 %v1839, %v2480
    %v2609 = vadd.f32 %v1840, %v2481
    %2610 = vset.pattern.permute.xlu0 3
    %2611 = vperm.xlu0 %2610, %v42
    %v2612 = vpop.permute.xlu0 %2611
    %2614 = vset.pattern.permute.xlu0 3
    %2615 = vperm.xlu0 %2614, %v43
    %v2616 = vpop.permute.xlu0 %2615
    %2618 = vset.pattern.permute.xlu0 3
    %2619 = vperm.xlu0 %2618, %v44
    %v2620 = vpop.permute.xlu0 %2619
    %2622 = vset.pattern.permute.xlu0 3
    %2623 = vperm.xlu0 %2622, %v45
    %v2624 = vpop.permute.xlu0 %2623
    %2626 = vset.pattern.permute.xlu0 3
    %2627 = vperm.xlu0 %2626, %v46
    %v2628 = vpop.permute.xlu0 %2627
    %2630 = vset.pattern.permute.xlu0 3
    %2631 = vperm.xlu0 %2630, %v47
    %v2632 = vpop.permute.xlu0 %2631
    %2634 = vset.pattern.permute.xlu0 3
    %2635 = vperm.xlu0 %2634, %v48
    %v2636 = vpop.permute.xlu0 %2635
    %2638 = vset.pattern.permute.xlu0 3
    %2639 = vperm.xlu0 %2638, %v49
    %v2640 = vpop.permute.xlu0 %2639
    %2642 = vset.pattern.permute.xlu0 3
    %2643 = vperm.xlu0 %2642, %v50
    %v2644 = vpop.permute.xlu0 %2643
    %2646 = vset.pattern.permute.xlu0 3
    %2647 = vperm.xlu0 %2646, %v51
    %v2648 = vpop.permute.xlu0 %2647
    %2650 = vset.pattern.permute.xlu0 3
    %2651 = vperm.xlu0 %2650, %v52
    %v2652 = vpop.permute.xlu0 %2651
    %2654 = vset.pattern.permute.xlu0 3
    %2655 = vperm.xlu0 %2654, %v53
    %v2656 = vpop.permute.xlu0 %2655
    %2658 = vset.pattern.permute.xlu0 3
    %2659 = vperm.xlu0 %2658, %v54
    %v2660 = vpop.permute.xlu0 %2659
    %2662 = vset.pattern.permute.xlu0 3
    %2663 = vperm.xlu0 %2662, %v55
    %v2664 = vpop.permute.xlu0 %2663
    %2666 = vset.pattern.permute.xlu0 3
    %2667 = vperm.xlu0 %2666, %v56
    %v2668 = vpop.permute.xlu0 %2667
    %2670 = vset.pattern.permute.xlu0 3
    %2671 = vperm.xlu0 %2670, %v57
    %v2672 = vpop.permute.xlu0 %2671
    %2674 = vset.pattern.permute.xlu0 3
    %2675 = vperm.xlu0 %2674, %v58
    %v2676 = vpop.permute.xlu0 %2675
    %2678 = vset.pattern.permute.xlu0 3
    %2679 = vperm.xlu0 %2678, %v59
    %v2680 = vpop.permute.xlu0 %2679
    %2682 = vset.pattern.permute.xlu0 3
    %2683 = vperm.xlu0 %2682, %v60
    %v2684 = vpop.permute.xlu0 %2683
    %2686 = vset.pattern.permute.xlu0 3
    %2687 = vperm.xlu0 %2686, %v61
    %v2688 = vpop.permute.xlu0 %2687
    %2690 = vset.pattern.permute.xlu0 3
    %2691 = vperm.xlu0 %2690, %v62
    %v2692 = vpop.permute.xlu0 %2691
    %2694 = vset.pattern.permute.xlu0 3
    %2695 = vperm.xlu0 %2694, %v63
    %v2696 = vpop.permute.xlu0 %2695
    %2698 = vset.pattern.permute.xlu0 3
    %2699 = vperm.xlu0 %2698, %v64
    %v2700 = vpop.permute.xlu0 %2699
    %2702 = vset.pattern.permute.xlu0 3
    %2703 = vperm.xlu0 %2702, %v65
    %v2704 = vpop.permute.xlu0 %2703
    %2706 = vset.pattern.permute.xlu0 3
    %2707 = vperm.xlu0 %2706, %v66
    %v2708 = vpop.permute.xlu0 %2707
    %2710 = vset.pattern.permute.xlu0 3
    %2711 = vperm.xlu0 %2710, %v67
    %v2712 = vpop.permute.xlu0 %2711
    %2714 = vset.pattern.permute.xlu0 3
    %2715 = vperm.xlu0 %2714, %v68
    %v2716 = vpop.permute.xlu0 %2715
    %2718 = vset.pattern.permute.xlu0 3
    %2719 = vperm.xlu0 %2718, %v69
    %v2720 = vpop.permute.xlu0 %2719
    %2722 = vset.pattern.permute.xlu0 3
    %2723 = vperm.xlu0 %2722, %v70
    %v2724 = vpop.permute.xlu0 %2723
    %2726 = vset.pattern.permute.xlu0 3
    %2727 = vperm.xlu0 %2726, %v71
    %v2728 = vpop.permute.xlu0 %2727
    %2730 = vset.pattern.permute.xlu0 3
    %2731 = vperm.xlu0 %2730, %v72
    %v2732 = vpop.permute.xlu0 %2731
    %2734 = vset.pattern.permute.xlu0 3
    %2735 = vperm.xlu0 %2734, %v73
    %v2736 = vpop.permute.xlu0 %2735
    %2738 = vset.pattern.permute.xlu0 3
    %2739 = vperm.xlu0 %2738, %v74
    %v2740 = vpop.permute.xlu0 %2739
    %2742 = vset.pattern.permute.xlu0 3
    %2743 = vperm.xlu0 %2742, %v75
    %v2744 = vpop.permute.xlu0 %2743
    %2746 = vset.pattern.permute.xlu0 3
    %2747 = vperm.xlu0 %2746, %v76
    %v2748 = vpop.permute.xlu0 %2747
    %2750 = vset.pattern.permute.xlu0 3
    %2751 = vperm.xlu0 %2750, %v77
    %v2752 = vpop.permute.xlu0 %2751
    %2754 = vset.pattern.permute.xlu0 3
    %2755 = vperm.xlu0 %2754, %v78
    %v2756 = vpop.permute.xlu0 %2755
    %2758 = vset.pattern.permute.xlu0 3
    %2759 = vperm.xlu0 %2758, %v79
    %v2760 = vpop.permute.xlu0 %2759
    %2762 = vset.pattern.permute.xlu0 3
    %2763 = vperm.xlu0 %2762, %v80
    %v2764 = vpop.permute.xlu0 %2763
    %2766 = vset.pattern.permute.xlu0 3
    %2767 = vperm.xlu0 %2766, %v81
    %v2768 = vpop.permute.xlu0 %2767
    %2770 = vset.pattern.permute.xlu0 3
    %2771 = vperm.xlu0 %2770, %v82
    %v2772 = vpop.permute.xlu0 %2771
    %2774 = vset.pattern.permute.xlu0 3
    %2775 = vperm.xlu0 %2774, %v83
    %v2776 = vpop.permute.xlu0 %2775
    %2778 = vset.pattern.permute.xlu0 3
    %2779 = vperm.xlu0 %2778, %v84
    %v2780 = vpop.permute.xlu0 %2779
    %2782 = vset.pattern.permute.xlu0 3
    %2783 = vperm.xlu0 %2782, %v85
    %v2784 = vpop.permute.xlu0 %2783
    %2786 = vset.pattern.permute.xlu0 3
    %2787 = vperm.xlu0 %2786, %v86
    %v2788 = vpop.permute.xlu0 %2787
    %2790 = vset.pattern.permute.xlu0 3
    %2791 = vperm.xlu0 %2790, %v87
    %v2792 = vpop.permute.xlu0 %2791
    %2794 = vset.pattern.permute.xlu0 3
    %2795 = vperm.xlu0 %2794, %v88
    %v2796 = vpop.permute.xlu0 %2795
    %2798 = vset.pattern.permute.xlu0 3
    %2799 = vperm.xlu0 %2798, %v89
    %v2800 = vpop.permute.xlu0 %2799
    %2802 = vset.pattern.permute.xlu0 3
    %2803 = vperm.xlu0 %2802, %v90
    %v2804 = vpop.permute.xlu0 %2803
    %2806 = vset.pattern.permute.xlu0 3
    %2807 = vperm.xlu0 %2806, %v91
    %v2808 = vpop.permute.xlu0 %2807
    %2810 = vset.pattern.permute.xlu0 3
    %2811 = vperm.xlu0 %2810, %v92
    %v2812 = vpop.permute.xlu0 %2811
    %2814 = vset.pattern.permute.xlu0 3
    %2815 = vperm.xlu0 %2814, %v93
    %v2816 = vpop.permute.xlu0 %2815
    %2818 = vset.pattern.permute.xlu0 3
    %2819 = vperm.xlu0 %2818, %v94
    %v2820 = vpop.permute.xlu0 %2819
    %2822 = vset.pattern.permute.xlu0 3
    %2823 = vperm.xlu0 %2822, %v95
    %v2824 = vpop.permute.xlu0 %2823
    %2826 = vset.pattern.permute.xlu0 3
    %2827 = vperm.xlu0 %2826, %v96
    %v2828 = vpop.permute.xlu0 %2827
    %2830 = vset.pattern.permute.xlu0 3
    %2831 = vperm.xlu0 %2830, %v97
    %v2832 = vpop.permute.xlu0 %2831
    %2834 = vset.pattern.permute.xlu0 3
    %2835 = vperm.xlu0 %2834, %v98
    %v2836 = vpop.permute.xlu0 %2835
    %2838 = vset.pattern.permute.xlu0 3
    %2839 = vperm.xlu0 %2838, %v99
    %v2840 = vpop.permute.xlu0 %2839
    %2842 = vset.pattern.permute.xlu0 3
    %2843 = vperm.xlu0 %2842, %v100
    %v2844 = vpop.permute.xlu0 %2843
    %2846 = vset.pattern.permute.xlu0 3
    %2847 = vperm.xlu0 %2846, %v101
    %v2848 = vpop.permute.xlu0 %2847
    %2850 = vset.pattern.permute.xlu0 3
    %2851 = vperm.xlu0 %2850, %v102
    %v2852 = vpop.permute.xlu0 %2851
    %2854 = vset.pattern.permute.xlu0 3
    %2855 = vperm.xlu0 %2854, %v103
    %v2856 = vpop.permute.xlu0 %2855
    %2858 = vset.pattern.permute.xlu0 3
    %2859 = vperm.xlu0 %2858, %v104
    %v2860 = vpop.permute.xlu0 %2859
    %2862 = vset.pattern.permute.xlu0 3
    %2863 = vperm.xlu0 %2862, %v105
    %v2864 = vpop.permute.xlu0 %2863
    %2866 = vset.pattern.permute.xlu0 3
    %2867 = vperm.xlu0 %2866, %v106
    %v2868 = vpop.permute.xlu0 %2867
    %2870 = vset.pattern.permute.xlu0 3
    %2871 = vperm.xlu0 %2870, %v107
    %v2872 = vpop.permute.xlu0 %2871
    %2874 = vset.pattern.permute.xlu0 3
    %2875 = vperm.xlu0 %2874, %v108
    %v2876 = vpop.permute.xlu0 %2875
    %2878 = vset.pattern.permute.xlu0 3
    %2879 = vperm.xlu0 %2878, %v109
    %v2880 = vpop.permute.xlu0 %2879
    %2882 = vset.pattern.permute.xlu0 3
    %2883 = vperm.xlu0 %2882, %v110
    %v2884 = vpop.permute.xlu0 %2883
    %2886 = vset.pattern.permute.xlu0 3
    %2887 = vperm.xlu0 %2886, %v111
    %v2888 = vpop.permute.xlu0 %2887
    %2890 = vset.pattern.permute.xlu0 3
    %2891 = vperm.xlu0 %2890, %v112
    %v2892 = vpop.permute.xlu0 %2891
    %2894 = vset.pattern.permute.xlu0 3
    %2895 = vperm.xlu0 %2894, %v113
    %v2896 = vpop.permute.xlu0 %2895
    %2898 = vset.pattern.permute.xlu0 3
    %2899 = vperm.xlu0 %2898, %v114
    %v2900 = vpop.permute.xlu0 %2899
    %2902 = vset.pattern.permute.xlu0 3
    %2903 = vperm.xlu0 %2902, %v115
    %v2904 = vpop.permute.xlu0 %2903
    %2906 = vset.pattern.permute.xlu0 3
    %2907 = vperm.xlu0 %2906, %v116
    %v2908 = vpop.permute.xlu0 %2907
    %2910 = vset.pattern.permute.xlu0 3
    %2911 = vperm.xlu0 %2910, %v117
    %v2912 = vpop.permute.xlu0 %2911
    %2914 = vset.pattern.permute.xlu0 3
    %2915 = vperm.xlu0 %2914, %v118
    %v2916 = vpop.permute.xlu0 %2915
    %2918 = vset.pattern.permute.xlu0 3
    %2919 = vperm.xlu0 %2918, %v119
    %v2920 = vpop.permute.xlu0 %2919
    %2922 = vset.pattern.permute.xlu0 3
    %2923 = vperm.xlu0 %2922, %v120
    %v2924 = vpop.permute.xlu0 %2923
    %2926 = vset.pattern.permute.xlu0 3
    %2927 = vperm.xlu0 %2926, %v121
    %v2928 = vpop.permute.xlu0 %2927
    %2930 = vset.pattern.permute.xlu0 3
    %2931 = vperm.xlu0 %2930, %v122
    %v2932 = vpop.permute.xlu0 %2931
    %2934 = vset.pattern.permute.xlu0 3
    %2935 = vperm.xlu0 %2934, %v123
    %v2936 = vpop.permute.xlu0 %2935
    %2938 = vset.pattern.permute.xlu0 3
    %2939 = vperm.xlu0 %2938, %v124
    %v2940 = vpop.permute.xlu0 %2939
    %2942 = vset.pattern.permute.xlu0 3
    %2943 = vperm.xlu0 %2942, %v125
    %v2944 = vpop.permute.xlu0 %2943
    %2946 = vset.pattern.permute.xlu0 3
    %2947 = vperm.xlu0 %2946, %v126
    %v2948 = vpop.permute.xlu0 %2947
    %2950 = vset.pattern.permute.xlu0 3
    %2951 = vperm.xlu0 %2950, %v127
    %v2952 = vpop.permute.xlu0 %2951
    %2954 = vset.pattern.permute.xlu0 3
    %2955 = vperm.xlu0 %2954, %v128
    %v2956 = vpop.permute.xlu0 %2955
    %2958 = vset.pattern.permute.xlu0 3
    %2959 = vperm.xlu0 %2958, %v129
    %v2960 = vpop.permute.xlu0 %2959
    %2962 = vset.pattern.permute.xlu0 3
    %2963 = vperm.xlu0 %2962, %v130
    %v2964 = vpop.permute.xlu0 %2963
    %2966 = vset.pattern.permute.xlu0 3
    %2967 = vperm.xlu0 %2966, %v131
    %v2968 = vpop.permute.xlu0 %2967
    %2970 = vset.pattern.permute.xlu0 3
    %2971 = vperm.xlu0 %2970, %v132
    %v2972 = vpop.permute.xlu0 %2971
    %2974 = vset.pattern.permute.xlu0 3
    %2975 = vperm.xlu0 %2974, %v133
    %v2976 = vpop.permute.xlu0 %2975
    %2978 = vset.pattern.permute.xlu0 3
    %2979 = vperm.xlu0 %2978, %v134
    %v2980 = vpop.permute.xlu0 %2979
    %2982 = vset.pattern.permute.xlu0 3
    %2983 = vperm.xlu0 %2982, %v135
    %v2984 = vpop.permute.xlu0 %2983
    %2986 = vset.pattern.permute.xlu0 3
    %2987 = vperm.xlu0 %2986, %v136
    %v2988 = vpop.permute.xlu0 %2987
    %2990 = vset.pattern.permute.xlu0 3
    %2991 = vperm.xlu0 %2990, %v137
    %v2992 = vpop.permute.xlu0 %2991
    %2994 = vset.pattern.permute.xlu0 3
    %2995 = vperm.xlu0 %2994, %v138
    %v2996 = vpop.permute.xlu0 %2995
    %2998 = vset.pattern.permute.xlu0 3
    %2999 = vperm.xlu0 %2998, %v139
    %v3000 = vpop.permute.xlu0 %2999
    %3002 = vset.pattern.permute.xlu0 3
    %3003 = vperm.xlu0 %3002, %v140
    %v3004 = vpop.permute.xlu0 %3003
    %3006 = vset.pattern.permute.xlu0 3
    %3007 = vperm.xlu0 %3006, %v141
    %v3008 = vpop.permute.xlu0 %3007
    %3010 = vset.pattern.permute.xlu0 3
    %3011 = vperm.xlu0 %3010, %v142
    %v3012 = vpop.permute.xlu0 %3011
    %3014 = vset.pattern.permute.xlu0 3
    %3015 = vperm.xlu0 %3014, %v143
    %v3016 = vpop.permute.xlu0 %3015
    %3018 = vset.pattern.permute.xlu0 3
    %3019 = vperm.xlu0 %3018, %v144
    %v3020 = vpop.permute.xlu0 %3019
    %3022 = vset.pattern.permute.xlu0 3
    %3023 = vperm.xlu0 %3022, %v145
    %v3024 = vpop.permute.xlu0 %3023
    %3026 = vset.pattern.permute.xlu0 3
    %3027 = vperm.xlu0 %3026, %v146
    %v3028 = vpop.permute.xlu0 %3027
    %3030 = vset.pattern.permute.xlu0 3
    %3031 = vperm.xlu0 %3030, %v147
    %v3032 = vpop.permute.xlu0 %3031
    %3034 = vset.pattern.permute.xlu0 3
    %3035 = vperm.xlu0 %3034, %v148
    %v3036 = vpop.permute.xlu0 %3035
    %3038 = vset.pattern.permute.xlu0 3
    %3039 = vperm.xlu0 %3038, %v149
    %v3040 = vpop.permute.xlu0 %3039
    %3042 = vset.pattern.permute.xlu0 3
    %3043 = vperm.xlu0 %3042, %v150
    %v3044 = vpop.permute.xlu0 %3043
    %3046 = vset.pattern.permute.xlu0 3
    %3047 = vperm.xlu0 %3046, %v151
    %v3048 = vpop.permute.xlu0 %3047
    %3050 = vset.pattern.permute.xlu0 3
    %3051 = vperm.xlu0 %3050, %v152
    %v3052 = vpop.permute.xlu0 %3051
    %3054 = vset.pattern.permute.xlu0 3
    %3055 = vperm.xlu0 %3054, %v153
    %v3056 = vpop.permute.xlu0 %3055
    %3058 = vset.pattern.permute.xlu0 3
    %3059 = vperm.xlu0 %3058, %v154
    %v3060 = vpop.permute.xlu0 %3059
    %3062 = vset.pattern.permute.xlu0 3
    %3063 = vperm.xlu0 %3062, %v155
    %v3064 = vpop.permute.xlu0 %3063
    %3066 = vset.pattern.permute.xlu0 3
    %3067 = vperm.xlu0 %3066, %v156
    %v3068 = vpop.permute.xlu0 %3067
    %3070 = vset.pattern.permute.xlu0 3
    %3071 = vperm.xlu0 %3070, %v157
    %v3072 = vpop.permute.xlu0 %3071
    %3074 = vset.pattern.permute.xlu0 3
    %3075 = vperm.xlu0 %3074, %v158
    %v3076 = vpop.permute.xlu0 %3075
    %3078 = vset.pattern.permute.xlu0 3
    %3079 = vperm.xlu0 %3078, %v159
    %v3080 = vpop.permute.xlu0 %3079
    %3082 = vset.pattern.permute.xlu0 3
    %3083 = vperm.xlu0 %3082, %v160
    %v3084 = vpop.permute.xlu0 %3083
    %3086 = vset.pattern.permute.xlu0 3
    %3087 = vperm.xlu0 %3086, %v161
    %v3088 = vpop.permute.xlu0 %3087
    %3090 = vset.pattern.permute.xlu0 3
    %3091 = vperm.xlu0 %3090, %v162
    %v3092 = vpop.permute.xlu0 %3091
    %3094 = vset.pattern.permute.xlu0 3
    %3095 = vperm.xlu0 %3094, %v163
    %v3096 = vpop.permute.xlu0 %3095
    %3098 = vset.pattern.permute.xlu0 3
    %3099 = vperm.xlu0 %3098, %v164
    %v3100 = vpop.permute.xlu0 %3099
    %3102 = vset.pattern.permute.xlu0 3
    %3103 = vperm.xlu0 %3102, %v165
    %v3104 = vpop.permute.xlu0 %3103
    %3106 = vset.pattern.permute.xlu0 3
    %3107 = vperm.xlu0 %3106, %v166
    %v3108 = vpop.permute.xlu0 %3107
    %3110 = vset.pattern.permute.xlu0 3
    %3111 = vperm.xlu0 %3110, %v167
    %v3112 = vpop.permute.xlu0 %3111
    %3114 = vset.pattern.permute.xlu0 3
    %3115 = vperm.xlu0 %3114, %v168
    %v3116 = vpop.permute.xlu0 %3115
    %3118 = vset.pattern.permute.xlu0 3
    %3119 = vperm.xlu0 %3118, %v169
    %v3120 = vpop.permute.xlu0 %3119
    %v3122 = vperm.slane %v170, 3
    %v3123 = vmul.f32 %v2612, %v3122
    %v3124 = vmul.f32 %v2616, %v3122
    %v3125 = vmul.f32 %v2620, %v3122
    %v3126 = vmul.f32 %v2624, %v3122
    %v3127 = vmul.f32 %v2628, %v3122
    %v3128 = vmul.f32 %v2632, %v3122
    %v3129 = vmul.f32 %v2636, %v3122
    %v3130 = vmul.f32 %v2640, %v3122
    %v3131 = vmul.f32 %v2644, %v3122
    %v3132 = vmul.f32 %v2648, %v3122
    %v3133 = vmul.f32 %v2652, %v3122
    %v3134 = vmul.f32 %v2656, %v3122
    %v3135 = vmul.f32 %v2660, %v3122
    %v3136 = vmul.f32 %v2664, %v3122
    %v3137 = vmul.f32 %v2668, %v3122
    %v3138 = vmul.f32 %v2672, %v3122
    %v3139 = vmul.f32 %v2676, %v3122
    %v3140 = vmul.f32 %v2680, %v3122
    %v3141 = vmul.f32 %v2684, %v3122
    %v3142 = vmul.f32 %v2688, %v3122
    %v3143 = vmul.f32 %v2692, %v3122
    %v3144 = vmul.f32 %v2696, %v3122
    %v3145 = vmul.f32 %v2700, %v3122
    %v3146 = vmul.f32 %v2704, %v3122
    %v3147 = vmul.f32 %v2708, %v3122
    %v3148 = vmul.f32 %v2712, %v3122
    %v3149 = vmul.f32 %v2716, %v3122
    %v3150 = vmul.f32 %v2720, %v3122
    %v3151 = vmul.f32 %v2724, %v3122
    %v3152 = vmul.f32 %v2728, %v3122
    %v3153 = vmul.f32 %v2732, %v3122
    %v3154 = vmul.f32 %v2736, %v3122
    %v3155 = vmul.f32 %v2740, %v3122
    %v3156 = vmul.f32 %v2744, %v3122
    %v3157 = vmul.f32 %v2748, %v3122
    %v3158 = vmul.f32 %v2752, %v3122
    %v3159 = vmul.f32 %v2756, %v3122
    %v3160 = vmul.f32 %v2760, %v3122
    %v3161 = vmul.f32 %v2764, %v3122
    %v3162 = vmul.f32 %v2768, %v3122
    %v3163 = vmul.f32 %v2772, %v3122
    %v3164 = vmul.f32 %v2776, %v3122
    %v3165 = vmul.f32 %v2780, %v3122
    %v3166 = vmul.f32 %v2784, %v3122
    %v3167 = vmul.f32 %v2788, %v3122
    %v3168 = vmul.f32 %v2792, %v3122
    %v3169 = vmul.f32 %v2796, %v3122
    %v3170 = vmul.f32 %v2800, %v3122
    %v3171 = vmul.f32 %v2804, %v3122
    %v3172 = vmul.f32 %v2808, %v3122
    %v3173 = vmul.f32 %v2812, %v3122
    %v3174 = vmul.f32 %v2816, %v3122
    %v3175 = vmul.f32 %v2820, %v3122
    %v3176 = vmul.f32 %v2824, %v3122
    %v3177 = vmul.f32 %v2828, %v3122
    %v3178 = vmul.f32 %v2832, %v3122
    %v3179 = vmul.f32 %v2836, %v3122
    %v3180 = vmul.f32 %v2840, %v3122
    %v3181 = vmul.f32 %v2844, %v3122
    %v3182 = vmul.f32 %v2848, %v3122
    %v3183 = vmul.f32 %v2852, %v3122
    %v3184 = vmul.f32 %v2856, %v3122
    %v3185 = vmul.f32 %v2860, %v3122
    %v3186 = vmul.f32 %v2864, %v3122
    %v3187 = vmul.f32 %v2868, %v3122
    %v3188 = vmul.f32 %v2872, %v3122
    %v3189 = vmul.f32 %v2876, %v3122
    %v3190 = vmul.f32 %v2880, %v3122
    %v3191 = vmul.f32 %v2884, %v3122
    %v3192 = vmul.f32 %v2888, %v3122
    %v3193 = vmul.f32 %v2892, %v3122
    %v3194 = vmul.f32 %v2896, %v3122
    %v3195 = vmul.f32 %v2900, %v3122
    %v3196 = vmul.f32 %v2904, %v3122
    %v3197 = vmul.f32 %v2908, %v3122
    %v3198 = vmul.f32 %v2912, %v3122
    %v3199 = vmul.f32 %v2916, %v3122
    %v3200 = vmul.f32 %v2920, %v3122
    %v3201 = vmul.f32 %v2924, %v3122
    %v3202 = vmul.f32 %v2928, %v3122
    %v3203 = vmul.f32 %v2932, %v3122
    %v3204 = vmul.f32 %v2936, %v3122
    %v3205 = vmul.f32 %v2940, %v3122
    %v3206 = vmul.f32 %v2944, %v3122
    %v3207 = vmul.f32 %v2948, %v3122
    %v3208 = vmul.f32 %v2952, %v3122
    %v3209 = vmul.f32 %v2956, %v3122
    %v3210 = vmul.f32 %v2960, %v3122
    %v3211 = vmul.f32 %v2964, %v3122
    %v3212 = vmul.f32 %v2968, %v3122
    %v3213 = vmul.f32 %v2972, %v3122
    %v3214 = vmul.f32 %v2976, %v3122
    %v3215 = vmul.f32 %v2980, %v3122
    %v3216 = vmul.f32 %v2984, %v3122
    %v3217 = vmul.f32 %v2988, %v3122
    %v3218 = vmul.f32 %v2992, %v3122
    %v3219 = vmul.f32 %v2996, %v3122
    %v3220 = vmul.f32 %v3000, %v3122
    %v3221 = vmul.f32 %v3004, %v3122
    %v3222 = vmul.f32 %v3008, %v3122
    %v3223 = vmul.f32 %v3012, %v3122
    %v3224 = vmul.f32 %v3016, %v3122
    %v3225 = vmul.f32 %v3020, %v3122
    %v3226 = vmul.f32 %v3024, %v3122
    %v3227 = vmul.f32 %v3028, %v3122
    %v3228 = vmul.f32 %v3032, %v3122
    %v3229 = vmul.f32 %v3036, %v3122
    %v3230 = vmul.f32 %v3040, %v3122
    %v3231 = vmul.f32 %v3044, %v3122
    %v3232 = vmul.f32 %v3048, %v3122
    %v3233 = vmul.f32 %v3052, %v3122
    %v3234 = vmul.f32 %v3056, %v3122
    %v3235 = vmul.f32 %v3060, %v3122
    %v3236 = vmul.f32 %v3064, %v3122
    %v3237 = vmul.f32 %v3068, %v3122
    %v3238 = vmul.f32 %v3072, %v3122
    %v3239 = vmul.f32 %v3076, %v3122
    %v3240 = vmul.f32 %v3080, %v3122
    %v3241 = vmul.f32 %v3084, %v3122
    %v3242 = vmul.f32 %v3088, %v3122
    %v3243 = vmul.f32 %v3092, %v3122
    %v3244 = vmul.f32 %v3096, %v3122
    %v3245 = vmul.f32 %v3100, %v3122
    %v3246 = vmul.f32 %v3104, %v3122
    %v3247 = vmul.f32 %v3108, %v3122
    %v3248 = vmul.f32 %v3112, %v3122
    %v3249 = vmul.f32 %v3116, %v3122
    %v3250 = vmul.f32 %v3120, %v3122
    %v3251 = vadd.f32 %v2482, %v3123
    %v3252 = vadd.f32 %v2483, %v3124
    %v3253 = vadd.f32 %v2484, %v3125
    %v3254 = vadd.f32 %v2485, %v3126
    %v3255 = vadd.f32 %v2486, %v3127
    %v3256 = vadd.f32 %v2487, %v3128
    %v3257 = vadd.f32 %v2488, %v3129
    %v3258 = vadd.f32 %v2489, %v3130
    %v3259 = vadd.f32 %v2490, %v3131
    %v3260 = vadd.f32 %v2491, %v3132
    %v3261 = vadd.f32 %v2492, %v3133
    %v3262 = vadd.f32 %v2493, %v3134
    %v3263 = vadd.f32 %v2494, %v3135
    %v3264 = vadd.f32 %v2495, %v3136
    %v3265 = vadd.f32 %v2496, %v3137
    %v3266 = vadd.f32 %v2497, %v3138
    %v3267 = vadd.f32 %v2498, %v3139
    %v3268 = vadd.f32 %v2499, %v3140
    %v3269 = vadd.f32 %v2500, %v3141
    %v3270 = vadd.f32 %v2501, %v3142
    %v3271 = vadd.f32 %v2502, %v3143
    %v3272 = vadd.f32 %v2503, %v3144
    %v3273 = vadd.f32 %v2504, %v3145
    %v3274 = vadd.f32 %v2505, %v3146
    %v3275 = vadd.f32 %v2506, %v3147
    %v3276 = vadd.f32 %v2507, %v3148
    %v3277 = vadd.f32 %v2508, %v3149
    %v3278 = vadd.f32 %v2509, %v3150
    %v3279 = vadd.f32 %v2510, %v3151
    %v3280 = vadd.f32 %v2511, %v3152
    %v3281 = vadd.f32 %v2512, %v3153
    %v3282 = vadd.f32 %v2513, %v3154
    %v3283 = vadd.f32 %v2514, %v3155
    %v3284 = vadd.f32 %v2515, %v3156
    %v3285 = vadd.f32 %v2516, %v3157
    %v3286 = vadd.f32 %v2517, %v3158
    %v3287 = vadd.f32 %v2518, %v3159
    %v3288 = vadd.f32 %v2519, %v3160
    %v3289 = vadd.f32 %v2520, %v3161
    %v3290 = vadd.f32 %v2521, %v3162
    %v3291 = vadd.f32 %v2522, %v3163
    %v3292 = vadd.f32 %v2523, %v3164
    %v3293 = vadd.f32 %v2524, %v3165
    %v3294 = vadd.f32 %v2525, %v3166
    %v3295 = vadd.f32 %v2526, %v3167
    %v3296 = vadd.f32 %v2527, %v3168
    %v3297 = vadd.f32 %v2528, %v3169
    %v3298 = vadd.f32 %v2529, %v3170
    %v3299 = vadd.f32 %v2530, %v3171
    %v3300 = vadd.f32 %v2531, %v3172
    %v3301 = vadd.f32 %v2532, %v3173
    %v3302 = vadd.f32 %v2533, %v3174
    %v3303 = vadd.f32 %v2534, %v3175
    %v3304 = vadd.f32 %v2535, %v3176
    %v3305 = vadd.f32 %v2536, %v3177
    %v3306 = vadd.f32 %v2537, %v3178
    %v3307 = vadd.f32 %v2538, %v3179
    %v3308 = vadd.f32 %v2539, %v3180
    %v3309 = vadd.f32 %v2540, %v3181
    %v3310 = vadd.f32 %v2541, %v3182
    %v3311 = vadd.f32 %v2542, %v3183
    %v3312 = vadd.f32 %v2543, %v3184
    %v3313 = vadd.f32 %v2544, %v3185
    %v3314 = vadd.f32 %v2545, %v3186
    %v3315 = vadd.f32 %v2546, %v3187
    %v3316 = vadd.f32 %v2547, %v3188
    %v3317 = vadd.f32 %v2548, %v3189
    %v3318 = vadd.f32 %v2549, %v3190
    %v3319 = vadd.f32 %v2550, %v3191
    %v3320 = vadd.f32 %v2551, %v3192
    %v3321 = vadd.f32 %v2552, %v3193
    %v3322 = vadd.f32 %v2553, %v3194
    %v3323 = vadd.f32 %v2554, %v3195
    %v3324 = vadd.f32 %v2555, %v3196
    %v3325 = vadd.f32 %v2556, %v3197
    %v3326 = vadd.f32 %v2557, %v3198
    %v3327 = vadd.f32 %v2558, %v3199
    %v3328 = vadd.f32 %v2559, %v3200
    %v3329 = vadd.f32 %v2560, %v3201
    %v3330 = vadd.f32 %v2561, %v3202
    %v3331 = vadd.f32 %v2562, %v3203
    %v3332 = vadd.f32 %v2563, %v3204
    %v3333 = vadd.f32 %v2564, %v3205
    %v3334 = vadd.f32 %v2565, %v3206
    %v3335 = vadd.f32 %v2566, %v3207
    %v3336 = vadd.f32 %v2567, %v3208
    %v3337 = vadd.f32 %v2568, %v3209
    %v3338 = vadd.f32 %v2569, %v3210
    %v3339 = vadd.f32 %v2570, %v3211
    %v3340 = vadd.f32 %v2571, %v3212
    %v3341 = vadd.f32 %v2572, %v3213
    %v3342 = vadd.f32 %v2573, %v3214
    %v3343 = vadd.f32 %v2574, %v3215
    %v3344 = vadd.f32 %v2575, %v3216
    %v3345 = vadd.f32 %v2576, %v3217
    %v3346 = vadd.f32 %v2577, %v3218
    %v3347 = vadd.f32 %v2578, %v3219
    %v3348 = vadd.f32 %v2579, %v3220
    %v3349 = vadd.f32 %v2580, %v3221
    %v3350 = vadd.f32 %v2581, %v3222
    %v3351 = vadd.f32 %v2582, %v3223
    %v3352 = vadd.f32 %v2583, %v3224
    %v3353 = vadd.f32 %v2584, %v3225
    %v3354 = vadd.f32 %v2585, %v3226
    %v3355 = vadd.f32 %v2586, %v3227
    %v3356 = vadd.f32 %v2587, %v3228
    %v3357 = vadd.f32 %v2588, %v3229
    %v3358 = vadd.f32 %v2589, %v3230
    %v3359 = vadd.f32 %v2590, %v3231
    %v3360 = vadd.f32 %v2591, %v3232
    %v3361 = vadd.f32 %v2592, %v3233
    %v3362 = vadd.f32 %v2593, %v3234
    %v3363 = vadd.f32 %v2594, %v3235
    %v3364 = vadd.f32 %v2595, %v3236
    %v3365 = vadd.f32 %v2596, %v3237
    %v3366 = vadd.f32 %v2597, %v3238
    %v3367 = vadd.f32 %v2598, %v3239
    %v3368 = vadd.f32 %v2599, %v3240
    %v3369 = vadd.f32 %v2600, %v3241
    %v3370 = vadd.f32 %v2601, %v3242
    %v3371 = vadd.f32 %v2602, %v3243
    %v3372 = vadd.f32 %v2603, %v3244
    %v3373 = vadd.f32 %v2604, %v3245
    %v3374 = vadd.f32 %v2605, %v3246
    %v3375 = vadd.f32 %v2606, %v3247
    %v3376 = vadd.f32 %v2607, %v3248
    %v3377 = vadd.f32 %v2608, %v3249
    %v3378 = vadd.f32 %v2609, %v3250
    %3379 = vset.pattern.permute.xlu0 4
    %3380 = vperm.xlu0 %3379, %v42
    %v3381 = vpop.permute.xlu0 %3380
    %3383 = vset.pattern.permute.xlu0 4
    %3384 = vperm.xlu0 %3383, %v43
    %v3385 = vpop.permute.xlu0 %3384
    %3387 = vset.pattern.permute.xlu0 4
    %3388 = vperm.xlu0 %3387, %v44
    %v3389 = vpop.permute.xlu0 %3388
    %3391 = vset.pattern.permute.xlu0 4
    %3392 = vperm.xlu0 %3391, %v45
    %v3393 = vpop.permute.xlu0 %3392
    %3395 = vset.pattern.permute.xlu0 4
    %3396 = vperm.xlu0 %3395, %v46
    %v3397 = vpop.permute.xlu0 %3396
    %3399 = vset.pattern.permute.xlu0 4
    %3400 = vperm.xlu0 %3399, %v47
    %v3401 = vpop.permute.xlu0 %3400
    %3403 = vset.pattern.permute.xlu0 4
    %3404 = vperm.xlu0 %3403, %v48
    %v3405 = vpop.permute.xlu0 %3404
    %3407 = vset.pattern.permute.xlu0 4
    %3408 = vperm.xlu0 %3407, %v49
    %v3409 = vpop.permute.xlu0 %3408
    %3411 = vset.pattern.permute.xlu0 4
    %3412 = vperm.xlu0 %3411, %v50
    %v3413 = vpop.permute.xlu0 %3412
    %3415 = vset.pattern.permute.xlu0 4
    %3416 = vperm.xlu0 %3415, %v51
    %v3417 = vpop.permute.xlu0 %3416
    %3419 = vset.pattern.permute.xlu0 4
    %3420 = vperm.xlu0 %3419, %v52
    %v3421 = vpop.permute.xlu0 %3420
    %3423 = vset.pattern.permute.xlu0 4
    %3424 = vperm.xlu0 %3423, %v53
    %v3425 = vpop.permute.xlu0 %3424
    %3427 = vset.pattern.permute.xlu0 4
    %3428 = vperm.xlu0 %3427, %v54
    %v3429 = vpop.permute.xlu0 %3428
    %3431 = vset.pattern.permute.xlu0 4
    %3432 = vperm.xlu0 %3431, %v55
    %v3433 = vpop.permute.xlu0 %3432
    %3435 = vset.pattern.permute.xlu0 4
    %3436 = vperm.xlu0 %3435, %v56
    %v3437 = vpop.permute.xlu0 %3436
    %3439 = vset.pattern.permute.xlu0 4
    %3440 = vperm.xlu0 %3439, %v57
    %v3441 = vpop.permute.xlu0 %3440
    %3443 = vset.pattern.permute.xlu0 4
    %3444 = vperm.xlu0 %3443, %v58
    %v3445 = vpop.permute.xlu0 %3444
    %3447 = vset.pattern.permute.xlu0 4
    %3448 = vperm.xlu0 %3447, %v59
    %v3449 = vpop.permute.xlu0 %3448
    %3451 = vset.pattern.permute.xlu0 4
    %3452 = vperm.xlu0 %3451, %v60
    %v3453 = vpop.permute.xlu0 %3452
    %3455 = vset.pattern.permute.xlu0 4
    %3456 = vperm.xlu0 %3455, %v61
    %v3457 = vpop.permute.xlu0 %3456
    %3459 = vset.pattern.permute.xlu0 4
    %3460 = vperm.xlu0 %3459, %v62
    %v3461 = vpop.permute.xlu0 %3460
    %3463 = vset.pattern.permute.xlu0 4
    %3464 = vperm.xlu0 %3463, %v63
    %v3465 = vpop.permute.xlu0 %3464
    %3467 = vset.pattern.permute.xlu0 4
    %3468 = vperm.xlu0 %3467, %v64
    %v3469 = vpop.permute.xlu0 %3468
    %3471 = vset.pattern.permute.xlu0 4
    %3472 = vperm.xlu0 %3471, %v65
    %v3473 = vpop.permute.xlu0 %3472
    %3475 = vset.pattern.permute.xlu0 4
    %3476 = vperm.xlu0 %3475, %v66
    %v3477 = vpop.permute.xlu0 %3476
    %3479 = vset.pattern.permute.xlu0 4
    %3480 = vperm.xlu0 %3479, %v67
    %v3481 = vpop.permute.xlu0 %3480
    %3483 = vset.pattern.permute.xlu0 4
    %3484 = vperm.xlu0 %3483, %v68
    %v3485 = vpop.permute.xlu0 %3484
    %3487 = vset.pattern.permute.xlu0 4
    %3488 = vperm.xlu0 %3487, %v69
    %v3489 = vpop.permute.xlu0 %3488
    %3491 = vset.pattern.permute.xlu0 4
    %3492 = vperm.xlu0 %3491, %v70
    %v3493 = vpop.permute.xlu0 %3492
    %3495 = vset.pattern.permute.xlu0 4
    %3496 = vperm.xlu0 %3495, %v71
    %v3497 = vpop.permute.xlu0 %3496
    %3499 = vset.pattern.permute.xlu0 4
    %3500 = vperm.xlu0 %3499, %v72
    %v3501 = vpop.permute.xlu0 %3500
    %3503 = vset.pattern.permute.xlu0 4
    %3504 = vperm.xlu0 %3503, %v73
    %v3505 = vpop.permute.xlu0 %3504
    %3507 = vset.pattern.permute.xlu0 4
    %3508 = vperm.xlu0 %3507, %v74
    %v3509 = vpop.permute.xlu0 %3508
    %3511 = vset.pattern.permute.xlu0 4
    %3512 = vperm.xlu0 %3511, %v75
    %v3513 = vpop.permute.xlu0 %3512
    %3515 = vset.pattern.permute.xlu0 4
    %3516 = vperm.xlu0 %3515, %v76
    %v3517 = vpop.permute.xlu0 %3516
    %3519 = vset.pattern.permute.xlu0 4
    %3520 = vperm.xlu0 %3519, %v77
    %v3521 = vpop.permute.xlu0 %3520
    %3523 = vset.pattern.permute.xlu0 4
    %3524 = vperm.xlu0 %3523, %v78
    %v3525 = vpop.permute.xlu0 %3524
    %3527 = vset.pattern.permute.xlu0 4
    %3528 = vperm.xlu0 %3527, %v79
    %v3529 = vpop.permute.xlu0 %3528
    %3531 = vset.pattern.permute.xlu0 4
    %3532 = vperm.xlu0 %3531, %v80
    %v3533 = vpop.permute.xlu0 %3532
    %3535 = vset.pattern.permute.xlu0 4
    %3536 = vperm.xlu0 %3535, %v81
    %v3537 = vpop.permute.xlu0 %3536
    %3539 = vset.pattern.permute.xlu0 4
    %3540 = vperm.xlu0 %3539, %v82
    %v3541 = vpop.permute.xlu0 %3540
    %3543 = vset.pattern.permute.xlu0 4
    %3544 = vperm.xlu0 %3543, %v83
    %v3545 = vpop.permute.xlu0 %3544
    %3547 = vset.pattern.permute.xlu0 4
    %3548 = vperm.xlu0 %3547, %v84
    %v3549 = vpop.permute.xlu0 %3548
    %3551 = vset.pattern.permute.xlu0 4
    %3552 = vperm.xlu0 %3551, %v85
    %v3553 = vpop.permute.xlu0 %3552
    %3555 = vset.pattern.permute.xlu0 4
    %3556 = vperm.xlu0 %3555, %v86
    %v3557 = vpop.permute.xlu0 %3556
    %3559 = vset.pattern.permute.xlu0 4
    %3560 = vperm.xlu0 %3559, %v87
    %v3561 = vpop.permute.xlu0 %3560
    %3563 = vset.pattern.permute.xlu0 4
    %3564 = vperm.xlu0 %3563, %v88
    %v3565 = vpop.permute.xlu0 %3564
    %3567 = vset.pattern.permute.xlu0 4
    %3568 = vperm.xlu0 %3567, %v89
    %v3569 = vpop.permute.xlu0 %3568
    %3571 = vset.pattern.permute.xlu0 4
    %3572 = vperm.xlu0 %3571, %v90
    %v3573 = vpop.permute.xlu0 %3572
    %3575 = vset.pattern.permute.xlu0 4
    %3576 = vperm.xlu0 %3575, %v91
    %v3577 = vpop.permute.xlu0 %3576
    %3579 = vset.pattern.permute.xlu0 4
    %3580 = vperm.xlu0 %3579, %v92
    %v3581 = vpop.permute.xlu0 %3580
    %3583 = vset.pattern.permute.xlu0 4
    %3584 = vperm.xlu0 %3583, %v93
    %v3585 = vpop.permute.xlu0 %3584
    %3587 = vset.pattern.permute.xlu0 4
    %3588 = vperm.xlu0 %3587, %v94
    %v3589 = vpop.permute.xlu0 %3588
    %3591 = vset.pattern.permute.xlu0 4
    %3592 = vperm.xlu0 %3591, %v95
    %v3593 = vpop.permute.xlu0 %3592
    %3595 = vset.pattern.permute.xlu0 4
    %3596 = vperm.xlu0 %3595, %v96
    %v3597 = vpop.permute.xlu0 %3596
    %3599 = vset.pattern.permute.xlu0 4
    %3600 = vperm.xlu0 %3599, %v97
    %v3601 = vpop.permute.xlu0 %3600
    %3603 = vset.pattern.permute.xlu0 4
    %3604 = vperm.xlu0 %3603, %v98
    %v3605 = vpop.permute.xlu0 %3604
    %3607 = vset.pattern.permute.xlu0 4
    %3608 = vperm.xlu0 %3607, %v99
    %v3609 = vpop.permute.xlu0 %3608
    %3611 = vset.pattern.permute.xlu0 4
    %3612 = vperm.xlu0 %3611, %v100
    %v3613 = vpop.permute.xlu0 %3612
    %3615 = vset.pattern.permute.xlu0 4
    %3616 = vperm.xlu0 %3615, %v101
    %v3617 = vpop.permute.xlu0 %3616
    %3619 = vset.pattern.permute.xlu0 4
    %3620 = vperm.xlu0 %3619, %v102
    %v3621 = vpop.permute.xlu0 %3620
    %3623 = vset.pattern.permute.xlu0 4
    %3624 = vperm.xlu0 %3623, %v103
    %v3625 = vpop.permute.xlu0 %3624
    %3627 = vset.pattern.permute.xlu0 4
    %3628 = vperm.xlu0 %3627, %v104
    %v3629 = vpop.permute.xlu0 %3628
    %3631 = vset.pattern.permute.xlu0 4
    %3632 = vperm.xlu0 %3631, %v105
    %v3633 = vpop.permute.xlu0 %3632
    %3635 = vset.pattern.permute.xlu0 4
    %3636 = vperm.xlu0 %3635, %v106
    %v3637 = vpop.permute.xlu0 %3636
    %3639 = vset.pattern.permute.xlu0 4
    %3640 = vperm.xlu0 %3639, %v107
    %v3641 = vpop.permute.xlu0 %3640
    %3643 = vset.pattern.permute.xlu0 4
    %3644 = vperm.xlu0 %3643, %v108
    %v3645 = vpop.permute.xlu0 %3644
    %3647 = vset.pattern.permute.xlu0 4
    %3648 = vperm.xlu0 %3647, %v109
    %v3649 = vpop.permute.xlu0 %3648
    %3651 = vset.pattern.permute.xlu0 4
    %3652 = vperm.xlu0 %3651, %v110
    %v3653 = vpop.permute.xlu0 %3652
    %3655 = vset.pattern.permute.xlu0 4
    %3656 = vperm.xlu0 %3655, %v111
    %v3657 = vpop.permute.xlu0 %3656
    %3659 = vset.pattern.permute.xlu0 4
    %3660 = vperm.xlu0 %3659, %v112
    %v3661 = vpop.permute.xlu0 %3660
    %3663 = vset.pattern.permute.xlu0 4
    %3664 = vperm.xlu0 %3663, %v113
    %v3665 = vpop.permute.xlu0 %3664
    %3667 = vset.pattern.permute.xlu0 4
    %3668 = vperm.xlu0 %3667, %v114
    %v3669 = vpop.permute.xlu0 %3668
    %3671 = vset.pattern.permute.xlu0 4
    %3672 = vperm.xlu0 %3671, %v115
    %v3673 = vpop.permute.xlu0 %3672
    %3675 = vset.pattern.permute.xlu0 4
    %3676 = vperm.xlu0 %3675, %v116
    %v3677 = vpop.permute.xlu0 %3676
    %3679 = vset.pattern.permute.xlu0 4
    %3680 = vperm.xlu0 %3679, %v117
    %v3681 = vpop.permute.xlu0 %3680
    %3683 = vset.pattern.permute.xlu0 4
    %3684 = vperm.xlu0 %3683, %v118
    %v3685 = vpop.permute.xlu0 %3684
    %3687 = vset.pattern.permute.xlu0 4
    %3688 = vperm.xlu0 %3687, %v119
    %v3689 = vpop.permute.xlu0 %3688
    %3691 = vset.pattern.permute.xlu0 4
    %3692 = vperm.xlu0 %3691, %v120
    %v3693 = vpop.permute.xlu0 %3692
    %3695 = vset.pattern.permute.xlu0 4
    %3696 = vperm.xlu0 %3695, %v121
    %v3697 = vpop.permute.xlu0 %3696
    %3699 = vset.pattern.permute.xlu0 4
    %3700 = vperm.xlu0 %3699, %v122
    %v3701 = vpop.permute.xlu0 %3700
    %3703 = vset.pattern.permute.xlu0 4
    %3704 = vperm.xlu0 %3703, %v123
    %v3705 = vpop.permute.xlu0 %3704
    %3707 = vset.pattern.permute.xlu0 4
    %3708 = vperm.xlu0 %3707, %v124
    %v3709 = vpop.permute.xlu0 %3708
    %3711 = vset.pattern.permute.xlu0 4
    %3712 = vperm.xlu0 %3711, %v125
    %v3713 = vpop.permute.xlu0 %3712
    %3715 = vset.pattern.permute.xlu0 4
    %3716 = vperm.xlu0 %3715, %v126
    %v3717 = vpop.permute.xlu0 %3716
    %3719 = vset.pattern.permute.xlu0 4
    %3720 = vperm.xlu0 %3719, %v127
    %v3721 = vpop.permute.xlu0 %3720
    %3723 = vset.pattern.permute.xlu0 4
    %3724 = vperm.xlu0 %3723, %v128
    %v3725 = vpop.permute.xlu0 %3724
    %3727 = vset.pattern.permute.xlu0 4
    %3728 = vperm.xlu0 %3727, %v129
    %v3729 = vpop.permute.xlu0 %3728
    %3731 = vset.pattern.permute.xlu0 4
    %3732 = vperm.xlu0 %3731, %v130
    %v3733 = vpop.permute.xlu0 %3732
    %3735 = vset.pattern.permute.xlu0 4
    %3736 = vperm.xlu0 %3735, %v131
    %v3737 = vpop.permute.xlu0 %3736
    %3739 = vset.pattern.permute.xlu0 4
    %3740 = vperm.xlu0 %3739, %v132
    %v3741 = vpop.permute.xlu0 %3740
    %3743 = vset.pattern.permute.xlu0 4
    %3744 = vperm.xlu0 %3743, %v133
    %v3745 = vpop.permute.xlu0 %3744
    %3747 = vset.pattern.permute.xlu0 4
    %3748 = vperm.xlu0 %3747, %v134
    %v3749 = vpop.permute.xlu0 %3748
    %3751 = vset.pattern.permute.xlu0 4
    %3752 = vperm.xlu0 %3751, %v135
    %v3753 = vpop.permute.xlu0 %3752
    %3755 = vset.pattern.permute.xlu0 4
    %3756 = vperm.xlu0 %3755, %v136
    %v3757 = vpop.permute.xlu0 %3756
    %3759 = vset.pattern.permute.xlu0 4
    %3760 = vperm.xlu0 %3759, %v137
    %v3761 = vpop.permute.xlu0 %3760
    %3763 = vset.pattern.permute.xlu0 4
    %3764 = vperm.xlu0 %3763, %v138
    %v3765 = vpop.permute.xlu0 %3764
    %3767 = vset.pattern.permute.xlu0 4
    %3768 = vperm.xlu0 %3767, %v139
    %v3769 = vpop.permute.xlu0 %3768
    %3771 = vset.pattern.permute.xlu0 4
    %3772 = vperm.xlu0 %3771, %v140
    %v3773 = vpop.permute.xlu0 %3772
    %3775 = vset.pattern.permute.xlu0 4
    %3776 = vperm.xlu0 %3775, %v141
    %v3777 = vpop.permute.xlu0 %3776
    %3779 = vset.pattern.permute.xlu0 4
    %3780 = vperm.xlu0 %3779, %v142
    %v3781 = vpop.permute.xlu0 %3780
    %3783 = vset.pattern.permute.xlu0 4
    %3784 = vperm.xlu0 %3783, %v143
    %v3785 = vpop.permute.xlu0 %3784
    %3787 = vset.pattern.permute.xlu0 4
    %3788 = vperm.xlu0 %3787, %v144
    %v3789 = vpop.permute.xlu0 %3788
    %3791 = vset.pattern.permute.xlu0 4
    %3792 = vperm.xlu0 %3791, %v145
    %v3793 = vpop.permute.xlu0 %3792
    %3795 = vset.pattern.permute.xlu0 4
    %3796 = vperm.xlu0 %3795, %v146
    %v3797 = vpop.permute.xlu0 %3796
    %3799 = vset.pattern.permute.xlu0 4
    %3800 = vperm.xlu0 %3799, %v147
    %v3801 = vpop.permute.xlu0 %3800
    %3803 = vset.pattern.permute.xlu0 4
    %3804 = vperm.xlu0 %3803, %v148
    %v3805 = vpop.permute.xlu0 %3804
    %3807 = vset.pattern.permute.xlu0 4
    %3808 = vperm.xlu0 %3807, %v149
    %v3809 = vpop.permute.xlu0 %3808
    %3811 = vset.pattern.permute.xlu0 4
    %3812 = vperm.xlu0 %3811, %v150
    %v3813 = vpop.permute.xlu0 %3812
    %3815 = vset.pattern.permute.xlu0 4
    %3816 = vperm.xlu0 %3815, %v151
    %v3817 = vpop.permute.xlu0 %3816
    %3819 = vset.pattern.permute.xlu0 4
    %3820 = vperm.xlu0 %3819, %v152
    %v3821 = vpop.permute.xlu0 %3820
    %3823 = vset.pattern.permute.xlu0 4
    %3824 = vperm.xlu0 %3823, %v153
    %v3825 = vpop.permute.xlu0 %3824
    %3827 = vset.pattern.permute.xlu0 4
    %3828 = vperm.xlu0 %3827, %v154
    %v3829 = vpop.permute.xlu0 %3828
    %3831 = vset.pattern.permute.xlu0 4
    %3832 = vperm.xlu0 %3831, %v155
    %v3833 = vpop.permute.xlu0 %3832
    %3835 = vset.pattern.permute.xlu0 4
    %3836 = vperm.xlu0 %3835, %v156
    %v3837 = vpop.permute.xlu0 %3836
    %3839 = vset.pattern.permute.xlu0 4
    %3840 = vperm.xlu0 %3839, %v157
    %v3841 = vpop.permute.xlu0 %3840
    %3843 = vset.pattern.permute.xlu0 4
    %3844 = vperm.xlu0 %3843, %v158
    %v3845 = vpop.permute.xlu0 %3844
    %3847 = vset.pattern.permute.xlu0 4
    %3848 = vperm.xlu0 %3847, %v159
    %v3849 = vpop.permute.xlu0 %3848
    %3851 = vset.pattern.permute.xlu0 4
    %3852 = vperm.xlu0 %3851, %v160
    %v3853 = vpop.permute.xlu0 %3852
    %3855 = vset.pattern.permute.xlu0 4
    %3856 = vperm.xlu0 %3855, %v161
    %v3857 = vpop.permute.xlu0 %3856
    %3859 = vset.pattern.permute.xlu0 4
    %3860 = vperm.xlu0 %3859, %v162
    %v3861 = vpop.permute.xlu0 %3860
    %3863 = vset.pattern.permute.xlu0 4
    %3864 = vperm.xlu0 %3863, %v163
    %v3865 = vpop.permute.xlu0 %3864
    %3867 = vset.pattern.permute.xlu0 4
    %3868 = vperm.xlu0 %3867, %v164
    %v3869 = vpop.permute.xlu0 %3868
    %3871 = vset.pattern.permute.xlu0 4
    %3872 = vperm.xlu0 %3871, %v165
    %v3873 = vpop.permute.xlu0 %3872
    %3875 = vset.pattern.permute.xlu0 4
    %3876 = vperm.xlu0 %3875, %v166
    %v3877 = vpop.permute.xlu0 %3876
    %3879 = vset.pattern.permute.xlu0 4
    %3880 = vperm.xlu0 %3879, %v167
    %v3881 = vpop.permute.xlu0 %3880
    %3883 = vset.pattern.permute.xlu0 4
    %3884 = vperm.xlu0 %3883, %v168
    %v3885 = vpop.permute.xlu0 %3884
    %3887 = vset.pattern.permute.xlu0 4
    %3888 = vperm.xlu0 %3887, %v169
    %v3889 = vpop.permute.xlu0 %3888
    %v3891 = vperm.slane %v170, 4
    %v3892 = vmul.f32 %v3381, %v3891
    %v3893 = vmul.f32 %v3385, %v3891
    %v3894 = vmul.f32 %v3389, %v3891
    %v3895 = vmul.f32 %v3393, %v3891
    %v3896 = vmul.f32 %v3397, %v3891
    %v3897 = vmul.f32 %v3401, %v3891
    %v3898 = vmul.f32 %v3405, %v3891
    %v3899 = vmul.f32 %v3409, %v3891
    %v3900 = vmul.f32 %v3413, %v3891
    %v3901 = vmul.f32 %v3417, %v3891
    %v3902 = vmul.f32 %v3421, %v3891
    %v3903 = vmul.f32 %v3425, %v3891
    %v3904 = vmul.f32 %v3429, %v3891
    %v3905 = vmul.f32 %v3433, %v3891
    %v3906 = vmul.f32 %v3437, %v3891
    %v3907 = vmul.f32 %v3441, %v3891
    %v3908 = vmul.f32 %v3445, %v3891
    %v3909 = vmul.f32 %v3449, %v3891
    %v3910 = vmul.f32 %v3453, %v3891
    %v3911 = vmul.f32 %v3457, %v3891
    %v3912 = vmul.f32 %v3461, %v3891
    %v3913 = vmul.f32 %v3465, %v3891
    %v3914 = vmul.f32 %v3469, %v3891
    %v3915 = vmul.f32 %v3473, %v3891
    %v3916 = vmul.f32 %v3477, %v3891
    %v3917 = vmul.f32 %v3481, %v3891
    %v3918 = vmul.f32 %v3485, %v3891
    %v3919 = vmul.f32 %v3489, %v3891
    %v3920 = vmul.f32 %v3493, %v3891
    %v3921 = vmul.f32 %v3497, %v3891
    %v3922 = vmul.f32 %v3501, %v3891
    %v3923 = vmul.f32 %v3505, %v3891
    %v3924 = vmul.f32 %v3509, %v3891
    %v3925 = vmul.f32 %v3513, %v3891
    %v3926 = vmul.f32 %v3517, %v3891
    %v3927 = vmul.f32 %v3521, %v3891
    %v3928 = vmul.f32 %v3525, %v3891
    %v3929 = vmul.f32 %v3529, %v3891
    %v3930 = vmul.f32 %v3533, %v3891
    %v3931 = vmul.f32 %v3537, %v3891
    %v3932 = vmul.f32 %v3541, %v3891
    %v3933 = vmul.f32 %v3545, %v3891
    %v3934 = vmul.f32 %v3549, %v3891
    %v3935 = vmul.f32 %v3553, %v3891
    %v3936 = vmul.f32 %v3557, %v3891
    %v3937 = vmul.f32 %v3561, %v3891
    %v3938 = vmul.f32 %v3565, %v3891
    %v3939 = vmul.f32 %v3569, %v3891
    %v3940 = vmul.f32 %v3573, %v3891
    %v3941 = vmul.f32 %v3577, %v3891
    %v3942 = vmul.f32 %v3581, %v3891
    %v3943 = vmul.f32 %v3585, %v3891
    %v3944 = vmul.f32 %v3589, %v3891
    %v3945 = vmul.f32 %v3593, %v3891
    %v3946 = vmul.f32 %v3597, %v3891
    %v3947 = vmul.f32 %v3601, %v3891
    %v3948 = vmul.f32 %v3605, %v3891
    %v3949 = vmul.f32 %v3609, %v3891
    %v3950 = vmul.f32 %v3613, %v3891
    %v3951 = vmul.f32 %v3617, %v3891
    %v3952 = vmul.f32 %v3621, %v3891
    %v3953 = vmul.f32 %v3625, %v3891
    %v3954 = vmul.f32 %v3629, %v3891
    %v3955 = vmul.f32 %v3633, %v3891
    %v3956 = vmul.f32 %v3637, %v3891
    %v3957 = vmul.f32 %v3641, %v3891
    %v3958 = vmul.f32 %v3645, %v3891
    %v3959 = vmul.f32 %v3649, %v3891
    %v3960 = vmul.f32 %v3653, %v3891
    %v3961 = vmul.f32 %v3657, %v3891
    %v3962 = vmul.f32 %v3661, %v3891
    %v3963 = vmul.f32 %v3665, %v3891
    %v3964 = vmul.f32 %v3669, %v3891
    %v3965 = vmul.f32 %v3673, %v3891
    %v3966 = vmul.f32 %v3677, %v3891
    %v3967 = vmul.f32 %v3681, %v3891
    %v3968 = vmul.f32 %v3685, %v3891
    %v3969 = vmul.f32 %v3689, %v3891
    %v3970 = vmul.f32 %v3693, %v3891
    %v3971 = vmul.f32 %v3697, %v3891
    %v3972 = vmul.f32 %v3701, %v3891
    %v3973 = vmul.f32 %v3705, %v3891
    %v3974 = vmul.f32 %v3709, %v3891
    %v3975 = vmul.f32 %v3713, %v3891
    %v3976 = vmul.f32 %v3717, %v3891
    %v3977 = vmul.f32 %v3721, %v3891
    %v3978 = vmul.f32 %v3725, %v3891
    %v3979 = vmul.f32 %v3729, %v3891
    %v3980 = vmul.f32 %v3733, %v3891
    %v3981 = vmul.f32 %v3737, %v3891
    %v3982 = vmul.f32 %v3741, %v3891
    %v3983 = vmul.f32 %v3745, %v3891
    %v3984 = vmul.f32 %v3749, %v3891
    %v3985 = vmul.f32 %v3753, %v3891
    %v3986 = vmul.f32 %v3757, %v3891
    %v3987 = vmul.f32 %v3761, %v3891
    %v3988 = vmul.f32 %v3765, %v3891
    %v3989 = vmul.f32 %v3769, %v3891
    %v3990 = vmul.f32 %v3773, %v3891
    %v3991 = vmul.f32 %v3777, %v3891
    %v3992 = vmul.f32 %v3781, %v3891
    %v3993 = vmul.f32 %v3785, %v3891
    %v3994 = vmul.f32 %v3789, %v3891
    %v3995 = vmul.f32 %v3793, %v3891
    %v3996 = vmul.f32 %v3797, %v3891
    %v3997 = vmul.f32 %v3801, %v3891
    %v3998 = vmul.f32 %v3805, %v3891
    %v3999 = vmul.f32 %v3809, %v3891
    %v4000 = vmul.f32 %v3813, %v3891
    %v4001 = vmul.f32 %v3817, %v3891
    %v4002 = vmul.f32 %v3821, %v3891
    %v4003 = vmul.f32 %v3825, %v3891
    %v4004 = vmul.f32 %v3829, %v3891
    %v4005 = vmul.f32 %v3833, %v3891
    %v4006 = vmul.f32 %v3837, %v3891
    %v4007 = vmul.f32 %v3841, %v3891
    %v4008 = vmul.f32 %v3845, %v3891
    %v4009 = vmul.f32 %v3849, %v3891
    %v4010 = vmul.f32 %v3853, %v3891
    %v4011 = vmul.f32 %v3857, %v3891
    %v4012 = vmul.f32 %v3861, %v3891
    %v4013 = vmul.f32 %v3865, %v3891
    %v4014 = vmul.f32 %v3869, %v3891
    %v4015 = vmul.f32 %v3873, %v3891
    %v4016 = vmul.f32 %v3877, %v3891
    %v4017 = vmul.f32 %v3881, %v3891
    %v4018 = vmul.f32 %v3885, %v3891
    %v4019 = vmul.f32 %v3889, %v3891
    %v4020 = vadd.f32 %v3251, %v3892
    %v4021 = vadd.f32 %v3252, %v3893
    %v4022 = vadd.f32 %v3253, %v3894
    %v4023 = vadd.f32 %v3254, %v3895
    %v4024 = vadd.f32 %v3255, %v3896
    %v4025 = vadd.f32 %v3256, %v3897
    %v4026 = vadd.f32 %v3257, %v3898
    %v4027 = vadd.f32 %v3258, %v3899
    %v4028 = vadd.f32 %v3259, %v3900
    %v4029 = vadd.f32 %v3260, %v3901
    %v4030 = vadd.f32 %v3261, %v3902
    %v4031 = vadd.f32 %v3262, %v3903
    %v4032 = vadd.f32 %v3263, %v3904
    %v4033 = vadd.f32 %v3264, %v3905
    %v4034 = vadd.f32 %v3265, %v3906
    %v4035 = vadd.f32 %v3266, %v3907
    %v4036 = vadd.f32 %v3267, %v3908
    %v4037 = vadd.f32 %v3268, %v3909
    %v4038 = vadd.f32 %v3269, %v3910
    %v4039 = vadd.f32 %v3270, %v3911
    %v4040 = vadd.f32 %v3271, %v3912
    %v4041 = vadd.f32 %v3272, %v3913
    %v4042 = vadd.f32 %v3273, %v3914
    %v4043 = vadd.f32 %v3274, %v3915
    %v4044 = vadd.f32 %v3275, %v3916
    %v4045 = vadd.f32 %v3276, %v3917
    %v4046 = vadd.f32 %v3277, %v3918
    %v4047 = vadd.f32 %v3278, %v3919
    %v4048 = vadd.f32 %v3279, %v3920
    %v4049 = vadd.f32 %v3280, %v3921
    %v4050 = vadd.f32 %v3281, %v3922
    %v4051 = vadd.f32 %v3282, %v3923
    %v4052 = vadd.f32 %v3283, %v3924
    %v4053 = vadd.f32 %v3284, %v3925
    %v4054 = vadd.f32 %v3285, %v3926
    %v4055 = vadd.f32 %v3286, %v3927
    %v4056 = vadd.f32 %v3287, %v3928
    %v4057 = vadd.f32 %v3288, %v3929
    %v4058 = vadd.f32 %v3289, %v3930
    %v4059 = vadd.f32 %v3290, %v3931
    %v4060 = vadd.f32 %v3291, %v3932
    %v4061 = vadd.f32 %v3292, %v3933
    %v4062 = vadd.f32 %v3293, %v3934
    %v4063 = vadd.f32 %v3294, %v3935
    %v4064 = vadd.f32 %v3295, %v3936
    %v4065 = vadd.f32 %v3296, %v3937
    %v4066 = vadd.f32 %v3297, %v3938
    %v4067 = vadd.f32 %v3298, %v3939
    %v4068 = vadd.f32 %v3299, %v3940
    %v4069 = vadd.f32 %v3300, %v3941
    %v4070 = vadd.f32 %v3301, %v3942
    %v4071 = vadd.f32 %v3302, %v3943
    %v4072 = vadd.f32 %v3303, %v3944
    %v4073 = vadd.f32 %v3304, %v3945
    %v4074 = vadd.f32 %v3305, %v3946
    %v4075 = vadd.f32 %v3306, %v3947
    %v4076 = vadd.f32 %v3307, %v3948
    %v4077 = vadd.f32 %v3308, %v3949
    %v4078 = vadd.f32 %v3309, %v3950
    %v4079 = vadd.f32 %v3310, %v3951
    %v4080 = vadd.f32 %v3311, %v3952
    %v4081 = vadd.f32 %v3312, %v3953
    %v4082 = vadd.f32 %v3313, %v3954
    %v4083 = vadd.f32 %v3314, %v3955
    %v4084 = vadd.f32 %v3315, %v3956
    %v4085 = vadd.f32 %v3316, %v3957
    %v4086 = vadd.f32 %v3317, %v3958
    %v4087 = vadd.f32 %v3318, %v3959
    %v4088 = vadd.f32 %v3319, %v3960
    %v4089 = vadd.f32 %v3320, %v3961
    %v4090 = vadd.f32 %v3321, %v3962
    %v4091 = vadd.f32 %v3322, %v3963
    %v4092 = vadd.f32 %v3323, %v3964
    %v4093 = vadd.f32 %v3324, %v3965
    %v4094 = vadd.f32 %v3325, %v3966
    %v4095 = vadd.f32 %v3326, %v3967
    %v4096 = vadd.f32 %v3327, %v3968
    %v4097 = vadd.f32 %v3328, %v3969
    %v4098 = vadd.f32 %v3329, %v3970
    %v4099 = vadd.f32 %v3330, %v3971
    %v4100 = vadd.f32 %v3331, %v3972
    %v4101 = vadd.f32 %v3332, %v3973
    %v4102 = vadd.f32 %v3333, %v3974
    %v4103 = vadd.f32 %v3334, %v3975
    %v4104 = vadd.f32 %v3335, %v3976
    %v4105 = vadd.f32 %v3336, %v3977
    %v4106 = vadd.f32 %v3337, %v3978
    %v4107 = vadd.f32 %v3338, %v3979
    %v4108 = vadd.f32 %v3339, %v3980
    %v4109 = vadd.f32 %v3340, %v3981
    %v4110 = vadd.f32 %v3341, %v3982
    %v4111 = vadd.f32 %v3342, %v3983
    %v4112 = vadd.f32 %v3343, %v3984
    %v4113 = vadd.f32 %v3344, %v3985
    %v4114 = vadd.f32 %v3345, %v3986
    %v4115 = vadd.f32 %v3346, %v3987
    %v4116 = vadd.f32 %v3347, %v3988
    %v4117 = vadd.f32 %v3348, %v3989
    %v4118 = vadd.f32 %v3349, %v3990
    %v4119 = vadd.f32 %v3350, %v3991
    %v4120 = vadd.f32 %v3351, %v3992
    %v4121 = vadd.f32 %v3352, %v3993
    %v4122 = vadd.f32 %v3353, %v3994
    %v4123 = vadd.f32 %v3354, %v3995
    %v4124 = vadd.f32 %v3355, %v3996
    %v4125 = vadd.f32 %v3356, %v3997
    %v4126 = vadd.f32 %v3357, %v3998
    %v4127 = vadd.f32 %v3358, %v3999
    %v4128 = vadd.f32 %v3359, %v4000
    %v4129 = vadd.f32 %v3360, %v4001
    %v4130 = vadd.f32 %v3361, %v4002
    %v4131 = vadd.f32 %v3362, %v4003
    %v4132 = vadd.f32 %v3363, %v4004
    %v4133 = vadd.f32 %v3364, %v4005
    %v4134 = vadd.f32 %v3365, %v4006
    %v4135 = vadd.f32 %v3366, %v4007
    %v4136 = vadd.f32 %v3367, %v4008
    %v4137 = vadd.f32 %v3368, %v4009
    %v4138 = vadd.f32 %v3369, %v4010
    %v4139 = vadd.f32 %v3370, %v4011
    %v4140 = vadd.f32 %v3371, %v4012
    %v4141 = vadd.f32 %v3372, %v4013
    %v4142 = vadd.f32 %v3373, %v4014
    %v4143 = vadd.f32 %v3374, %v4015
    %v4144 = vadd.f32 %v3375, %v4016
    %v4145 = vadd.f32 %v3376, %v4017
    %v4146 = vadd.f32 %v3377, %v4018
    %v4147 = vadd.f32 %v3378, %v4019
    %4148 = vset.pattern.permute.xlu0 5
    %4149 = vperm.xlu0 %4148, %v42
    %v4150 = vpop.permute.xlu0 %4149
    %4152 = vset.pattern.permute.xlu0 5
    %4153 = vperm.xlu0 %4152, %v43
    %v4154 = vpop.permute.xlu0 %4153
    %4156 = vset.pattern.permute.xlu0 5
    %4157 = vperm.xlu0 %4156, %v44
    %v4158 = vpop.permute.xlu0 %4157
    %4160 = vset.pattern.permute.xlu0 5
    %4161 = vperm.xlu0 %4160, %v45
    %v4162 = vpop.permute.xlu0 %4161
    %4164 = vset.pattern.permute.xlu0 5
    %4165 = vperm.xlu0 %4164, %v46
    %v4166 = vpop.permute.xlu0 %4165
    %4168 = vset.pattern.permute.xlu0 5
    %4169 = vperm.xlu0 %4168, %v47
    %v4170 = vpop.permute.xlu0 %4169
    %4172 = vset.pattern.permute.xlu0 5
    %4173 = vperm.xlu0 %4172, %v48
    %v4174 = vpop.permute.xlu0 %4173
    %4176 = vset.pattern.permute.xlu0 5
    %4177 = vperm.xlu0 %4176, %v49
    %v4178 = vpop.permute.xlu0 %4177
    %4180 = vset.pattern.permute.xlu0 5
    %4181 = vperm.xlu0 %4180, %v50
    %v4182 = vpop.permute.xlu0 %4181
    %4184 = vset.pattern.permute.xlu0 5
    %4185 = vperm.xlu0 %4184, %v51
    %v4186 = vpop.permute.xlu0 %4185
    %4188 = vset.pattern.permute.xlu0 5
    %4189 = vperm.xlu0 %4188, %v52
    %v4190 = vpop.permute.xlu0 %4189
    %4192 = vset.pattern.permute.xlu0 5
    %4193 = vperm.xlu0 %4192, %v53
    %v4194 = vpop.permute.xlu0 %4193
    %4196 = vset.pattern.permute.xlu0 5
    %4197 = vperm.xlu0 %4196, %v54
    %v4198 = vpop.permute.xlu0 %4197
    %4200 = vset.pattern.permute.xlu0 5
    %4201 = vperm.xlu0 %4200, %v55
    %v4202 = vpop.permute.xlu0 %4201
    %4204 = vset.pattern.permute.xlu0 5
    %4205 = vperm.xlu0 %4204, %v56
    %v4206 = vpop.permute.xlu0 %4205
    %4208 = vset.pattern.permute.xlu0 5
    %4209 = vperm.xlu0 %4208, %v57
    %v4210 = vpop.permute.xlu0 %4209
    %4212 = vset.pattern.permute.xlu0 5
    %4213 = vperm.xlu0 %4212, %v58
    %v4214 = vpop.permute.xlu0 %4213
    %4216 = vset.pattern.permute.xlu0 5
    %4217 = vperm.xlu0 %4216, %v59
    %v4218 = vpop.permute.xlu0 %4217
    %4220 = vset.pattern.permute.xlu0 5
    %4221 = vperm.xlu0 %4220, %v60
    %v4222 = vpop.permute.xlu0 %4221
    %4224 = vset.pattern.permute.xlu0 5
    %4225 = vperm.xlu0 %4224, %v61
    %v4226 = vpop.permute.xlu0 %4225
    %4228 = vset.pattern.permute.xlu0 5
    %4229 = vperm.xlu0 %4228, %v62
    %v4230 = vpop.permute.xlu0 %4229
    %4232 = vset.pattern.permute.xlu0 5
    %4233 = vperm.xlu0 %4232, %v63
    %v4234 = vpop.permute.xlu0 %4233
    %4236 = vset.pattern.permute.xlu0 5
    %4237 = vperm.xlu0 %4236, %v64
    %v4238 = vpop.permute.xlu0 %4237
    %4240 = vset.pattern.permute.xlu0 5
    %4241 = vperm.xlu0 %4240, %v65
    %v4242 = vpop.permute.xlu0 %4241
    %4244 = vset.pattern.permute.xlu0 5
    %4245 = vperm.xlu0 %4244, %v66
    %v4246 = vpop.permute.xlu0 %4245
    %4248 = vset.pattern.permute.xlu0 5
    %4249 = vperm.xlu0 %4248, %v67
    %v4250 = vpop.permute.xlu0 %4249
    %4252 = vset.pattern.permute.xlu0 5
    %4253 = vperm.xlu0 %4252, %v68
    %v4254 = vpop.permute.xlu0 %4253
    %4256 = vset.pattern.permute.xlu0 5
    %4257 = vperm.xlu0 %4256, %v69
    %v4258 = vpop.permute.xlu0 %4257
    %4260 = vset.pattern.permute.xlu0 5
    %4261 = vperm.xlu0 %4260, %v70
    %v4262 = vpop.permute.xlu0 %4261
    %4264 = vset.pattern.permute.xlu0 5
    %4265 = vperm.xlu0 %4264, %v71
    %v4266 = vpop.permute.xlu0 %4265
    %4268 = vset.pattern.permute.xlu0 5
    %4269 = vperm.xlu0 %4268, %v72
    %v4270 = vpop.permute.xlu0 %4269
    %4272 = vset.pattern.permute.xlu0 5
    %4273 = vperm.xlu0 %4272, %v73
    %v4274 = vpop.permute.xlu0 %4273
    %4276 = vset.pattern.permute.xlu0 5
    %4277 = vperm.xlu0 %4276, %v74
    %v4278 = vpop.permute.xlu0 %4277
    %4280 = vset.pattern.permute.xlu0 5
    %4281 = vperm.xlu0 %4280, %v75
    %v4282 = vpop.permute.xlu0 %4281
    %4284 = vset.pattern.permute.xlu0 5
    %4285 = vperm.xlu0 %4284, %v76
    %v4286 = vpop.permute.xlu0 %4285
    %4288 = vset.pattern.permute.xlu0 5
    %4289 = vperm.xlu0 %4288, %v77
    %v4290 = vpop.permute.xlu0 %4289
    %4292 = vset.pattern.permute.xlu0 5
    %4293 = vperm.xlu0 %4292, %v78
    %v4294 = vpop.permute.xlu0 %4293
    %4296 = vset.pattern.permute.xlu0 5
    %4297 = vperm.xlu0 %4296, %v79
    %v4298 = vpop.permute.xlu0 %4297
    %4300 = vset.pattern.permute.xlu0 5
    %4301 = vperm.xlu0 %4300, %v80
    %v4302 = vpop.permute.xlu0 %4301
    %4304 = vset.pattern.permute.xlu0 5
    %4305 = vperm.xlu0 %4304, %v81
    %v4306 = vpop.permute.xlu0 %4305
    %4308 = vset.pattern.permute.xlu0 5
    %4309 = vperm.xlu0 %4308, %v82
    %v4310 = vpop.permute.xlu0 %4309
    %4312 = vset.pattern.permute.xlu0 5
    %4313 = vperm.xlu0 %4312, %v83
    %v4314 = vpop.permute.xlu0 %4313
    %4316 = vset.pattern.permute.xlu0 5
    %4317 = vperm.xlu0 %4316, %v84
    %v4318 = vpop.permute.xlu0 %4317
    %4320 = vset.pattern.permute.xlu0 5
    %4321 = vperm.xlu0 %4320, %v85
    %v4322 = vpop.permute.xlu0 %4321
    %4324 = vset.pattern.permute.xlu0 5
    %4325 = vperm.xlu0 %4324, %v86
    %v4326 = vpop.permute.xlu0 %4325
    %4328 = vset.pattern.permute.xlu0 5
    %4329 = vperm.xlu0 %4328, %v87
    %v4330 = vpop.permute.xlu0 %4329
    %4332 = vset.pattern.permute.xlu0 5
    %4333 = vperm.xlu0 %4332, %v88
    %v4334 = vpop.permute.xlu0 %4333
    %4336 = vset.pattern.permute.xlu0 5
    %4337 = vperm.xlu0 %4336, %v89
    %v4338 = vpop.permute.xlu0 %4337
    %4340 = vset.pattern.permute.xlu0 5
    %4341 = vperm.xlu0 %4340, %v90
    %v4342 = vpop.permute.xlu0 %4341
    %4344 = vset.pattern.permute.xlu0 5
    %4345 = vperm.xlu0 %4344, %v91
    %v4346 = vpop.permute.xlu0 %4345
    %4348 = vset.pattern.permute.xlu0 5
    %4349 = vperm.xlu0 %4348, %v92
    %v4350 = vpop.permute.xlu0 %4349
    %4352 = vset.pattern.permute.xlu0 5
    %4353 = vperm.xlu0 %4352, %v93
    %v4354 = vpop.permute.xlu0 %4353
    %4356 = vset.pattern.permute.xlu0 5
    %4357 = vperm.xlu0 %4356, %v94
    %v4358 = vpop.permute.xlu0 %4357
    %4360 = vset.pattern.permute.xlu0 5
    %4361 = vperm.xlu0 %4360, %v95
    %v4362 = vpop.permute.xlu0 %4361
    %4364 = vset.pattern.permute.xlu0 5
    %4365 = vperm.xlu0 %4364, %v96
    %v4366 = vpop.permute.xlu0 %4365
    %4368 = vset.pattern.permute.xlu0 5
    %4369 = vperm.xlu0 %4368, %v97
    %v4370 = vpop.permute.xlu0 %4369
    %4372 = vset.pattern.permute.xlu0 5
    %4373 = vperm.xlu0 %4372, %v98
    %v4374 = vpop.permute.xlu0 %4373
    %4376 = vset.pattern.permute.xlu0 5
    %4377 = vperm.xlu0 %4376, %v99
    %v4378 = vpop.permute.xlu0 %4377
    %4380 = vset.pattern.permute.xlu0 5
    %4381 = vperm.xlu0 %4380, %v100
    %v4382 = vpop.permute.xlu0 %4381
    %4384 = vset.pattern.permute.xlu0 5
    %4385 = vperm.xlu0 %4384, %v101
    %v4386 = vpop.permute.xlu0 %4385
    %4388 = vset.pattern.permute.xlu0 5
    %4389 = vperm.xlu0 %4388, %v102
    %v4390 = vpop.permute.xlu0 %4389
    %4392 = vset.pattern.permute.xlu0 5
    %4393 = vperm.xlu0 %4392, %v103
    %v4394 = vpop.permute.xlu0 %4393
    %4396 = vset.pattern.permute.xlu0 5
    %4397 = vperm.xlu0 %4396, %v104
    %v4398 = vpop.permute.xlu0 %4397
    %4400 = vset.pattern.permute.xlu0 5
    %4401 = vperm.xlu0 %4400, %v105
    %v4402 = vpop.permute.xlu0 %4401
    %4404 = vset.pattern.permute.xlu0 5
    %4405 = vperm.xlu0 %4404, %v106
    %v4406 = vpop.permute.xlu0 %4405
    %4408 = vset.pattern.permute.xlu0 5
    %4409 = vperm.xlu0 %4408, %v107
    %v4410 = vpop.permute.xlu0 %4409
    %4412 = vset.pattern.permute.xlu0 5
    %4413 = vperm.xlu0 %4412, %v108
    %v4414 = vpop.permute.xlu0 %4413
    %4416 = vset.pattern.permute.xlu0 5
    %4417 = vperm.xlu0 %4416, %v109
    %v4418 = vpop.permute.xlu0 %4417
    %4420 = vset.pattern.permute.xlu0 5
    %4421 = vperm.xlu0 %4420, %v110
    %v4422 = vpop.permute.xlu0 %4421
    %4424 = vset.pattern.permute.xlu0 5
    %4425 = vperm.xlu0 %4424, %v111
    %v4426 = vpop.permute.xlu0 %4425
    %4428 = vset.pattern.permute.xlu0 5
    %4429 = vperm.xlu0 %4428, %v112
    %v4430 = vpop.permute.xlu0 %4429
    %4432 = vset.pattern.permute.xlu0 5
    %4433 = vperm.xlu0 %4432, %v113
    %v4434 = vpop.permute.xlu0 %4433
    %4436 = vset.pattern.permute.xlu0 5
    %4437 = vperm.xlu0 %4436, %v114
    %v4438 = vpop.permute.xlu0 %4437
    %4440 = vset.pattern.permute.xlu0 5
    %4441 = vperm.xlu0 %4440, %v115
    %v4442 = vpop.permute.xlu0 %4441
    %4444 = vset.pattern.permute.xlu0 5
    %4445 = vperm.xlu0 %4444, %v116
    %v4446 = vpop.permute.xlu0 %4445
    %4448 = vset.pattern.permute.xlu0 5
    %4449 = vperm.xlu0 %4448, %v117
    %v4450 = vpop.permute.xlu0 %4449
    %4452 = vset.pattern.permute.xlu0 5
    %4453 = vperm.xlu0 %4452, %v118
    %v4454 = vpop.permute.xlu0 %4453
    %4456 = vset.pattern.permute.xlu0 5
    %4457 = vperm.xlu0 %4456, %v119
    %v4458 = vpop.permute.xlu0 %4457
    %4460 = vset.pattern.permute.xlu0 5
    %4461 = vperm.xlu0 %4460, %v120
    %v4462 = vpop.permute.xlu0 %4461
    %4464 = vset.pattern.permute.xlu0 5
    %4465 = vperm.xlu0 %4464, %v121
    %v4466 = vpop.permute.xlu0 %4465
    %4468 = vset.pattern.permute.xlu0 5
    %4469 = vperm.xlu0 %4468, %v122
    %v4470 = vpop.permute.xlu0 %4469
    %4472 = vset.pattern.permute.xlu0 5
    %4473 = vperm.xlu0 %4472, %v123
    %v4474 = vpop.permute.xlu0 %4473
    %4476 = vset.pattern.permute.xlu0 5
    %4477 = vperm.xlu0 %4476, %v124
    %v4478 = vpop.permute.xlu0 %4477
    %4480 = vset.pattern.permute.xlu0 5
    %4481 = vperm.xlu0 %4480, %v125
    %v4482 = vpop.permute.xlu0 %4481
    %4484 = vset.pattern.permute.xlu0 5
    %4485 = vperm.xlu0 %4484, %v126
    %v4486 = vpop.permute.xlu0 %4485
    %4488 = vset.pattern.permute.xlu0 5
    %4489 = vperm.xlu0 %4488, %v127
    %v4490 = vpop.permute.xlu0 %4489
    %4492 = vset.pattern.permute.xlu0 5
    %4493 = vperm.xlu0 %4492, %v128
    %v4494 = vpop.permute.xlu0 %4493
    %4496 = vset.pattern.permute.xlu0 5
    %4497 = vperm.xlu0 %4496, %v129
    %v4498 = vpop.permute.xlu0 %4497
    %4500 = vset.pattern.permute.xlu0 5
    %4501 = vperm.xlu0 %4500, %v130
    %v4502 = vpop.permute.xlu0 %4501
    %4504 = vset.pattern.permute.xlu0 5
    %4505 = vperm.xlu0 %4504, %v131
    %v4506 = vpop.permute.xlu0 %4505
    %4508 = vset.pattern.permute.xlu0 5
    %4509 = vperm.xlu0 %4508, %v132
    %v4510 = vpop.permute.xlu0 %4509
    %4512 = vset.pattern.permute.xlu0 5
    %4513 = vperm.xlu0 %4512, %v133
    %v4514 = vpop.permute.xlu0 %4513
    %4516 = vset.pattern.permute.xlu0 5
    %4517 = vperm.xlu0 %4516, %v134
    %v4518 = vpop.permute.xlu0 %4517
    %4520 = vset.pattern.permute.xlu0 5
    %4521 = vperm.xlu0 %4520, %v135
    %v4522 = vpop.permute.xlu0 %4521
    %4524 = vset.pattern.permute.xlu0 5
    %4525 = vperm.xlu0 %4524, %v136
    %v4526 = vpop.permute.xlu0 %4525
    %4528 = vset.pattern.permute.xlu0 5
    %4529 = vperm.xlu0 %4528, %v137
    %v4530 = vpop.permute.xlu0 %4529
    %4532 = vset.pattern.permute.xlu0 5
    %4533 = vperm.xlu0 %4532, %v138
    %v4534 = vpop.permute.xlu0 %4533
    %4536 = vset.pattern.permute.xlu0 5
    %4537 = vperm.xlu0 %4536, %v139
    %v4538 = vpop.permute.xlu0 %4537
    %4540 = vset.pattern.permute.xlu0 5
    %4541 = vperm.xlu0 %4540, %v140
    %v4542 = vpop.permute.xlu0 %4541
    %4544 = vset.pattern.permute.xlu0 5
    %4545 = vperm.xlu0 %4544, %v141
    %v4546 = vpop.permute.xlu0 %4545
    %4548 = vset.pattern.permute.xlu0 5
    %4549 = vperm.xlu0 %4548, %v142
    %v4550 = vpop.permute.xlu0 %4549
    %4552 = vset.pattern.permute.xlu0 5
    %4553 = vperm.xlu0 %4552, %v143
    %v4554 = vpop.permute.xlu0 %4553
    %4556 = vset.pattern.permute.xlu0 5
    %4557 = vperm.xlu0 %4556, %v144
    %v4558 = vpop.permute.xlu0 %4557
    %4560 = vset.pattern.permute.xlu0 5
    %4561 = vperm.xlu0 %4560, %v145
    %v4562 = vpop.permute.xlu0 %4561
    %4564 = vset.pattern.permute.xlu0 5
    %4565 = vperm.xlu0 %4564, %v146
    %v4566 = vpop.permute.xlu0 %4565
    %4568 = vset.pattern.permute.xlu0 5
    %4569 = vperm.xlu0 %4568, %v147
    %v4570 = vpop.permute.xlu0 %4569
    %4572 = vset.pattern.permute.xlu0 5
    %4573 = vperm.xlu0 %4572, %v148
    %v4574 = vpop.permute.xlu0 %4573
    %4576 = vset.pattern.permute.xlu0 5
    %4577 = vperm.xlu0 %4576, %v149
    %v4578 = vpop.permute.xlu0 %4577
    %4580 = vset.pattern.permute.xlu0 5
    %4581 = vperm.xlu0 %4580, %v150
    %v4582 = vpop.permute.xlu0 %4581
    %4584 = vset.pattern.permute.xlu0 5
    %4585 = vperm.xlu0 %4584, %v151
    %v4586 = vpop.permute.xlu0 %4585
    %4588 = vset.pattern.permute.xlu0 5
    %4589 = vperm.xlu0 %4588, %v152
    %v4590 = vpop.permute.xlu0 %4589
    %4592 = vset.pattern.permute.xlu0 5
    %4593 = vperm.xlu0 %4592, %v153
    %v4594 = vpop.permute.xlu0 %4593
    %4596 = vset.pattern.permute.xlu0 5
    %4597 = vperm.xlu0 %4596, %v154
    %v4598 = vpop.permute.xlu0 %4597
    %4600 = vset.pattern.permute.xlu0 5
    %4601 = vperm.xlu0 %4600, %v155
    %v4602 = vpop.permute.xlu0 %4601
    %4604 = vset.pattern.permute.xlu0 5
    %4605 = vperm.xlu0 %4604, %v156
    %v4606 = vpop.permute.xlu0 %4605
    %4608 = vset.pattern.permute.xlu0 5
    %4609 = vperm.xlu0 %4608, %v157
    %v4610 = vpop.permute.xlu0 %4609
    %4612 = vset.pattern.permute.xlu0 5
    %4613 = vperm.xlu0 %4612, %v158
    %v4614 = vpop.permute.xlu0 %4613
    %4616 = vset.pattern.permute.xlu0 5
    %4617 = vperm.xlu0 %4616, %v159
    %v4618 = vpop.permute.xlu0 %4617
    %4620 = vset.pattern.permute.xlu0 5
    %4621 = vperm.xlu0 %4620, %v160
    %v4622 = vpop.permute.xlu0 %4621
    %4624 = vset.pattern.permute.xlu0 5
    %4625 = vperm.xlu0 %4624, %v161
    %v4626 = vpop.permute.xlu0 %4625
    %4628 = vset.pattern.permute.xlu0 5
    %4629 = vperm.xlu0 %4628, %v162
    %v4630 = vpop.permute.xlu0 %4629
    %4632 = vset.pattern.permute.xlu0 5
    %4633 = vperm.xlu0 %4632, %v163
    %v4634 = vpop.permute.xlu0 %4633
    %4636 = vset.pattern.permute.xlu0 5
    %4637 = vperm.xlu0 %4636, %v164
    %v4638 = vpop.permute.xlu0 %4637
    %4640 = vset.pattern.permute.xlu0 5
    %4641 = vperm.xlu0 %4640, %v165
    %v4642 = vpop.permute.xlu0 %4641
    %4644 = vset.pattern.permute.xlu0 5
    %4645 = vperm.xlu0 %4644, %v166
    %v4646 = vpop.permute.xlu0 %4645
    %4648 = vset.pattern.permute.xlu0 5
    %4649 = vperm.xlu0 %4648, %v167
    %v4650 = vpop.permute.xlu0 %4649
    %4652 = vset.pattern.permute.xlu0 5
    %4653 = vperm.xlu0 %4652, %v168
    %v4654 = vpop.permute.xlu0 %4653
    %4656 = vset.pattern.permute.xlu0 5
    %4657 = vperm.xlu0 %4656, %v169
    %v4658 = vpop.permute.xlu0 %4657
    %v4660 = vperm.slane %v170, 5
    %v4661 = vmul.f32 %v4150, %v4660
    %v4662 = vmul.f32 %v4154, %v4660
    %v4663 = vmul.f32 %v4158, %v4660
    %v4664 = vmul.f32 %v4162, %v4660
    %v4665 = vmul.f32 %v4166, %v4660
    %v4666 = vmul.f32 %v4170, %v4660
    %v4667 = vmul.f32 %v4174, %v4660
    %v4668 = vmul.f32 %v4178, %v4660
    %v4669 = vmul.f32 %v4182, %v4660
    %v4670 = vmul.f32 %v4186, %v4660
    %v4671 = vmul.f32 %v4190, %v4660
    %v4672 = vmul.f32 %v4194, %v4660
    %v4673 = vmul.f32 %v4198, %v4660
    %v4674 = vmul.f32 %v4202, %v4660
    %v4675 = vmul.f32 %v4206, %v4660
    %v4676 = vmul.f32 %v4210, %v4660
    %v4677 = vmul.f32 %v4214, %v4660
    %v4678 = vmul.f32 %v4218, %v4660
    %v4679 = vmul.f32 %v4222, %v4660
    %v4680 = vmul.f32 %v4226, %v4660
    %v4681 = vmul.f32 %v4230, %v4660
    %v4682 = vmul.f32 %v4234, %v4660
    %v4683 = vmul.f32 %v4238, %v4660
    %v4684 = vmul.f32 %v4242, %v4660
    %v4685 = vmul.f32 %v4246, %v4660
    %v4686 = vmul.f32 %v4250, %v4660
    %v4687 = vmul.f32 %v4254, %v4660
    %v4688 = vmul.f32 %v4258, %v4660
    %v4689 = vmul.f32 %v4262, %v4660
    %v4690 = vmul.f32 %v4266, %v4660
    %v4691 = vmul.f32 %v4270, %v4660
    %v4692 = vmul.f32 %v4274, %v4660
    %v4693 = vmul.f32 %v4278, %v4660
    %v4694 = vmul.f32 %v4282, %v4660
    %v4695 = vmul.f32 %v4286, %v4660
    %v4696 = vmul.f32 %v4290, %v4660
    %v4697 = vmul.f32 %v4294, %v4660
    %v4698 = vmul.f32 %v4298, %v4660
    %v4699 = vmul.f32 %v4302, %v4660
    %v4700 = vmul.f32 %v4306, %v4660
    %v4701 = vmul.f32 %v4310, %v4660
    %v4702 = vmul.f32 %v4314, %v4660
    %v4703 = vmul.f32 %v4318, %v4660
    %v4704 = vmul.f32 %v4322, %v4660
    %v4705 = vmul.f32 %v4326, %v4660
    %v4706 = vmul.f32 %v4330, %v4660
    %v4707 = vmul.f32 %v4334, %v4660
    %v4708 = vmul.f32 %v4338, %v4660
    %v4709 = vmul.f32 %v4342, %v4660
    %v4710 = vmul.f32 %v4346, %v4660
    %v4711 = vmul.f32 %v4350, %v4660
    %v4712 = vmul.f32 %v4354, %v4660
    %v4713 = vmul.f32 %v4358, %v4660
    %v4714 = vmul.f32 %v4362, %v4660
    %v4715 = vmul.f32 %v4366, %v4660
    %v4716 = vmul.f32 %v4370, %v4660
    %v4717 = vmul.f32 %v4374, %v4660
    %v4718 = vmul.f32 %v4378, %v4660
    %v4719 = vmul.f32 %v4382, %v4660
    %v4720 = vmul.f32 %v4386, %v4660
    %v4721 = vmul.f32 %v4390, %v4660
    %v4722 = vmul.f32 %v4394, %v4660
    %v4723 = vmul.f32 %v4398, %v4660
    %v4724 = vmul.f32 %v4402, %v4660
    %v4725 = vmul.f32 %v4406, %v4660
    %v4726 = vmul.f32 %v4410, %v4660
    %v4727 = vmul.f32 %v4414, %v4660
    %v4728 = vmul.f32 %v4418, %v4660
    %v4729 = vmul.f32 %v4422, %v4660
    %v4730 = vmul.f32 %v4426, %v4660
    %v4731 = vmul.f32 %v4430, %v4660
    %v4732 = vmul.f32 %v4434, %v4660
    %v4733 = vmul.f32 %v4438, %v4660
    %v4734 = vmul.f32 %v4442, %v4660
    %v4735 = vmul.f32 %v4446, %v4660
    %v4736 = vmul.f32 %v4450, %v4660
    %v4737 = vmul.f32 %v4454, %v4660
    %v4738 = vmul.f32 %v4458, %v4660
    %v4739 = vmul.f32 %v4462, %v4660
    %v4740 = vmul.f32 %v4466, %v4660
    %v4741 = vmul.f32 %v4470, %v4660
    %v4742 = vmul.f32 %v4474, %v4660
    %v4743 = vmul.f32 %v4478, %v4660
    %v4744 = vmul.f32 %v4482, %v4660
    %v4745 = vmul.f32 %v4486, %v4660
    %v4746 = vmul.f32 %v4490, %v4660
    %v4747 = vmul.f32 %v4494, %v4660
    %v4748 = vmul.f32 %v4498, %v4660
    %v4749 = vmul.f32 %v4502, %v4660
    %v4750 = vmul.f32 %v4506, %v4660
    %v4751 = vmul.f32 %v4510, %v4660
    %v4752 = vmul.f32 %v4514, %v4660
    %v4753 = vmul.f32 %v4518, %v4660
    %v4754 = vmul.f32 %v4522, %v4660
    %v4755 = vmul.f32 %v4526, %v4660
    %v4756 = vmul.f32 %v4530, %v4660
    %v4757 = vmul.f32 %v4534, %v4660
    %v4758 = vmul.f32 %v4538, %v4660
    %v4759 = vmul.f32 %v4542, %v4660
    %v4760 = vmul.f32 %v4546, %v4660
    %v4761 = vmul.f32 %v4550, %v4660
    %v4762 = vmul.f32 %v4554, %v4660
    %v4763 = vmul.f32 %v4558, %v4660
    %v4764 = vmul.f32 %v4562, %v4660
    %v4765 = vmul.f32 %v4566, %v4660
    %v4766 = vmul.f32 %v4570, %v4660
    %v4767 = vmul.f32 %v4574, %v4660
    %v4768 = vmul.f32 %v4578, %v4660
    %v4769 = vmul.f32 %v4582, %v4660
    %v4770 = vmul.f32 %v4586, %v4660
    %v4771 = vmul.f32 %v4590, %v4660
    %v4772 = vmul.f32 %v4594, %v4660
    %v4773 = vmul.f32 %v4598, %v4660
    %v4774 = vmul.f32 %v4602, %v4660
    %v4775 = vmul.f32 %v4606, %v4660
    %v4776 = vmul.f32 %v4610, %v4660
    %v4777 = vmul.f32 %v4614, %v4660
    %v4778 = vmul.f32 %v4618, %v4660
    %v4779 = vmul.f32 %v4622, %v4660
    %v4780 = vmul.f32 %v4626, %v4660
    %v4781 = vmul.f32 %v4630, %v4660
    %v4782 = vmul.f32 %v4634, %v4660
    %v4783 = vmul.f32 %v4638, %v4660
    %v4784 = vmul.f32 %v4642, %v4660
    %v4785 = vmul.f32 %v4646, %v4660
    %v4786 = vmul.f32 %v4650, %v4660
    %v4787 = vmul.f32 %v4654, %v4660
    %v4788 = vmul.f32 %v4658, %v4660
    %v4789 = vadd.f32 %v4020, %v4661
    %v4790 = vadd.f32 %v4021, %v4662
    %v4791 = vadd.f32 %v4022, %v4663
    %v4792 = vadd.f32 %v4023, %v4664
    %v4793 = vadd.f32 %v4024, %v4665
    %v4794 = vadd.f32 %v4025, %v4666
    %v4795 = vadd.f32 %v4026, %v4667
    %v4796 = vadd.f32 %v4027, %v4668
    %v4797 = vadd.f32 %v4028, %v4669
    %v4798 = vadd.f32 %v4029, %v4670
    %v4799 = vadd.f32 %v4030, %v4671
    %v4800 = vadd.f32 %v4031, %v4672
    %v4801 = vadd.f32 %v4032, %v4673
    %v4802 = vadd.f32 %v4033, %v4674
    %v4803 = vadd.f32 %v4034, %v4675
    %v4804 = vadd.f32 %v4035, %v4676
    %v4805 = vadd.f32 %v4036, %v4677
    %v4806 = vadd.f32 %v4037, %v4678
    %v4807 = vadd.f32 %v4038, %v4679
    %v4808 = vadd.f32 %v4039, %v4680
    %v4809 = vadd.f32 %v4040, %v4681
    %v4810 = vadd.f32 %v4041, %v4682
    %v4811 = vadd.f32 %v4042, %v4683
    %v4812 = vadd.f32 %v4043, %v4684
    %v4813 = vadd.f32 %v4044, %v4685
    %v4814 = vadd.f32 %v4045, %v4686
    %v4815 = vadd.f32 %v4046, %v4687
    %v4816 = vadd.f32 %v4047, %v4688
    %v4817 = vadd.f32 %v4048, %v4689
    %v4818 = vadd.f32 %v4049, %v4690
    %v4819 = vadd.f32 %v4050, %v4691
    %v4820 = vadd.f32 %v4051, %v4692
    %v4821 = vadd.f32 %v4052, %v4693
    %v4822 = vadd.f32 %v4053, %v4694
    %v4823 = vadd.f32 %v4054, %v4695
    %v4824 = vadd.f32 %v4055, %v4696
    %v4825 = vadd.f32 %v4056, %v4697
    %v4826 = vadd.f32 %v4057, %v4698
    %v4827 = vadd.f32 %v4058, %v4699
    %v4828 = vadd.f32 %v4059, %v4700
    %v4829 = vadd.f32 %v4060, %v4701
    %v4830 = vadd.f32 %v4061, %v4702
    %v4831 = vadd.f32 %v4062, %v4703
    %v4832 = vadd.f32 %v4063, %v4704
    %v4833 = vadd.f32 %v4064, %v4705
    %v4834 = vadd.f32 %v4065, %v4706
    %v4835 = vadd.f32 %v4066, %v4707
    %v4836 = vadd.f32 %v4067, %v4708
    %v4837 = vadd.f32 %v4068, %v4709
    %v4838 = vadd.f32 %v4069, %v4710
    %v4839 = vadd.f32 %v4070, %v4711
    %v4840 = vadd.f32 %v4071, %v4712
    %v4841 = vadd.f32 %v4072, %v4713
    %v4842 = vadd.f32 %v4073, %v4714
    %v4843 = vadd.f32 %v4074, %v4715
    %v4844 = vadd.f32 %v4075, %v4716
    %v4845 = vadd.f32 %v4076, %v4717
    %v4846 = vadd.f32 %v4077, %v4718
    %v4847 = vadd.f32 %v4078, %v4719
    %v4848 = vadd.f32 %v4079, %v4720
    %v4849 = vadd.f32 %v4080, %v4721
    %v4850 = vadd.f32 %v4081, %v4722
    %v4851 = vadd.f32 %v4082, %v4723
    %v4852 = vadd.f32 %v4083, %v4724
    %v4853 = vadd.f32 %v4084, %v4725
    %v4854 = vadd.f32 %v4085, %v4726
    %v4855 = vadd.f32 %v4086, %v4727
    %v4856 = vadd.f32 %v4087, %v4728
    %v4857 = vadd.f32 %v4088, %v4729
    %v4858 = vadd.f32 %v4089, %v4730
    %v4859 = vadd.f32 %v4090, %v4731
    %v4860 = vadd.f32 %v4091, %v4732
    %v4861 = vadd.f32 %v4092, %v4733
    %v4862 = vadd.f32 %v4093, %v4734
    %v4863 = vadd.f32 %v4094, %v4735
    %v4864 = vadd.f32 %v4095, %v4736
    %v4865 = vadd.f32 %v4096, %v4737
    %v4866 = vadd.f32 %v4097, %v4738
    %v4867 = vadd.f32 %v4098, %v4739
    %v4868 = vadd.f32 %v4099, %v4740
    %v4869 = vadd.f32 %v4100, %v4741
    %v4870 = vadd.f32 %v4101, %v4742
    %v4871 = vadd.f32 %v4102, %v4743
    %v4872 = vadd.f32 %v4103, %v4744
    %v4873 = vadd.f32 %v4104, %v4745
    %v4874 = vadd.f32 %v4105, %v4746
    %v4875 = vadd.f32 %v4106, %v4747
    %v4876 = vadd.f32 %v4107, %v4748
    %v4877 = vadd.f32 %v4108, %v4749
    %v4878 = vadd.f32 %v4109, %v4750
    %v4879 = vadd.f32 %v4110, %v4751
    %v4880 = vadd.f32 %v4111, %v4752
    %v4881 = vadd.f32 %v4112, %v4753
    %v4882 = vadd.f32 %v4113, %v4754
    %v4883 = vadd.f32 %v4114, %v4755
    %v4884 = vadd.f32 %v4115, %v4756
    %v4885 = vadd.f32 %v4116, %v4757
    %v4886 = vadd.f32 %v4117, %v4758
    %v4887 = vadd.f32 %v4118, %v4759
    %v4888 = vadd.f32 %v4119, %v4760
    %v4889 = vadd.f32 %v4120, %v4761
    %v4890 = vadd.f32 %v4121, %v4762
    %v4891 = vadd.f32 %v4122, %v4763
    %v4892 = vadd.f32 %v4123, %v4764
    %v4893 = vadd.f32 %v4124, %v4765
    %v4894 = vadd.f32 %v4125, %v4766
    %v4895 = vadd.f32 %v4126, %v4767
    %v4896 = vadd.f32 %v4127, %v4768
    %v4897 = vadd.f32 %v4128, %v4769
    %v4898 = vadd.f32 %v4129, %v4770
    %v4899 = vadd.f32 %v4130, %v4771
    %v4900 = vadd.f32 %v4131, %v4772
    %v4901 = vadd.f32 %v4132, %v4773
    %v4902 = vadd.f32 %v4133, %v4774
    %v4903 = vadd.f32 %v4134, %v4775
    %v4904 = vadd.f32 %v4135, %v4776
    %v4905 = vadd.f32 %v4136, %v4777
    %v4906 = vadd.f32 %v4137, %v4778
    %v4907 = vadd.f32 %v4138, %v4779
    %v4908 = vadd.f32 %v4139, %v4780
    %v4909 = vadd.f32 %v4140, %v4781
    %v4910 = vadd.f32 %v4141, %v4782
    %v4911 = vadd.f32 %v4142, %v4783
    %v4912 = vadd.f32 %v4143, %v4784
    %v4913 = vadd.f32 %v4144, %v4785
    %v4914 = vadd.f32 %v4145, %v4786
    %v4915 = vadd.f32 %v4146, %v4787
    %v4916 = vadd.f32 %v4147, %v4788
    %v4917 = vmax.f32 %v4789, 0.0
    %v4918 = vmax.f32 %v4790, 0.0
    %v4919 = vmax.f32 %v4791, 0.0
    %v4920 = vmax.f32 %v4792, 0.0
    %v4921 = vmax.f32 %v4793, 0.0
    %v4922 = vmax.f32 %v4794, 0.0
    %v4923 = vmax.f32 %v4795, 0.0
    %v4924 = vmax.f32 %v4796, 0.0
    %v4925 = vmax.f32 %v4797, 0.0
    %v4926 = vmax.f32 %v4798, 0.0
    %v4927 = vmax.f32 %v4799, 0.0
    %v4928 = vmax.f32 %v4800, 0.0
    %v4929 = vmax.f32 %v4801, 0.0
    %v4930 = vmax.f32 %v4802, 0.0
    %v4931 = vmax.f32 %v4803, 0.0
    %v4932 = vmax.f32 %v4804, 0.0
    %v4933 = vmax.f32 %v4805, 0.0
    %v4934 = vmax.f32 %v4806, 0.0
    %v4935 = vmax.f32 %v4807, 0.0
    %v4936 = vmax.f32 %v4808, 0.0
    %v4937 = vmax.f32 %v4809, 0.0
    %v4938 = vmax.f32 %v4810, 0.0
    %v4939 = vmax.f32 %v4811, 0.0
    %v4940 = vmax.f32 %v4812, 0.0
    %v4941 = vmax.f32 %v4813, 0.0
    %v4942 = vmax.f32 %v4814, 0.0
    %v4943 = vmax.f32 %v4815, 0.0
    %v4944 = vmax.f32 %v4816, 0.0
    %v4945 = vmax.f32 %v4817, 0.0
    %v4946 = vmax.f32 %v4818, 0.0
    %v4947 = vmax.f32 %v4819, 0.0
    %v4948 = vmax.f32 %v4820, 0.0
    %v4949 = vmax.f32 %v4821, 0.0
    %v4950 = vmax.f32 %v4822, 0.0
    %v4951 = vmax.f32 %v4823, 0.0
    %v4952 = vmax.f32 %v4824, 0.0
    %v4953 = vmax.f32 %v4825, 0.0
    %v4954 = vmax.f32 %v4826, 0.0
    %v4955 = vmax.f32 %v4827, 0.0
    %v4956 = vmax.f32 %v4828, 0.0
    %v4957 = vmax.f32 %v4829, 0.0
    %v4958 = vmax.f32 %v4830, 0.0
    %v4959 = vmax.f32 %v4831, 0.0
    %v4960 = vmax.f32 %v4832, 0.0
    %v4961 = vmax.f32 %v4833, 0.0
    %v4962 = vmax.f32 %v4834, 0.0
    %v4963 = vmax.f32 %v4835, 0.0
    %v4964 = vmax.f32 %v4836, 0.0
    %v4965 = vmax.f32 %v4837, 0.0
    %v4966 = vmax.f32 %v4838, 0.0
    %v4967 = vmax.f32 %v4839, 0.0
    %v4968 = vmax.f32 %v4840, 0.0
    %v4969 = vmax.f32 %v4841, 0.0
    %v4970 = vmax.f32 %v4842, 0.0
    %v4971 = vmax.f32 %v4843, 0.0
    %v4972 = vmax.f32 %v4844, 0.0
    %v4973 = vmax.f32 %v4845, 0.0
    %v4974 = vmax.f32 %v4846, 0.0
    %v4975 = vmax.f32 %v4847, 0.0
    %v4976 = vmax.f32 %v4848, 0.0
    %v4977 = vmax.f32 %v4849, 0.0
    %v4978 = vmax.f32 %v4850, 0.0
    %v4979 = vmax.f32 %v4851, 0.0
    %v4980 = vmax.f32 %v4852, 0.0
    %v4981 = vmax.f32 %v4853, 0.0
    %v4982 = vmax.f32 %v4854, 0.0
    %v4983 = vmax.f32 %v4855, 0.0
    %v4984 = vmax.f32 %v4856, 0.0
    %v4985 = vmax.f32 %v4857, 0.0
    %v4986 = vmax.f32 %v4858, 0.0
    %v4987 = vmax.f32 %v4859, 0.0
    %v4988 = vmax.f32 %v4860, 0.0
    %v4989 = vmax.f32 %v4861, 0.0
    %v4990 = vmax.f32 %v4862, 0.0
    %v4991 = vmax.f32 %v4863, 0.0
    %v4992 = vmax.f32 %v4864, 0.0
    %v4993 = vmax.f32 %v4865, 0.0
    %v4994 = vmax.f32 %v4866, 0.0
    %v4995 = vmax.f32 %v4867, 0.0
    %v4996 = vmax.f32 %v4868, 0.0
    %v4997 = vmax.f32 %v4869, 0.0
    %v4998 = vmax.f32 %v4870, 0.0
    %v4999 = vmax.f32 %v4871, 0.0
    %v5000 = vmax.f32 %v4872, 0.0
    %v5001 = vmax.f32 %v4873, 0.0
    %v5002 = vmax.f32 %v4874, 0.0
    %v5003 = vmax.f32 %v4875, 0.0
    %v5004 = vmax.f32 %v4876, 0.0
    %v5005 = vmax.f32 %v4877, 0.0
    %v5006 = vmax.f32 %v4878, 0.0
    %v5007 = vmax.f32 %v4879, 0.0
    %v5008 = vmax.f32 %v4880, 0.0
    %v5009 = vmax.f32 %v4881, 0.0
    %v5010 = vmax.f32 %v4882, 0.0
    %v5011 = vmax.f32 %v4883, 0.0
    %v5012 = vmax.f32 %v4884, 0.0
    %v5013 = vmax.f32 %v4885, 0.0
    %v5014 = vmax.f32 %v4886, 0.0
    %v5015 = vmax.f32 %v4887, 0.0
    %v5016 = vmax.f32 %v4888, 0.0
    %v5017 = vmax.f32 %v4889, 0.0
    %v5018 = vmax.f32 %v4890, 0.0
    %v5019 = vmax.f32 %v4891, 0.0
    %v5020 = vmax.f32 %v4892, 0.0
    %v5021 = vmax.f32 %v4893, 0.0
    %v5022 = vmax.f32 %v4894, 0.0
    %v5023 = vmax.f32 %v4895, 0.0
    %v5024 = vmax.f32 %v4896, 0.0
    %v5025 = vmax.f32 %v4897, 0.0
    %v5026 = vmax.f32 %v4898, 0.0
    %v5027 = vmax.f32 %v4899, 0.0
    %v5028 = vmax.f32 %v4900, 0.0
    %v5029 = vmax.f32 %v4901, 0.0
    %v5030 = vmax.f32 %v4902, 0.0
    %v5031 = vmax.f32 %v4903, 0.0
    %v5032 = vmax.f32 %v4904, 0.0
    %v5033 = vmax.f32 %v4905, 0.0
    %v5034 = vmax.f32 %v4906, 0.0
    %v5035 = vmax.f32 %v4907, 0.0
    %v5036 = vmax.f32 %v4908, 0.0
    %v5037 = vmax.f32 %v4909, 0.0
    %v5038 = vmax.f32 %v4910, 0.0
    %v5039 = vmax.f32 %v4911, 0.0
    %v5040 = vmax.f32 %v4912, 0.0
    %v5041 = vmax.f32 %v4913, 0.0
    %v5042 = vmax.f32 %v4914, 0.0
    %v5043 = vmax.f32 %v4915, 0.0
    %v5044 = vmax.f32 %v4916, 0.0
    %v5045 = vpack.c.bf16 %v4917, %v4917
    %v5046 = vpack.c.bf16 %v4918, %v4918
    %v5047 = vpack.c.bf16 %v4919, %v4919
    %v5048 = vpack.c.bf16 %v4920, %v4920
    %v5049 = vpack.c.bf16 %v4921, %v4921
    %v5050 = vpack.c.bf16 %v4922, %v4922
    %v5051 = vpack.c.bf16 %v4923, %v4923
    %v5052 = vpack.c.bf16 %v4924, %v4924
    %v5053 = vpack.c.bf16 %v4925, %v4925
    %v5054 = vpack.c.bf16 %v4926, %v4926
    %v5055 = vpack.c.bf16 %v4927, %v4927
    %v5056 = vpack.c.bf16 %v4928, %v4928
    %v5057 = vpack.c.bf16 %v4929, %v4929
    %v5058 = vpack.c.bf16 %v4930, %v4930
    %v5059 = vpack.c.bf16 %v4931, %v4931
    %v5060 = vpack.c.bf16 %v4932, %v4932
    %v5061 = vpack.c.bf16 %v4933, %v4933
    %v5062 = vpack.c.bf16 %v4934, %v4934
    %v5063 = vpack.c.bf16 %v4935, %v4935
    %v5064 = vpack.c.bf16 %v4936, %v4936
    %v5065 = vpack.c.bf16 %v4937, %v4937
    %v5066 = vpack.c.bf16 %v4938, %v4938
    %v5067 = vpack.c.bf16 %v4939, %v4939
    %v5068 = vpack.c.bf16 %v4940, %v4940
    %v5069 = vpack.c.bf16 %v4941, %v4941
    %v5070 = vpack.c.bf16 %v4942, %v4942
    %v5071 = vpack.c.bf16 %v4943, %v4943
    %v5072 = vpack.c.bf16 %v4944, %v4944
    %v5073 = vpack.c.bf16 %v4945, %v4945
    %v5074 = vpack.c.bf16 %v4946, %v4946
    %v5075 = vpack.c.bf16 %v4947, %v4947
    %v5076 = vpack.c.bf16 %v4948, %v4948
    %v5077 = vpack.c.bf16 %v4949, %v4949
    %v5078 = vpack.c.bf16 %v4950, %v4950
    %v5079 = vpack.c.bf16 %v4951, %v4951
    %v5080 = vpack.c.bf16 %v4952, %v4952
    %v5081 = vpack.c.bf16 %v4953, %v4953
    %v5082 = vpack.c.bf16 %v4954, %v4954
    %v5083 = vpack.c.bf16 %v4955, %v4955
    %v5084 = vpack.c.bf16 %v4956, %v4956
    %v5085 = vpack.c.bf16 %v4957, %v4957
    %v5086 = vpack.c.bf16 %v4958, %v4958
    %v5087 = vpack.c.bf16 %v4959, %v4959
    %v5088 = vpack.c.bf16 %v4960, %v4960
    %v5089 = vpack.c.bf16 %v4961, %v4961
    %v5090 = vpack.c.bf16 %v4962, %v4962
    %v5091 = vpack.c.bf16 %v4963, %v4963
    %v5092 = vpack.c.bf16 %v4964, %v4964
    %v5093 = vpack.c.bf16 %v4965, %v4965
    %v5094 = vpack.c.bf16 %v4966, %v4966
    %v5095 = vpack.c.bf16 %v4967, %v4967
    %v5096 = vpack.c.bf16 %v4968, %v4968
    %v5097 = vpack.c.bf16 %v4969, %v4969
    %v5098 = vpack.c.bf16 %v4970, %v4970
    %v5099 = vpack.c.bf16 %v4971, %v4971
    %v5100 = vpack.c.bf16 %v4972, %v4972
    %v5101 = vpack.c.bf16 %v4973, %v4973
    %v5102 = vpack.c.bf16 %v4974, %v4974
    %v5103 = vpack.c.bf16 %v4975, %v4975
    %v5104 = vpack.c.bf16 %v4976, %v4976
    %v5105 = vpack.c.bf16 %v4977, %v4977
    %v5106 = vpack.c.bf16 %v4978, %v4978
    %v5107 = vpack.c.bf16 %v4979, %v4979
    %v5108 = vpack.c.bf16 %v4980, %v4980
    %v5109 = vpack.c.bf16 %v4981, %v4981
    %v5110 = vpack.c.bf16 %v4982, %v4982
    %v5111 = vpack.c.bf16 %v4983, %v4983
    %v5112 = vpack.c.bf16 %v4984, %v4984
    %v5113 = vpack.c.bf16 %v4985, %v4985
    %v5114 = vpack.c.bf16 %v4986, %v4986
    %v5115 = vpack.c.bf16 %v4987, %v4987
    %v5116 = vpack.c.bf16 %v4988, %v4988
    %v5117 = vpack.c.bf16 %v4989, %v4989
    %v5118 = vpack.c.bf16 %v4990, %v4990
    %v5119 = vpack.c.bf16 %v4991, %v4991
    %v5120 = vpack.c.bf16 %v4992, %v4992
    %v5121 = vpack.c.bf16 %v4993, %v4993
    %v5122 = vpack.c.bf16 %v4994, %v4994
    %v5123 = vpack.c.bf16 %v4995, %v4995
    %v5124 = vpack.c.bf16 %v4996, %v4996
    %v5125 = vpack.c.bf16 %v4997, %v4997
    %v5126 = vpack.c.bf16 %v4998, %v4998
    %v5127 = vpack.c.bf16 %v4999, %v4999
    %v5128 = vpack.c.bf16 %v5000, %v5000
    %v5129 = vpack.c.bf16 %v5001, %v5001
    %v5130 = vpack.c.bf16 %v5002, %v5002
    %v5131 = vpack.c.bf16 %v5003, %v5003
    %v5132 = vpack.c.bf16 %v5004, %v5004
    %v5133 = vpack.c.bf16 %v5005, %v5005
    %v5134 = vpack.c.bf16 %v5006, %v5006
    %v5135 = vpack.c.bf16 %v5007, %v5007
    %v5136 = vpack.c.bf16 %v5008, %v5008
    %v5137 = vpack.c.bf16 %v5009, %v5009
    %v5138 = vpack.c.bf16 %v5010, %v5010
    %v5139 = vpack.c.bf16 %v5011, %v5011
    %v5140 = vpack.c.bf16 %v5012, %v5012
    %v5141 = vpack.c.bf16 %v5013, %v5013
    %v5142 = vpack.c.bf16 %v5014, %v5014
    %v5143 = vpack.c.bf16 %v5015, %v5015
    %v5144 = vpack.c.bf16 %v5016, %v5016
    %v5145 = vpack.c.bf16 %v5017, %v5017
    %v5146 = vpack.c.bf16 %v5018, %v5018
    %v5147 = vpack.c.bf16 %v5019, %v5019
    %v5148 = vpack.c.bf16 %v5020, %v5020
    %v5149 = vpack.c.bf16 %v5021, %v5021
    %v5150 = vpack.c.bf16 %v5022, %v5022
    %v5151 = vpack.c.bf16 %v5023, %v5023
    %v5152 = vpack.c.bf16 %v5024, %v5024
    %v5153 = vpack.c.bf16 %v5025, %v5025
    %v5154 = vpack.c.bf16 %v5026, %v5026
    %v5155 = vpack.c.bf16 %v5027, %v5027
    %v5156 = vpack.c.bf16 %v5028, %v5028
    %v5157 = vpack.c.bf16 %v5029, %v5029
    %v5158 = vpack.c.bf16 %v5030, %v5030
    %v5159 = vpack.c.bf16 %v5031, %v5031
    %v5160 = vpack.c.bf16 %v5032, %v5032
    %v5161 = vpack.c.bf16 %v5033, %v5033
    %v5162 = vpack.c.bf16 %v5034, %v5034
    %v5163 = vpack.c.bf16 %v5035, %v5035
    %v5164 = vpack.c.bf16 %v5036, %v5036
    %v5165 = vpack.c.bf16 %v5037, %v5037
    %v5166 = vpack.c.bf16 %v5038, %v5038
    %v5167 = vpack.c.bf16 %v5039, %v5039
    %v5168 = vpack.c.bf16 %v5040, %v5040
    %v5169 = vpack.c.bf16 %v5041, %v5041
    %v5170 = vpack.c.bf16 %v5042, %v5042
    %v5171 = vpack.c.bf16 %v5043, %v5043
    %v5172 = vpack.c.bf16 %v5044, %v5044
    %vm5173 = vcmask 257024
    %5174 = vst.msk [vmem:[%s3] sm:$0xf] %vm5173, %v5045
    %5175 = vst.msk [vmem:[%s3 + $0x4] sm:$0xf] %vm5173, %v5046
    %5176 = vst.msk [vmem:[%s3 + $0x8] sm:$0xf] %vm5173, %v5047
    %5177 = vst.msk [vmem:[%s3 + $0xc] sm:$0xf] %vm5173, %v5048
    %5178 = vst.msk [vmem:[%s3 + $0x10] sm:$0xf] %vm5173, %v5049
    %5179 = vst.msk [vmem:[%s3 + $0x14] sm:$0xf] %vm5173, %v5050
    %5180 = vst.msk [vmem:[%s3 + $0x18] sm:$0xf] %vm5173, %v5051
    %5181 = vst.msk [vmem:[%s3 + $0x1c] sm:$0xf] %vm5173, %v5052
    %5182 = vst.msk [vmem:[%s3 + $0x20] sm:$0xf] %vm5173, %v5053
    %5183 = vst.msk [vmem:[%s3 + $0x24] sm:$0xf] %vm5173, %v5054
    %5184 = vst.msk [vmem:[%s3 + $0x28] sm:$0xf] %vm5173, %v5055
    %5185 = vst.msk [vmem:[%s3 + $0x2c] sm:$0xf] %vm5173, %v5056
    %5186 = vst.msk [vmem:[%s3 + $0x30] sm:$0xf] %vm5173, %v5057
    %5187 = vst.msk [vmem:[%s3 + $0x34] sm:$0xf] %vm5173, %v5058
    %5188 = vst.msk [vmem:[%s3 + $0x38] sm:$0xf] %vm5173, %v5059
    %5189 = vst.msk [vmem:[%s3 + $0x3c] sm:$0xf] %vm5173, %v5060
    %5190 = vst.msk [vmem:[%s3 + $0x40] sm:$0xf] %vm5173, %v5061
    %5191 = vst.msk [vmem:[%s3 + $0x44] sm:$0xf] %vm5173, %v5062
    %5192 = vst.msk [vmem:[%s3 + $0x48] sm:$0xf] %vm5173, %v5063
    %5193 = vst.msk [vmem:[%s3 + $0x4c] sm:$0xf] %vm5173, %v5064
    %5194 = vst.msk [vmem:[%s3 + $0x50] sm:$0xf] %vm5173, %v5065
    %5195 = vst.msk [vmem:[%s3 + $0x54] sm:$0xf] %vm5173, %v5066
    %5196 = vst.msk [vmem:[%s3 + $0x58] sm:$0xf] %vm5173, %v5067
    %5197 = vst.msk [vmem:[%s3 + $0x5c] sm:$0xf] %vm5173, %v5068
    %5198 = vst.msk [vmem:[%s3 + $0x60] sm:$0xf] %vm5173, %v5069
    %5199 = vst.msk [vmem:[%s3 + $0x64] sm:$0xf] %vm5173, %v5070
    %5200 = vst.msk [vmem:[%s3 + $0x68] sm:$0xf] %vm5173, %v5071
    %5201 = vst.msk [vmem:[%s3 + $0x6c] sm:$0xf] %vm5173, %v5072
    %5202 = vst.msk [vmem:[%s3 + $0x70] sm:$0xf] %vm5173, %v5073
    %5203 = vst.msk [vmem:[%s3 + $0x74] sm:$0xf] %vm5173, %v5074
    %5204 = vst.msk [vmem:[%s3 + $0x78] sm:$0xf] %vm5173, %v5075
    %5205 = vst.msk [vmem:[%s3 + $0x7c] sm:$0xf] %vm5173, %v5076
    %5206 = vst.msk [vmem:[%s3 + $0x80] sm:$0xf] %vm5173, %v5077
    %5207 = vst.msk [vmem:[%s3 + $0x84] sm:$0xf] %vm5173, %v5078
    %5208 = vst.msk [vmem:[%s3 + $0x88] sm:$0xf] %vm5173, %v5079
    %5209 = vst.msk [vmem:[%s3 + $0x8c] sm:$0xf] %vm5173, %v5080
    %5210 = vst.msk [vmem:[%s3 + $0x90] sm:$0xf] %vm5173, %v5081
    %5211 = vst.msk [vmem:[%s3 + $0x94] sm:$0xf] %vm5173, %v5082
    %5212 = vst.msk [vmem:[%s3 + $0x98] sm:$0xf] %vm5173, %v5083
    %5213 = vst.msk [vmem:[%s3 + $0x9c] sm:$0xf] %vm5173, %v5084
    %5214 = vst.msk [vmem:[%s3 + $0xa0] sm:$0xf] %vm5173, %v5085
    %5215 = vst.msk [vmem:[%s3 + $0xa4] sm:$0xf] %vm5173, %v5086
    %5216 = vst.msk [vmem:[%s3 + $0xa8] sm:$0xf] %vm5173, %v5087
    %5217 = vst.msk [vmem:[%s3 + $0xac] sm:$0xf] %vm5173, %v5088
    %5218 = vst.msk [vmem:[%s3 + $0xb0] sm:$0xf] %vm5173, %v5089
    %5219 = vst.msk [vmem:[%s3 + $0xb4] sm:$0xf] %vm5173, %v5090
    %5220 = vst.msk [vmem:[%s3 + $0xb8] sm:$0xf] %vm5173, %v5091
    %5221 = vst.msk [vmem:[%s3 + $0xbc] sm:$0xf] %vm5173, %v5092
    %5222 = vst.msk [vmem:[%s3 + $0xc0] sm:$0xf] %vm5173, %v5093
    %5223 = vst.msk [vmem:[%s3 + $0xc4] sm:$0xf] %vm5173, %v5094
    %5224 = vst.msk [vmem:[%s3 + $0xc8] sm:$0xf] %vm5173, %v5095
    %5225 = vst.msk [vmem:[%s3 + $0xcc] sm:$0xf] %vm5173, %v5096
    %5226 = vst.msk [vmem:[%s3 + $0xd0] sm:$0xf] %vm5173, %v5097
    %5227 = vst.msk [vmem:[%s3 + $0xd4] sm:$0xf] %vm5173, %v5098
    %5228 = vst.msk [vmem:[%s3 + $0xd8] sm:$0xf] %vm5173, %v5099
    %5229 = vst.msk [vmem:[%s3 + $0xdc] sm:$0xf] %vm5173, %v5100
    %5230 = vst.msk [vmem:[%s3 + $0xe0] sm:$0xf] %vm5173, %v5101
    %5231 = vst.msk [vmem:[%s3 + $0xe4] sm:$0xf] %vm5173, %v5102
    %5232 = vst.msk [vmem:[%s3 + $0xe8] sm:$0xf] %vm5173, %v5103
    %5233 = vst.msk [vmem:[%s3 + $0xec] sm:$0xf] %vm5173, %v5104
    %5234 = vst.msk [vmem:[%s3 + $0xf0] sm:$0xf] %vm5173, %v5105
    %5235 = vst.msk [vmem:[%s3 + $0xf4] sm:$0xf] %vm5173, %v5106
    %5236 = vst.msk [vmem:[%s3 + $0xf8] sm:$0xf] %vm5173, %v5107
    %5237 = vst.msk [vmem:[%s3 + $0xfc] sm:$0xf] %vm5173, %v5108
    %5238 = vst.msk [vmem:[%s3 + $0x100] sm:$0xf] %vm5173, %v5109
    %5239 = vst.msk [vmem:[%s3 + $0x104] sm:$0xf] %vm5173, %v5110
    %5240 = vst.msk [vmem:[%s3 + $0x108] sm:$0xf] %vm5173, %v5111
    %5241 = vst.msk [vmem:[%s3 + $0x10c] sm:$0xf] %vm5173, %v5112
    %5242 = vst.msk [vmem:[%s3 + $0x110] sm:$0xf] %vm5173, %v5113
    %5243 = vst.msk [vmem:[%s3 + $0x114] sm:$0xf] %vm5173, %v5114
    %5244 = vst.msk [vmem:[%s3 + $0x118] sm:$0xf] %vm5173, %v5115
    %5245 = vst.msk [vmem:[%s3 + $0x11c] sm:$0xf] %vm5173, %v5116
    %5246 = vst.msk [vmem:[%s3 + $0x120] sm:$0xf] %vm5173, %v5117
    %5247 = vst.msk [vmem:[%s3 + $0x124] sm:$0xf] %vm5173, %v5118
    %5248 = vst.msk [vmem:[%s3 + $0x128] sm:$0xf] %vm5173, %v5119
    %5249 = vst.msk [vmem:[%s3 + $0x12c] sm:$0xf] %vm5173, %v5120
    %5250 = vst.msk [vmem:[%s3 + $0x130] sm:$0xf] %vm5173, %v5121
    %5251 = vst.msk [vmem:[%s3 + $0x134] sm:$0xf] %vm5173, %v5122
    %5252 = vst.msk [vmem:[%s3 + $0x138] sm:$0xf] %vm5173, %v5123
    %5253 = vst.msk [vmem:[%s3 + $0x13c] sm:$0xf] %vm5173, %v5124
    %5254 = vst.msk [vmem:[%s3 + $0x140] sm:$0xf] %vm5173, %v5125
    %5255 = vst.msk [vmem:[%s3 + $0x144] sm:$0xf] %vm5173, %v5126
    %5256 = vst.msk [vmem:[%s3 + $0x148] sm:$0xf] %vm5173, %v5127
    %5257 = vst.msk [vmem:[%s3 + $0x14c] sm:$0xf] %vm5173, %v5128
    %5258 = vst.msk [vmem:[%s3 + $0x150] sm:$0xf] %vm5173, %v5129
    %5259 = vst.msk [vmem:[%s3 + $0x154] sm:$0xf] %vm5173, %v5130
    %5260 = vst.msk [vmem:[%s3 + $0x158] sm:$0xf] %vm5173, %v5131
    %5261 = vst.msk [vmem:[%s3 + $0x15c] sm:$0xf] %vm5173, %v5132
    %5262 = vst.msk [vmem:[%s3 + $0x160] sm:$0xf] %vm5173, %v5133
    %5263 = vst.msk [vmem:[%s3 + $0x164] sm:$0xf] %vm5173, %v5134
    %5264 = vst.msk [vmem:[%s3 + $0x168] sm:$0xf] %vm5173, %v5135
    %5265 = vst.msk [vmem:[%s3 + $0x16c] sm:$0xf] %vm5173, %v5136
    %5266 = vst.msk [vmem:[%s3 + $0x170] sm:$0xf] %vm5173, %v5137
    %5267 = vst.msk [vmem:[%s3 + $0x174] sm:$0xf] %vm5173, %v5138
    %5268 = vst.msk [vmem:[%s3 + $0x178] sm:$0xf] %vm5173, %v5139
    %5269 = vst.msk [vmem:[%s3 + $0x17c] sm:$0xf] %vm5173, %v5140
    %5270 = vst.msk [vmem:[%s3 + $0x180] sm:$0xf] %vm5173, %v5141
    %5271 = vst.msk [vmem:[%s3 + $0x184] sm:$0xf] %vm5173, %v5142
    %5272 = vst.msk [vmem:[%s3 + $0x188] sm:$0xf] %vm5173, %v5143
    %5273 = vst.msk [vmem:[%s3 + $0x18c] sm:$0xf] %vm5173, %v5144
    %5274 = vst.msk [vmem:[%s3 + $0x190] sm:$0xf] %vm5173, %v5145
    %5275 = vst.msk [vmem:[%s3 + $0x194] sm:$0xf] %vm5173, %v5146
    %5276 = vst.msk [vmem:[%s3 + $0x198] sm:$0xf] %vm5173, %v5147
    %5277 = vst.msk [vmem:[%s3 + $0x19c] sm:$0xf] %vm5173, %v5148
    %5278 = vst.msk [vmem:[%s3 + $0x1a0] sm:$0xf] %vm5173, %v5149
    %5279 = vst.msk [vmem:[%s3 + $0x1a4] sm:$0xf] %vm5173, %v5150
    %5280 = vst.msk [vmem:[%s3 + $0x1a8] sm:$0xf] %vm5173, %v5151
    %5281 = vst.msk [vmem:[%s3 + $0x1ac] sm:$0xf] %vm5173, %v5152
    %5282 = vst.msk [vmem:[%s3 + $0x1b0] sm:$0xf] %vm5173, %v5153
    %5283 = vst.msk [vmem:[%s3 + $0x1b4] sm:$0xf] %vm5173, %v5154
    %5284 = vst.msk [vmem:[%s3 + $0x1b8] sm:$0xf] %vm5173, %v5155
    %5285 = vst.msk [vmem:[%s3 + $0x1bc] sm:$0xf] %vm5173, %v5156
    %5286 = vst.msk [vmem:[%s3 + $0x1c0] sm:$0xf] %vm5173, %v5157
    %5287 = vst.msk [vmem:[%s3 + $0x1c4] sm:$0xf] %vm5173, %v5158
    %5288 = vst.msk [vmem:[%s3 + $0x1c8] sm:$0xf] %vm5173, %v5159
    %5289 = vst.msk [vmem:[%s3 + $0x1cc] sm:$0xf] %vm5173, %v5160
    %5290 = vst.msk [vmem:[%s3 + $0x1d0] sm:$0xf] %vm5173, %v5161
    %5291 = vst.msk [vmem:[%s3 + $0x1d4] sm:$0xf] %vm5173, %v5162
    %5292 = vst.msk [vmem:[%s3 + $0x1d8] sm:$0xf] %vm5173, %v5163
    %5293 = vst.msk [vmem:[%s3 + $0x1dc] sm:$0xf] %vm5173, %v5164
    %5294 = vst.msk [vmem:[%s3 + $0x1e0] sm:$0xf] %vm5173, %v5165
    %5295 = vst.msk [vmem:[%s3 + $0x1e4] sm:$0xf] %vm5173, %v5166
    %5296 = vst.msk [vmem:[%s3 + $0x1e8] sm:$0xf] %vm5173, %v5167
    %5297 = vst.msk [vmem:[%s3 + $0x1ec] sm:$0xf] %vm5173, %v5168
    %5298 = vst.msk [vmem:[%s3 + $0x1f0] sm:$0xf] %vm5173, %v5169
    %5299 = vst.msk [vmem:[%s3 + $0x1f4] sm:$0xf] %vm5173, %v5170
    %5300 = vst.msk [vmem:[%s3 + $0x1f8] sm:$0xf] %vm5173, %v5171
    %5301 = vst.msk [vmem:[%s3 + $0x1fc] sm:$0xf] %vm5173, %v5172
    // Predicated region
    $region22: #{tex_pamir_net_forward.4} parent=1 // pred_check
      _
    $region23: #{tex_pamir_net_forward.4} parent=1 // pred_check_branch
      %5303 = sbr.rel (0) target = $region25
    $region24: #{tex_pamir_net_forward.4} parent=1 // pred_region
      _
    $region25: #{tex_pamir_net_forward.4} parent=1 // pred_fallthru
      _
    // Predicated region
    $region26: #{tex_pamir_net_forward.4} parent=1 // pred_check
      _
    $region27: #{tex_pamir_net_forward.4} parent=1 // pred_check_branch
      %5305 = sbr.rel (0) target = $region29
    $region28: #{tex_pamir_net_forward.4} parent=1 // pred_region
      _
    $region29: #{tex_pamir_net_forward.4} parent=1 // pred_fallthru
      _
    %5306 = vsyncpa [#allocation3], 1
    %5307 = vsyncpa [#allocation5], 1

// kernel: tex_pamir_net_forward.3
$region0: #{tex_pamir_net_forward.3}
  #allocation0 [shape = 'u32[]', space=smem, size = 0x4, offset = 0x4, fixed_abs, tag = 'smem constant byte address 0x4 - core index']
  #allocation1 [shape = 'u32[72,128]{1,0:T(1,128)}', space=vmem, size = 0x9000, scoped, tag = 'internal scratch']
  %s0 = inlined_call_operand.vmem [shape: f32[512,3], index: 0, kind: input, shape index: {}]
  %s1 = inlined_call_operand.hbm [shape: f32[3,256], index: 1, kind: input, shape index: {}]
  %s2 = inlined_call_operand.hbm [shape: f32[1,256], index: 2, kind: input, shape index: {}]
  %s3 = inlined_call_operand.vmem [shape: bf16[512,256], index: 3, kind: output, shape index: {}]
  %s4 = sld [smem:[#allocation0]]
  $region30: #{tex_pamir_net_forward.3} parent=0
    _
  %s6 = ssub.s32 1, %s4
  %s7 = scalar_select 0, %s6, %s4
  $region1: #{tex_pamir_net_forward.3} parent=0
    #allocation2 [shape = 'u8[4096]{0}', space=vmem, size = 0x1000, scoped, tag = 'input window, operand 1, single buffered']
    #allocation3 [shape = 's32[1]{0}', space=sflag, size = 0x4, scoped, tag = 'scoped memory for tex_pamir_net_forward.3']
    #allocation4 [shape = 'u8[1024]{0}', space=vmem, size = 0x400, scoped, tag = 'input window, operand 2, single buffered']
    #allocation5 [shape = 's32[1]{0}', space=sflag, size = 0x4, scoped, tag = 'scoped memory for tex_pamir_net_forward.3']
    %8 = vsyncpa [#allocation3], 0
    %9 = vsyncpa [#allocation5], 0
    // Predicated region
    $region2: #{tex_pamir_net_forward.3} parent=1 // pred_check
      _
    $region3: #{tex_pamir_net_forward.3} parent=1 // pred_check_branch
      %11 = sbr.rel (0) target = $region5
    $region4: #{tex_pamir_net_forward.3} parent=1 // pred_region
      _
    $region5: #{tex_pamir_net_forward.3} parent=1 // pred_fallthru
      _
    // Predicated region
    $region6: #{tex_pamir_net_forward.3} parent=1 // pred_check
      _
    $region7: #{tex_pamir_net_forward.3} parent=1 // pred_check_branch
      %13 = sbr.rel (0) target = $region9
    $region8: #{tex_pamir_net_forward.3} parent=1 // pred_region
      %15 = vsyncadd [#allocation3], 0
      %s17 = sshll.u32 %s1, 4
      %s18 = int_to_ptr.hbm [resolvable:$true] %s17
      %s19 = sshll.u32 [#allocation2], 4
      %s20 = int_to_ptr.vmem [resolvable:$true] %s19
      %22 = dma.hbm_to_vmem [thread:$0]  %s18, 128, %s20, [#allocation3]
    $region9: #{tex_pamir_net_forward.3} parent=1 // pred_fallthru
      _
    // Predicated region
    $region10: #{tex_pamir_net_forward.3} parent=1 // pred_check
      _
    $region11: #{tex_pamir_net_forward.3} parent=1 // pred_check_branch
      %24 = sbr.rel (0) target = $region13
    $region12: #{tex_pamir_net_forward.3} parent=1 // pred_region
      %26 = vsyncadd [#allocation5], 0
      %s28 = sshll.u32 %s2, 4
      %s29 = int_to_ptr.hbm [resolvable:$true] %s28
      %s30 = sshll.u32 [#allocation4], 4
      %s31 = int_to_ptr.vmem [resolvable:$true] %s30
      %33 = dma.hbm_to_vmem [thread:$0]  %s29, 32, %s31, [#allocation5]
    $region13: #{tex_pamir_net_forward.3} parent=1 // pred_fallthru
      _
    // Predicated region
    $region14: #{tex_pamir_net_forward.3} parent=1 // pred_check
      _
    $region15: #{tex_pamir_net_forward.3} parent=1 // pred_check_branch
      %35 = sbr.rel (0) target = $region17
    $region16: #{tex_pamir_net_forward.3} parent=1 // pred_region
      %37 = dma.done [#allocation3], 128
    $region17: #{tex_pamir_net_forward.3} parent=1 // pred_fallthru
      _
    // Predicated region
    $region18: #{tex_pamir_net_forward.3} parent=1 // pred_check
      _
    $region19: #{tex_pamir_net_forward.3} parent=1 // pred_check_branch
      %39 = sbr.rel (0) target = $region21
    $region20: #{tex_pamir_net_forward.3} parent=1 // pred_region
      %41 = dma.done [#allocation5], 32
    $region21: #{tex_pamir_net_forward.3} parent=1 // pred_fallthru
      _
    %v42 = vld [vmem:[%s0] sm:$0xff]
    %v43 = vld [vmem:[%s0 + $0x8] sm:$0xff]
    %v44 = vld [vmem:[%s0 + $0x10] sm:$0xff]
    %v45 = vld [vmem:[%s0 + $0x18] sm:$0xff]
    %v46 = vld [vmem:[%s0 + $0x20] sm:$0xff]
    %v47 = vld [vmem:[%s0 + $0x28] sm:$0xff]
    %v48 = vld [vmem:[%s0 + $0x30] sm:$0xff]
    %v49 = vld [vmem:[%s0 + $0x38] sm:$0xff]
    %v50 = vld [vmem:[%s0 + $0x40] sm:$0xff]
    %v51 = vld [vmem:[%s0 + $0x48] sm:$0xff]
    %v52 = vld [vmem:[%s0 + $0x50] sm:$0xff]
    %v53 = vld [vmem:[%s0 + $0x58] sm:$0xff]
    %v54 = vld [vmem:[%s0 + $0x60] sm:$0xff]
    %v55 = vld [vmem:[%s0 + $0x68] sm:$0xff]
    %v56 = vld [vmem:[%s0 + $0x70] sm:$0xff]
    %v57 = vld [vmem:[%s0 + $0x78] sm:$0xff]
    %v58 = vld [vmem:[%s0 + $0x80] sm:$0xff]
    %v59 = vld [vmem:[%s0 + $0x88] sm:$0xff]
    %v60 = vld [vmem:[%s0 + $0x90] sm:$0xff]
    %v61 = vld [vmem:[%s0 + $0x98] sm:$0xff]
    %v62 = vld [vmem:[%s0 + $0xa0] sm:$0xff]
    %v63 = vld [vmem:[%s0 + $0xa8] sm:$0xff]
    %v64 = vld [vmem:[%s0 + $0xb0] sm:$0xff]
    %v65 = vld [vmem:[%s0 + $0xb8] sm:$0xff]
    %v66 = vld [vmem:[%s0 + $0xc0] sm:$0xff]
    %v67 = vld [vmem:[%s0 + $0xc8] sm:$0xff]
    %v68 = vld [vmem:[%s0 + $0xd0] sm:$0xff]
    %v69 = vld [vmem:[%s0 + $0xd8] sm:$0xff]
    %v70 = vld [vmem:[%s0 + $0xe0] sm:$0xff]
    %v71 = vld [vmem:[%s0 + $0xe8] sm:$0xff]
    %v72 = vld [vmem:[%s0 + $0xf0] sm:$0xff]
    %v73 = vld [vmem:[%s0 + $0xf8] sm:$0xff]
    %v74 = vld [vmem:[%s0 + $0x100] sm:$0xff]
    %v75 = vld [vmem:[%s0 + $0x108] sm:$0xff]
    %v76 = vld [vmem:[%s0 + $0x110] sm:$0xff]
    %v77 = vld [vmem:[%s0 + $0x118] sm:$0xff]
    %v78 = vld [vmem:[%s0 + $0x120] sm:$0xff]
    %v79 = vld [vmem:[%s0 + $0x128] sm:$0xff]
    %v80 = vld [vmem:[%s0 + $0x130] sm:$0xff]
    %v81 = vld [vmem:[%s0 + $0x138] sm:$0xff]
    %v82 = vld [vmem:[%s0 + $0x140] sm:$0xff]
    %v83 = vld [vmem:[%s0 + $0x148] sm:$0xff]
    %v84 = vld [vmem:[%s0 + $0x150] sm:$0xff]
    %v85 = vld [vmem:[%s0 + $0x158] sm:$0xff]
    %v86 = vld [vmem:[%s0 + $0x160] sm:$0xff]
    %v87 = vld [vmem:[%s0 + $0x168] sm:$0xff]
    %v88 = vld [vmem:[%s0 + $0x170] sm:$0xff]
    %v89 = vld [vmem:[%s0 + $0x178] sm:$0xff]
    %v90 = vld [vmem:[%s0 + $0x180] sm:$0xff]
    %v91 = vld [vmem:[%s0 + $0x188] sm:$0xff]
    %v92 = vld [vmem:[%s0 + $0x190] sm:$0xff]
    %v93 = vld [vmem:[%s0 + $0x198] sm:$0xff]
    %v94 = vld [vmem:[%s0 + $0x1a0] sm:$0xff]
    %v95 = vld [vmem:[%s0 + $0x1a8] sm:$0xff]
    %v96 = vld [vmem:[%s0 + $0x1b0] sm:$0xff]
    %v97 = vld [vmem:[%s0 + $0x1b8] sm:$0xff]
    %v98 = vld [vmem:[%s0 + $0x1c0] sm:$0xff]
    %v99 = vld [vmem:[%s0 + $0x1c8] sm:$0xff]
    %v100 = vld [vmem:[%s0 + $0x1d0] sm:$0xff]
    %v101 = vld [vmem:[%s0 + $0x1d8] sm:$0xff]
    %v102 = vld [vmem:[%s0 + $0x1e0] sm:$0xff]
    %v103 = vld [vmem:[%s0 + $0x1e8] sm:$0xff]
    %v104 = vld [vmem:[%s0 + $0x1f0] sm:$0xff]
    %v105 = vld [vmem:[%s0 + $0x1f8] sm:$0xff]
    %v106 = vld [vmem:[#allocation2] sm:$0x77]
    %v107 = vld [vmem:[#allocation4] sm:$0x3]
    %109 = vset.pattern.permute.xlu0 0
    %110 = vperm.xlu0 %109, %v42
    %v111 = vpop.permute.xlu0 %110
    %114 = vset.pattern.permute.xlu0 0
    %115 = vperm.xlu0 %114, %v43
    %v116 = vpop.permute.xlu0 %115
    %119 = vset.pattern.permute.xlu0 0
    %120 = vperm.xlu0 %119, %v44
    %v121 = vpop.permute.xlu0 %120
    %124 = vset.pattern.permute.xlu0 0
    %125 = vperm.xlu0 %124, %v45
    %v126 = vpop.permute.xlu0 %125
    %129 = vset.pattern.permute.xlu0 0
    %130 = vperm.xlu0 %129, %v46
    %v131 = vpop.permute.xlu0 %130
    %134 = vset.pattern.permute.xlu0 0
    %135 = vperm.xlu0 %134, %v47
    %v136 = vpop.permute.xlu0 %135
    %139 = vset.pattern.permute.xlu0 0
    %140 = vperm.xlu0 %139, %v48
    %v141 = vpop.permute.xlu0 %140
    %144 = vset.pattern.permute.xlu0 0
    %145 = vperm.xlu0 %144, %v49
    %v146 = vpop.permute.xlu0 %145
    %149 = vset.pattern.permute.xlu0 0
    %150 = vperm.xlu0 %149, %v50
    %v151 = vpop.permute.xlu0 %150
    %154 = vset.pattern.permute.xlu0 0
    %155 = vperm.xlu0 %154, %v51
    %v156 = vpop.permute.xlu0 %155
    %159 = vset.pattern.permute.xlu0 0
    %160 = vperm.xlu0 %159, %v52
    %v161 = vpop.permute.xlu0 %160
    %164 = vset.pattern.permute.xlu0 0
    %165 = vperm.xlu0 %164, %v53
    %v166 = vpop.permute.xlu0 %165
    %169 = vset.pattern.permute.xlu0 0
    %170 = vperm.xlu0 %169, %v54
    %v171 = vpop.permute.xlu0 %170
    %174 = vset.pattern.permute.xlu0 0
    %175 = vperm.xlu0 %174, %v55
    %v176 = vpop.permute.xlu0 %175
    %179 = vset.pattern.permute.xlu0 0
    %180 = vperm.xlu0 %179, %v56
    %v181 = vpop.permute.xlu0 %180
    %184 = vset.pattern.permute.xlu0 0
    %185 = vperm.xlu0 %184, %v57
    %v186 = vpop.permute.xlu0 %185
    %189 = vset.pattern.permute.xlu0 0
    %190 = vperm.xlu0 %189, %v58
    %v191 = vpop.permute.xlu0 %190
    %194 = vset.pattern.permute.xlu0 0
    %195 = vperm.xlu0 %194, %v59
    %v196 = vpop.permute.xlu0 %195
    %199 = vset.pattern.permute.xlu0 0
    %200 = vperm.xlu0 %199, %v60
    %v201 = vpop.permute.xlu0 %200
    %204 = vset.pattern.permute.xlu0 0
    %205 = vperm.xlu0 %204, %v61
    %v206 = vpop.permute.xlu0 %205
    %209 = vset.pattern.permute.xlu0 0
    %210 = vperm.xlu0 %209, %v62
    %v211 = vpop.permute.xlu0 %210
    %214 = vset.pattern.permute.xlu0 0
    %215 = vperm.xlu0 %214, %v63
    %v216 = vpop.permute.xlu0 %215
    %219 = vset.pattern.permute.xlu0 0
    %220 = vperm.xlu0 %219, %v64
    %v221 = vpop.permute.xlu0 %220
    %224 = vset.pattern.permute.xlu0 0
    %225 = vperm.xlu0 %224, %v65
    %v226 = vpop.permute.xlu0 %225
    %229 = vset.pattern.permute.xlu0 0
    %230 = vperm.xlu0 %229, %v66
    %v231 = vpop.permute.xlu0 %230
    %234 = vset.pattern.permute.xlu0 0
    %235 = vperm.xlu0 %234, %v67
    %v236 = vpop.permute.xlu0 %235
    %239 = vset.pattern.permute.xlu0 0
    %240 = vperm.xlu0 %239, %v68
    %v241 = vpop.permute.xlu0 %240
    %244 = vset.pattern.permute.xlu0 0
    %245 = vperm.xlu0 %244, %v69
    %v246 = vpop.permute.xlu0 %245
    %249 = vset.pattern.permute.xlu0 0
    %250 = vperm.xlu0 %249, %v70
    %v251 = vpop.permute.xlu0 %250
    %254 = vset.pattern.permute.xlu0 0
    %255 = vperm.xlu0 %254, %v71
    %v256 = vpop.permute.xlu0 %255
    %259 = vset.pattern.permute.xlu0 0
    %260 = vperm.xlu0 %259, %v72
    %v261 = vpop.permute.xlu0 %260
    %264 = vset.pattern.permute.xlu0 0
    %265 = vperm.xlu0 %264, %v73
    %v266 = vpop.permute.xlu0 %265
    %269 = vset.pattern.permute.xlu0 0
    %270 = vperm.xlu0 %269, %v74
    %v271 = vpop.permute.xlu0 %270
    %274 = vset.pattern.permute.xlu0 0
    %275 = vperm.xlu0 %274, %v75
    %v276 = vpop.permute.xlu0 %275
    %279 = vset.pattern.permute.xlu0 0
    %280 = vperm.xlu0 %279, %v76
    %v281 = vpop.permute.xlu0 %280
    %284 = vset.pattern.permute.xlu0 0
    %285 = vperm.xlu0 %284, %v77
    %v286 = vpop.permute.xlu0 %285
    %289 = vset.pattern.permute.xlu0 0
    %290 = vperm.xlu0 %289, %v78
    %v291 = vpop.permute.xlu0 %290
    %294 = vset.pattern.permute.xlu0 0
    %295 = vperm.xlu0 %294, %v79
    %v296 = vpop.permute.xlu0 %295
    %299 = vset.pattern.permute.xlu0 0
    %300 = vperm.xlu0 %299, %v80
    %v301 = vpop.permute.xlu0 %300
    %304 = vset.pattern.permute.xlu0 0
    %305 = vperm.xlu0 %304, %v81
    %v306 = vpop.permute.xlu0 %305
    %309 = vset.pattern.permute.xlu0 0
    %310 = vperm.xlu0 %309, %v82
    %v311 = vpop.permute.xlu0 %310
    %314 = vset.pattern.permute.xlu0 0
    %315 = vperm.xlu0 %314, %v83
    %v316 = vpop.permute.xlu0 %315
    %319 = vset.pattern.permute.xlu0 0
    %320 = vperm.xlu0 %319, %v84
    %v321 = vpop.permute.xlu0 %320
    %324 = vset.pattern.permute.xlu0 0
    %325 = vperm.xlu0 %324, %v85
    %v326 = vpop.permute.xlu0 %325
    %329 = vset.pattern.permute.xlu0 0
    %330 = vperm.xlu0 %329, %v86
    %v331 = vpop.permute.xlu0 %330
    %334 = vset.pattern.permute.xlu0 0
    %335 = vperm.xlu0 %334, %v87
    %v336 = vpop.permute.xlu0 %335
    %339 = vset.pattern.permute.xlu0 0
    %340 = vperm.xlu0 %339, %v88
    %v341 = vpop.permute.xlu0 %340
    %344 = vset.pattern.permute.xlu0 0
    %345 = vperm.xlu0 %344, %v89
    %v346 = vpop.permute.xlu0 %345
    %349 = vset.pattern.permute.xlu0 0
    %350 = vperm.xlu0 %349, %v90
    %v351 = vpop.permute.xlu0 %350
    %354 = vset.pattern.permute.xlu0 0
    %355 = vperm.xlu0 %354, %v91
    %v356 = vpop.permute.xlu0 %355
    %359 = vset.pattern.permute.xlu0 0
    %360 = vperm.xlu0 %359, %v92
    %v361 = vpop.permute.xlu0 %360
    %364 = vset.pattern.permute.xlu0 0
    %365 = vperm.xlu0 %364, %v93
    %v366 = vpop.permute.xlu0 %365
    %369 = vset.pattern.permute.xlu0 0
    %370 = vperm.xlu0 %369, %v94
    %v371 = vpop.permute.xlu0 %370
    %374 = vset.pattern.permute.xlu0 0
    %375 = vperm.xlu0 %374, %v95
    %v376 = vpop.permute.xlu0 %375
    %379 = vset.pattern.permute.xlu0 0
    %380 = vperm.xlu0 %379, %v96
    %v381 = vpop.permute.xlu0 %380
    %384 = vset.pattern.permute.xlu0 0
    %385 = vperm.xlu0 %384, %v97
    %v386 = vpop.permute.xlu0 %385
    %389 = vset.pattern.permute.xlu0 0
    %390 = vperm.xlu0 %389, %v98
    %v391 = vpop.permute.xlu0 %390
    %394 = vset.pattern.permute.xlu0 0
    %395 = vperm.xlu0 %394, %v99
    %v396 = vpop.permute.xlu0 %395
    %399 = vset.pattern.permute.xlu0 0
    %400 = vperm.xlu0 %399, %v100
    %v401 = vpop.permute.xlu0 %400
    %404 = vset.pattern.permute.xlu0 0
    %405 = vperm.xlu0 %404, %v101
    %v406 = vpop.permute.xlu0 %405
    %409 = vset.pattern.permute.xlu0 0
    %410 = vperm.xlu0 %409, %v102
    %v411 = vpop.permute.xlu0 %410
    %414 = vset.pattern.permute.xlu0 0
    %415 = vperm.xlu0 %414, %v103
    %v416 = vpop.permute.xlu0 %415
    %419 = vset.pattern.permute.xlu0 0
    %420 = vperm.xlu0 %419, %v104
    %v421 = vpop.permute.xlu0 %420
    %424 = vset.pattern.permute.xlu0 0
    %425 = vperm.xlu0 %424, %v105
    %v426 = vpop.permute.xlu0 %425
    %v429 = vperm.slane %v106, 0
    %v430 = vperm.slane %v106, 4
    %v433 = vperm.slane %v429, 0
    %v434 = vperm.slane %v430, 0
    %v435 = vmul.f32 %v111, %v433
    %v436 = vmul.f32 %v111, %v434
    %v437 = vmul.f32 %v116, %v433
    %v438 = vmul.f32 %v116, %v434
    %v439 = vmul.f32 %v121, %v433
    %v440 = vmul.f32 %v121, %v434
    %v441 = vmul.f32 %v126, %v433
    %v442 = vmul.f32 %v126, %v434
    %v443 = vmul.f32 %v131, %v433
    %v444 = vmul.f32 %v131, %v434
    %v445 = vmul.f32 %v136, %v433
    %v446 = vmul.f32 %v136, %v434
    %v447 = vmul.f32 %v141, %v433
    %v448 = vmul.f32 %v141, %v434
    %v449 = vmul.f32 %v146, %v433
    %v450 = vmul.f32 %v146, %v434
    %v451 = vmul.f32 %v151, %v433
    %v452 = vmul.f32 %v151, %v434
    %v453 = vmul.f32 %v156, %v433
    %v454 = vmul.f32 %v156, %v434
    %v455 = vmul.f32 %v161, %v433
    %v456 = vmul.f32 %v161, %v434
    %v457 = vmul.f32 %v166, %v433
    %v458 = vmul.f32 %v166, %v434
    %v459 = vmul.f32 %v171, %v433
    %v460 = vmul.f32 %v171, %v434
    %v461 = vmul.f32 %v176, %v433
    %v462 = vmul.f32 %v176, %v434
    %v463 = vmul.f32 %v181, %v433
    %v464 = vmul.f32 %v181, %v434
    %v465 = vmul.f32 %v186, %v433
    %v466 = vmul.f32 %v186, %v434
    %v467 = vmul.f32 %v191, %v433
    %v468 = vmul.f32 %v191, %v434
    %v469 = vmul.f32 %v196, %v433
    %v470 = vmul.f32 %v196, %v434
    %v471 = vmul.f32 %v201, %v433
    %v472 = vmul.f32 %v201, %v434
    %v473 = vmul.f32 %v206, %v433
    %v474 = vmul.f32 %v206, %v434
    %v475 = vmul.f32 %v211, %v433
    %v476 = vmul.f32 %v211, %v434
    %v477 = vmul.f32 %v216, %v433
    %v478 = vmul.f32 %v216, %v434
    %v479 = vmul.f32 %v221, %v433
    %v480 = vmul.f32 %v221, %v434
    %v481 = vmul.f32 %v226, %v433
    %v482 = vmul.f32 %v226, %v434
    %v483 = vmul.f32 %v231, %v433
    %v484 = vmul.f32 %v231, %v434
    %v485 = vmul.f32 %v236, %v433
    %v486 = vmul.f32 %v236, %v434
    %v487 = vmul.f32 %v241, %v433
    %v488 = vmul.f32 %v241, %v434
    %v489 = vmul.f32 %v246, %v433
    %v490 = vmul.f32 %v246, %v434
    %v491 = vmul.f32 %v251, %v433
    %v492 = vmul.f32 %v251, %v434
    %v493 = vmul.f32 %v256, %v433
    %v494 = vmul.f32 %v256, %v434
    %v495 = vmul.f32 %v261, %v433
    %v496 = vmul.f32 %v261, %v434
    %v497 = vmul.f32 %v266, %v433
    %v498 = vmul.f32 %v266, %v434
    %v499 = vmul.f32 %v271, %v433
    %v500 = vmul.f32 %v271, %v434
    %v501 = vmul.f32 %v276, %v433
    %v502 = vmul.f32 %v276, %v434
    %v503 = vmul.f32 %v281, %v433
    %v504 = vmul.f32 %v281, %v434
    %v505 = vmul.f32 %v286, %v433
    %v506 = vmul.f32 %v286, %v434
    %v507 = vmul.f32 %v291, %v433
    %v508 = vmul.f32 %v291, %v434
    %v509 = vmul.f32 %v296, %v433
    %v510 = vmul.f32 %v296, %v434
    %v511 = vmul.f32 %v301, %v433
    %v512 = vmul.f32 %v301, %v434
    %v513 = vmul.f32 %v306, %v433
    %v514 = vmul.f32 %v306, %v434
    %v515 = vmul.f32 %v311, %v433
    %v516 = vmul.f32 %v311, %v434
    %v517 = vmul.f32 %v316, %v433
    %v518 = vmul.f32 %v316, %v434
    %v519 = vmul.f32 %v321, %v433
    %v520 = vmul.f32 %v321, %v434
    %v521 = vmul.f32 %v326, %v433
    %v522 = vmul.f32 %v326, %v434
    %v523 = vmul.f32 %v331, %v433
    %v524 = vmul.f32 %v331, %v434
    %v525 = vmul.f32 %v336, %v433
    %v526 = vmul.f32 %v336, %v434
    %v527 = vmul.f32 %v341, %v433
    %v528 = vmul.f32 %v341, %v434
    %v529 = vmul.f32 %v346, %v433
    %v530 = vmul.f32 %v346, %v434
    %v531 = vmul.f32 %v351, %v433
    %v532 = vmul.f32 %v351, %v434
    %v533 = vmul.f32 %v356, %v433
    %v534 = vmul.f32 %v356, %v434
    %v535 = vmul.f32 %v361, %v433
    %v536 = vmul.f32 %v361, %v434
    %v537 = vmul.f32 %v366, %v433
    %v538 = vmul.f32 %v366, %v434
    %v539 = vmul.f32 %v371, %v433
    %v540 = vmul.f32 %v371, %v434
    %v541 = vmul.f32 %v376, %v433
    %v542 = vmul.f32 %v376, %v434
    %v543 = vmul.f32 %v381, %v433
    %v544 = vmul.f32 %v381, %v434
    %v545 = vmul.f32 %v386, %v433
    %v546 = vmul.f32 %v386, %v434
    %v547 = vmul.f32 %v391, %v433
    %v548 = vmul.f32 %v391, %v434
    %v549 = vmul.f32 %v396, %v433
    %v550 = vmul.f32 %v396, %v434
    %v551 = vmul.f32 %v401, %v433
    %v552 = vmul.f32 %v401, %v434
    %v553 = vmul.f32 %v406, %v433
    %v554 = vmul.f32 %v406, %v434
    %v555 = vmul.f32 %v411, %v433
    %v556 = vmul.f32 %v411, %v434
    %v557 = vmul.f32 %v416, %v433
    %v558 = vmul.f32 %v416, %v434
    %v559 = vmul.f32 %v421, %v433
    %v560 = vmul.f32 %v421, %v434
    %v561 = vmul.f32 %v426, %v433
    %v562 = vmul.f32 %v426, %v434
    %v564 = vperm.slane %v107, 0
    %v565 = vperm.slane %v107, 1
    %v568 = vadd.f32 %v564, %v435
    %v569 = vadd.f32 %v565, %v436
    %v570 = vadd.f32 %v564, %v437
    %v571 = vadd.f32 %v565, %v438
    %v572 = vadd.f32 %v564, %v439
    %v573 = vadd.f32 %v565, %v440
    %v574 = vadd.f32 %v564, %v441
    %v575 = vadd.f32 %v565, %v442
    %v576 = vadd.f32 %v564, %v443
    %v577 = vadd.f32 %v565, %v444
    %v578 = vadd.f32 %v564, %v445
    %v579 = vadd.f32 %v565, %v446
    %v580 = vadd.f32 %v564, %v447
    %v581 = vadd.f32 %v565, %v448
    %v582 = vadd.f32 %v564, %v449
    %v583 = vadd.f32 %v565, %v450
    %v584 = vadd.f32 %v564, %v451
    %v585 = vadd.f32 %v565, %v452
    %v586 = vadd.f32 %v564, %v453
    %v587 = vadd.f32 %v565, %v454
    %v588 = vadd.f32 %v564, %v455
    %v589 = vadd.f32 %v565, %v456
    %v590 = vadd.f32 %v564, %v457
    %v591 = vadd.f32 %v565, %v458
    %v592 = vadd.f32 %v564, %v459
    %v593 = vadd.f32 %v565, %v460
    %v594 = vadd.f32 %v564, %v461
    %v595 = vadd.f32 %v565, %v462
    %v596 = vadd.f32 %v564, %v463
    %v597 = vadd.f32 %v565, %v464
    %v598 = vadd.f32 %v564, %v465
    %v599 = vadd.f32 %v565, %v466
    %v600 = vadd.f32 %v564, %v467
    %v601 = vadd.f32 %v565, %v468
    %v602 = vadd.f32 %v564, %v469
    %v603 = vadd.f32 %v565, %v470
    %v604 = vadd.f32 %v564, %v471
    %v605 = vadd.f32 %v565, %v472
    %v606 = vadd.f32 %v564, %v473
    %v607 = vadd.f32 %v565, %v474
    %v608 = vadd.f32 %v564, %v475
    %v609 = vadd.f32 %v565, %v476
    %v610 = vadd.f32 %v564, %v477
    %v611 = vadd.f32 %v565, %v478
    %v612 = vadd.f32 %v564, %v479
    %v613 = vadd.f32 %v565, %v480
    %v614 = vadd.f32 %v564, %v481
    %v615 = vadd.f32 %v565, %v482
    %v616 = vadd.f32 %v564, %v483
    %v617 = vadd.f32 %v565, %v484
    %v618 = vadd.f32 %v564, %v485
    %v619 = vadd.f32 %v565, %v486
    %v620 = vadd.f32 %v564, %v487
    %v621 = vadd.f32 %v565, %v488
    %v622 = vadd.f32 %v564, %v489
    %v623 = vadd.f32 %v565, %v490
    %v624 = vadd.f32 %v564, %v491
    %v625 = vadd.f32 %v565, %v492
    %v626 = vadd.f32 %v564, %v493
    %v627 = vadd.f32 %v565, %v494
    %v628 = vadd.f32 %v564, %v495
    %v629 = vadd.f32 %v565, %v496
    %v630 = vadd.f32 %v564, %v497
    %v631 = vadd.f32 %v565, %v498
    %v632 = vadd.f32 %v564, %v499
    %v633 = vadd.f32 %v565, %v500
    %v634 = vadd.f32 %v564, %v501
    %v635 = vadd.f32 %v565, %v502
    %v636 = vadd.f32 %v564, %v503
    %v637 = vadd.f32 %v565, %v504
    %v638 = vadd.f32 %v564, %v505
    %v639 = vadd.f32 %v565, %v506
    %v640 = vadd.f32 %v564, %v507
    %v641 = vadd.f32 %v565, %v508
    %v642 = vadd.f32 %v564, %v509
    %v643 = vadd.f32 %v565, %v510
    %v644 = vadd.f32 %v564, %v511
    %v645 = vadd.f32 %v565, %v512
    %v646 = vadd.f32 %v564, %v513
    %v647 = vadd.f32 %v565, %v514
    %v648 = vadd.f32 %v564, %v515
    %v649 = vadd.f32 %v565, %v516
    %v650 = vadd.f32 %v564, %v517
    %v651 = vadd.f32 %v565, %v518
    %v652 = vadd.f32 %v564, %v519
    %v653 = vadd.f32 %v565, %v520
    %v654 = vadd.f32 %v564, %v521
    %v655 = vadd.f32 %v565, %v522
    %v656 = vadd.f32 %v564, %v523
    %v657 = vadd.f32 %v565, %v524
    %v658 = vadd.f32 %v564, %v525
    %v659 = vadd.f32 %v565, %v526
    %v660 = vadd.f32 %v564, %v527
    %v661 = vadd.f32 %v565, %v528
    %v662 = vadd.f32 %v564, %v529
    %v663 = vadd.f32 %v565, %v530
    %v664 = vadd.f32 %v564, %v531
    %v665 = vadd.f32 %v565, %v532
    %v666 = vadd.f32 %v564, %v533
    %v667 = vadd.f32 %v565, %v534
    %v668 = vadd.f32 %v564, %v535
    %v669 = vadd.f32 %v565, %v536
    %v670 = vadd.f32 %v564, %v537
    %v671 = vadd.f32 %v565, %v538
    %v672 = vadd.f32 %v564, %v539
    %v673 = vadd.f32 %v565, %v540
    %v674 = vadd.f32 %v564, %v541
    %v675 = vadd.f32 %v565, %v542
    %v676 = vadd.f32 %v564, %v543
    %v677 = vadd.f32 %v565, %v544
    %v678 = vadd.f32 %v564, %v545
    %v679 = vadd.f32 %v565, %v546
    %v680 = vadd.f32 %v564, %v547
    %v681 = vadd.f32 %v565, %v548
    %v682 = vadd.f32 %v564, %v549
    %v683 = vadd.f32 %v565, %v550
    %v684 = vadd.f32 %v564, %v551
    %v685 = vadd.f32 %v565, %v552
    %v686 = vadd.f32 %v564, %v553
    %v687 = vadd.f32 %v565, %v554
    %v688 = vadd.f32 %v564, %v555
    %v689 = vadd.f32 %v565, %v556
    %v690 = vadd.f32 %v564, %v557
    %v691 = vadd.f32 %v565, %v558
    %v692 = vadd.f32 %v564, %v559
    %v693 = vadd.f32 %v565, %v560
    %v694 = vadd.f32 %v564, %v561
    %v695 = vadd.f32 %v565, %v562
    %696 = vset.pattern.permute.xlu0 1
    %697 = vperm.xlu0 %696, %v42
    %v698 = vpop.permute.xlu0 %697
    %700 = vset.pattern.permute.xlu0 1
    %701 = vperm.xlu0 %700, %v43
    %v702 = vpop.permute.xlu0 %701
    %704 = vset.pattern.permute.xlu0 1
    %705 = vperm.xlu0 %704, %v44
    %v706 = vpop.permute.xlu0 %705
    %708 = vset.pattern.permute.xlu0 1
    %709 = vperm.xlu0 %708, %v45
    %v710 = vpop.permute.xlu0 %709
    %712 = vset.pattern.permute.xlu0 1
    %713 = vperm.xlu0 %712, %v46
    %v714 = vpop.permute.xlu0 %713
    %716 = vset.pattern.permute.xlu0 1
    %717 = vperm.xlu0 %716, %v47
    %v718 = vpop.permute.xlu0 %717
    %720 = vset.pattern.permute.xlu0 1
    %721 = vperm.xlu0 %720, %v48
    %v722 = vpop.permute.xlu0 %721
    %724 = vset.pattern.permute.xlu0 1
    %725 = vperm.xlu0 %724, %v49
    %v726 = vpop.permute.xlu0 %725
    %728 = vset.pattern.permute.xlu0 1
    %729 = vperm.xlu0 %728, %v50
    %v730 = vpop.permute.xlu0 %729
    %732 = vset.pattern.permute.xlu0 1
    %733 = vperm.xlu0 %732, %v51
    %v734 = vpop.permute.xlu0 %733
    %736 = vset.pattern.permute.xlu0 1
    %737 = vperm.xlu0 %736, %v52
    %v738 = vpop.permute.xlu0 %737
    %740 = vset.pattern.permute.xlu0 1
    %741 = vperm.xlu0 %740, %v53
    %v742 = vpop.permute.xlu0 %741
    %744 = vset.pattern.permute.xlu0 1
    %745 = vperm.xlu0 %744, %v54
    %v746 = vpop.permute.xlu0 %745
    %748 = vset.pattern.permute.xlu0 1
    %749 = vperm.xlu0 %748, %v55
    %v750 = vpop.permute.xlu0 %749
    %752 = vset.pattern.permute.xlu0 1
    %753 = vperm.xlu0 %752, %v56
    %v754 = vpop.permute.xlu0 %753
    %756 = vset.pattern.permute.xlu0 1
    %757 = vperm.xlu0 %756, %v57
    %v758 = vpop.permute.xlu0 %757
    %760 = vset.pattern.permute.xlu0 1
    %761 = vperm.xlu0 %760, %v58
    %v762 = vpop.permute.xlu0 %761
    %764 = vset.pattern.permute.xlu0 1
    %765 = vperm.xlu0 %764, %v59
    %v766 = vpop.permute.xlu0 %765
    %768 = vset.pattern.permute.xlu0 1
    %769 = vperm.xlu0 %768, %v60
    %v770 = vpop.permute.xlu0 %769
    %772 = vset.pattern.permute.xlu0 1
    %773 = vperm.xlu0 %772, %v61
    %v774 = vpop.permute.xlu0 %773
    %776 = vset.pattern.permute.xlu0 1
    %777 = vperm.xlu0 %776, %v62
    %v778 = vpop.permute.xlu0 %777
    %780 = vset.pattern.permute.xlu0 1
    %781 = vperm.xlu0 %780, %v63
    %v782 = vpop.permute.xlu0 %781
    %784 = vset.pattern.permute.xlu0 1
    %785 = vperm.xlu0 %784, %v64
    %v786 = vpop.permute.xlu0 %785
    %788 = vset.pattern.permute.xlu0 1
    %789 = vperm.xlu0 %788, %v65
    %v790 = vpop.permute.xlu0 %789
    %792 = vset.pattern.permute.xlu0 1
    %793 = vperm.xlu0 %792, %v66
    %v794 = vpop.permute.xlu0 %793
    %796 = vset.pattern.permute.xlu0 1
    %797 = vperm.xlu0 %796, %v67
    %v798 = vpop.permute.xlu0 %797
    %800 = vset.pattern.permute.xlu0 1
    %801 = vperm.xlu0 %800, %v68
    %v802 = vpop.permute.xlu0 %801
    %804 = vset.pattern.permute.xlu0 1
    %805 = vperm.xlu0 %804, %v69
    %v806 = vpop.permute.xlu0 %805
    %808 = vset.pattern.permute.xlu0 1
    %809 = vperm.xlu0 %808, %v70
    %v810 = vpop.permute.xlu0 %809
    %812 = vset.pattern.permute.xlu0 1
    %813 = vperm.xlu0 %812, %v71
    %v814 = vpop.permute.xlu0 %813
    %816 = vset.pattern.permute.xlu0 1
    %817 = vperm.xlu0 %816, %v72
    %v818 = vpop.permute.xlu0 %817
    %820 = vset.pattern.permute.xlu0 1
    %821 = vperm.xlu0 %820, %v73
    %v822 = vpop.permute.xlu0 %821
    %824 = vset.pattern.permute.xlu0 1
    %825 = vperm.xlu0 %824, %v74
    %v826 = vpop.permute.xlu0 %825
    %828 = vset.pattern.permute.xlu0 1
    %829 = vperm.xlu0 %828, %v75
    %v830 = vpop.permute.xlu0 %829
    %832 = vset.pattern.permute.xlu0 1
    %833 = vperm.xlu0 %832, %v76
    %v834 = vpop.permute.xlu0 %833
    %836 = vset.pattern.permute.xlu0 1
    %837 = vperm.xlu0 %836, %v77
    %v838 = vpop.permute.xlu0 %837
    %840 = vset.pattern.permute.xlu0 1
    %841 = vperm.xlu0 %840, %v78
    %v842 = vpop.permute.xlu0 %841
    %844 = vset.pattern.permute.xlu0 1
    %845 = vperm.xlu0 %844, %v79
    %v846 = vpop.permute.xlu0 %845
    %848 = vset.pattern.permute.xlu0 1
    %849 = vperm.xlu0 %848, %v80
    %v850 = vpop.permute.xlu0 %849
    %852 = vset.pattern.permute.xlu0 1
    %853 = vperm.xlu0 %852, %v81
    %v854 = vpop.permute.xlu0 %853
    %856 = vset.pattern.permute.xlu0 1
    %857 = vperm.xlu0 %856, %v82
    %v858 = vpop.permute.xlu0 %857
    %860 = vset.pattern.permute.xlu0 1
    %861 = vperm.xlu0 %860, %v83
    %v862 = vpop.permute.xlu0 %861
    %864 = vset.pattern.permute.xlu0 1
    %865 = vperm.xlu0 %864, %v84
    %v866 = vpop.permute.xlu0 %865
    %868 = vset.pattern.permute.xlu0 1
    %869 = vperm.xlu0 %868, %v85
    %v870 = vpop.permute.xlu0 %869
    %872 = vset.pattern.permute.xlu0 1
    %873 = vperm.xlu0 %872, %v86
    %v874 = vpop.permute.xlu0 %873
    %876 = vset.pattern.permute.xlu0 1
    %877 = vperm.xlu0 %876, %v87
    %v878 = vpop.permute.xlu0 %877
    %880 = vset.pattern.permute.xlu0 1
    %881 = vperm.xlu0 %880, %v88
    %v882 = vpop.permute.xlu0 %881
    %884 = vset.pattern.permute.xlu0 1
    %885 = vperm.xlu0 %884, %v89
    %v886 = vpop.permute.xlu0 %885
    %888 = vset.pattern.permute.xlu0 1
    %889 = vperm.xlu0 %888, %v90
    %v890 = vpop.permute.xlu0 %889
    %892 = vset.pattern.permute.xlu0 1
    %893 = vperm.xlu0 %892, %v91
    %v894 = vpop.permute.xlu0 %893
    %896 = vset.pattern.permute.xlu0 1
    %897 = vperm.xlu0 %896, %v92
    %v898 = vpop.permute.xlu0 %897
    %900 = vset.pattern.permute.xlu0 1
    %901 = vperm.xlu0 %900, %v93
    %v902 = vpop.permute.xlu0 %901
    %904 = vset.pattern.permute.xlu0 1
    %905 = vperm.xlu0 %904, %v94
    %v906 = vpop.permute.xlu0 %905
    %908 = vset.pattern.permute.xlu0 1
    %909 = vperm.xlu0 %908, %v95
    %v910 = vpop.permute.xlu0 %909
    %912 = vset.pattern.permute.xlu0 1
    %913 = vperm.xlu0 %912, %v96
    %v914 = vpop.permute.xlu0 %913
    %916 = vset.pattern.permute.xlu0 1
    %917 = vperm.xlu0 %916, %v97
    %v918 = vpop.permute.xlu0 %917
    %920 = vset.pattern.permute.xlu0 1
    %921 = vperm.xlu0 %920, %v98
    %v922 = vpop.permute.xlu0 %921
    %924 = vset.pattern.permute.xlu0 1
    %925 = vperm.xlu0 %924, %v99
    %v926 = vpop.permute.xlu0 %925
    %928 = vset.pattern.permute.xlu0 1
    %929 = vperm.xlu0 %928, %v100
    %v930 = vpop.permute.xlu0 %929
    %932 = vset.pattern.permute.xlu0 1
    %933 = vperm.xlu0 %932, %v101
    %v934 = vpop.permute.xlu0 %933
    %936 = vset.pattern.permute.xlu0 1
    %937 = vperm.xlu0 %936, %v102
    %v938 = vpop.permute.xlu0 %937
    %940 = vset.pattern.permute.xlu0 1
    %941 = vperm.xlu0 %940, %v103
    %v942 = vpop.permute.xlu0 %941
    %944 = vset.pattern.permute.xlu0 1
    %945 = vperm.xlu0 %944, %v104
    %v946 = vpop.permute.xlu0 %945
    %948 = vset.pattern.permute.xlu0 1
    %949 = vperm.xlu0 %948, %v105
    %v950 = vpop.permute.xlu0 %949
    %v952 = vperm.slane %v106, 1
    %v953 = vperm.slane %v106, 5
    %v956 = vperm.slane %v952, 1
    %v957 = vperm.slane %v953, 1
    %v958 = vmul.f32 %v698, %v956
    %v959 = vmul.f32 %v698, %v957
    %v960 = vmul.f32 %v702, %v956
    %v961 = vmul.f32 %v702, %v957
    %v962 = vmul.f32 %v706, %v956
    %v963 = vmul.f32 %v706, %v957
    %v964 = vmul.f32 %v710, %v956
    %v965 = vmul.f32 %v710, %v957
    %v966 = vmul.f32 %v714, %v956
    %v967 = vmul.f32 %v714, %v957
    %v968 = vmul.f32 %v718, %v956
    %v969 = vmul.f32 %v718, %v957
    %v970 = vmul.f32 %v722, %v956
    %v971 = vmul.f32 %v722, %v957
    %v972 = vmul.f32 %v726, %v956
    %v973 = vmul.f32 %v726, %v957
    %v974 = vmul.f32 %v730, %v956
    %v975 = vmul.f32 %v730, %v957
    %v976 = vmul.f32 %v734, %v956
    %v977 = vmul.f32 %v734, %v957
    %v978 = vmul.f32 %v738, %v956
    %v979 = vmul.f32 %v738, %v957
    %v980 = vmul.f32 %v742, %v956
    %v981 = vmul.f32 %v742, %v957
    %v982 = vmul.f32 %v746, %v956
    %v983 = vmul.f32 %v746, %v957
    %v984 = vmul.f32 %v750, %v956
    %v985 = vmul.f32 %v750, %v957
    %v986 = vmul.f32 %v754, %v956
    %v987 = vmul.f32 %v754, %v957
    %v988 = vmul.f32 %v758, %v956
    %v989 = vmul.f32 %v758, %v957
    %v990 = vmul.f32 %v762, %v956
    %v991 = vmul.f32 %v762, %v957
    %v992 = vmul.f32 %v766, %v956
    %v993 = vmul.f32 %v766, %v957
    %v994 = vmul.f32 %v770, %v956
    %v995 = vmul.f32 %v770, %v957
    %v996 = vmul.f32 %v774, %v956
    %v997 = vmul.f32 %v774, %v957
    %v998 = vmul.f32 %v778, %v956
    %v999 = vmul.f32 %v778, %v957
    %v1000 = vmul.f32 %v782, %v956
    %v1001 = vmul.f32 %v782, %v957
    %v1002 = vmul.f32 %v786, %v956
    %v1003 = vmul.f32 %v786, %v957
    %v1004 = vmul.f32 %v790, %v956
    %v1005 = vmul.f32 %v790, %v957
    %v1006 = vmul.f32 %v794, %v956
    %v1007 = vmul.f32 %v794, %v957
    %v1008 = vmul.f32 %v798, %v956
    %v1009 = vmul.f32 %v798, %v957
    %v1010 = vmul.f32 %v802, %v956
    %v1011 = vmul.f32 %v802, %v957
    %v1012 = vmul.f32 %v806, %v956
    %v1013 = vmul.f32 %v806, %v957
    %v1014 = vmul.f32 %v810, %v956
    %v1015 = vmul.f32 %v810, %v957
    %v1016 = vmul.f32 %v814, %v956
    %v1017 = vmul.f32 %v814, %v957
    %v1018 = vmul.f32 %v818, %v956
    %v1019 = vmul.f32 %v818, %v957
    %v1020 = vmul.f32 %v822, %v956
    %v1021 = vmul.f32 %v822, %v957
    %v1022 = vmul.f32 %v826, %v956
    %v1023 = vmul.f32 %v826, %v957
    %v1024 = vmul.f32 %v830, %v956
    %v1025 = vmul.f32 %v830, %v957
    %v1026 = vmul.f32 %v834, %v956
    %v1027 = vmul.f32 %v834, %v957
    %v1028 = vmul.f32 %v838, %v956
    %v1029 = vmul.f32 %v838, %v957
    %v1030 = vmul.f32 %v842, %v956
    %v1031 = vmul.f32 %v842, %v957
    %v1032 = vmul.f32 %v846, %v956
    %v1033 = vmul.f32 %v846, %v957
    %v1034 = vmul.f32 %v850, %v956
    %v1035 = vmul.f32 %v850, %v957
    %v1036 = vmul.f32 %v854, %v956
    %v1037 = vmul.f32 %v854, %v957
    %v1038 = vmul.f32 %v858, %v956
    %v1039 = vmul.f32 %v858, %v957
    %v1040 = vmul.f32 %v862, %v956
    %v1041 = vmul.f32 %v862, %v957
    %v1042 = vmul.f32 %v866, %v956
    %v1043 = vmul.f32 %v866, %v957
    %v1044 = vmul.f32 %v870, %v956
    %v1045 = vmul.f32 %v870, %v957
    %v1046 = vmul.f32 %v874, %v956
    %v1047 = vmul.f32 %v874, %v957
    %v1048 = vmul.f32 %v878, %v956
    %v1049 = vmul.f32 %v878, %v957
    %v1050 = vmul.f32 %v882, %v956
    %v1051 = vmul.f32 %v882, %v957
    %v1052 = vmul.f32 %v886, %v956
    %v1053 = vmul.f32 %v886, %v957
    %v1054 = vmul.f32 %v890, %v956
    %v1055 = vmul.f32 %v890, %v957
    %v1056 = vmul.f32 %v894, %v956
    %v1057 = vmul.f32 %v894, %v957
    %v1058 = vmul.f32 %v898, %v956
    %v1059 = vmul.f32 %v898, %v957
    %v1060 = vmul.f32 %v902, %v956
    %v1061 = vmul.f32 %v902, %v957
    %v1062 = vmul.f32 %v906, %v956
    %v1063 = vmul.f32 %v906, %v957
    %v1064 = vmul.f32 %v910, %v956
    %v1065 = vmul.f32 %v910, %v957
    %v1066 = vmul.f32 %v914, %v956
    %v1067 = vmul.f32 %v914, %v957
    %v1068 = vmul.f32 %v918, %v956
    %v1069 = vmul.f32 %v918, %v957
    %v1070 = vmul.f32 %v922, %v956
    %v1071 = vmul.f32 %v922, %v957
    %v1072 = vmul.f32 %v926, %v956
    %v1073 = vmul.f32 %v926, %v957
    %v1074 = vmul.f32 %v930, %v956
    %v1075 = vmul.f32 %v930, %v957
    %v1076 = vmul.f32 %v934, %v956
    %v1077 = vmul.f32 %v934, %v957
    %v1078 = vmul.f32 %v938, %v956
    %v1079 = vmul.f32 %v938, %v957
    %v1080 = vmul.f32 %v942, %v956
    %v1081 = vmul.f32 %v942, %v957
    %v1082 = vmul.f32 %v946, %v956
    %v1083 = vmul.f32 %v946, %v957
    %v1084 = vmul.f32 %v950, %v956
    %v1085 = vmul.f32 %v950, %v957
    %v1086 = vadd.f32 %v568, %v958
    %v1087 = vadd.f32 %v569, %v959
    %v1088 = vadd.f32 %v570, %v960
    %v1089 = vadd.f32 %v571, %v961
    %v1090 = vadd.f32 %v572, %v962
    %v1091 = vadd.f32 %v573, %v963
    %v1092 = vadd.f32 %v574, %v964
    %v1093 = vadd.f32 %v575, %v965
    %v1094 = vadd.f32 %v576, %v966
    %v1095 = vadd.f32 %v577, %v967
    %v1096 = vadd.f32 %v578, %v968
    %v1097 = vadd.f32 %v579, %v969
    %v1098 = vadd.f32 %v580, %v970
    %v1099 = vadd.f32 %v581, %v971
    %v1100 = vadd.f32 %v582, %v972
    %v1101 = vadd.f32 %v583, %v973
    %v1102 = vadd.f32 %v584, %v974
    %v1103 = vadd.f32 %v585, %v975
    %v1104 = vadd.f32 %v586, %v976
    %v1105 = vadd.f32 %v587, %v977
    %v1106 = vadd.f32 %v588, %v978
    %v1107 = vadd.f32 %v589, %v979
    %v1108 = vadd.f32 %v590, %v980
    %v1109 = vadd.f32 %v591, %v981
    %v1110 = vadd.f32 %v592, %v982
    %v1111 = vadd.f32 %v593, %v983
    %v1112 = vadd.f32 %v594, %v984
    %v1113 = vadd.f32 %v595, %v985
    %v1114 = vadd.f32 %v596, %v986
    %v1115 = vadd.f32 %v597, %v987
    %v1116 = vadd.f32 %v598, %v988
    %v1117 = vadd.f32 %v599, %v989
    %v1118 = vadd.f32 %v600, %v990
    %v1119 = vadd.f32 %v601, %v991
    %v1120 = vadd.f32 %v602, %v992
    %v1121 = vadd.f32 %v603, %v993
    %v1122 = vadd.f32 %v604, %v994
    %v1123 = vadd.f32 %v605, %v995
    %v1124 = vadd.f32 %v606, %v996
    %v1125 = vadd.f32 %v607, %v997
    %v1126 = vadd.f32 %v608, %v998
    %v1127 = vadd.f32 %v609, %v999
    %v1128 = vadd.f32 %v610, %v1000
    %v1129 = vadd.f32 %v611, %v1001
    %v1130 = vadd.f32 %v612, %v1002
    %v1131 = vadd.f32 %v613, %v1003
    %v1132 = vadd.f32 %v614, %v1004
    %v1133 = vadd.f32 %v615, %v1005
    %v1134 = vadd.f32 %v616, %v1006
    %v1135 = vadd.f32 %v617, %v1007
    %v1136 = vadd.f32 %v618, %v1008
    %v1137 = vadd.f32 %v619, %v1009
    %v1138 = vadd.f32 %v620, %v1010
    %v1139 = vadd.f32 %v621, %v1011
    %v1140 = vadd.f32 %v622, %v1012
    %v1141 = vadd.f32 %v623, %v1013
    %v1142 = vadd.f32 %v624, %v1014
    %v1143 = vadd.f32 %v625, %v1015
    %v1144 = vadd.f32 %v626, %v1016
    %v1145 = vadd.f32 %v627, %v1017
    %v1146 = vadd.f32 %v628, %v1018
    %v1147 = vadd.f32 %v629, %v1019
    %v1148 = vadd.f32 %v630, %v1020
    %v1149 = vadd.f32 %v631, %v1021
    %v1150 = vadd.f32 %v632, %v1022
    %v1151 = vadd.f32 %v633, %v1023
    %v1152 = vadd.f32 %v634, %v1024
    %v1153 = vadd.f32 %v635, %v1025
    %v1154 = vadd.f32 %v636, %v1026
    %v1155 = vadd.f32 %v637, %v1027
    %v1156 = vadd.f32 %v638, %v1028
    %v1157 = vadd.f32 %v639, %v1029
    %v1158 = vadd.f32 %v640, %v1030
    %v1159 = vadd.f32 %v641, %v1031
    %v1160 = vadd.f32 %v642, %v1032
    %v1161 = vadd.f32 %v643, %v1033
    %v1162 = vadd.f32 %v644, %v1034
    %v1163 = vadd.f32 %v645, %v1035
    %v1164 = vadd.f32 %v646, %v1036
    %v1165 = vadd.f32 %v647, %v1037
    %v1166 = vadd.f32 %v648, %v1038
    %v1167 = vadd.f32 %v649, %v1039
    %v1168 = vadd.f32 %v650, %v1040
    %v1169 = vadd.f32 %v651, %v1041
    %v1170 = vadd.f32 %v652, %v1042
    %v1171 = vadd.f32 %v653, %v1043
    %v1172 = vadd.f32 %v654, %v1044
    %v1173 = vadd.f32 %v655, %v1045
    %v1174 = vadd.f32 %v656, %v1046
    %v1175 = vadd.f32 %v657, %v1047
    %v1176 = vadd.f32 %v658, %v1048
    %v1177 = vadd.f32 %v659, %v1049
    %v1178 = vadd.f32 %v660, %v1050
    %v1179 = vadd.f32 %v661, %v1051
    %v1180 = vadd.f32 %v662, %v1052
    %v1181 = vadd.f32 %v663, %v1053
    %v1182 = vadd.f32 %v664, %v1054
    %v1183 = vadd.f32 %v665, %v1055
    %v1184 = vadd.f32 %v666, %v1056
    %v1185 = vadd.f32 %v667, %v1057
    %v1186 = vadd.f32 %v668, %v1058
    %v1187 = vadd.f32 %v669, %v1059
    %v1188 = vadd.f32 %v670, %v1060
    %v1189 = vadd.f32 %v671, %v1061
    %v1190 = vadd.f32 %v672, %v1062
    %v1191 = vadd.f32 %v673, %v1063
    %v1192 = vadd.f32 %v674, %v1064
    %v1193 = vadd.f32 %v675, %v1065
    %v1194 = vadd.f32 %v676, %v1066
    %v1195 = vadd.f32 %v677, %v1067
    %v1196 = vadd.f32 %v678, %v1068
    %v1197 = vadd.f32 %v679, %v1069
    %v1198 = vadd.f32 %v680, %v1070
    %v1199 = vadd.f32 %v681, %v1071
    %v1200 = vadd.f32 %v682, %v1072
    %v1201 = vadd.f32 %v683, %v1073
    %v1202 = vadd.f32 %v684, %v1074
    %v1203 = vadd.f32 %v685, %v1075
    %v1204 = vadd.f32 %v686, %v1076
    %v1205 = vadd.f32 %v687, %v1077
    %v1206 = vadd.f32 %v688, %v1078
    %v1207 = vadd.f32 %v689, %v1079
    %v1208 = vadd.f32 %v690, %v1080
    %v1209 = vadd.f32 %v691, %v1081
    %v1210 = vadd.f32 %v692, %v1082
    %v1211 = vadd.f32 %v693, %v1083
    %v1212 = vadd.f32 %v694, %v1084
    %v1213 = vadd.f32 %v695, %v1085
    %1214 = vset.pattern.permute.xlu0 2
    %1215 = vperm.xlu0 %1214, %v42
    %v1216 = vpop.permute.xlu0 %1215
    %1218 = vset.pattern.permute.xlu0 2
    %1219 = vperm.xlu0 %1218, %v43
    %v1220 = vpop.permute.xlu0 %1219
    %1222 = vset.pattern.permute.xlu0 2
    %1223 = vperm.xlu0 %1222, %v44
    %v1224 = vpop.permute.xlu0 %1223
    %1226 = vset.pattern.permute.xlu0 2
    %1227 = vperm.xlu0 %1226, %v45
    %v1228 = vpop.permute.xlu0 %1227
    %1230 = vset.pattern.permute.xlu0 2
    %1231 = vperm.xlu0 %1230, %v46
    %v1232 = vpop.permute.xlu0 %1231
    %1234 = vset.pattern.permute.xlu0 2
    %1235 = vperm.xlu0 %1234, %v47
    %v1236 = vpop.permute.xlu0 %1235
    %1238 = vset.pattern.permute.xlu0 2
    %1239 = vperm.xlu0 %1238, %v48
    %v1240 = vpop.permute.xlu0 %1239
    %1242 = vset.pattern.permute.xlu0 2
    %1243 = vperm.xlu0 %1242, %v49
    %v1244 = vpop.permute.xlu0 %1243
    %1246 = vset.pattern.permute.xlu0 2
    %1247 = vperm.xlu0 %1246, %v50
    %v1248 = vpop.permute.xlu0 %1247
    %1250 = vset.pattern.permute.xlu0 2
    %1251 = vperm.xlu0 %1250, %v51
    %v1252 = vpop.permute.xlu0 %1251
    %1254 = vset.pattern.permute.xlu0 2
    %1255 = vperm.xlu0 %1254, %v52
    %v1256 = vpop.permute.xlu0 %1255
    %1258 = vset.pattern.permute.xlu0 2
    %1259 = vperm.xlu0 %1258, %v53
    %v1260 = vpop.permute.xlu0 %1259
    %1262 = vset.pattern.permute.xlu0 2
    %1263 = vperm.xlu0 %1262, %v54
    %v1264 = vpop.permute.xlu0 %1263
    %1266 = vset.pattern.permute.xlu0 2
    %1267 = vperm.xlu0 %1266, %v55
    %v1268 = vpop.permute.xlu0 %1267
    %1270 = vset.pattern.permute.xlu0 2
    %1271 = vperm.xlu0 %1270, %v56
    %v1272 = vpop.permute.xlu0 %1271
    %1274 = vset.pattern.permute.xlu0 2
    %1275 = vperm.xlu0 %1274, %v57
    %v1276 = vpop.permute.xlu0 %1275
    %1278 = vset.pattern.permute.xlu0 2
    %1279 = vperm.xlu0 %1278, %v58
    %v1280 = vpop.permute.xlu0 %1279
    %1282 = vset.pattern.permute.xlu0 2
    %1283 = vperm.xlu0 %1282, %v59
    %v1284 = vpop.permute.xlu0 %1283
    %1286 = vset.pattern.permute.xlu0 2
    %1287 = vperm.xlu0 %1286, %v60
    %v1288 = vpop.permute.xlu0 %1287
    %1290 = vset.pattern.permute.xlu0 2
    %1291 = vperm.xlu0 %1290, %v61
    %v1292 = vpop.permute.xlu0 %1291
    %1294 = vset.pattern.permute.xlu0 2
    %1295 = vperm.xlu0 %1294, %v62
    %v1296 = vpop.permute.xlu0 %1295
    %1298 = vset.pattern.permute.xlu0 2
    %1299 = vperm.xlu0 %1298, %v63
    %v1300 = vpop.permute.xlu0 %1299
    %1302 = vset.pattern.permute.xlu0 2
    %1303 = vperm.xlu0 %1302, %v64
    %v1304 = vpop.permute.xlu0 %1303
    %1306 = vset.pattern.permute.xlu0 2
    %1307 = vperm.xlu0 %1306, %v65
    %v1308 = vpop.permute.xlu0 %1307
    %1310 = vset.pattern.permute.xlu0 2
    %1311 = vperm.xlu0 %1310, %v66
    %v1312 = vpop.permute.xlu0 %1311
    %1314 = vset.pattern.permute.xlu0 2
    %1315 = vperm.xlu0 %1314, %v67
    %v1316 = vpop.permute.xlu0 %1315
    %1318 = vset.pattern.permute.xlu0 2
    %1319 = vperm.xlu0 %1318, %v68
    %v1320 = vpop.permute.xlu0 %1319
    %1322 = vset.pattern.permute.xlu0 2
    %1323 = vperm.xlu0 %1322, %v69
    %v1324 = vpop.permute.xlu0 %1323
    %1326 = vset.pattern.permute.xlu0 2
    %1327 = vperm.xlu0 %1326, %v70
    %v1328 = vpop.permute.xlu0 %1327
    %1330 = vset.pattern.permute.xlu0 2
    %1331 = vperm.xlu0 %1330, %v71
    %v1332 = vpop.permute.xlu0 %1331
    %1334 = vset.pattern.permute.xlu0 2
    %1335 = vperm.xlu0 %1334, %v72
    %v1336 = vpop.permute.xlu0 %1335
    %1338 = vset.pattern.permute.xlu0 2
    %1339 = vperm.xlu0 %1338, %v73
    %v1340 = vpop.permute.xlu0 %1339
    %1342 = vset.pattern.permute.xlu0 2
    %1343 = vperm.xlu0 %1342, %v74
    %v1344 = vpop.permute.xlu0 %1343
    %1346 = vset.pattern.permute.xlu0 2
    %1347 = vperm.xlu0 %1346, %v75
    %v1348 = vpop.permute.xlu0 %1347
    %1350 = vset.pattern.permute.xlu0 2
    %1351 = vperm.xlu0 %1350, %v76
    %v1352 = vpop.permute.xlu0 %1351
    %1354 = vset.pattern.permute.xlu0 2
    %1355 = vperm.xlu0 %1354, %v77
    %v1356 = vpop.permute.xlu0 %1355
    %1358 = vset.pattern.permute.xlu0 2
    %1359 = vperm.xlu0 %1358, %v78
    %v1360 = vpop.permute.xlu0 %1359
    %1362 = vset.pattern.permute.xlu0 2
    %1363 = vperm.xlu0 %1362, %v79
    %v1364 = vpop.permute.xlu0 %1363
    %1366 = vset.pattern.permute.xlu0 2
    %1367 = vperm.xlu0 %1366, %v80
    %v1368 = vpop.permute.xlu0 %1367
    %1370 = vset.pattern.permute.xlu0 2
    %1371 = vperm.xlu0 %1370, %v81
    %v1372 = vpop.permute.xlu0 %1371
    %1374 = vset.pattern.permute.xlu0 2
    %1375 = vperm.xlu0 %1374, %v82
    %v1376 = vpop.permute.xlu0 %1375
    %1378 = vset.pattern.permute.xlu0 2
    %1379 = vperm.xlu0 %1378, %v83
    %v1380 = vpop.permute.xlu0 %1379
    %1382 = vset.pattern.permute.xlu0 2
    %1383 = vperm.xlu0 %1382, %v84
    %v1384 = vpop.permute.xlu0 %1383
    %1386 = vset.pattern.permute.xlu0 2
    %1387 = vperm.xlu0 %1386, %v85
    %v1388 = vpop.permute.xlu0 %1387
    %1390 = vset.pattern.permute.xlu0 2
    %1391 = vperm.xlu0 %1390, %v86
    %v1392 = vpop.permute.xlu0 %1391
    %1394 = vset.pattern.permute.xlu0 2
    %1395 = vperm.xlu0 %1394, %v87
    %v1396 = vpop.permute.xlu0 %1395
    %1398 = vset.pattern.permute.xlu0 2
    %1399 = vperm.xlu0 %1398, %v88
    %v1400 = vpop.permute.xlu0 %1399
    %1402 = vset.pattern.permute.xlu0 2
    %1403 = vperm.xlu0 %1402, %v89
    %v1404 = vpop.permute.xlu0 %1403
    %1406 = vset.pattern.permute.xlu0 2
    %1407 = vperm.xlu0 %1406, %v90
    %v1408 = vpop.permute.xlu0 %1407
    %1410 = vset.pattern.permute.xlu0 2
    %1411 = vperm.xlu0 %1410, %v91
    %v1412 = vpop.permute.xlu0 %1411
    %1414 = vset.pattern.permute.xlu0 2
    %1415 = vperm.xlu0 %1414, %v92
    %v1416 = vpop.permute.xlu0 %1415
    %1418 = vset.pattern.permute.xlu0 2
    %1419 = vperm.xlu0 %1418, %v93
    %v1420 = vpop.permute.xlu0 %1419
    %1422 = vset.pattern.permute.xlu0 2
    %1423 = vperm.xlu0 %1422, %v94
    %v1424 = vpop.permute.xlu0 %1423
    %1426 = vset.pattern.permute.xlu0 2
    %1427 = vperm.xlu0 %1426, %v95
    %v1428 = vpop.permute.xlu0 %1427
    %1430 = vset.pattern.permute.xlu0 2
    %1431 = vperm.xlu0 %1430, %v96
    %v1432 = vpop.permute.xlu0 %1431
    %1434 = vset.pattern.permute.xlu0 2
    %1435 = vperm.xlu0 %1434, %v97
    %v1436 = vpop.permute.xlu0 %1435
    %1438 = vset.pattern.permute.xlu0 2
    %1439 = vperm.xlu0 %1438, %v98
    %v1440 = vpop.permute.xlu0 %1439
    %1442 = vset.pattern.permute.xlu0 2
    %1443 = vperm.xlu0 %1442, %v99
    %v1444 = vpop.permute.xlu0 %1443
    %1446 = vset.pattern.permute.xlu0 2
    %1447 = vperm.xlu0 %1446, %v100
    %v1448 = vpop.permute.xlu0 %1447
    %1450 = vset.pattern.permute.xlu0 2
    %1451 = vperm.xlu0 %1450, %v101
    %v1452 = vpop.permute.xlu0 %1451
    %1454 = vset.pattern.permute.xlu0 2
    %1455 = vperm.xlu0 %1454, %v102
    %v1456 = vpop.permute.xlu0 %1455
    %1458 = vset.pattern.permute.xlu0 2
    %1459 = vperm.xlu0 %1458, %v103
    %v1460 = vpop.permute.xlu0 %1459
    %1462 = vset.pattern.permute.xlu0 2
    %1463 = vperm.xlu0 %1462, %v104
    %v1464 = vpop.permute.xlu0 %1463
    %1466 = vset.pattern.permute.xlu0 2
    %1467 = vperm.xlu0 %1466, %v105
    %v1468 = vpop.permute.xlu0 %1467
    %v1470 = vperm.slane %v106, 2
    %v1471 = vperm.slane %v106, 6
    %v1474 = vperm.slane %v1470, 2
    %v1475 = vperm.slane %v1471, 2
    %v1476 = vmul.f32 %v1216, %v1474
    %v1477 = vmul.f32 %v1216, %v1475
    %v1478 = vmul.f32 %v1220, %v1474
    %v1479 = vmul.f32 %v1220, %v1475
    %v1480 = vmul.f32 %v1224, %v1474
    %v1481 = vmul.f32 %v1224, %v1475
    %v1482 = vmul.f32 %v1228, %v1474
    %v1483 = vmul.f32 %v1228, %v1475
    %v1484 = vmul.f32 %v1232, %v1474
    %v1485 = vmul.f32 %v1232, %v1475
    %v1486 = vmul.f32 %v1236, %v1474
    %v1487 = vmul.f32 %v1236, %v1475
    %v1488 = vmul.f32 %v1240, %v1474
    %v1489 = vmul.f32 %v1240, %v1475
    %v1490 = vmul.f32 %v1244, %v1474
    %v1491 = vmul.f32 %v1244, %v1475
    %v1492 = vmul.f32 %v1248, %v1474
    %v1493 = vmul.f32 %v1248, %v1475
    %v1494 = vmul.f32 %v1252, %v1474
    %v1495 = vmul.f32 %v1252, %v1475
    %v1496 = vmul.f32 %v1256, %v1474
    %v1497 = vmul.f32 %v1256, %v1475
    %v1498 = vmul.f32 %v1260, %v1474
    %v1499 = vmul.f32 %v1260, %v1475
    %v1500 = vmul.f32 %v1264, %v1474
    %v1501 = vmul.f32 %v1264, %v1475
    %v1502 = vmul.f32 %v1268, %v1474
    %v1503 = vmul.f32 %v1268, %v1475
    %v1504 = vmul.f32 %v1272, %v1474
    %v1505 = vmul.f32 %v1272, %v1475
    %v1506 = vmul.f32 %v1276, %v1474
    %v1507 = vmul.f32 %v1276, %v1475
    %v1508 = vmul.f32 %v1280, %v1474
    %v1509 = vmul.f32 %v1280, %v1475
    %v1510 = vmul.f32 %v1284, %v1474
    %v1511 = vmul.f32 %v1284, %v1475
    %v1512 = vmul.f32 %v1288, %v1474
    %v1513 = vmul.f32 %v1288, %v1475
    %v1514 = vmul.f32 %v1292, %v1474
    %v1515 = vmul.f32 %v1292, %v1475
    %v1516 = vmul.f32 %v1296, %v1474
    %v1517 = vmul.f32 %v1296, %v1475
    %v1518 = vmul.f32 %v1300, %v1474
    %v1519 = vmul.f32 %v1300, %v1475
    %v1520 = vmul.f32 %v1304, %v1474
    %v1521 = vmul.f32 %v1304, %v1475
    %v1522 = vmul.f32 %v1308, %v1474
    %v1523 = vmul.f32 %v1308, %v1475
    %v1524 = vmul.f32 %v1312, %v1474
    %v1525 = vmul.f32 %v1312, %v1475
    %v1526 = vmul.f32 %v1316, %v1474
    %v1527 = vmul.f32 %v1316, %v1475
    %v1528 = vmul.f32 %v1320, %v1474
    %v1529 = vmul.f32 %v1320, %v1475
    %v1530 = vmul.f32 %v1324, %v1474
    %v1531 = vmul.f32 %v1324, %v1475
    %v1532 = vmul.f32 %v1328, %v1474
    %v1533 = vmul.f32 %v1328, %v1475
    %v1534 = vmul.f32 %v1332, %v1474
    %v1535 = vmul.f32 %v1332, %v1475
    %v1536 = vmul.f32 %v1336, %v1474
    %v1537 = vmul.f32 %v1336, %v1475
    %v1538 = vmul.f32 %v1340, %v1474
    %v1539 = vmul.f32 %v1340, %v1475
    %v1540 = vmul.f32 %v1344, %v1474
    %v1541 = vmul.f32 %v1344, %v1475
    %v1542 = vmul.f32 %v1348, %v1474
    %v1543 = vmul.f32 %v1348, %v1475
    %v1544 = vmul.f32 %v1352, %v1474
    %v1545 = vmul.f32 %v1352, %v1475
    %v1546 = vmul.f32 %v1356, %v1474
    %v1547 = vmul.f32 %v1356, %v1475
    %v1548 = vmul.f32 %v1360, %v1474
    %v1549 = vmul.f32 %v1360, %v1475
    %v1550 = vmul.f32 %v1364, %v1474
    %v1551 = vmul.f32 %v1364, %v1475
    %v1552 = vmul.f32 %v1368, %v1474
    %v1553 = vmul.f32 %v1368, %v1475
    %v1554 = vmul.f32 %v1372, %v1474
    %v1555 = vmul.f32 %v1372, %v1475
    %v1556 = vmul.f32 %v1376, %v1474
    %v1557 = vmul.f32 %v1376, %v1475
    %v1558 = vmul.f32 %v1380, %v1474
    %v1559 = vmul.f32 %v1380, %v1475
    %v1560 = vmul.f32 %v1384, %v1474
    %v1561 = vmul.f32 %v1384, %v1475
    %v1562 = vmul.f32 %v1388, %v1474
    %v1563 = vmul.f32 %v1388, %v1475
    %v1564 = vmul.f32 %v1392, %v1474
    %v1565 = vmul.f32 %v1392, %v1475
    %v1566 = vmul.f32 %v1396, %v1474
    %v1567 = vmul.f32 %v1396, %v1475
    %v1568 = vmul.f32 %v1400, %v1474
    %v1569 = vmul.f32 %v1400, %v1475
    %v1570 = vmul.f32 %v1404, %v1474
    %v1571 = vmul.f32 %v1404, %v1475
    %v1572 = vmul.f32 %v1408, %v1474
    %v1573 = vmul.f32 %v1408, %v1475
    %v1574 = vmul.f32 %v1412, %v1474
    %v1575 = vmul.f32 %v1412, %v1475
    %v1576 = vmul.f32 %v1416, %v1474
    %v1577 = vmul.f32 %v1416, %v1475
    %v1578 = vmul.f32 %v1420, %v1474
    %v1579 = vmul.f32 %v1420, %v1475
    %v1580 = vmul.f32 %v1424, %v1474
    %v1581 = vmul.f32 %v1424, %v1475
    %v1582 = vmul.f32 %v1428, %v1474
    %v1583 = vmul.f32 %v1428, %v1475
    %v1584 = vmul.f32 %v1432, %v1474
    %v1585 = vmul.f32 %v1432, %v1475
    %v1586 = vmul.f32 %v1436, %v1474
    %v1587 = vmul.f32 %v1436, %v1475
    %v1588 = vmul.f32 %v1440, %v1474
    %v1589 = vmul.f32 %v1440, %v1475
    %v1590 = vmul.f32 %v1444, %v1474
    %v1591 = vmul.f32 %v1444, %v1475
    %v1592 = vmul.f32 %v1448, %v1474
    %v1593 = vmul.f32 %v1448, %v1475
    %v1594 = vmul.f32 %v1452, %v1474
    %v1595 = vmul.f32 %v1452, %v1475
    %v1596 = vmul.f32 %v1456, %v1474
    %v1597 = vmul.f32 %v1456, %v1475
    %v1598 = vmul.f32 %v1460, %v1474
    %v1599 = vmul.f32 %v1460, %v1475
    %v1600 = vmul.f32 %v1464, %v1474
    %v1601 = vmul.f32 %v1464, %v1475
    %v1602 = vmul.f32 %v1468, %v1474
    %v1603 = vmul.f32 %v1468, %v1475
    %v1604 = vadd.f32 %v1086, %v1476
    %v1605 = vadd.f32 %v1087, %v1477
    %v1606 = vadd.f32 %v1088, %v1478
    %v1607 = vadd.f32 %v1089, %v1479
    %v1608 = vadd.f32 %v1090, %v1480
    %v1609 = vadd.f32 %v1091, %v1481
    %v1610 = vadd.f32 %v1092, %v1482
    %v1611 = vadd.f32 %v1093, %v1483
    %v1612 = vadd.f32 %v1094, %v1484
    %v1613 = vadd.f32 %v1095, %v1485
    %v1614 = vadd.f32 %v1096, %v1486
    %v1615 = vadd.f32 %v1097, %v1487
    %v1616 = vadd.f32 %v1098, %v1488
    %v1617 = vadd.f32 %v1099, %v1489
    %v1618 = vadd.f32 %v1100, %v1490
    %v1619 = vadd.f32 %v1101, %v1491
    %v1620 = vadd.f32 %v1102, %v1492
    %v1621 = vadd.f32 %v1103, %v1493
    %v1622 = vadd.f32 %v1104, %v1494
    %v1623 = vadd.f32 %v1105, %v1495
    %v1624 = vadd.f32 %v1106, %v1496
    %v1625 = vadd.f32 %v1107, %v1497
    %v1626 = vadd.f32 %v1108, %v1498
    %v1627 = vadd.f32 %v1109, %v1499
    %v1628 = vadd.f32 %v1110, %v1500
    %v1629 = vadd.f32 %v1111, %v1501
    %v1630 = vadd.f32 %v1112, %v1502
    %v1631 = vadd.f32 %v1113, %v1503
    %v1632 = vadd.f32 %v1114, %v1504
    %v1633 = vadd.f32 %v1115, %v1505
    %v1634 = vadd.f32 %v1116, %v1506
    %v1635 = vadd.f32 %v1117, %v1507
    %v1636 = vadd.f32 %v1118, %v1508
    %v1637 = vadd.f32 %v1119, %v1509
    %v1638 = vadd.f32 %v1120, %v1510
    %v1639 = vadd.f32 %v1121, %v1511
    %v1640 = vadd.f32 %v1122, %v1512
    %v1641 = vadd.f32 %v1123, %v1513
    %v1642 = vadd.f32 %v1124, %v1514
    %v1643 = vadd.f32 %v1125, %v1515
    %v1644 = vadd.f32 %v1126, %v1516
    %v1645 = vadd.f32 %v1127, %v1517
    %v1646 = vadd.f32 %v1128, %v1518
    %v1647 = vadd.f32 %v1129, %v1519
    %v1648 = vadd.f32 %v1130, %v1520
    %v1649 = vadd.f32 %v1131, %v1521
    %v1650 = vadd.f32 %v1132, %v1522
    %v1651 = vadd.f32 %v1133, %v1523
    %v1652 = vadd.f32 %v1134, %v1524
    %v1653 = vadd.f32 %v1135, %v1525
    %v1654 = vadd.f32 %v1136, %v1526
    %v1655 = vadd.f32 %v1137, %v1527
    %v1656 = vadd.f32 %v1138, %v1528
    %v1657 = vadd.f32 %v1139, %v1529
    %v1658 = vadd.f32 %v1140, %v1530
    %v1659 = vadd.f32 %v1141, %v1531
    %v1660 = vadd.f32 %v1142, %v1532
    %v1661 = vadd.f32 %v1143, %v1533
    %v1662 = vadd.f32 %v1144, %v1534
    %v1663 = vadd.f32 %v1145, %v1535
    %v1664 = vadd.f32 %v1146, %v1536
    %v1665 = vadd.f32 %v1147, %v1537
    %v1666 = vadd.f32 %v1148, %v1538
    %v1667 = vadd.f32 %v1149, %v1539
    %v1668 = vadd.f32 %v1150, %v1540
    %v1669 = vadd.f32 %v1151, %v1541
    %v1670 = vadd.f32 %v1152, %v1542
    %v1671 = vadd.f32 %v1153, %v1543
    %v1672 = vadd.f32 %v1154, %v1544
    %v1673 = vadd.f32 %v1155, %v1545
    %v1674 = vadd.f32 %v1156, %v1546
    %v1675 = vadd.f32 %v1157, %v1547
    %v1676 = vadd.f32 %v1158, %v1548
    %v1677 = vadd.f32 %v1159, %v1549
    %v1678 = vadd.f32 %v1160, %v1550
    %v1679 = vadd.f32 %v1161, %v1551
    %v1680 = vadd.f32 %v1162, %v1552
    %v1681 = vadd.f32 %v1163, %v1553
    %v1682 = vadd.f32 %v1164, %v1554
    %v1683 = vadd.f32 %v1165, %v1555
    %v1684 = vadd.f32 %v1166, %v1556
    %v1685 = vadd.f32 %v1167, %v1557
    %v1686 = vadd.f32 %v1168, %v1558
    %v1687 = vadd.f32 %v1169, %v1559
    %v1688 = vadd.f32 %v1170, %v1560
    %v1689 = vadd.f32 %v1171, %v1561
    %v1690 = vadd.f32 %v1172, %v1562
    %v1691 = vadd.f32 %v1173, %v1563
    %v1692 = vadd.f32 %v1174, %v1564
    %v1693 = vadd.f32 %v1175, %v1565
    %v1694 = vadd.f32 %v1176, %v1566
    %v1695 = vadd.f32 %v1177, %v1567
    %v1696 = vadd.f32 %v1178, %v1568
    %v1697 = vadd.f32 %v1179, %v1569
    %v1698 = vadd.f32 %v1180, %v1570
    %v1699 = vadd.f32 %v1181, %v1571
    %v1700 = vadd.f32 %v1182, %v1572
    %v1701 = vadd.f32 %v1183, %v1573
    %v1702 = vadd.f32 %v1184, %v1574
    %v1703 = vadd.f32 %v1185, %v1575
    %v1704 = vadd.f32 %v1186, %v1576
    %v1705 = vadd.f32 %v1187, %v1577
    %v1706 = vadd.f32 %v1188, %v1578
    %v1707 = vadd.f32 %v1189, %v1579
    %v1708 = vadd.f32 %v1190, %v1580
    %v1709 = vadd.f32 %v1191, %v1581
    %v1710 = vadd.f32 %v1192, %v1582
    %v1711 = vadd.f32 %v1193, %v1583
    %v1712 = vadd.f32 %v1194, %v1584
    %v1713 = vadd.f32 %v1195, %v1585
    %v1714 = vadd.f32 %v1196, %v1586
    %v1715 = vadd.f32 %v1197, %v1587
    %v1716 = vadd.f32 %v1198, %v1588
    %v1717 = vadd.f32 %v1199, %v1589
    %v1718 = vadd.f32 %v1200, %v1590
    %v1719 = vadd.f32 %v1201, %v1591
    %v1720 = vadd.f32 %v1202, %v1592
    %v1721 = vadd.f32 %v1203, %v1593
    %v1722 = vadd.f32 %v1204, %v1594
    %v1723 = vadd.f32 %v1205, %v1595
    %v1724 = vadd.f32 %v1206, %v1596
    %v1725 = vadd.f32 %v1207, %v1597
    %v1726 = vadd.f32 %v1208, %v1598
    %v1727 = vadd.f32 %v1209, %v1599
    %v1728 = vadd.f32 %v1210, %v1600
    %v1729 = vadd.f32 %v1211, %v1601
    %v1730 = vadd.f32 %v1212, %v1602
    %v1731 = vadd.f32 %v1213, %v1603
    %v1732 = vmax.f32 %v1604, 0.0
    %v1733 = vmax.f32 %v1605, 0.0
    %v1734 = vmax.f32 %v1606, 0.0
    %v1735 = vmax.f32 %v1607, 0.0
    %v1736 = vmax.f32 %v1608, 0.0
    %v1737 = vmax.f32 %v1609, 0.0
    %v1738 = vmax.f32 %v1610, 0.0
    %v1739 = vmax.f32 %v1611, 0.0
    %v1740 = vmax.f32 %v1612, 0.0
    %v1741 = vmax.f32 %v1613, 0.0
    %v1742 = vmax.f32 %v1614, 0.0
    %v1743 = vmax.f32 %v1615, 0.0
    %v1744 = vmax.f32 %v1616, 0.0
    %v1745 = vmax.f32 %v1617, 0.0
    %v1746 = vmax.f32 %v1618, 0.0
    %v1747 = vmax.f32 %v1619, 0.0
    %v1748 = vmax.f32 %v1620, 0.0
    %v1749 = vmax.f32 %v1621, 0.0
    %v1750 = vmax.f32 %v1622, 0.0
    %v1751 = vmax.f32 %v1623, 0.0
    %v1752 = vmax.f32 %v1624, 0.0
    %v1753 = vmax.f32 %v1625, 0.0
    %v1754 = vmax.f32 %v1626, 0.0
    %v1755 = vmax.f32 %v1627, 0.0
    %v1756 = vmax.f32 %v1628, 0.0
    %v1757 = vmax.f32 %v1629, 0.0
    %v1758 = vmax.f32 %v1630, 0.0
    %v1759 = vmax.f32 %v1631, 0.0
    %v1760 = vmax.f32 %v1632, 0.0
    %v1761 = vmax.f32 %v1633, 0.0
    %v1762 = vmax.f32 %v1634, 0.0
    %v1763 = vmax.f32 %v1635, 0.0
    %v1764 = vmax.f32 %v1636, 0.0
    %v1765 = vmax.f32 %v1637, 0.0
    %v1766 = vmax.f32 %v1638, 0.0
    %v1767 = vmax.f32 %v1639, 0.0
    %v1768 = vmax.f32 %v1640, 0.0
    %v1769 = vmax.f32 %v1641, 0.0
    %v1770 = vmax.f32 %v1642, 0.0
    %v1771 = vmax.f32 %v1643, 0.0
    %v1772 = vmax.f32 %v1644, 0.0
    %v1773 = vmax.f32 %v1645, 0.0
    %v1774 = vmax.f32 %v1646, 0.0
    %v1775 = vmax.f32 %v1647, 0.0
    %v1776 = vmax.f32 %v1648, 0.0
    %v1777 = vmax.f32 %v1649, 0.0
    %v1778 = vmax.f32 %v1650, 0.0
    %v1779 = vmax.f32 %v1651, 0.0
    %v1780 = vmax.f32 %v1652, 0.0
    %v1781 = vmax.f32 %v1653, 0.0
    %v1782 = vmax.f32 %v1654, 0.0
    %v1783 = vmax.f32 %v1655, 0.0
    %v1784 = vmax.f32 %v1656, 0.0
    %v1785 = vmax.f32 %v1657, 0.0
    %v1786 = vmax.f32 %v1658, 0.0
    %v1787 = vmax.f32 %v1659, 0.0
    %v1788 = vmax.f32 %v1660, 0.0
    %v1789 = vmax.f32 %v1661, 0.0
    %v1790 = vmax.f32 %v1662, 0.0
    %v1791 = vmax.f32 %v1663, 0.0
    %v1792 = vmax.f32 %v1664, 0.0
    %v1793 = vmax.f32 %v1665, 0.0
    %v1794 = vmax.f32 %v1666, 0.0
    %v1795 = vmax.f32 %v1667, 0.0
    %v1796 = vmax.f32 %v1668, 0.0
    %v1797 = vmax.f32 %v1669, 0.0
    %v1798 = vmax.f32 %v1670, 0.0
    %v1799 = vmax.f32 %v1671, 0.0
    %v1800 = vmax.f32 %v1672, 0.0
    %v1801 = vmax.f32 %v1673, 0.0
    %v1802 = vmax.f32 %v1674, 0.0
    %v1803 = vmax.f32 %v1675, 0.0
    %v1804 = vmax.f32 %v1676, 0.0
    %v1805 = vmax.f32 %v1677, 0.0
    %v1806 = vmax.f32 %v1678, 0.0
    %v1807 = vmax.f32 %v1679, 0.0
    %v1808 = vmax.f32 %v1680, 0.0
    %v1809 = vmax.f32 %v1681, 0.0
    %v1810 = vmax.f32 %v1682, 0.0
    %v1811 = vmax.f32 %v1683, 0.0
    %v1812 = vmax.f32 %v1684, 0.0
    %v1813 = vmax.f32 %v1685, 0.0
    %v1814 = vmax.f32 %v1686, 0.0
    %v1815 = vmax.f32 %v1687, 0.0
    %v1816 = vmax.f32 %v1688, 0.0
    %v1817 = vmax.f32 %v1689, 0.0
    %v1818 = vmax.f32 %v1690, 0.0
    %v1819 = vmax.f32 %v1691, 0.0
    %v1820 = vmax.f32 %v1692, 0.0
    %v1821 = vmax.f32 %v1693, 0.0
    %v1822 = vmax.f32 %v1694, 0.0
    %v1823 = vmax.f32 %v1695, 0.0
    %v1824 = vmax.f32 %v1696, 0.0
    %v1825 = vmax.f32 %v1697, 0.0
    %v1826 = vmax.f32 %v1698, 0.0
    %v1827 = vmax.f32 %v1699, 0.0
    %v1828 = vmax.f32 %v1700, 0.0
    %v1829 = vmax.f32 %v1701, 0.0
    %v1830 = vmax.f32 %v1702, 0.0
    %v1831 = vmax.f32 %v1703, 0.0
    %v1832 = vmax.f32 %v1704, 0.0
    %v1833 = vmax.f32 %v1705, 0.0
    %v1834 = vmax.f32 %v1706, 0.0
    %v1835 = vmax.f32 %v1707, 0.0
    %v1836 = vmax.f32 %v1708, 0.0
    %v1837 = vmax.f32 %v1709, 0.0
    %v1838 = vmax.f32 %v1710, 0.0
    %v1839 = vmax.f32 %v1711, 0.0
    %v1840 = vmax.f32 %v1712, 0.0
    %v1841 = vmax.f32 %v1713, 0.0
    %v1842 = vmax.f32 %v1714, 0.0
    %v1843 = vmax.f32 %v1715, 0.0
    %v1844 = vmax.f32 %v1716, 0.0
    %v1845 = vmax.f32 %v1717, 0.0
    %v1846 = vmax.f32 %v1718, 0.0
    %v1847 = vmax.f32 %v1719, 0.0
    %v1848 = vmax.f32 %v1720, 0.0
    %v1849 = vmax.f32 %v1721, 0.0
    %v1850 = vmax.f32 %v1722, 0.0
    %v1851 = vmax.f32 %v1723, 0.0
    %v1852 = vmax.f32 %v1724, 0.0
    %v1853 = vmax.f32 %v1725, 0.0
    %v1854 = vmax.f32 %v1726, 0.0
    %v1855 = vmax.f32 %v1727, 0.0
    %v1856 = vmax.f32 %v1728, 0.0
    %v1857 = vmax.f32 %v1729, 0.0
    %v1858 = vmax.f32 %v1730, 0.0
    %v1859 = vmax.f32 %v1731, 0.0
    %v1860 = vpack.c.bf16 %v1733, %v1732
    %v1861 = vpack.c.bf16 %v1735, %v1734
    %v1862 = vpack.c.bf16 %v1737, %v1736
    %v1863 = vpack.c.bf16 %v1739, %v1738
    %v1864 = vpack.c.bf16 %v1741, %v1740
    %v1865 = vpack.c.bf16 %v1743, %v1742
    %v1866 = vpack.c.bf16 %v1745, %v1744
    %v1867 = vpack.c.bf16 %v1747, %v1746
    %v1868 = vpack.c.bf16 %v1749, %v1748
    %v1869 = vpack.c.bf16 %v1751, %v1750
    %v1870 = vpack.c.bf16 %v1753, %v1752
    %v1871 = vpack.c.bf16 %v1755, %v1754
    %v1872 = vpack.c.bf16 %v1757, %v1756
    %v1873 = vpack.c.bf16 %v1759, %v1758
    %v1874 = vpack.c.bf16 %v1761, %v1760
    %v1875 = vpack.c.bf16 %v1763, %v1762
    %v1876 = vpack.c.bf16 %v1765, %v1764
    %v1877 = vpack.c.bf16 %v1767, %v1766
    %v1878 = vpack.c.bf16 %v1769, %v1768
    %v1879 = vpack.c.bf16 %v1771, %v1770
    %v1880 = vpack.c.bf16 %v1773, %v1772
    %v1881 = vpack.c.bf16 %v1775, %v1774
    %v1882 = vpack.c.bf16 %v1777, %v1776
    %v1883 = vpack.c.bf16 %v1779, %v1778
    %v1884 = vpack.c.bf16 %v1781, %v1780
    %v1885 = vpack.c.bf16 %v1783, %v1782
    %v1886 = vpack.c.bf16 %v1785, %v1784
    %v1887 = vpack.c.bf16 %v1787, %v1786
    %v1888 = vpack.c.bf16 %v1789, %v1788
    %v1889 = vpack.c.bf16 %v1791, %v1790
    %v1890 = vpack.c.bf16 %v1793, %v1792
    %v1891 = vpack.c.bf16 %v1795, %v1794
    %v1892 = vpack.c.bf16 %v1797, %v1796
    %v1893 = vpack.c.bf16 %v1799, %v1798
    %v1894 = vpack.c.bf16 %v1801, %v1800
    %v1895 = vpack.c.bf16 %v1803, %v1802
    %v1896 = vpack.c.bf16 %v1805, %v1804
    %v1897 = vpack.c.bf16 %v1807, %v1806
    %v1898 = vpack.c.bf16 %v1809, %v1808
    %v1899 = vpack.c.bf16 %v1811, %v1810
    %v1900 = vpack.c.bf16 %v1813, %v1812
    %v1901 = vpack.c.bf16 %v1815, %v1814
    %v1902 = vpack.c.bf16 %v1817, %v1816
    %v1903 = vpack.c.bf16 %v1819, %v1818
    %v1904 = vpack.c.bf16 %v1821, %v1820
    %v1905 = vpack.c.bf16 %v1823, %v1822
    %v1906 = vpack.c.bf16 %v1825, %v1824
    %v1907 = vpack.c.bf16 %v1827, %v1826
    %v1908 = vpack.c.bf16 %v1829, %v1828
    %v1909 = vpack.c.bf16 %v1831, %v1830
    %v1910 = vpack.c.bf16 %v1833, %v1832
    %v1911 = vpack.c.bf16 %v1835, %v1834
    %v1912 = vpack.c.bf16 %v1837, %v1836
    %v1913 = vpack.c.bf16 %v1839, %v1838
    %v1914 = vpack.c.bf16 %v1841, %v1840
    %v1915 = vpack.c.bf16 %v1843, %v1842
    %v1916 = vpack.c.bf16 %v1845, %v1844
    %v1917 = vpack.c.bf16 %v1847, %v1846
    %v1918 = vpack.c.bf16 %v1849, %v1848
    %v1919 = vpack.c.bf16 %v1851, %v1850
    %v1920 = vpack.c.bf16 %v1853, %v1852
    %v1921 = vpack.c.bf16 %v1855, %v1854
    %v1922 = vpack.c.bf16 %v1857, %v1856
    %v1923 = vpack.c.bf16 %v1859, %v1858
    %1924 = vst [vmem:[%s3] sm:$0xff] %v1860
    %1925 = vst [vmem:[%s3 + $0x8] sm:$0xff] %v1861
    %1926 = vst [vmem:[%s3 + $0x10] sm:$0xff] %v1862
    %1927 = vst [vmem:[%s3 + $0x18] sm:$0xff] %v1863
    %1928 = vst [vmem:[%s3 + $0x20] sm:$0xff] %v1864
    %1929 = vst [vmem:[%s3 + $0x28] sm:$0xff] %v1865
    %1930 = vst [vmem:[%s3 + $0x30] sm:$0xff] %v1866
    %1931 = vst [vmem:[%s3 + $0x38] sm:$0xff] %v1867
    %1932 = vst [vmem:[%s3 + $0x40] sm:$0xff] %v1868
    %1933 = vst [vmem:[%s3 + $0x48] sm:$0xff] %v1869
    %1934 = vst [vmem:[%s3 + $0x50] sm:$0xff] %v1870
    %1935 = vst [vmem:[%s3 + $0x58] sm:$0xff] %v1871
    %1936 = vst [vmem:[%s3 + $0x60] sm:$0xff] %v1872
    %1937 = vst [vmem:[%s3 + $0x68] sm:$0xff] %v1873
    %1938 = vst [vmem:[%s3 + $0x70] sm:$0xff] %v1874
    %1939 = vst [vmem:[%s3 + $0x78] sm:$0xff] %v1875
    %1940 = vst [vmem:[%s3 + $0x80] sm:$0xff] %v1876
    %1941 = vst [vmem:[%s3 + $0x88] sm:$0xff] %v1877
    %1942 = vst [vmem:[%s3 + $0x90] sm:$0xff] %v1878
    %1943 = vst [vmem:[%s3 + $0x98] sm:$0xff] %v1879
    %1944 = vst [vmem:[%s3 + $0xa0] sm:$0xff] %v1880
    %1945 = vst [vmem:[%s3 + $0xa8] sm:$0xff] %v1881
    %1946 = vst [vmem:[%s3 + $0xb0] sm:$0xff] %v1882
    %1947 = vst [vmem:[%s3 + $0xb8] sm:$0xff] %v1883
    %1948 = vst [vmem:[%s3 + $0xc0] sm:$0xff] %v1884
    %1949 = vst [vmem:[%s3 + $0xc8] sm:$0xff] %v1885
    %1950 = vst [vmem:[%s3 + $0xd0] sm:$0xff] %v1886
    %1951 = vst [vmem:[%s3 + $0xd8] sm:$0xff] %v1887
    %1952 = vst [vmem:[%s3 + $0xe0] sm:$0xff] %v1888
    %1953 = vst [vmem:[%s3 + $0xe8] sm:$0xff] %v1889
    %1954 = vst [vmem:[%s3 + $0xf0] sm:$0xff] %v1890
    %1955 = vst [vmem:[%s3 + $0xf8] sm:$0xff] %v1891
    %1956 = vst [vmem:[%s3 + $0x100] sm:$0xff] %v1892
    %1957 = vst [vmem:[%s3 + $0x108] sm:$0xff] %v1893
    %1958 = vst [vmem:[%s3 + $0x110] sm:$0xff] %v1894
    %1959 = vst [vmem:[%s3 + $0x118] sm:$0xff] %v1895
    %1960 = vst [vmem:[%s3 + $0x120] sm:$0xff] %v1896
    %1961 = vst [vmem:[%s3 + $0x128] sm:$0xff] %v1897
    %1962 = vst [vmem:[%s3 + $0x130] sm:$0xff] %v1898
    %1963 = vst [vmem:[%s3 + $0x138] sm:$0xff] %v1899
    %1964 = vst [vmem:[%s3 + $0x140] sm:$0xff] %v1900
    %1965 = vst [vmem:[%s3 + $0x148] sm:$0xff] %v1901
    %1966 = vst [vmem:[%s3 + $0x150] sm:$0xff] %v1902
    %1967 = vst [vmem:[%s3 + $0x158] sm:$0xff] %v1903
    %1968 = vst [vmem:[%s3 + $0x160] sm:$0xff] %v1904
    %1969 = vst [vmem:[%s3 + $0x168] sm:$0xff] %v1905
    %1970 = vst [vmem:[%s3 + $0x170] sm:$0xff] %v1906
    %1971 = vst [vmem:[%s3 + $0x178] sm:$0xff] %v1907
    %1972 = vst [vmem:[%s3 + $0x180] sm:$0xff] %v1908
    %1973 = vst [vmem:[%s3 + $0x188] sm:$0xff] %v1909
    %1974 = vst [vmem:[%s3 + $0x190] sm:$0xff] %v1910
    %1975 = vst [vmem:[%s3 + $0x198] sm:$0xff] %v1911
    %1976 = vst [vmem:[%s3 + $0x1a0] sm:$0xff] %v1912
    %1977 = vst [vmem:[%s3 + $0x1a8] sm:$0xff] %v1913
    %1978 = vst [vmem:[%s3 + $0x1b0] sm:$0xff] %v1914
    %1979 = vst [vmem:[%s3 + $0x1b8] sm:$0xff] %v1915
    %1980 = vst [vmem:[%s3 + $0x1c0] sm:$0xff] %v1916
    %1981 = vst [vmem:[%s3 + $0x1c8] sm:$0xff] %v1917
    %1982 = vst [vmem:[%s3 + $0x1d0] sm:$0xff] %v1918
    %1983 = vst [vmem:[%s3 + $0x1d8] sm:$0xff] %v1919
    %1984 = vst [vmem:[%s3 + $0x1e0] sm:$0xff] %v1920
    %1985 = vst [vmem:[%s3 + $0x1e8] sm:$0xff] %v1921
    %1986 = vst [vmem:[%s3 + $0x1f0] sm:$0xff] %v1922
    %1987 = vst [vmem:[%s3 + $0x1f8] sm:$0xff] %v1923
    // Predicated region
    $region22: #{tex_pamir_net_forward.3} parent=1 // pred_check
      _
    $region23: #{tex_pamir_net_forward.3} parent=1 // pred_check_branch
      %1989 = sbr.rel (0) target = $region25
    $region24: #{tex_pamir_net_forward.3} parent=1 // pred_region
      _
    $region25: #{tex_pamir_net_forward.3} parent=1 // pred_fallthru
      _
    // Predicated region
    $region26: #{tex_pamir_net_forward.3} parent=1 // pred_check
      _
    $region27: #{tex_pamir_net_forward.3} parent=1 // pred_check_branch
      %1991 = sbr.rel (0) target = $region29
    $region28: #{tex_pamir_net_forward.3} parent=1 // pred_region
      _
    $region29: #{tex_pamir_net_forward.3} parent=1 // pred_fallthru
      _
    %1992 = vsyncpa [#allocation3], 1
    %1993 = vsyncpa [#allocation5], 1

// kernel: tex_pamir_net_forward.5
$region0: #{tex_pamir_net_forward.5}
  #allocation0 [shape = 'u32[]', space=smem, size = 0x4, offset = 0x4, fixed_abs, tag = 'smem constant byte address 0x4 - core index']
  #allocation1 [shape = 'u32[72,128]{1,0:T(1,128)}', space=vmem, size = 0x9000, scoped, tag = 'internal scratch']
  %s0 = inlined_call_operand.vmem [shape: bf16[16,512], index: 0, kind: input, shape index: {}]
  %s1 = inlined_call_operand.vmem [shape: bf16[16,32], index: 1, kind: input, shape index: {}]
  %s2 = inlined_call_operand.vmem [shape: bf16[512,1920], index: 2, kind: input, shape index: {}]
  %s3 = inlined_call_operand.vmem [shape: bf16[32,1920], index: 3, kind: input, shape index: {}]
  %s4 = inlined_call_operand.vmem [shape: f32[1,1920], index: 4, kind: input, shape index: {}]
  %s5 = inlined_call_operand.hbm [shape: bf16[1024,512], index: 5, kind: input, shape index: {}]
  %s6 = inlined_call_operand.vmem [shape: bf16[512,256], index: 6, kind: input, shape index: {}]
  %s7 = inlined_call_operand.vmem [shape: bf16[256,128], index: 7, kind: input, shape index: {}]
  %s8 = inlined_call_operand.vmem [shape: bf16[128,128], index: 8, kind: input, shape index: {}]
  %s9 = inlined_call_operand.vmem [shape: f32[1,128], index: 9, kind: input, shape index: {}]
  %s10 = inlined_call_operand.vmem [shape: f32[16,128], index: 10, kind: output, shape index: {}]
  %s11 = sld [smem:[#allocation0]]
  $region54: #{tex_pamir_net_forward.5} parent=0
    _
  %s13 = ssub.s32 1, %s11
  %s14 = scalar_select 0, %s13, %s11
  $region1: #{tex_pamir_net_forward.5} parent=0
    #allocation2 [shape = 'u8[1048576]{0}', space=vmem, size = 0x100000, scoped, tag = 'input window, operand 5, single buffered']
    #allocation3 [shape = 's32[1]{0}', space=sflag, size = 0x4, scoped, tag = 'scoped memory for tex_pamir_net_forward.5']
    %15 = vsyncpa [#allocation3], 0
    // Predicated region
    $region2: #{tex_pamir_net_forward.5} parent=1 // pred_check
      _
    $region3: #{tex_pamir_net_forward.5} parent=1 // pred_check_branch
      %17 = sbr.rel (0) target = $region5
    $region4: #{tex_pamir_net_forward.5} parent=1 // pred_region
      _
    $region5: #{tex_pamir_net_forward.5} parent=1 // pred_fallthru
      _
    // Predicated region
    $region6: #{tex_pamir_net_forward.5} parent=1 // pred_check
      _
    $region7: #{tex_pamir_net_forward.5} parent=1 // pred_check_branch
      %19 = sbr.rel (0) target = $region9
    $region8: #{tex_pamir_net_forward.5} parent=1 // pred_region
      _
    $region9: #{tex_pamir_net_forward.5} parent=1 // pred_fallthru
      _
    // Predicated region
    $region10: #{tex_pamir_net_forward.5} parent=1 // pred_check
      _
    $region11: #{tex_pamir_net_forward.5} parent=1 // pred_check_branch
      %21 = sbr.rel (0) target = $region13
    $region12: #{tex_pamir_net_forward.5} parent=1 // pred_region
      _
    $region13: #{tex_pamir_net_forward.5} parent=1 // pred_fallthru
      _
    // Predicated region
    $region14: #{tex_pamir_net_forward.5} parent=1 // pred_check
      _
    $region15: #{tex_pamir_net_forward.5} parent=1 // pred_check_branch
      %23 = sbr.rel (0) target = $region17
    $region16: #{tex_pamir_net_forward.5} parent=1 // pred_region
      _
    $region17: #{tex_pamir_net_forward.5} parent=1 // pred_fallthru
      _
    // Predicated region
    $region18: #{tex_pamir_net_forward.5} parent=1 // pred_check
      _
    $region19: #{tex_pamir_net_forward.5} parent=1 // pred_check_branch
      %25 = sbr.rel (0) target = $region21
    $region20: #{tex_pamir_net_forward.5} parent=1 // pred_region
      _
    $region21: #{tex_pamir_net_forward.5} parent=1 // pred_fallthru
      _
    // Predicated region
    $region22: #{tex_pamir_net_forward.5} parent=1 // pred_check
      _
    $region23: #{tex_pamir_net_forward.5} parent=1 // pred_check_branch
      %27 = sbr.rel (0) target = $region25
    $region24: #{tex_pamir_net_forward.5} parent=1 // pred_region
      %29 = vsyncadd [#allocation3], 0
      %s30 = sshll.u32 %s5, 4
      %s31 = int_to_ptr.hbm [resolvable:$true] %s30
      %s32 = sshll.u32 [#allocation2], 4
      %s33 = int_to_ptr.vmem [resolvable:$true] %s32
      %38 = dma.hbm_to_vmem [thread:$0]  %s31, 32768, %s33, [#allocation3], 256, 256, 16
    $region25: #{tex_pamir_net_forward.5} parent=1 // pred_fallthru
      _
    // Predicated region
    $region26: #{tex_pamir_net_forward.5} parent=1 // pred_check
      _
    $region27: #{tex_pamir_net_forward.5} parent=1 // pred_check_branch
      %40 = sbr.rel (0) target = $region29
    $region28: #{tex_pamir_net_forward.5} parent=1 // pred_region
      _
    $region29: #{tex_pamir_net_forward.5} parent=1 // pred_fallthru
      _
    // Predicated region
    $region30: #{tex_pamir_net_forward.5} parent=1 // pred_check
      _
    $region31: #{tex_pamir_net_forward.5} parent=1 // pred_check_branch
      %42 = sbr.rel (0) target = $region33
    $region32: #{tex_pamir_net_forward.5} parent=1 // pred_region
      _
    $region33: #{tex_pamir_net_forward.5} parent=1 // pred_fallthru
      _
    // Predicated region
    $region34: #{tex_pamir_net_forward.5} parent=1 // pred_check
      _
    $region35: #{tex_pamir_net_forward.5} parent=1 // pred_check_branch
      %44 = sbr.rel (0) target = $region37
    $region36: #{tex_pamir_net_forward.5} parent=1 // pred_region
      _
    $region37: #{tex_pamir_net_forward.5} parent=1 // pred_fallthru
      _
    // Predicated region
    $region38: #{tex_pamir_net_forward.5} parent=1 // pred_check
      _
    $region39: #{tex_pamir_net_forward.5} parent=1 // pred_check_branch
      %46 = sbr.rel (0) target = $region41
    $region40: #{tex_pamir_net_forward.5} parent=1 // pred_region
      _
    $region41: #{tex_pamir_net_forward.5} parent=1 // pred_fallthru
      _
    // Predicated region
    $region42: #{tex_pamir_net_forward.5} parent=1 // pred_check
      _
    $region43: #{tex_pamir_net_forward.5} parent=1 // pred_check_branch
      %48 = sbr.rel (0) target = $region45
    $region44: #{tex_pamir_net_forward.5} parent=1 // pred_region
      %50 = dma.done [#allocation3], 32768
    $region45: #{tex_pamir_net_forward.5} parent=1 // pred_fallthru
      _
    %v52 = vld [vmem:[%s0] sm:$0xff]
    %v53 = vld [vmem:[%s0 + $0x8] sm:$0xff]
    %v54 = vld [vmem:[%s0 + $0x10] sm:$0xff]
    %v55 = vld [vmem:[%s0 + $0x18] sm:$0xff]
    %v56 = vld [vmem:[%s1] sm:$0xf]
    %v57 = vld [vmem:[%s1 + $0x4] sm:$0xf]
    %v58 = vld [vmem:[%s2] sm:$0xff]
    %v59 = vld [vmem:[%s2 + $0x8] sm:$0xff]
    %v60 = vld [vmem:[%s2 + $0x10] sm:$0xff]
    %v61 = vld [vmem:[%s2 + $0x18] sm:$0xff]
    %v62 = vld [vmem:[%s2 + $0x20] sm:$0xff]
    %v63 = vld [vmem:[%s2 + $0x28] sm:$0xff]
    %v64 = vld [vmem:[%s2 + $0x30] sm:$0xff]
    %v65 = vld [vmem:[%s2 + $0x38] sm:$0xf]
    %v66 = vld [vmem:[%s2 + $0x3c] sm:$0xff]
    %v67 = vld [vmem:[%s2 + $0x44] sm:$0xff]
    %v68 = vld [vmem:[%s2 + $0x4c] sm:$0xff]
    %v69 = vld [vmem:[%s2 + $0x54] sm:$0xff]
    %v70 = vld [vmem:[%s2 + $0x5c] sm:$0xff]
    %v71 = vld [vmem:[%s2 + $0x64] sm:$0xff]
    %v72 = vld [vmem:[%s2 + $0x6c] sm:$0xff]
    %v73 = vld [vmem:[%s2 + $0x74] sm:$0xf]
    %v74 = vld [vmem:[%s2 + $0x78] sm:$0xff]
    %v75 = vld [vmem:[%s2 + $0x80] sm:$0xff]
    %v76 = vld [vmem:[%s2 + $0x88] sm:$0xff]
    %v77 = vld [vmem:[%s2 + $0x90] sm:$0xff]
    %v78 = vld [vmem:[%s2 + $0x98] sm:$0xff]
    %v79 = vld [vmem:[%s2 + $0xa0] sm:$0xff]
    %v80 = vld [vmem:[%s2 + $0xa8] sm:$0xff]
    %v81 = vld [vmem:[%s2 + $0xb0] sm:$0xf]
    %v82 = vld [vmem:[%s2 + $0xb4] sm:$0xff]
    %v83 = vld [vmem:[%s2 + $0xbc] sm:$0xff]
    %v84 = vld [vmem:[%s2 + $0xc4] sm:$0xff]
    %v85 = vld [vmem:[%s2 + $0xcc] sm:$0xff]
    %v86 = vld [vmem:[%s2 + $0xd4] sm:$0xff]
    %v87 = vld [vmem:[%s2 + $0xdc] sm:$0xff]
    %v88 = vld [vmem:[%s2 + $0xe4] sm:$0xff]
    %v89 = vld [vmem:[%s2 + $0xec] sm:$0xf]
    %v90 = vld [vmem:[%s2 + $0xf0] sm:$0xff]
    %v91 = vld [vmem:[%s2 + $0xf8] sm:$0xff]
    %v92 = vld [vmem:[%s2 + $0x100] sm:$0xff]
    %v93 = vld [vmem:[%s2 + $0x108] sm:$0xff]
    %v94 = vld [vmem:[%s2 + $0x110] sm:$0xff]
    %v95 = vld [vmem:[%s2 + $0x118] sm:$0xff]
    %v96 = vld [vmem:[%s2 + $0x120] sm:$0xff]
    %v97 = vld [vmem:[%s2 + $0x128] sm:$0xf]
    %v98 = vld [vmem:[%s2 + $0x12c] sm:$0xff]
    %v99 = vld [vmem:[%s2 + $0x134] sm:$0xff]
    %v100 = vld [vmem:[%s2 + $0x13c] sm:$0xff]
    %v101 = vld [vmem:[%s2 + $0x144] sm:$0xff]
    %v102 = vld [vmem:[%s2 + $0x14c] sm:$0xff]
    %v103 = vld [vmem:[%s2 + $0x154] sm:$0xff]
    %v104 = vld [vmem:[%s2 + $0x15c] sm:$0xff]
    %v105 = vld [vmem:[%s2 + $0x164] sm:$0xf]
    %v106 = vld [vmem:[%s2 + $0x168] sm:$0xff]
    %v107 = vld [vmem:[%s2 + $0x170] sm:$0xff]
    %v108 = vld [vmem:[%s2 + $0x178] sm:$0xff]
    %v109 = vld [vmem:[%s2 + $0x180] sm:$0xff]
    %v110 = vld [vmem:[%s2 + $0x188] sm:$0xff]
    %v111 = vld [vmem:[%s2 + $0x190] sm:$0xff]
    %v112 = vld [vmem:[%s2 + $0x198] sm:$0xff]
    %v113 = vld [vmem:[%s2 + $0x1a0] sm:$0xf]
    %v114 = vld [vmem:[%s2 + $0x1a4] sm:$0xff]
    %v115 = vld [vmem:[%s2 + $0x1ac] sm:$0xff]
    %v116 = vld [vmem:[%s2 + $0x1b4] sm:$0xff]
    %v117 = vld [vmem:[%s2 + $0x1bc] sm:$0xff]
    %v118 = vld [vmem:[%s2 + $0x1c4] sm:$0xff]
    %v119 = vld [vmem:[%s2 + $0x1cc] sm:$0xff]
    %v120 = vld [vmem:[%s2 + $0x1d4] sm:$0xff]
    %v121 = vld [vmem:[%s2 + $0x1dc] sm:$0xf]
    %v122 = vld [vmem:[%s2 + $0x1e0] sm:$0xff]
    %v123 = vld [vmem:[%s2 + $0x1e8] sm:$0xff]
    %v124 = vld [vmem:[%s2 + $0x1f0] sm:$0xff]
    %v125 = vld [vmem:[%s2 + $0x1f8] sm:$0xff]
    %v126 = vld [vmem:[%s2 + $0x200] sm:$0xff]
    %v127 = vld [vmem:[%s2 + $0x208] sm:$0xff]
    %v128 = vld [vmem:[%s2 + $0x210] sm:$0xff]
    %v129 = vld [vmem:[%s2 + $0x218] sm:$0xf]
    %v130 = vld [vmem:[%s2 + $0x21c] sm:$0xff]
    %v131 = vld [vmem:[%s2 + $0x224] sm:$0xff]
    %v132 = vld [vmem:[%s2 + $0x22c] sm:$0xff]
    %v133 = vld [vmem:[%s2 + $0x234] sm:$0xff]
    %v134 = vld [vmem:[%s2 + $0x23c] sm:$0xff]
    %v135 = vld [vmem:[%s2 + $0x244] sm:$0xff]
    %v136 = vld [vmem:[%s2 + $0x24c] sm:$0xff]
    %v137 = vld [vmem:[%s2 + $0x254] sm:$0xf]
    %v138 = vld [vmem:[%s2 + $0x258] sm:$0xff]
    %v139 = vld [vmem:[%s2 + $0x260] sm:$0xff]
    %v140 = vld [vmem:[%s2 + $0x268] sm:$0xff]
    %v141 = vld [vmem:[%s2 + $0x270] sm:$0xff]
    %v142 = vld [vmem:[%s2 + $0x278] sm:$0xff]
    %v143 = vld [vmem:[%s2 + $0x280] sm:$0xff]
    %v144 = vld [vmem:[%s2 + $0x288] sm:$0xff]
    %v145 = vld [vmem:[%s2 + $0x290] sm:$0xf]
    %v146 = vld [vmem:[%s2 + $0x294] sm:$0xff]
    %v147 = vld [vmem:[%s2 + $0x29c] sm:$0xff]
    %v148 = vld [vmem:[%s2 + $0x2a4] sm:$0xff]
    %v149 = vld [vmem:[%s2 + $0x2ac] sm:$0xff]
    %v150 = vld [vmem:[%s2 + $0x2b4] sm:$0xff]
    %v151 = vld [vmem:[%s2 + $0x2bc] sm:$0xff]
    %v152 = vld [vmem:[%s2 + $0x2c4] sm:$0xff]
    %v153 = vld [vmem:[%s2 + $0x2cc] sm:$0xf]
    %v154 = vld [vmem:[%s2 + $0x2d0] sm:$0xff]
    %v155 = vld [vmem:[%s2 + $0x2d8] sm:$0xff]
    %v156 = vld [vmem:[%s2 + $0x2e0] sm:$0xff]
    %v157 = vld [vmem:[%s2 + $0x2e8] sm:$0xff]
    %v158 = vld [vmem:[%s2 + $0x2f0] sm:$0xff]
    %v159 = vld [vmem:[%s2 + $0x2f8] sm:$0xff]
    %v160 = vld [vmem:[%s2 + $0x300] sm:$0xff]
    %v161 = vld [vmem:[%s2 + $0x308] sm:$0xf]
    %v162 = vld [vmem:[%s2 + $0x30c] sm:$0xff]
    %v163 = vld [vmem:[%s2 + $0x314] sm:$0xff]
    %v164 = vld [vmem:[%s2 + $0x31c] sm:$0xff]
    %v165 = vld [vmem:[%s2 + $0x324] sm:$0xff]
    %v166 = vld [vmem:[%s2 + $0x32c] sm:$0xff]
    %v167 = vld [vmem:[%s2 + $0x334] sm:$0xff]
    %v168 = vld [vmem:[%s2 + $0x33c] sm:$0xff]
    %v169 = vld [vmem:[%s2 + $0x344] sm:$0xf]
    %v170 = vld [vmem:[%s2 + $0x348] sm:$0xff]
    %v171 = vld [vmem:[%s2 + $0x350] sm:$0xff]
    %v172 = vld [vmem:[%s2 + $0x358] sm:$0xff]
    %v173 = vld [vmem:[%s2 + $0x360] sm:$0xff]
    %v174 = vld [vmem:[%s2 + $0x368] sm:$0xff]
    %v175 = vld [vmem:[%s2 + $0x370] sm:$0xff]
    %v176 = vld [vmem:[%s2 + $0x378] sm:$0xff]
    %v177 = vld [vmem:[%s2 + $0x380] sm:$0xf]
    %v178 = vld [vmem:[%s2 + $0x384] sm:$0xff]
    %v179 = vld [vmem:[%s2 + $0x38c] sm:$0xff]
    %v180 = vld [vmem:[%s2 + $0x394] sm:$0xff]
    %v181 = vld [vmem:[%s2 + $0x39c] sm:$0xff]
    %v182 = vld [vmem:[%s2 + $0x3a4] sm:$0xff]
    %v183 = vld [vmem:[%s2 + $0x3ac] sm:$0xff]
    %v184 = vld [vmem:[%s2 + $0x3b4] sm:$0xff]
    %v185 = vld [vmem:[%s2 + $0x3bc] sm:$0xf]
    %v186 = vld [vmem:[%s2 + $0x3c0] sm:$0xff]
    %v187 = vld [vmem:[%s2 + $0x3c8] sm:$0xff]
    %v188 = vld [vmem:[%s2 + $0x3d0] sm:$0xff]
    %v189 = vld [vmem:[%s2 + $0x3d8] sm:$0xff]
    %v190 = vld [vmem:[%s2 + $0x3e0] sm:$0xff]
    %v191 = vld [vmem:[%s2 + $0x3e8] sm:$0xff]
    %v192 = vld [vmem:[%s2 + $0x3f0] sm:$0xff]
    %v193 = vld [vmem:[%s2 + $0x3f8] sm:$0xf]
    %v194 = vld [vmem:[%s2 + $0x3fc] sm:$0xff]
    %v195 = vld [vmem:[%s2 + $0x404] sm:$0xff]
    %v196 = vld [vmem:[%s2 + $0x40c] sm:$0xff]
    %v197 = vld [vmem:[%s2 + $0x414] sm:$0xff]
    %v198 = vld [vmem:[%s2 + $0x41c] sm:$0xff]
    %v199 = vld [vmem:[%s2 + $0x424] sm:$0xff]
    %v200 = vld [vmem:[%s2 + $0x42c] sm:$0xff]
    %v201 = vld [vmem:[%s2 + $0x434] sm:$0xf]
    %v202 = vld [vmem:[%s2 + $0x438] sm:$0xff]
    %v203 = vld [vmem:[%s2 + $0x440] sm:$0xff]
    %v204 = vld [vmem:[%s2 + $0x448] sm:$0xff]
    %v205 = vld [vmem:[%s2 + $0x450] sm:$0xff]
    %v206 = vld [vmem:[%s2 + $0x458] sm:$0xff]
    %v207 = vld [vmem:[%s2 + $0x460] sm:$0xff]
    %v208 = vld [vmem:[%s2 + $0x468] sm:$0xff]
    %v209 = vld [vmem:[%s2 + $0x470] sm:$0xf]
    %v210 = vld [vmem:[%s2 + $0x474] sm:$0xff]
    %v211 = vld [vmem:[%s2 + $0x47c] sm:$0xff]
    %v212 = vld [vmem:[%s2 + $0x484] sm:$0xff]
    %v213 = vld [vmem:[%s2 + $0x48c] sm:$0xff]
    %v214 = vld [vmem:[%s2 + $0x494] sm:$0xff]
    %v215 = vld [vmem:[%s2 + $0x49c] sm:$0xff]
    %v216 = vld [vmem:[%s2 + $0x4a4] sm:$0xff]
    %v217 = vld [vmem:[%s2 + $0x4ac] sm:$0xf]
    %v218 = vld [vmem:[%s2 + $0x4b0] sm:$0xff]
    %v219 = vld [vmem:[%s2 + $0x4b8] sm:$0xff]
    %v220 = vld [vmem:[%s2 + $0x4c0] sm:$0xff]
    %v221 = vld [vmem:[%s2 + $0x4c8] sm:$0xff]
    %v222 = vld [vmem:[%s2 + $0x4d0] sm:$0xff]
    %v223 = vld [vmem:[%s2 + $0x4d8] sm:$0xff]
    %v224 = vld [vmem:[%s2 + $0x4e0] sm:$0xff]
    %v225 = vld [vmem:[%s2 + $0x4e8] sm:$0xf]
    %v226 = vld [vmem:[%s2 + $0x4ec] sm:$0xff]
    %v227 = vld [vmem:[%s2 + $0x4f4] sm:$0xff]
    %v228 = vld [vmem:[%s2 + $0x4fc] sm:$0xff]
    %v229 = vld [vmem:[%s2 + $0x504] sm:$0xff]
    %v230 = vld [vmem:[%s2 + $0x50c] sm:$0xff]
    %v231 = vld [vmem:[%s2 + $0x514] sm:$0xff]
    %v232 = vld [vmem:[%s2 + $0x51c] sm:$0xff]
    %v233 = vld [vmem:[%s2 + $0x524] sm:$0xf]
    %v234 = vld [vmem:[%s2 + $0x528] sm:$0xff]
    %v235 = vld [vmem:[%s2 + $0x530] sm:$0xff]
    %v236 = vld [vmem:[%s2 + $0x538] sm:$0xff]
    %v237 = vld [vmem:[%s2 + $0x540] sm:$0xff]
    %v238 = vld [vmem:[%s2 + $0x548] sm:$0xff]
    %v239 = vld [vmem:[%s2 + $0x550] sm:$0xff]
    %v240 = vld [vmem:[%s2 + $0x558] sm:$0xff]
    %v241 = vld [vmem:[%s2 + $0x560] sm:$0xf]
    %v242 = vld [vmem:[%s2 + $0x564] sm:$0xff]
    %v243 = vld [vmem:[%s2 + $0x56c] sm:$0xff]
    %v244 = vld [vmem:[%s2 + $0x574] sm:$0xff]
    %v245 = vld [vmem:[%s2 + $0x57c] sm:$0xff]
    %v246 = vld [vmem:[%s2 + $0x584] sm:$0xff]
    %v247 = vld [vmem:[%s2 + $0x58c] sm:$0xff]
    %v248 = vld [vmem:[%s2 + $0x594] sm:$0xff]
    %v249 = vld [vmem:[%s2 + $0x59c] sm:$0xf]
    %v250 = vld [vmem:[%s2 + $0x5a0] sm:$0xff]
    %v251 = vld [vmem:[%s2 + $0x5a8] sm:$0xff]
    %v252 = vld [vmem:[%s2 + $0x5b0] sm:$0xff]
    %v253 = vld [vmem:[%s2 + $0x5b8] sm:$0xff]
    %v254 = vld [vmem:[%s2 + $0x5c0] sm:$0xff]
    %v255 = vld [vmem:[%s2 + $0x5c8] sm:$0xff]
    %v256 = vld [vmem:[%s2 + $0x5d0] sm:$0xff]
    %v257 = vld [vmem:[%s2 + $0x5d8] sm:$0xf]
    %v258 = vld [vmem:[%s2 + $0x5dc] sm:$0xff]
    %v259 = vld [vmem:[%s2 + $0x5e4] sm:$0xff]
    %v260 = vld [vmem:[%s2 + $0x5ec] sm:$0xff]
    %v261 = vld [vmem:[%s2 + $0x5f4] sm:$0xff]
    %v262 = vld [vmem:[%s2 + $0x5fc] sm:$0xff]
    %v263 = vld [vmem:[%s2 + $0x604] sm:$0xff]
    %v264 = vld [vmem:[%s2 + $0x60c] sm:$0xff]
    %v265 = vld [vmem:[%s2 + $0x614] sm:$0xf]
    %v266 = vld [vmem:[%s2 + $0x618] sm:$0xff]
    %v267 = vld [vmem:[%s2 + $0x620] sm:$0xff]
    %v268 = vld [vmem:[%s2 + $0x628] sm:$0xff]
    %v269 = vld [vmem:[%s2 + $0x630] sm:$0xff]
    %v270 = vld [vmem:[%s2 + $0x638] sm:$0xff]
    %v271 = vld [vmem:[%s2 + $0x640] sm:$0xff]
    %v272 = vld [vmem:[%s2 + $0x648] sm:$0xff]
    %v273 = vld [vmem:[%s2 + $0x650] sm:$0xf]
    %v274 = vld [vmem:[%s2 + $0x654] sm:$0xff]
    %v275 = vld [vmem:[%s2 + $0x65c] sm:$0xff]
    %v276 = vld [vmem:[%s2 + $0x664] sm:$0xff]
    %v277 = vld [vmem:[%s2 + $0x66c] sm:$0xff]
    %v278 = vld [vmem:[%s2 + $0x674] sm:$0xff]
    %v279 = vld [vmem:[%s2 + $0x67c] sm:$0xff]
    %v280 = vld [vmem:[%s2 + $0x684] sm:$0xff]
    %v281 = vld [vmem:[%s2 + $0x68c] sm:$0xf]
    %v282 = vld [vmem:[%s2 + $0x690] sm:$0xff]
    %v283 = vld [vmem:[%s2 + $0x698] sm:$0xff]
    %v284 = vld [vmem:[%s2 + $0x6a0] sm:$0xff]
    %v285 = vld [vmem:[%s2 + $0x6a8] sm:$0xff]
    %v286 = vld [vmem:[%s2 + $0x6b0] sm:$0xff]
    %v287 = vld [vmem:[%s2 + $0x6b8] sm:$0xff]
    %v288 = vld [vmem:[%s2 + $0x6c0] sm:$0xff]
    %v289 = vld [vmem:[%s2 + $0x6c8] sm:$0xf]
    %v290 = vld [vmem:[%s2 + $0x6cc] sm:$0xff]
    %v291 = vld [vmem:[%s2 + $0x6d4] sm:$0xff]
    %v292 = vld [vmem:[%s2 + $0x6dc] sm:$0xff]
    %v293 = vld [vmem:[%s2 + $0x6e4] sm:$0xff]
    %v294 = vld [vmem:[%s2 + $0x6ec] sm:$0xff]
    %v295 = vld [vmem:[%s2 + $0x6f4] sm:$0xff]
    %v296 = vld [vmem:[%s2 + $0x6fc] sm:$0xff]
    %v297 = vld [vmem:[%s2 + $0x704] sm:$0xf]
    %v298 = vld [vmem:[%s2 + $0x708] sm:$0xff]
    %v299 = vld [vmem:[%s2 + $0x710] sm:$0xff]
    %v300 = vld [vmem:[%s2 + $0x718] sm:$0xff]
    %v301 = vld [vmem:[%s2 + $0x720] sm:$0xff]
    %v302 = vld [vmem:[%s2 + $0x728] sm:$0xff]
    %v303 = vld [vmem:[%s2 + $0x730] sm:$0xff]
    %v304 = vld [vmem:[%s2 + $0x738] sm:$0xff]
    %v305 = vld [vmem:[%s2 + $0x740] sm:$0xf]
    %v306 = vld [vmem:[%s2 + $0x744] sm:$0xff]
    %v307 = vld [vmem:[%s2 + $0x74c] sm:$0xff]
    %v308 = vld [vmem:[%s2 + $0x754] sm:$0xff]
    %v309 = vld [vmem:[%s2 + $0x75c] sm:$0xff]
    %v310 = vld [vmem:[%s2 + $0x764] sm:$0xff]
    %v311 = vld [vmem:[%s2 + $0x76c] sm:$0xff]
    %v312 = vld [vmem:[%s2 + $0x774] sm:$0xff]
    %v313 = vld [vmem:[%s2 + $0x77c] sm:$0xf]
    %v314 = vld [vmem:[%s2 + $0x780] sm:$0xff]
    %v315 = vld [vmem:[%s2 + $0x788] sm:$0xff]
    %v316 = vld [vmem:[%s2 + $0x790] sm:$0xff]
    %v317 = vld [vmem:[%s2 + $0x798] sm:$0xff]
    %v318 = vld [vmem:[%s2 + $0x7a0] sm:$0xff]
    %v319 = vld [vmem:[%s2 + $0x7a8] sm:$0xff]
    %v320 = vld [vmem:[%s2 + $0x7b0] sm:$0xff]
    %v321 = vld [vmem:[%s2 + $0x7b8] sm:$0xf]
    %v322 = vld [vmem:[%s2 + $0x7bc] sm:$0xff]
    %v323 = vld [vmem:[%s2 + $0x7c4] sm:$0xff]
    %v324 = vld [vmem:[%s2 + $0x7cc] sm:$0xff]
    %v325 = vld [vmem:[%s2 + $0x7d4] sm:$0xff]
    %v326 = vld [vmem:[%s2 + $0x7dc] sm:$0xff]
    %v327 = vld [vmem:[%s2 + $0x7e4] sm:$0xff]
    %v328 = vld [vmem:[%s2 + $0x7ec] sm:$0xff]
    %v329 = vld [vmem:[%s2 + $0x7f4] sm:$0xf]
    %v330 = vld [vmem:[%s2 + $0x7f8] sm:$0xff]
    %v331 = vld [vmem:[%s2 + $0x800] sm:$0xff]
    %v332 = vld [vmem:[%s2 + $0x808] sm:$0xff]
    %v333 = vld [vmem:[%s2 + $0x810] sm:$0xff]
    %v334 = vld [vmem:[%s2 + $0x818] sm:$0xff]
    %v335 = vld [vmem:[%s2 + $0x820] sm:$0xff]
    %v336 = vld [vmem:[%s2 + $0x828] sm:$0xff]
    %v337 = vld [vmem:[%s2 + $0x830] sm:$0xf]
    %v338 = vld [vmem:[%s2 + $0x834] sm:$0xff]
    %v339 = vld [vmem:[%s2 + $0x83c] sm:$0xff]
    %v340 = vld [vmem:[%s2 + $0x844] sm:$0xff]
    %v341 = vld [vmem:[%s2 + $0x84c] sm:$0xff]
    %v342 = vld [vmem:[%s2 + $0x854] sm:$0xff]
    %v343 = vld [vmem:[%s2 + $0x85c] sm:$0xff]
    %v344 = vld [vmem:[%s2 + $0x864] sm:$0xff]
    %v345 = vld [vmem:[%s2 + $0x86c] sm:$0xf]
    %v346 = vld [vmem:[%s2 + $0x870] sm:$0xff]
    %v347 = vld [vmem:[%s2 + $0x878] sm:$0xff]
    %v348 = vld [vmem:[%s2 + $0x880] sm:$0xff]
    %v349 = vld [vmem:[%s2 + $0x888] sm:$0xff]
    %v350 = vld [vmem:[%s2 + $0x890] sm:$0xff]
    %v351 = vld [vmem:[%s2 + $0x898] sm:$0xff]
    %v352 = vld [vmem:[%s2 + $0x8a0] sm:$0xff]
    %v353 = vld [vmem:[%s2 + $0x8a8] sm:$0xf]
    %v354 = vld [vmem:[%s2 + $0x8ac] sm:$0xff]
    %v355 = vld [vmem:[%s2 + $0x8b4] sm:$0xff]
    %v356 = vld [vmem:[%s2 + $0x8bc] sm:$0xff]
    %v357 = vld [vmem:[%s2 + $0x8c4] sm:$0xff]
    %v358 = vld [vmem:[%s2 + $0x8cc] sm:$0xff]
    %v359 = vld [vmem:[%s2 + $0x8d4] sm:$0xff]
    %v360 = vld [vmem:[%s2 + $0x8dc] sm:$0xff]
    %v361 = vld [vmem:[%s2 + $0x8e4] sm:$0xf]
    %v362 = vld [vmem:[%s2 + $0x8e8] sm:$0xff]
    %v363 = vld [vmem:[%s2 + $0x8f0] sm:$0xff]
    %v364 = vld [vmem:[%s2 + $0x8f8] sm:$0xff]
    %v365 = vld [vmem:[%s2 + $0x900] sm:$0xff]
    %v366 = vld [vmem:[%s2 + $0x908] sm:$0xff]
    %v367 = vld [vmem:[%s2 + $0x910] sm:$0xff]
    %v368 = vld [vmem:[%s2 + $0x918] sm:$0xff]
    %v369 = vld [vmem:[%s2 + $0x920] sm:$0xf]
    %v370 = vld [vmem:[%s2 + $0x924] sm:$0xff]
    %v371 = vld [vmem:[%s2 + $0x92c] sm:$0xff]
    %v372 = vld [vmem:[%s2 + $0x934] sm:$0xff]
    %v373 = vld [vmem:[%s2 + $0x93c] sm:$0xff]
    %v374 = vld [vmem:[%s2 + $0x944] sm:$0xff]
    %v375 = vld [vmem:[%s2 + $0x94c] sm:$0xff]
    %v376 = vld [vmem:[%s2 + $0x954] sm:$0xff]
    %v377 = vld [vmem:[%s2 + $0x95c] sm:$0xf]
    %v378 = vld [vmem:[%s2 + $0x960] sm:$0xff]
    %v379 = vld [vmem:[%s2 + $0x968] sm:$0xff]
    %v380 = vld [vmem:[%s2 + $0x970] sm:$0xff]
    %v381 = vld [vmem:[%s2 + $0x978] sm:$0xff]
    %v382 = vld [vmem:[%s2 + $0x980] sm:$0xff]
    %v383 = vld [vmem:[%s2 + $0x988] sm:$0xff]
    %v384 = vld [vmem:[%s2 + $0x990] sm:$0xff]
    %v385 = vld [vmem:[%s2 + $0x998] sm:$0xf]
    %v386 = vld [vmem:[%s2 + $0x99c] sm:$0xff]
    %v387 = vld [vmem:[%s2 + $0x9a4] sm:$0xff]
    %v388 = vld [vmem:[%s2 + $0x9ac] sm:$0xff]
    %v389 = vld [vmem:[%s2 + $0x9b4] sm:$0xff]
    %v390 = vld [vmem:[%s2 + $0x9bc] sm:$0xff]
    %v391 = vld [vmem:[%s2 + $0x9c4] sm:$0xff]
    %v392 = vld [vmem:[%s2 + $0x9cc] sm:$0xff]
    %v393 = vld [vmem:[%s2 + $0x9d4] sm:$0xf]
    %v394 = vld [vmem:[%s2 + $0x9d8] sm:$0xff]
    %v395 = vld [vmem:[%s2 + $0x9e0] sm:$0xff]
    %v396 = vld [vmem:[%s2 + $0x9e8] sm:$0xff]
    %v397 = vld [vmem:[%s2 + $0x9f0] sm:$0xff]
    %v398 = vld [vmem:[%s2 + $0x9f8] sm:$0xff]
    %v399 = vld [vmem:[%s2 + $0xa00] sm:$0xff]
    %v400 = vld [vmem:[%s2 + $0xa08] sm:$0xff]
    %v401 = vld [vmem:[%s2 + $0xa10] sm:$0xf]
    %v402 = vld [vmem:[%s2 + $0xa14] sm:$0xff]
    %v403 = vld [vmem:[%s2 + $0xa1c] sm:$0xff]
    %v404 = vld [vmem:[%s2 + $0xa24] sm:$0xff]
    %v405 = vld [vmem:[%s2 + $0xa2c] sm:$0xff]
    %v406 = vld [vmem:[%s2 + $0xa34] sm:$0xff]
    %v407 = vld [vmem:[%s2 + $0xa3c] sm:$0xff]
    %v408 = vld [vmem:[%s2 + $0xa44] sm:$0xff]
    %v409 = vld [vmem:[%s2 + $0xa4c] sm:$0xf]
    %v410 = vld [vmem:[%s2 + $0xa50] sm:$0xff]
    %v411 = vld [vmem:[%s2 + $0xa58] sm:$0xff]
    %v412 = vld [vmem:[%s2 + $0xa60] sm:$0xff]
    %v413 = vld [vmem:[%s2 + $0xa68] sm:$0xff]
    %v414 = vld [vmem:[%s2 + $0xa70] sm:$0xff]
    %v415 = vld [vmem:[%s2 + $0xa78] sm:$0xff]
    %v416 = vld [vmem:[%s2 + $0xa80] sm:$0xff]
    %v417 = vld [vmem:[%s2 + $0xa88] sm:$0xf]
    %v418 = vld [vmem:[%s2 + $0xa8c] sm:$0xff]
    %v419 = vld [vmem:[%s2 + $0xa94] sm:$0xff]
    %v420 = vld [vmem:[%s2 + $0xa9c] sm:$0xff]
    %v421 = vld [vmem:[%s2 + $0xaa4] sm:$0xff]
    %v422 = vld [vmem:[%s2 + $0xaac] sm:$0xff]
    %v423 = vld [vmem:[%s2 + $0xab4] sm:$0xff]
    %v424 = vld [vmem:[%s2 + $0xabc] sm:$0xff]
    %v425 = vld [vmem:[%s2 + $0xac4] sm:$0xf]
    %v426 = vld [vmem:[%s2 + $0xac8] sm:$0xff]
    %v427 = vld [vmem:[%s2 + $0xad0] sm:$0xff]
    %v428 = vld [vmem:[%s2 + $0xad8] sm:$0xff]
    %v429 = vld [vmem:[%s2 + $0xae0] sm:$0xff]
    %v430 = vld [vmem:[%s2 + $0xae8] sm:$0xff]
    %v431 = vld [vmem:[%s2 + $0xaf0] sm:$0xff]
    %v432 = vld [vmem:[%s2 + $0xaf8] sm:$0xff]
    %v433 = vld [vmem:[%s2 + $0xb00] sm:$0xf]
    %v434 = vld [vmem:[%s2 + $0xb04] sm:$0xff]
    %v435 = vld [vmem:[%s2 + $0xb0c] sm:$0xff]
    %v436 = vld [vmem:[%s2 + $0xb14] sm:$0xff]
    %v437 = vld [vmem:[%s2 + $0xb1c] sm:$0xff]
    %v438 = vld [vmem:[%s2 + $0xb24] sm:$0xff]
    %v439 = vld [vmem:[%s2 + $0xb2c] sm:$0xff]
    %v440 = vld [vmem:[%s2 + $0xb34] sm:$0xff]
    %v441 = vld [vmem:[%s2 + $0xb3c] sm:$0xf]
    %v442 = vld [vmem:[%s2 + $0xb40] sm:$0xff]
    %v443 = vld [vmem:[%s2 + $0xb48] sm:$0xff]
    %v444 = vld [vmem:[%s2 + $0xb50] sm:$0xff]
    %v445 = vld [vmem:[%s2 + $0xb58] sm:$0xff]
    %v446 = vld [vmem:[%s2 + $0xb60] sm:$0xff]
    %v447 = vld [vmem:[%s2 + $0xb68] sm:$0xff]
    %v448 = vld [vmem:[%s2 + $0xb70] sm:$0xff]
    %v449 = vld [vmem:[%s2 + $0xb78] sm:$0xf]
    %v450 = vld [vmem:[%s2 + $0xb7c] sm:$0xff]
    %v451 = vld [vmem:[%s2 + $0xb84] sm:$0xff]
    %v452 = vld [vmem:[%s2 + $0xb8c] sm:$0xff]
    %v453 = vld [vmem:[%s2 + $0xb94] sm:$0xff]
    %v454 = vld [vmem:[%s2 + $0xb9c] sm:$0xff]
    %v455 = vld [vmem:[%s2 + $0xba4] sm:$0xff]
    %v456 = vld [vmem:[%s2 + $0xbac] sm:$0xff]
    %v457 = vld [vmem:[%s2 + $0xbb4] sm:$0xf]
    %v458 = vld [vmem:[%s2 + $0xbb8] sm:$0xff]
    %v459 = vld [vmem:[%s2 + $0xbc0] sm:$0xff]
    %v460 = vld [vmem:[%s2 + $0xbc8] sm:$0xff]
    %v461 = vld [vmem:[%s2 + $0xbd0] sm:$0xff]
    %v462 = vld [vmem:[%s2 + $0xbd8] sm:$0xff]
    %v463 = vld [vmem:[%s2 + $0xbe0] sm:$0xff]
    %v464 = vld [vmem:[%s2 + $0xbe8] sm:$0xff]
    %v465 = vld [vmem:[%s2 + $0xbf0] sm:$0xf]
    %v466 = vld [vmem:[%s2 + $0xbf4] sm:$0xff]
    %v467 = vld [vmem:[%s2 + $0xbfc] sm:$0xff]
    %v468 = vld [vmem:[%s2 + $0xc04] sm:$0xff]
    %v469 = vld [vmem:[%s2 + $0xc0c] sm:$0xff]
    %v470 = vld [vmem:[%s2 + $0xc14] sm:$0xff]
    %v471 = vld [vmem:[%s2 + $0xc1c] sm:$0xff]
    %v472 = vld [vmem:[%s2 + $0xc24] sm:$0xff]
    %v473 = vld [vmem:[%s2 + $0xc2c] sm:$0xf]
    %v474 = vld [vmem:[%s2 + $0xc30] sm:$0xff]
    %v475 = vld [vmem:[%s2 + $0xc38] sm:$0xff]
    %v476 = vld [vmem:[%s2 + $0xc40] sm:$0xff]
    %v477 = vld [vmem:[%s2 + $0xc48] sm:$0xff]
    %v478 = vld [vmem:[%s2 + $0xc50] sm:$0xff]
    %v479 = vld [vmem:[%s2 + $0xc58] sm:$0xff]
    %v480 = vld [vmem:[%s2 + $0xc60] sm:$0xff]
    %v481 = vld [vmem:[%s2 + $0xc68] sm:$0xf]
    %v482 = vld [vmem:[%s2 + $0xc6c] sm:$0xff]
    %v483 = vld [vmem:[%s2 + $0xc74] sm:$0xff]
    %v484 = vld [vmem:[%s2 + $0xc7c] sm:$0xff]
    %v485 = vld [vmem:[%s2 + $0xc84] sm:$0xff]
    %v486 = vld [vmem:[%s2 + $0xc8c] sm:$0xff]
    %v487 = vld [vmem:[%s2 + $0xc94] sm:$0xff]
    %v488 = vld [vmem:[%s2 + $0xc9c] sm:$0xff]
    %v489 = vld [vmem:[%s2 + $0xca4] sm:$0xf]
    %v490 = vld [vmem:[%s2 + $0xca8] sm:$0xff]
    %v491 = vld [vmem:[%s2 + $0xcb0] sm:$0xff]
    %v492 = vld [vmem:[%s2 + $0xcb8] sm:$0xff]
    %v493 = vld [vmem:[%s2 + $0xcc0] sm:$0xff]
    %v494 = vld [vmem:[%s2 + $0xcc8] sm:$0xff]
    %v495 = vld [vmem:[%s2 + $0xcd0] sm:$0xff]
    %v496 = vld [vmem:[%s2 + $0xcd8] sm:$0xff]
    %v497 = vld [vmem:[%s2 + $0xce0] sm:$0xf]
    %v498 = vld [vmem:[%s2 + $0xce4] sm:$0xff]
    %v499 = vld [vmem:[%s2 + $0xcec] sm:$0xff]
    %v500 = vld [vmem:[%s2 + $0xcf4] sm:$0xff]
    %v501 = vld [vmem:[%s2 + $0xcfc] sm:$0xff]
    %v502 = vld [vmem:[%s2 + $0xd04] sm:$0xff]
    %v503 = vld [vmem:[%s2 + $0xd0c] sm:$0xff]
    %v504 = vld [vmem:[%s2 + $0xd14] sm:$0xff]
    %v505 = vld [vmem:[%s2 + $0xd1c] sm:$0xf]
    %v506 = vld [vmem:[%s2 + $0xd20] sm:$0xff]
    %v507 = vld [vmem:[%s2 + $0xd28] sm:$0xff]
    %v508 = vld [vmem:[%s2 + $0xd30] sm:$0xff]
    %v509 = vld [vmem:[%s2 + $0xd38] sm:$0xff]
    %v510 = vld [vmem:[%s2 + $0xd40] sm:$0xff]
    %v511 = vld [vmem:[%s2 + $0xd48] sm:$0xff]
    %v512 = vld [vmem:[%s2 + $0xd50] sm:$0xff]
    %v513 = vld [vmem:[%s2 + $0xd58] sm:$0xf]
    %v514 = vld [vmem:[%s2 + $0xd5c] sm:$0xff]
    %v515 = vld [vmem:[%s2 + $0xd64] sm:$0xff]
    %v516 = vld [vmem:[%s2 + $0xd6c] sm:$0xff]
    %v517 = vld [vmem:[%s2 + $0xd74] sm:$0xff]
    %v518 = vld [vmem:[%s2 + $0xd7c] sm:$0xff]
    %v519 = vld [vmem:[%s2 + $0xd84] sm:$0xff]
    %v520 = vld [vmem:[%s2 + $0xd8c] sm:$0xff]
    %v521 = vld [vmem:[%s2 + $0xd94] sm:$0xf]
    %v522 = vld [vmem:[%s2 + $0xd98] sm:$0xff]
    %v523 = vld [vmem:[%s2 + $0xda0] sm:$0xff]
    %v524 = vld [vmem:[%s2 + $0xda8] sm:$0xff]
    %v525 = vld [vmem:[%s2 + $0xdb0] sm:$0xff]
    %v526 = vld [vmem:[%s2 + $0xdb8] sm:$0xff]
    %v527 = vld [vmem:[%s2 + $0xdc0] sm:$0xff]
    %v528 = vld [vmem:[%s2 + $0xdc8] sm:$0xff]
    %v529 = vld [vmem:[%s2 + $0xdd0] sm:$0xf]
    %v530 = vld [vmem:[%s2 + $0xdd4] sm:$0xff]
    %v531 = vld [vmem:[%s2 + $0xddc] sm:$0xff]
    %v532 = vld [vmem:[%s2 + $0xde4] sm:$0xff]
    %v533 = vld [vmem:[%s2 + $0xdec] sm:$0xff]
    %v534 = vld [vmem:[%s2 + $0xdf4] sm:$0xff]
    %v535 = vld [vmem:[%s2 + $0xdfc] sm:$0xff]
    %v536 = vld [vmem:[%s2 + $0xe04] sm:$0xff]
    %v537 = vld [vmem:[%s2 + $0xe0c] sm:$0xf]
    %v538 = vld [vmem:[%s2 + $0xe10] sm:$0xff]
    %v539 = vld [vmem:[%s2 + $0xe18] sm:$0xff]
    %v540 = vld [vmem:[%s2 + $0xe20] sm:$0xff]
    %v541 = vld [vmem:[%s2 + $0xe28] sm:$0xff]
    %v542 = vld [vmem:[%s2 + $0xe30] sm:$0xff]
    %v543 = vld [vmem:[%s2 + $0xe38] sm:$0xff]
    %v544 = vld [vmem:[%s2 + $0xe40] sm:$0xff]
    %v545 = vld [vmem:[%s2 + $0xe48] sm:$0xf]
    %v546 = vld [vmem:[%s2 + $0xe4c] sm:$0xff]
    %v547 = vld [vmem:[%s2 + $0xe54] sm:$0xff]
    %v548 = vld [vmem:[%s2 + $0xe5c] sm:$0xff]
    %v549 = vld [vmem:[%s2 + $0xe64] sm:$0xff]
    %v550 = vld [vmem:[%s2 + $0xe6c] sm:$0xff]
    %v551 = vld [vmem:[%s2 + $0xe74] sm:$0xff]
    %v552 = vld [vmem:[%s2 + $0xe7c] sm:$0xff]
    %v553 = vld [vmem:[%s2 + $0xe84] sm:$0xf]
    %v554 = vld [vmem:[%s2 + $0xe88] sm:$0xff]
    %v555 = vld [vmem:[%s2 + $0xe90] sm:$0xff]
    %v556 = vld [vmem:[%s2 + $0xe98] sm:$0xff]
    %v557 = vld [vmem:[%s2 + $0xea0] sm:$0xff]
    %v558 = vld [vmem:[%s2 + $0xea8] sm:$0xff]
    %v559 = vld [vmem:[%s2 + $0xeb0] sm:$0xff]
    %v560 = vld [vmem:[%s2 + $0xeb8] sm:$0xff]
    %v561 = vld [vmem:[%s2 + $0xec0] sm:$0xf]
    %v562 = vld [vmem:[%s2 + $0xec4] sm:$0xff]
    %v563 = vld [vmem:[%s2 + $0xecc] sm:$0xff]
    %v564 = vld [vmem:[%s2 + $0xed4] sm:$0xff]
    %v565 = vld [vmem:[%s2 + $0xedc] sm:$0xff]
    %v566 = vld [vmem:[%s2 + $0xee4] sm:$0xff]
    %v567 = vld [vmem:[%s2 + $0xeec] sm:$0xff]
    %v568 = vld [vmem:[%s2 + $0xef4] sm:$0xff]
    %v569 = vld [vmem:[%s2 + $0xefc] sm:$0xf]
    %v570 = vld [vmem:[%s3] sm:$0xff]
    %v571 = vld [vmem:[%s3 + $0x8] sm:$0xff]
    %v572 = vld [vmem:[%s3 + $0x10] sm:$0xff]
    %v573 = vld [vmem:[%s3 + $0x18] sm:$0xff]
    %v574 = vld [vmem:[%s3 + $0x20] sm:$0xff]
    %v575 = vld [vmem:[%s3 + $0x28] sm:$0xff]
    %v576 = vld [vmem:[%s3 + $0x30] sm:$0xff]
    %v577 = vld [vmem:[%s3 + $0x38] sm:$0xf]
    %v578 = vld [vmem:[%s3 + $0x3c] sm:$0xff]
    %v579 = vld [vmem:[%s3 + $0x44] sm:$0xff]
    %v580 = vld [vmem:[%s3 + $0x4c] sm:$0xff]
    %v581 = vld [vmem:[%s3 + $0x54] sm:$0xff]
    %v582 = vld [vmem:[%s3 + $0x5c] sm:$0xff]
    %v583 = vld [vmem:[%s3 + $0x64] sm:$0xff]
    %v584 = vld [vmem:[%s3 + $0x6c] sm:$0xff]
    %v585 = vld [vmem:[%s3 + $0x74] sm:$0xf]
    %v586 = vld [vmem:[%s3 + $0x78] sm:$0xff]
    %v587 = vld [vmem:[%s3 + $0x80] sm:$0xff]
    %v588 = vld [vmem:[%s3 + $0x88] sm:$0xff]
    %v589 = vld [vmem:[%s3 + $0x90] sm:$0xff]
    %v590 = vld [vmem:[%s3 + $0x98] sm:$0xff]
    %v591 = vld [vmem:[%s3 + $0xa0] sm:$0xff]
    %v592 = vld [vmem:[%s3 + $0xa8] sm:$0xff]
    %v593 = vld [vmem:[%s3 + $0xb0] sm:$0xf]
    %v594 = vld [vmem:[%s3 + $0xb4] sm:$0xff]
    %v595 = vld [vmem:[%s3 + $0xbc] sm:$0xff]
    %v596 = vld [vmem:[%s3 + $0xc4] sm:$0xff]
    %v597 = vld [vmem:[%s3 + $0xcc] sm:$0xff]
    %v598 = vld [vmem:[%s3 + $0xd4] sm:$0xff]
    %v599 = vld [vmem:[%s3 + $0xdc] sm:$0xff]
    %v600 = vld [vmem:[%s3 + $0xe4] sm:$0xff]
    %v601 = vld [vmem:[%s3 + $0xec] sm:$0xf]
    %v604 = vunpack.c.l.b16 %v56
    %v605 = vunpack.c.l.b16 %v57
    %v606 = vpack.c.b16 %v605, %v604
    %v639 = vunpack.c.l.b16 %v570
    %v640 = vunpack.c.h.b16 %v570
    %v641 = vunpack.c.l.b16 %v571
    %v642 = vunpack.c.h.b16 %v571
    %v643 = vunpack.c.l.b16 %v572
    %v644 = vunpack.c.h.b16 %v572
    %v645 = vunpack.c.l.b16 %v573
    %v646 = vunpack.c.h.b16 %v573
    %v647 = vunpack.c.l.b16 %v574
    %v648 = vunpack.c.h.b16 %v574
    %v649 = vunpack.c.l.b16 %v575
    %v650 = vunpack.c.h.b16 %v575
    %v651 = vunpack.c.l.b16 %v576
    %v652 = vunpack.c.h.b16 %v576
    %v653 = vunpack.c.l.b16 %v577
    %v654 = vunpack.c.l.b16 %v578
    %v655 = vunpack.c.h.b16 %v578
    %v656 = vunpack.c.l.b16 %v579
    %v657 = vunpack.c.h.b16 %v579
    %v658 = vunpack.c.l.b16 %v580
    %v659 = vunpack.c.h.b16 %v580
    %v660 = vunpack.c.l.b16 %v581
    %v661 = vunpack.c.h.b16 %v581
    %v662 = vunpack.c.l.b16 %v582
    %v663 = vunpack.c.h.b16 %v582
    %v664 = vunpack.c.l.b16 %v583
    %v665 = vunpack.c.h.b16 %v583
    %v666 = vunpack.c.l.b16 %v584
    %v667 = vunpack.c.h.b16 %v584
    %v668 = vunpack.c.l.b16 %v585
    %v669 = vunpack.c.l.b16 %v586
    %v670 = vunpack.c.h.b16 %v586
    %v671 = vunpack.c.l.b16 %v587
    %v672 = vunpack.c.h.b16 %v587
    %v673 = vunpack.c.l.b16 %v588
    %v674 = vunpack.c.h.b16 %v588
    %v675 = vunpack.c.l.b16 %v589
    %v676 = vunpack.c.h.b16 %v589
    %v677 = vunpack.c.l.b16 %v590
    %v678 = vunpack.c.h.b16 %v590
    %v679 = vunpack.c.l.b16 %v591
    %v680 = vunpack.c.h.b16 %v591
    %v681 = vunpack.c.l.b16 %v592
    %v682 = vunpack.c.h.b16 %v592
    %v683 = vunpack.c.l.b16 %v593
    %v684 = vunpack.c.l.b16 %v594
    %v685 = vunpack.c.h.b16 %v594
    %v686 = vunpack.c.l.b16 %v595
    %v687 = vunpack.c.h.b16 %v595
    %v688 = vunpack.c.l.b16 %v596
    %v689 = vunpack.c.h.b16 %v596
    %v690 = vunpack.c.l.b16 %v597
    %v691 = vunpack.c.h.b16 %v597
    %v692 = vunpack.c.l.b16 %v598
    %v693 = vunpack.c.h.b16 %v598
    %v694 = vunpack.c.l.b16 %v599
    %v695 = vunpack.c.h.b16 %v599
    %v696 = vunpack.c.l.b16 %v600
    %v697 = vunpack.c.h.b16 %v600
    %v698 = vunpack.c.l.b16 %v601
    %v699 = vpack.c.b16 %v654, %v639
    %v700 = vpack.c.b16 %v655, %v640
    %v701 = vpack.c.b16 %v656, %v641
    %v702 = vpack.c.b16 %v657, %v642
    %v703 = vpack.c.b16 %v658, %v643
    %v704 = vpack.c.b16 %v659, %v644
    %v705 = vpack.c.b16 %v660, %v645
    %v706 = vpack.c.b16 %v661, %v646
    %v707 = vpack.c.b16 %v662, %v647
    %v708 = vpack.c.b16 %v663, %v648
    %v709 = vpack.c.b16 %v664, %v649
    %v710 = vpack.c.b16 %v665, %v650
    %v711 = vpack.c.b16 %v666, %v651
    %v712 = vpack.c.b16 %v667, %v652
    %v713 = vpack.c.b16 %v668, %v653
    %v714 = vpack.c.b16 %v684, %v669
    %v715 = vpack.c.b16 %v685, %v670
    %v716 = vpack.c.b16 %v686, %v671
    %v717 = vpack.c.b16 %v687, %v672
    %v718 = vpack.c.b16 %v688, %v673
    %v719 = vpack.c.b16 %v689, %v674
    %v720 = vpack.c.b16 %v690, %v675
    %v721 = vpack.c.b16 %v691, %v676
    %v722 = vpack.c.b16 %v692, %v677
    %v723 = vpack.c.b16 %v693, %v678
    %v724 = vpack.c.b16 %v694, %v679
    %v725 = vpack.c.b16 %v695, %v680
    %v726 = vpack.c.b16 %v696, %v681
    %v727 = vpack.c.b16 %v697, %v682
    %v728 = vpack.c.b16 %v698, %v683
    %vm759 = vcmask 261120
    %v761 = vsel %vm759, %v606, 0
    %763 = vmatpush.bf16.msra.mxu0 0
    %764 = vmatpush.bf16.msra.mxu0 0
    %765 = vmatpush.bf16.msra.mxu0 0
    %766 = vmatpush.bf16.msra.mxu0 0
    %767 = vmatpush.bf16.msra.mxu0 0
    %768 = vmatpush.bf16.msra.mxu0 0
    %769 = vmatpush.bf16.msra.mxu0 %v714
    %770 = vmatpush.bf16.msra.mxu0 %v699
    %771 = vmatmul.bf16.gmra.mxu0 %v761
    %v772 = vpop.f32.mrf.mxu0
    %v773 = vadd.f32 0.0, %v772
    %v774 = vpop.f32.mrf.mxu0
    %v775 = vadd.f32 0.0, %v774
    %776 = vdwg.mxu0
    %777 = vmatpush.bf16.msra.mxu0 0
    %778 = vmatpush.bf16.msra.mxu0 0
    %779 = vmatpush.bf16.msra.mxu0 0
    %780 = vmatpush.bf16.msra.mxu0 0
    %781 = vmatpush.bf16.msra.mxu0 0
    %782 = vmatpush.bf16.msra.mxu0 0
    %783 = vmatpush.bf16.msra.mxu0 %v715
    %784 = vmatpush.bf16.msra.mxu0 %v700
    %785 = vmatmul.bf16.gmra.mxu0 %v761
    %v786 = vpop.f32.mrf.mxu0
    %v787 = vadd.f32 0.0, %v786
    %v788 = vpop.f32.mrf.mxu0
    %v789 = vadd.f32 0.0, %v788
    %790 = vdwg.mxu0
    %791 = vmatpush.bf16.msra.mxu0 0
    %792 = vmatpush.bf16.msra.mxu0 0
    %793 = vmatpush.bf16.msra.mxu0 0
    %794 = vmatpush.bf16.msra.mxu0 0
    %795 = vmatpush.bf16.msra.mxu0 0
    %796 = vmatpush.bf16.msra.mxu0 0
    %797 = vmatpush.bf16.msra.mxu0 %v716
    %798 = vmatpush.bf16.msra.mxu0 %v701
    %799 = vmatmul.bf16.gmra.mxu0 %v761
    %v800 = vpop.f32.mrf.mxu0
    %v801 = vadd.f32 0.0, %v800
    %v802 = vpop.f32.mrf.mxu0
    %v803 = vadd.f32 0.0, %v802
    %804 = vdwg.mxu0
    %805 = vmatpush.bf16.msra.mxu0 0
    %806 = vmatpush.bf16.msra.mxu0 0
    %807 = vmatpush.bf16.msra.mxu0 0
    %808 = vmatpush.bf16.msra.mxu0 0
    %809 = vmatpush.bf16.msra.mxu0 0
    %810 = vmatpush.bf16.msra.mxu0 0
    %811 = vmatpush.bf16.msra.mxu0 %v717
    %812 = vmatpush.bf16.msra.mxu0 %v702
    %813 = vmatmul.bf16.gmra.mxu0 %v761
    %v814 = vpop.f32.mrf.mxu0
    %v815 = vadd.f32 0.0, %v814
    %v816 = vpop.f32.mrf.mxu0
    %v817 = vadd.f32 0.0, %v816
    %818 = vdwg.mxu0
    %819 = vmatpush.bf16.msra.mxu0 0
    %820 = vmatpush.bf16.msra.mxu0 0
    %821 = vmatpush.bf16.msra.mxu0 0
    %822 = vmatpush.bf16.msra.mxu0 0
    %823 = vmatpush.bf16.msra.mxu0 0
    %824 = vmatpush.bf16.msra.mxu0 0
    %825 = vmatpush.bf16.msra.mxu0 %v718
    %826 = vmatpush.bf16.msra.mxu0 %v703
    %827 = vmatmul.bf16.gmra.mxu0 %v761
    %v828 = vpop.f32.mrf.mxu0
    %v829 = vadd.f32 0.0, %v828
    %v830 = vpop.f32.mrf.mxu0
    %v831 = vadd.f32 0.0, %v830
    %832 = vdwg.mxu0
    %833 = vmatpush.bf16.msra.mxu0 0
    %834 = vmatpush.bf16.msra.mxu0 0
    %835 = vmatpush.bf16.msra.mxu0 0
    %836 = vmatpush.bf16.msra.mxu0 0
    %837 = vmatpush.bf16.msra.mxu0 0
    %838 = vmatpush.bf16.msra.mxu0 0
    %839 = vmatpush.bf16.msra.mxu0 %v719
    %840 = vmatpush.bf16.msra.mxu0 %v704
    %841 = vmatmul.bf16.gmra.mxu0 %v761
    %v842 = vpop.f32.mrf.mxu0
    %v843 = vadd.f32 0.0, %v842
    %v844 = vpop.f32.mrf.mxu0
    %v845 = vadd.f32 0.0, %v844
    %846 = vdwg.mxu0
    %847 = vmatpush.bf16.msra.mxu0 0
    %848 = vmatpush.bf16.msra.mxu0 0
    %849 = vmatpush.bf16.msra.mxu0 0
    %850 = vmatpush.bf16.msra.mxu0 0
    %851 = vmatpush.bf16.msra.mxu0 0
    %852 = vmatpush.bf16.msra.mxu0 0
    %853 = vmatpush.bf16.msra.mxu0 %v720
    %854 = vmatpush.bf16.msra.mxu0 %v705
    %855 = vmatmul.bf16.gmra.mxu0 %v761
    %v856 = vpop.f32.mrf.mxu0
    %v857 = vadd.f32 0.0, %v856
    %v858 = vpop.f32.mrf.mxu0
    %v859 = vadd.f32 0.0, %v858
    %860 = vdwg.mxu0
    %861 = vmatpush.bf16.msra.mxu0 0
    %862 = vmatpush.bf16.msra.mxu0 0
    %863 = vmatpush.bf16.msra.mxu0 0
    %864 = vmatpush.bf16.msra.mxu0 0
    %865 = vmatpush.bf16.msra.mxu0 0
    %866 = vmatpush.bf16.msra.mxu0 0
    %867 = vmatpush.bf16.msra.mxu0 %v721
    %868 = vmatpush.bf16.msra.mxu0 %v706
    %869 = vmatmul.bf16.gmra.mxu0 %v761
    %v870 = vpop.f32.mrf.mxu0
    %v871 = vadd.f32 0.0, %v870
    %v872 = vpop.f32.mrf.mxu0
    %v873 = vadd.f32 0.0, %v872
    %874 = vdwg.mxu0
    %875 = vmatpush.bf16.msra.mxu0 0
    %876 = vmatpush.bf16.msra.mxu0 0
    %877 = vmatpush.bf16.msra.mxu0 0
    %878 = vmatpush.bf16.msra.mxu0 0
    %879 = vmatpush.bf16.msra.mxu0 0
    %880 = vmatpush.bf16.msra.mxu0 0
    %881 = vmatpush.bf16.msra.mxu0 %v722
    %882 = vmatpush.bf16.msra.mxu0 %v707
    %883 = vmatmul.bf16.gmra.mxu0 %v761
    %v884 = vpop.f32.mrf.mxu0
    %v885 = vadd.f32 0.0, %v884
    %v886 = vpop.f32.mrf.mxu0
    %v887 = vadd.f32 0.0, %v886
    %888 = vdwg.mxu0
    %889 = vmatpush.bf16.msra.mxu0 0
    %890 = vmatpush.bf16.msra.mxu0 0
    %891 = vmatpush.bf16.msra.mxu0 0
    %892 = vmatpush.bf16.msra.mxu0 0
    %893 = vmatpush.bf16.msra.mxu0 0
    %894 = vmatpush.bf16.msra.mxu0 0
    %895 = vmatpush.bf16.msra.mxu0 %v723
    %896 = vmatpush.bf16.msra.mxu0 %v708
    %897 = vmatmul.bf16.gmra.mxu0 %v761
    %v898 = vpop.f32.mrf.mxu0
    %v899 = vadd.f32 0.0, %v898
    %v900 = vpop.f32.mrf.mxu0
    %v901 = vadd.f32 0.0, %v900
    %902 = vdwg.mxu0
    %903 = vmatpush.bf16.msra.mxu0 0
    %904 = vmatpush.bf16.msra.mxu0 0
    %905 = vmatpush.bf16.msra.mxu0 0
    %906 = vmatpush.bf16.msra.mxu0 0
    %907 = vmatpush.bf16.msra.mxu0 0
    %908 = vmatpush.bf16.msra.mxu0 0
    %909 = vmatpush.bf16.msra.mxu0 %v724
    %910 = vmatpush.bf16.msra.mxu0 %v709
    %911 = vmatmul.bf16.gmra.mxu0 %v761
    %v912 = vpop.f32.mrf.mxu0
    %v913 = vadd.f32 0.0, %v912
    %v914 = vpop.f32.mrf.mxu0
    %v915 = vadd.f32 0.0, %v914
    %916 = vdwg.mxu0
    %917 = vmatpush.bf16.msra.mxu0 0
    %918 = vmatpush.bf16.msra.mxu0 0
    %919 = vmatpush.bf16.msra.mxu0 0
    %920 = vmatpush.bf16.msra.mxu0 0
    %921 = vmatpush.bf16.msra.mxu0 0
    %922 = vmatpush.bf16.msra.mxu0 0
    %923 = vmatpush.bf16.msra.mxu0 %v725
    %924 = vmatpush.bf16.msra.mxu0 %v710
    %925 = vmatmul.bf16.gmra.mxu0 %v761
    %v926 = vpop.f32.mrf.mxu0
    %v927 = vadd.f32 0.0, %v926
    %v928 = vpop.f32.mrf.mxu0
    %v929 = vadd.f32 0.0, %v928
    %930 = vdwg.mxu0
    %931 = vmatpush.bf16.msra.mxu0 0
    %932 = vmatpush.bf16.msra.mxu0 0
    %933 = vmatpush.bf16.msra.mxu0 0
    %934 = vmatpush.bf16.msra.mxu0 0
    %935 = vmatpush.bf16.msra.mxu0 0
    %936 = vmatpush.bf16.msra.mxu0 0
    %937 = vmatpush.bf16.msra.mxu0 %v726
    %938 = vmatpush.bf16.msra.mxu0 %v711
    %939 = vmatmul.bf16.gmra.mxu0 %v761
    %v940 = vpop.f32.mrf.mxu0
    %v941 = vadd.f32 0.0, %v940
    %v942 = vpop.f32.mrf.mxu0
    %v943 = vadd.f32 0.0, %v942
    %944 = vdwg.mxu0
    %945 = vmatpush.bf16.msra.mxu0 0
    %946 = vmatpush.bf16.msra.mxu0 0
    %947 = vmatpush.bf16.msra.mxu0 0
    %948 = vmatpush.bf16.msra.mxu0 0
    %949 = vmatpush.bf16.msra.mxu0 0
    %950 = vmatpush.bf16.msra.mxu0 0
    %951 = vmatpush.bf16.msra.mxu0 %v727
    %952 = vmatpush.bf16.msra.mxu0 %v712
    %953 = vmatmul.bf16.gmra.mxu0 %v761
    %v954 = vpop.f32.mrf.mxu0
    %v955 = vadd.f32 0.0, %v954
    %v956 = vpop.f32.mrf.mxu0
    %v957 = vadd.f32 0.0, %v956
    %958 = vdwg.mxu0
    %959 = vmatpush.bf16.msra.mxu0 0
    %960 = vmatpush.bf16.msra.mxu0 0
    %961 = vmatpush.bf16.msra.mxu0 0
    %962 = vmatpush.bf16.msra.mxu0 0
    %963 = vmatpush.bf16.msra.mxu0 0
    %964 = vmatpush.bf16.msra.mxu0 0
    %965 = vmatpush.bf16.msra.mxu0 %v728
    %966 = vmatpush.bf16.msra.mxu0 %v713
    %967 = vmatmul.bf16.gmra.mxu0 %v761
    %v968 = vpop.f32.mrf.mxu0
    %v969 = vadd.f32 0.0, %v968
    %v970 = vpop.f32.mrf.mxu0
    %v971 = vadd.f32 0.0, %v970
    %972 = vdwg.mxu0
    %v977 = vunpack.c.l.b16 %v52
    %v978 = vunpack.c.h.b16 %v52
    %v979 = vunpack.c.l.b16 %v53
    %v980 = vunpack.c.h.b16 %v53
    %v981 = vunpack.c.l.b16 %v54
    %v982 = vunpack.c.h.b16 %v54
    %v983 = vunpack.c.l.b16 %v55
    %v984 = vunpack.c.h.b16 %v55
    %v985 = vpack.c.b16 %v981, %v977
    %v986 = vpack.c.b16 %v982, %v978
    %v987 = vpack.c.b16 %v983, %v979
    %v988 = vpack.c.b16 %v984, %v980
    %v1505 = vunpack.c.l.b16 %v58
    %v1506 = vunpack.c.h.b16 %v58
    %v1507 = vunpack.c.l.b16 %v59
    %v1508 = vunpack.c.h.b16 %v59
    %v1509 = vunpack.c.l.b16 %v60
    %v1510 = vunpack.c.h.b16 %v60
    %v1511 = vunpack.c.l.b16 %v61
    %v1512 = vunpack.c.h.b16 %v61
    %v1513 = vunpack.c.l.b16 %v62
    %v1514 = vunpack.c.h.b16 %v62
    %v1515 = vunpack.c.l.b16 %v63
    %v1516 = vunpack.c.h.b16 %v63
    %v1517 = vunpack.c.l.b16 %v64
    %v1518 = vunpack.c.h.b16 %v64
    %v1519 = vunpack.c.l.b16 %v65
    %v1520 = vunpack.c.l.b16 %v66
    %v1521 = vunpack.c.h.b16 %v66
    %v1522 = vunpack.c.l.b16 %v67
    %v1523 = vunpack.c.h.b16 %v67
    %v1524 = vunpack.c.l.b16 %v68
    %v1525 = vunpack.c.h.b16 %v68
    %v1526 = vunpack.c.l.b16 %v69
    %v1527 = vunpack.c.h.b16 %v69
    %v1528 = vunpack.c.l.b16 %v70
    %v1529 = vunpack.c.h.b16 %v70
    %v1530 = vunpack.c.l.b16 %v71
    %v1531 = vunpack.c.h.b16 %v71
    %v1532 = vunpack.c.l.b16 %v72
    %v1533 = vunpack.c.h.b16 %v72
    %v1534 = vunpack.c.l.b16 %v73
    %v1535 = vunpack.c.l.b16 %v74
    %v1536 = vunpack.c.h.b16 %v74
    %v1537 = vunpack.c.l.b16 %v75
    %v1538 = vunpack.c.h.b16 %v75
    %v1539 = vunpack.c.l.b16 %v76
    %v1540 = vunpack.c.h.b16 %v76
    %v1541 = vunpack.c.l.b16 %v77
    %v1542 = vunpack.c.h.b16 %v77
    %v1543 = vunpack.c.l.b16 %v78
    %v1544 = vunpack.c.h.b16 %v78
    %v1545 = vunpack.c.l.b16 %v79
    %v1546 = vunpack.c.h.b16 %v79
    %v1547 = vunpack.c.l.b16 %v80
    %v1548 = vunpack.c.h.b16 %v80
    %v1549 = vunpack.c.l.b16 %v81
    %v1550 = vunpack.c.l.b16 %v82
    %v1551 = vunpack.c.h.b16 %v82
    %v1552 = vunpack.c.l.b16 %v83
    %v1553 = vunpack.c.h.b16 %v83
    %v1554 = vunpack.c.l.b16 %v84
    %v1555 = vunpack.c.h.b16 %v84
    %v1556 = vunpack.c.l.b16 %v85
    %v1557 = vunpack.c.h.b16 %v85
    %v1558 = vunpack.c.l.b16 %v86
    %v1559 = vunpack.c.h.b16 %v86
    %v1560 = vunpack.c.l.b16 %v87
    %v1561 = vunpack.c.h.b16 %v87
    %v1562 = vunpack.c.l.b16 %v88
    %v1563 = vunpack.c.h.b16 %v88
    %v1564 = vunpack.c.l.b16 %v89
    %v1565 = vunpack.c.l.b16 %v90
    %v1566 = vunpack.c.h.b16 %v90
    %v1567 = vunpack.c.l.b16 %v91
    %v1568 = vunpack.c.h.b16 %v91
    %v1569 = vunpack.c.l.b16 %v92
    %v1570 = vunpack.c.h.b16 %v92
    %v1571 = vunpack.c.l.b16 %v93
    %v1572 = vunpack.c.h.b16 %v93
    %v1573 = vunpack.c.l.b16 %v94
    %v1574 = vunpack.c.h.b16 %v94
    %v1575 = vunpack.c.l.b16 %v95
    %v1576 = vunpack.c.h.b16 %v95
    %v1577 = vunpack.c.l.b16 %v96
    %v1578 = vunpack.c.h.b16 %v96
    %v1579 = vunpack.c.l.b16 %v97
    %v1580 = vunpack.c.l.b16 %v98
    %v1581 = vunpack.c.h.b16 %v98
    %v1582 = vunpack.c.l.b16 %v99
    %v1583 = vunpack.c.h.b16 %v99
    %v1584 = vunpack.c.l.b16 %v100
    %v1585 = vunpack.c.h.b16 %v100
    %v1586 = vunpack.c.l.b16 %v101
    %v1587 = vunpack.c.h.b16 %v101
    %v1588 = vunpack.c.l.b16 %v102
    %v1589 = vunpack.c.h.b16 %v102
    %v1590 = vunpack.c.l.b16 %v103
    %v1591 = vunpack.c.h.b16 %v103
    %v1592 = vunpack.c.l.b16 %v104
    %v1593 = vunpack.c.h.b16 %v104
    %v1594 = vunpack.c.l.b16 %v105
    %v1595 = vunpack.c.l.b16 %v106
    %v1596 = vunpack.c.h.b16 %v106
    %v1597 = vunpack.c.l.b16 %v107
    %v1598 = vunpack.c.h.b16 %v107
    %v1599 = vunpack.c.l.b16 %v108
    %v1600 = vunpack.c.h.b16 %v108
    %v1601 = vunpack.c.l.b16 %v109
    %v1602 = vunpack.c.h.b16 %v109
    %v1603 = vunpack.c.l.b16 %v110
    %v1604 = vunpack.c.h.b16 %v110
    %v1605 = vunpack.c.l.b16 %v111
    %v1606 = vunpack.c.h.b16 %v111
    %v1607 = vunpack.c.l.b16 %v112
    %v1608 = vunpack.c.h.b16 %v112
    %v1609 = vunpack.c.l.b16 %v113
    %v1610 = vunpack.c.l.b16 %v114
    %v1611 = vunpack.c.h.b16 %v114
    %v1612 = vunpack.c.l.b16 %v115
    %v1613 = vunpack.c.h.b16 %v115
    %v1614 = vunpack.c.l.b16 %v116
    %v1615 = vunpack.c.h.b16 %v116
    %v1616 = vunpack.c.l.b16 %v117
    %v1617 = vunpack.c.h.b16 %v117
    %v1618 = vunpack.c.l.b16 %v118
    %v1619 = vunpack.c.h.b16 %v118
    %v1620 = vunpack.c.l.b16 %v119
    %v1621 = vunpack.c.h.b16 %v119
    %v1622 = vunpack.c.l.b16 %v120
    %v1623 = vunpack.c.h.b16 %v120
    %v1624 = vunpack.c.l.b16 %v121
    %v1625 = vunpack.c.l.b16 %v122
    %v1626 = vunpack.c.h.b16 %v122
    %v1627 = vunpack.c.l.b16 %v123
    %v1628 = vunpack.c.h.b16 %v123
    %v1629 = vunpack.c.l.b16 %v124
    %v1630 = vunpack.c.h.b16 %v124
    %v1631 = vunpack.c.l.b16 %v125
    %v1632 = vunpack.c.h.b16 %v125
    %v1633 = vunpack.c.l.b16 %v126
    %v1634 = vunpack.c.h.b16 %v126
    %v1635 = vunpack.c.l.b16 %v127
    %v1636 = vunpack.c.h.b16 %v127
    %v1637 = vunpack.c.l.b16 %v128
    %v1638 = vunpack.c.h.b16 %v128
    %v1639 = vunpack.c.l.b16 %v129
    %v1640 = vunpack.c.l.b16 %v130
    %v1641 = vunpack.c.h.b16 %v130
    %v1642 = vunpack.c.l.b16 %v131
    %v1643 = vunpack.c.h.b16 %v131
    %v1644 = vunpack.c.l.b16 %v132
    %v1645 = vunpack.c.h.b16 %v132
    %v1646 = vunpack.c.l.b16 %v133
    %v1647 = vunpack.c.h.b16 %v133
    %v1648 = vunpack.c.l.b16 %v134
    %v1649 = vunpack.c.h.b16 %v134
    %v1650 = vunpack.c.l.b16 %v135
    %v1651 = vunpack.c.h.b16 %v135
    %v1652 = vunpack.c.l.b16 %v136
    %v1653 = vunpack.c.h.b16 %v136
    %v1654 = vunpack.c.l.b16 %v137
    %v1655 = vunpack.c.l.b16 %v138
    %v1656 = vunpack.c.h.b16 %v138
    %v1657 = vunpack.c.l.b16 %v139
    %v1658 = vunpack.c.h.b16 %v139
    %v1659 = vunpack.c.l.b16 %v140
    %v1660 = vunpack.c.h.b16 %v140
    %v1661 = vunpack.c.l.b16 %v141
    %v1662 = vunpack.c.h.b16 %v141
    %v1663 = vunpack.c.l.b16 %v142
    %v1664 = vunpack.c.h.b16 %v142
    %v1665 = vunpack.c.l.b16 %v143
    %v1666 = vunpack.c.h.b16 %v143
    %v1667 = vunpack.c.l.b16 %v144
    %v1668 = vunpack.c.h.b16 %v144
    %v1669 = vunpack.c.l.b16 %v145
    %v1670 = vunpack.c.l.b16 %v146
    %v1671 = vunpack.c.h.b16 %v146
    %v1672 = vunpack.c.l.b16 %v147
    %v1673 = vunpack.c.h.b16 %v147
    %v1674 = vunpack.c.l.b16 %v148
    %v1675 = vunpack.c.h.b16 %v148
    %v1676 = vunpack.c.l.b16 %v149
    %v1677 = vunpack.c.h.b16 %v149
    %v1678 = vunpack.c.l.b16 %v150
    %v1679 = vunpack.c.h.b16 %v150
    %v1680 = vunpack.c.l.b16 %v151
    %v1681 = vunpack.c.h.b16 %v151
    %v1682 = vunpack.c.l.b16 %v152
    %v1683 = vunpack.c.h.b16 %v152
    %v1684 = vunpack.c.l.b16 %v153
    %v1685 = vunpack.c.l.b16 %v154
    %v1686 = vunpack.c.h.b16 %v154
    %v1687 = vunpack.c.l.b16 %v155
    %v1688 = vunpack.c.h.b16 %v155
    %v1689 = vunpack.c.l.b16 %v156
    %v1690 = vunpack.c.h.b16 %v156
    %v1691 = vunpack.c.l.b16 %v157
    %v1692 = vunpack.c.h.b16 %v157
    %v1693 = vunpack.c.l.b16 %v158
    %v1694 = vunpack.c.h.b16 %v158
    %v1695 = vunpack.c.l.b16 %v159
    %v1696 = vunpack.c.h.b16 %v159
    %v1697 = vunpack.c.l.b16 %v160
    %v1698 = vunpack.c.h.b16 %v160
    %v1699 = vunpack.c.l.b16 %v161
    %v1700 = vunpack.c.l.b16 %v162
    %v1701 = vunpack.c.h.b16 %v162
    %v1702 = vunpack.c.l.b16 %v163
    %v1703 = vunpack.c.h.b16 %v163
    %v1704 = vunpack.c.l.b16 %v164
    %v1705 = vunpack.c.h.b16 %v164
    %v1706 = vunpack.c.l.b16 %v165
    %v1707 = vunpack.c.h.b16 %v165
    %v1708 = vunpack.c.l.b16 %v166
    %v1709 = vunpack.c.h.b16 %v166
    %v1710 = vunpack.c.l.b16 %v167
    %v1711 = vunpack.c.h.b16 %v167
    %v1712 = vunpack.c.l.b16 %v168
    %v1713 = vunpack.c.h.b16 %v168
    %v1714 = vunpack.c.l.b16 %v169
    %v1715 = vunpack.c.l.b16 %v170
    %v1716 = vunpack.c.h.b16 %v170
    %v1717 = vunpack.c.l.b16 %v171
    %v1718 = vunpack.c.h.b16 %v171
    %v1719 = vunpack.c.l.b16 %v172
    %v1720 = vunpack.c.h.b16 %v172
    %v1721 = vunpack.c.l.b16 %v173
    %v1722 = vunpack.c.h.b16 %v173
    %v1723 = vunpack.c.l.b16 %v174
    %v1724 = vunpack.c.h.b16 %v174
    %v1725 = vunpack.c.l.b16 %v175
    %v1726 = vunpack.c.h.b16 %v175
    %v1727 = vunpack.c.l.b16 %v176
    %v1728 = vunpack.c.h.b16 %v176
    %v1729 = vunpack.c.l.b16 %v177
    %v1730 = vunpack.c.l.b16 %v178
    %v1731 = vunpack.c.h.b16 %v178
    %v1732 = vunpack.c.l.b16 %v179
    %v1733 = vunpack.c.h.b16 %v179
    %v1734 = vunpack.c.l.b16 %v180
    %v1735 = vunpack.c.h.b16 %v180
    %v1736 = vunpack.c.l.b16 %v181
    %v1737 = vunpack.c.h.b16 %v181
    %v1738 = vunpack.c.l.b16 %v182
    %v1739 = vunpack.c.h.b16 %v182
    %v1740 = vunpack.c.l.b16 %v183
    %v1741 = vunpack.c.h.b16 %v183
    %v1742 = vunpack.c.l.b16 %v184
    %v1743 = vunpack.c.h.b16 %v184
    %v1744 = vunpack.c.l.b16 %v185
    %v1745 = vunpack.c.l.b16 %v186
    %v1746 = vunpack.c.h.b16 %v186
    %v1747 = vunpack.c.l.b16 %v187
    %v1748 = vunpack.c.h.b16 %v187
    %v1749 = vunpack.c.l.b16 %v188
    %v1750 = vunpack.c.h.b16 %v188
    %v1751 = vunpack.c.l.b16 %v189
    %v1752 = vunpack.c.h.b16 %v189
    %v1753 = vunpack.c.l.b16 %v190
    %v1754 = vunpack.c.h.b16 %v190
    %v1755 = vunpack.c.l.b16 %v191
    %v1756 = vunpack.c.h.b16 %v191
    %v1757 = vunpack.c.l.b16 %v192
    %v1758 = vunpack.c.h.b16 %v192
    %v1759 = vunpack.c.l.b16 %v193
    %v1760 = vunpack.c.l.b16 %v194
    %v1761 = vunpack.c.h.b16 %v194
    %v1762 = vunpack.c.l.b16 %v195
    %v1763 = vunpack.c.h.b16 %v195
    %v1764 = vunpack.c.l.b16 %v196
    %v1765 = vunpack.c.h.b16 %v196
    %v1766 = vunpack.c.l.b16 %v197
    %v1767 = vunpack.c.h.b16 %v197
    %v1768 = vunpack.c.l.b16 %v198
    %v1769 = vunpack.c.h.b16 %v198
    %v1770 = vunpack.c.l.b16 %v199
    %v1771 = vunpack.c.h.b16 %v199
    %v1772 = vunpack.c.l.b16 %v200
    %v1773 = vunpack.c.h.b16 %v200
    %v1774 = vunpack.c.l.b16 %v201
    %v1775 = vunpack.c.l.b16 %v202
    %v1776 = vunpack.c.h.b16 %v202
    %v1777 = vunpack.c.l.b16 %v203
    %v1778 = vunpack.c.h.b16 %v203
    %v1779 = vunpack.c.l.b16 %v204
    %v1780 = vunpack.c.h.b16 %v204
    %v1781 = vunpack.c.l.b16 %v205
    %v1782 = vunpack.c.h.b16 %v205
    %v1783 = vunpack.c.l.b16 %v206
    %v1784 = vunpack.c.h.b16 %v206
    %v1785 = vunpack.c.l.b16 %v207
    %v1786 = vunpack.c.h.b16 %v207
    %v1787 = vunpack.c.l.b16 %v208
    %v1788 = vunpack.c.h.b16 %v208
    %v1789 = vunpack.c.l.b16 %v209
    %v1790 = vunpack.c.l.b16 %v210
    %v1791 = vunpack.c.h.b16 %v210
    %v1792 = vunpack.c.l.b16 %v211
    %v1793 = vunpack.c.h.b16 %v211
    %v1794 = vunpack.c.l.b16 %v212
    %v1795 = vunpack.c.h.b16 %v212
    %v1796 = vunpack.c.l.b16 %v213
    %v1797 = vunpack.c.h.b16 %v213
    %v1798 = vunpack.c.l.b16 %v214
    %v1799 = vunpack.c.h.b16 %v214
    %v1800 = vunpack.c.l.b16 %v215
    %v1801 = vunpack.c.h.b16 %v215
    %v1802 = vunpack.c.l.b16 %v216
    %v1803 = vunpack.c.h.b16 %v216
    %v1804 = vunpack.c.l.b16 %v217
    %v1805 = vunpack.c.l.b16 %v218
    %v1806 = vunpack.c.h.b16 %v218
    %v1807 = vunpack.c.l.b16 %v219
    %v1808 = vunpack.c.h.b16 %v219
    %v1809 = vunpack.c.l.b16 %v220
    %v1810 = vunpack.c.h.b16 %v220
    %v1811 = vunpack.c.l.b16 %v221
    %v1812 = vunpack.c.h.b16 %v221
    %v1813 = vunpack.c.l.b16 %v222
    %v1814 = vunpack.c.h.b16 %v222
    %v1815 = vunpack.c.l.b16 %v223
    %v1816 = vunpack.c.h.b16 %v223
    %v1817 = vunpack.c.l.b16 %v224
    %v1818 = vunpack.c.h.b16 %v224
    %v1819 = vunpack.c.l.b16 %v225
    %v1820 = vunpack.c.l.b16 %v226
    %v1821 = vunpack.c.h.b16 %v226
    %v1822 = vunpack.c.l.b16 %v227
    %v1823 = vunpack.c.h.b16 %v227
    %v1824 = vunpack.c.l.b16 %v228
    %v1825 = vunpack.c.h.b16 %v228
    %v1826 = vunpack.c.l.b16 %v229
    %v1827 = vunpack.c.h.b16 %v229
    %v1828 = vunpack.c.l.b16 %v230
    %v1829 = vunpack.c.h.b16 %v230
    %v1830 = vunpack.c.l.b16 %v231
    %v1831 = vunpack.c.h.b16 %v231
    %v1832 = vunpack.c.l.b16 %v232
    %v1833 = vunpack.c.h.b16 %v232
    %v1834 = vunpack.c.l.b16 %v233
    %v1835 = vunpack.c.l.b16 %v234
    %v1836 = vunpack.c.h.b16 %v234
    %v1837 = vunpack.c.l.b16 %v235
    %v1838 = vunpack.c.h.b16 %v235
    %v1839 = vunpack.c.l.b16 %v236
    %v1840 = vunpack.c.h.b16 %v236
    %v1841 = vunpack.c.l.b16 %v237
    %v1842 = vunpack.c.h.b16 %v237
    %v1843 = vunpack.c.l.b16 %v238
    %v1844 = vunpack.c.h.b16 %v238
    %v1845 = vunpack.c.l.b16 %v239
    %v1846 = vunpack.c.h.b16 %v239
    %v1847 = vunpack.c.l.b16 %v240
    %v1848 = vunpack.c.h.b16 %v240
    %v1849 = vunpack.c.l.b16 %v241
    %v1850 = vunpack.c.l.b16 %v242
    %v1851 = vunpack.c.h.b16 %v242
    %v1852 = vunpack.c.l.b16 %v243
    %v1853 = vunpack.c.h.b16 %v243
    %v1854 = vunpack.c.l.b16 %v244
    %v1855 = vunpack.c.h.b16 %v244
    %v1856 = vunpack.c.l.b16 %v245
    %v1857 = vunpack.c.h.b16 %v245
    %v1858 = vunpack.c.l.b16 %v246
    %v1859 = vunpack.c.h.b16 %v246
    %v1860 = vunpack.c.l.b16 %v247
    %v1861 = vunpack.c.h.b16 %v247
    %v1862 = vunpack.c.l.b16 %v248
    %v1863 = vunpack.c.h.b16 %v248
    %v1864 = vunpack.c.l.b16 %v249
    %v1865 = vunpack.c.l.b16 %v250
    %v1866 = vunpack.c.h.b16 %v250
    %v1867 = vunpack.c.l.b16 %v251
    %v1868 = vunpack.c.h.b16 %v251
    %v1869 = vunpack.c.l.b16 %v252
    %v1870 = vunpack.c.h.b16 %v252
    %v1871 = vunpack.c.l.b16 %v253
    %v1872 = vunpack.c.h.b16 %v253
    %v1873 = vunpack.c.l.b16 %v254
    %v1874 = vunpack.c.h.b16 %v254
    %v1875 = vunpack.c.l.b16 %v255
    %v1876 = vunpack.c.h.b16 %v255
    %v1877 = vunpack.c.l.b16 %v256
    %v1878 = vunpack.c.h.b16 %v256
    %v1879 = vunpack.c.l.b16 %v257
    %v1880 = vunpack.c.l.b16 %v258
    %v1881 = vunpack.c.h.b16 %v258
    %v1882 = vunpack.c.l.b16 %v259
    %v1883 = vunpack.c.h.b16 %v259
    %v1884 = vunpack.c.l.b16 %v260
    %v1885 = vunpack.c.h.b16 %v260
    %v1886 = vunpack.c.l.b16 %v261
    %v1887 = vunpack.c.h.b16 %v261
    %v1888 = vunpack.c.l.b16 %v262
    %v1889 = vunpack.c.h.b16 %v262
    %v1890 = vunpack.c.l.b16 %v263
    %v1891 = vunpack.c.h.b16 %v263
    %v1892 = vunpack.c.l.b16 %v264
    %v1893 = vunpack.c.h.b16 %v264
    %v1894 = vunpack.c.l.b16 %v265
    %v1895 = vunpack.c.l.b16 %v266
    %v1896 = vunpack.c.h.b16 %v266
    %v1897 = vunpack.c.l.b16 %v267
    %v1898 = vunpack.c.h.b16 %v267
    %v1899 = vunpack.c.l.b16 %v268
    %v1900 = vunpack.c.h.b16 %v268
    %v1901 = vunpack.c.l.b16 %v269
    %v1902 = vunpack.c.h.b16 %v269
    %v1903 = vunpack.c.l.b16 %v270
    %v1904 = vunpack.c.h.b16 %v270
    %v1905 = vunpack.c.l.b16 %v271
    %v1906 = vunpack.c.h.b16 %v271
    %v1907 = vunpack.c.l.b16 %v272
    %v1908 = vunpack.c.h.b16 %v272
    %v1909 = vunpack.c.l.b16 %v273
    %v1910 = vunpack.c.l.b16 %v274
    %v1911 = vunpack.c.h.b16 %v274
    %v1912 = vunpack.c.l.b16 %v275
    %v1913 = vunpack.c.h.b16 %v275
    %v1914 = vunpack.c.l.b16 %v276
    %v1915 = vunpack.c.h.b16 %v276
    %v1916 = vunpack.c.l.b16 %v277
    %v1917 = vunpack.c.h.b16 %v277
    %v1918 = vunpack.c.l.b16 %v278
    %v1919 = vunpack.c.h.b16 %v278
    %v1920 = vunpack.c.l.b16 %v279
    %v1921 = vunpack.c.h.b16 %v279
    %v1922 = vunpack.c.l.b16 %v280
    %v1923 = vunpack.c.h.b16 %v280
    %v1924 = vunpack.c.l.b16 %v281
    %v1925 = vunpack.c.l.b16 %v282
    %v1926 = vunpack.c.h.b16 %v282
    %v1927 = vunpack.c.l.b16 %v283
    %v1928 = vunpack.c.h.b16 %v283
    %v1929 = vunpack.c.l.b16 %v284
    %v1930 = vunpack.c.h.b16 %v284
    %v1931 = vunpack.c.l.b16 %v285
    %v1932 = vunpack.c.h.b16 %v285
    %v1933 = vunpack.c.l.b16 %v286
    %v1934 = vunpack.c.h.b16 %v286
    %v1935 = vunpack.c.l.b16 %v287
    %v1936 = vunpack.c.h.b16 %v287
    %v1937 = vunpack.c.l.b16 %v288
    %v1938 = vunpack.c.h.b16 %v288
    %v1939 = vunpack.c.l.b16 %v289
    %v1940 = vunpack.c.l.b16 %v290
    %v1941 = vunpack.c.h.b16 %v290
    %v1942 = vunpack.c.l.b16 %v291
    %v1943 = vunpack.c.h.b16 %v291
    %v1944 = vunpack.c.l.b16 %v292
    %v1945 = vunpack.c.h.b16 %v292
    %v1946 = vunpack.c.l.b16 %v293
    %v1947 = vunpack.c.h.b16 %v293
    %v1948 = vunpack.c.l.b16 %v294
    %v1949 = vunpack.c.h.b16 %v294
    %v1950 = vunpack.c.l.b16 %v295
    %v1951 = vunpack.c.h.b16 %v295
    %v1952 = vunpack.c.l.b16 %v296
    %v1953 = vunpack.c.h.b16 %v296
    %v1954 = vunpack.c.l.b16 %v297
    %v1955 = vunpack.c.l.b16 %v298
    %v1956 = vunpack.c.h.b16 %v298
    %v1957 = vunpack.c.l.b16 %v299
    %v1958 = vunpack.c.h.b16 %v299
    %v1959 = vunpack.c.l.b16 %v300
    %v1960 = vunpack.c.h.b16 %v300
    %v1961 = vunpack.c.l.b16 %v301
    %v1962 = vunpack.c.h.b16 %v301
    %v1963 = vunpack.c.l.b16 %v302
    %v1964 = vunpack.c.h.b16 %v302
    %v1965 = vunpack.c.l.b16 %v303
    %v1966 = vunpack.c.h.b16 %v303
    %v1967 = vunpack.c.l.b16 %v304
    %v1968 = vunpack.c.h.b16 %v304
    %v1969 = vunpack.c.l.b16 %v305
    %v1970 = vunpack.c.l.b16 %v306
    %v1971 = vunpack.c.h.b16 %v306
    %v1972 = vunpack.c.l.b16 %v307
    %v1973 = vunpack.c.h.b16 %v307
    %v1974 = vunpack.c.l.b16 %v308
    %v1975 = vunpack.c.h.b16 %v308
    %v1976 = vunpack.c.l.b16 %v309
    %v1977 = vunpack.c.h.b16 %v309
    %v1978 = vunpack.c.l.b16 %v310
    %v1979 = vunpack.c.h.b16 %v310
    %v1980 = vunpack.c.l.b16 %v311
    %v1981 = vunpack.c.h.b16 %v311
    %v1982 = vunpack.c.l.b16 %v312
    %v1983 = vunpack.c.h.b16 %v312
    %v1984 = vunpack.c.l.b16 %v313
    %v1985 = vunpack.c.l.b16 %v314
    %v1986 = vunpack.c.h.b16 %v314
    %v1987 = vunpack.c.l.b16 %v315
    %v1988 = vunpack.c.h.b16 %v315
    %v1989 = vunpack.c.l.b16 %v316
    %v1990 = vunpack.c.h.b16 %v316
    %v1991 = vunpack.c.l.b16 %v317
    %v1992 = vunpack.c.h.b16 %v317
    %v1993 = vunpack.c.l.b16 %v318
    %v1994 = vunpack.c.h.b16 %v318
    %v1995 = vunpack.c.l.b16 %v319
    %v1996 = vunpack.c.h.b16 %v319
    %v1997 = vunpack.c.l.b16 %v320
    %v1998 = vunpack.c.h.b16 %v320
    %v1999 = vunpack.c.l.b16 %v321
    %v2000 = vunpack.c.l.b16 %v322
    %v2001 = vunpack.c.h.b16 %v322
    %v2002 = vunpack.c.l.b16 %v323
    %v2003 = vunpack.c.h.b16 %v323
    %v2004 = vunpack.c.l.b16 %v324
    %v2005 = vunpack.c.h.b16 %v324
    %v2006 = vunpack.c.l.b16 %v325
    %v2007 = vunpack.c.h.b16 %v325
    %v2008 = vunpack.c.l.b16 %v326
    %v2009 = vunpack.c.h.b16 %v326
    %v2010 = vunpack.c.l.b16 %v327
    %v2011 = vunpack.c.h.b16 %v327
    %v2012 = vunpack.c.l.b16 %v328
    %v2013 = vunpack.c.h.b16 %v328
    %v2014 = vunpack.c.l.b16 %v329
    %v2015 = vunpack.c.l.b16 %v330
    %v2016 = vunpack.c.h.b16 %v330
    %v2017 = vunpack.c.l.b16 %v331
    %v2018 = vunpack.c.h.b16 %v331
    %v2019 = vunpack.c.l.b16 %v332
    %v2020 = vunpack.c.h.b16 %v332
    %v2021 = vunpack.c.l.b16 %v333
    %v2022 = vunpack.c.h.b16 %v333
    %v2023 = vunpack.c.l.b16 %v334
    %v2024 = vunpack.c.h.b16 %v334
    %v2025 = vunpack.c.l.b16 %v335
    %v2026 = vunpack.c.h.b16 %v335
    %v2027 = vunpack.c.l.b16 %v336
    %v2028 = vunpack.c.h.b16 %v336
    %v2029 = vunpack.c.l.b16 %v337
    %v2030 = vunpack.c.l.b16 %v338
    %v2031 = vunpack.c.h.b16 %v338
    %v2032 = vunpack.c.l.b16 %v339
    %v2033 = vunpack.c.h.b16 %v339
    %v2034 = vunpack.c.l.b16 %v340
    %v2035 = vunpack.c.h.b16 %v340
    %v2036 = vunpack.c.l.b16 %v341
    %v2037 = vunpack.c.h.b16 %v341
    %v2038 = vunpack.c.l.b16 %v342
    %v2039 = vunpack.c.h.b16 %v342
    %v2040 = vunpack.c.l.b16 %v343
    %v2041 = vunpack.c.h.b16 %v343
    %v2042 = vunpack.c.l.b16 %v344
    %v2043 = vunpack.c.h.b16 %v344
    %v2044 = vunpack.c.l.b16 %v345
    %v2045 = vunpack.c.l.b16 %v346
    %v2046 = vunpack.c.h.b16 %v346
    %v2047 = vunpack.c.l.b16 %v347
    %v2048 = vunpack.c.h.b16 %v347
    %v2049 = vunpack.c.l.b16 %v348
    %v2050 = vunpack.c.h.b16 %v348
    %v2051 = vunpack.c.l.b16 %v349
    %v2052 = vunpack.c.h.b16 %v349
    %v2053 = vunpack.c.l.b16 %v350
    %v2054 = vunpack.c.h.b16 %v350
    %v2055 = vunpack.c.l.b16 %v351
    %v2056 = vunpack.c.h.b16 %v351
    %v2057 = vunpack.c.l.b16 %v352
    %v2058 = vunpack.c.h.b16 %v352
    %v2059 = vunpack.c.l.b16 %v353
    %v2060 = vunpack.c.l.b16 %v354
    %v2061 = vunpack.c.h.b16 %v354
    %v2062 = vunpack.c.l.b16 %v355
    %v2063 = vunpack.c.h.b16 %v355
    %v2064 = vunpack.c.l.b16 %v356
    %v2065 = vunpack.c.h.b16 %v356
    %v2066 = vunpack.c.l.b16 %v357
    %v2067 = vunpack.c.h.b16 %v357
    %v2068 = vunpack.c.l.b16 %v358
    %v2069 = vunpack.c.h.b16 %v358
    %v2070 = vunpack.c.l.b16 %v359
    %v2071 = vunpack.c.h.b16 %v359
    %v2072 = vunpack.c.l.b16 %v360
    %v2073 = vunpack.c.h.b16 %v360
    %v2074 = vunpack.c.l.b16 %v361
    %v2075 = vunpack.c.l.b16 %v362
    %v2076 = vunpack.c.h.b16 %v362
    %v2077 = vunpack.c.l.b16 %v363
    %v2078 = vunpack.c.h.b16 %v363
    %v2079 = vunpack.c.l.b16 %v364
    %v2080 = vunpack.c.h.b16 %v364
    %v2081 = vunpack.c.l.b16 %v365
    %v2082 = vunpack.c.h.b16 %v365
    %v2083 = vunpack.c.l.b16 %v366
    %v2084 = vunpack.c.h.b16 %v366
    %v2085 = vunpack.c.l.b16 %v367
    %v2086 = vunpack.c.h.b16 %v367
    %v2087 = vunpack.c.l.b16 %v368
    %v2088 = vunpack.c.h.b16 %v368
    %v2089 = vunpack.c.l.b16 %v369
    %v2090 = vunpack.c.l.b16 %v370
    %v2091 = vunpack.c.h.b16 %v370
    %v2092 = vunpack.c.l.b16 %v371
    %v2093 = vunpack.c.h.b16 %v371
    %v2094 = vunpack.c.l.b16 %v372
    %v2095 = vunpack.c.h.b16 %v372
    %v2096 = vunpack.c.l.b16 %v373
    %v2097 = vunpack.c.h.b16 %v373
    %v2098 = vunpack.c.l.b16 %v374
    %v2099 = vunpack.c.h.b16 %v374
    %v2100 = vunpack.c.l.b16 %v375
    %v2101 = vunpack.c.h.b16 %v375
    %v2102 = vunpack.c.l.b16 %v376
    %v2103 = vunpack.c.h.b16 %v376
    %v2104 = vunpack.c.l.b16 %v377
    %v2105 = vunpack.c.l.b16 %v378
    %v2106 = vunpack.c.h.b16 %v378
    %v2107 = vunpack.c.l.b16 %v379
    %v2108 = vunpack.c.h.b16 %v379
    %v2109 = vunpack.c.l.b16 %v380
    %v2110 = vunpack.c.h.b16 %v380
    %v2111 = vunpack.c.l.b16 %v381
    %v2112 = vunpack.c.h.b16 %v381
    %v2113 = vunpack.c.l.b16 %v382
    %v2114 = vunpack.c.h.b16 %v382
    %v2115 = vunpack.c.l.b16 %v383
    %v2116 = vunpack.c.h.b16 %v383
    %v2117 = vunpack.c.l.b16 %v384
    %v2118 = vunpack.c.h.b16 %v384
    %v2119 = vunpack.c.l.b16 %v385
    %v2120 = vunpack.c.l.b16 %v386
    %v2121 = vunpack.c.h.b16 %v386
    %v2122 = vunpack.c.l.b16 %v387
    %v2123 = vunpack.c.h.b16 %v387
    %v2124 = vunpack.c.l.b16 %v388
    %v2125 = vunpack.c.h.b16 %v388
    %v2126 = vunpack.c.l.b16 %v389
    %v2127 = vunpack.c.h.b16 %v389
    %v2128 = vunpack.c.l.b16 %v390
    %v2129 = vunpack.c.h.b16 %v390
    %v2130 = vunpack.c.l.b16 %v391
    %v2131 = vunpack.c.h.b16 %v391
    %v2132 = vunpack.c.l.b16 %v392
    %v2133 = vunpack.c.h.b16 %v392
    %v2134 = vunpack.c.l.b16 %v393
    %v2135 = vunpack.c.l.b16 %v394
    %v2136 = vunpack.c.h.b16 %v394
    %v2137 = vunpack.c.l.b16 %v395
    %v2138 = vunpack.c.h.b16 %v395
    %v2139 = vunpack.c.l.b16 %v396
    %v2140 = vunpack.c.h.b16 %v396
    %v2141 = vunpack.c.l.b16 %v397
    %v2142 = vunpack.c.h.b16 %v397
    %v2143 = vunpack.c.l.b16 %v398
    %v2144 = vunpack.c.h.b16 %v398
    %v2145 = vunpack.c.l.b16 %v399
    %v2146 = vunpack.c.h.b16 %v399
    %v2147 = vunpack.c.l.b16 %v400
    %v2148 = vunpack.c.h.b16 %v400
    %v2149 = vunpack.c.l.b16 %v401
    %v2150 = vunpack.c.l.b16 %v402
    %v2151 = vunpack.c.h.b16 %v402
    %v2152 = vunpack.c.l.b16 %v403
    %v2153 = vunpack.c.h.b16 %v403
    %v2154 = vunpack.c.l.b16 %v404
    %v2155 = vunpack.c.h.b16 %v404
    %v2156 = vunpack.c.l.b16 %v405
    %v2157 = vunpack.c.h.b16 %v405
    %v2158 = vunpack.c.l.b16 %v406
    %v2159 = vunpack.c.h.b16 %v406
    %v2160 = vunpack.c.l.b16 %v407
    %v2161 = vunpack.c.h.b16 %v407
    %v2162 = vunpack.c.l.b16 %v408
    %v2163 = vunpack.c.h.b16 %v408
    %v2164 = vunpack.c.l.b16 %v409
    %v2165 = vunpack.c.l.b16 %v410
    %v2166 = vunpack.c.h.b16 %v410
    %v2167 = vunpack.c.l.b16 %v411
    %v2168 = vunpack.c.h.b16 %v411
    %v2169 = vunpack.c.l.b16 %v412
    %v2170 = vunpack.c.h.b16 %v412
    %v2171 = vunpack.c.l.b16 %v413
    %v2172 = vunpack.c.h.b16 %v413
    %v2173 = vunpack.c.l.b16 %v414
    %v2174 = vunpack.c.h.b16 %v414
    %v2175 = vunpack.c.l.b16 %v415
    %v2176 = vunpack.c.h.b16 %v415
    %v2177 = vunpack.c.l.b16 %v416
    %v2178 = vunpack.c.h.b16 %v416
    %v2179 = vunpack.c.l.b16 %v417
    %v2180 = vunpack.c.l.b16 %v418
    %v2181 = vunpack.c.h.b16 %v418
    %v2182 = vunpack.c.l.b16 %v419
    %v2183 = vunpack.c.h.b16 %v419
    %v2184 = vunpack.c.l.b16 %v420
    %v2185 = vunpack.c.h.b16 %v420
    %v2186 = vunpack.c.l.b16 %v421
    %v2187 = vunpack.c.h.b16 %v421
    %v2188 = vunpack.c.l.b16 %v422
    %v2189 = vunpack.c.h.b16 %v422
    %v2190 = vunpack.c.l.b16 %v423
    %v2191 = vunpack.c.h.b16 %v423
    %v2192 = vunpack.c.l.b16 %v424
    %v2193 = vunpack.c.h.b16 %v424
    %v2194 = vunpack.c.l.b16 %v425
    %v2195 = vunpack.c.l.b16 %v426
    %v2196 = vunpack.c.h.b16 %v426
    %v2197 = vunpack.c.l.b16 %v427
    %v2198 = vunpack.c.h.b16 %v427
    %v2199 = vunpack.c.l.b16 %v428
    %v2200 = vunpack.c.h.b16 %v428
    %v2201 = vunpack.c.l.b16 %v429
    %v2202 = vunpack.c.h.b16 %v429
    %v2203 = vunpack.c.l.b16 %v430
    %v2204 = vunpack.c.h.b16 %v430
    %v2205 = vunpack.c.l.b16 %v431
    %v2206 = vunpack.c.h.b16 %v431
    %v2207 = vunpack.c.l.b16 %v432
    %v2208 = vunpack.c.h.b16 %v432
    %v2209 = vunpack.c.l.b16 %v433
    %v2210 = vunpack.c.l.b16 %v434
    %v2211 = vunpack.c.h.b16 %v434
    %v2212 = vunpack.c.l.b16 %v435
    %v2213 = vunpack.c.h.b16 %v435
    %v2214 = vunpack.c.l.b16 %v436
    %v2215 = vunpack.c.h.b16 %v436
    %v2216 = vunpack.c.l.b16 %v437
    %v2217 = vunpack.c.h.b16 %v437
    %v2218 = vunpack.c.l.b16 %v438
    %v2219 = vunpack.c.h.b16 %v438
    %v2220 = vunpack.c.l.b16 %v439
    %v2221 = vunpack.c.h.b16 %v439
    %v2222 = vunpack.c.l.b16 %v440
    %v2223 = vunpack.c.h.b16 %v440
    %v2224 = vunpack.c.l.b16 %v441
    %v2225 = vunpack.c.l.b16 %v442
    %v2226 = vunpack.c.h.b16 %v442
    %v2227 = vunpack.c.l.b16 %v443
    %v2228 = vunpack.c.h.b16 %v443
    %v2229 = vunpack.c.l.b16 %v444
    %v2230 = vunpack.c.h.b16 %v444
    %v2231 = vunpack.c.l.b16 %v445
    %v2232 = vunpack.c.h.b16 %v445
    %v2233 = vunpack.c.l.b16 %v446
    %v2234 = vunpack.c.h.b16 %v446
    %v2235 = vunpack.c.l.b16 %v447
    %v2236 = vunpack.c.h.b16 %v447
    %v2237 = vunpack.c.l.b16 %v448
    %v2238 = vunpack.c.h.b16 %v448
    %v2239 = vunpack.c.l.b16 %v449
    %v2240 = vunpack.c.l.b16 %v450
    %v2241 = vunpack.c.h.b16 %v450
    %v2242 = vunpack.c.l.b16 %v451
    %v2243 = vunpack.c.h.b16 %v451
    %v2244 = vunpack.c.l.b16 %v452
    %v2245 = vunpack.c.h.b16 %v452
    %v2246 = vunpack.c.l.b16 %v453
    %v2247 = vunpack.c.h.b16 %v453
    %v2248 = vunpack.c.l.b16 %v454
    %v2249 = vunpack.c.h.b16 %v454
    %v2250 = vunpack.c.l.b16 %v455
    %v2251 = vunpack.c.h.b16 %v455
    %v2252 = vunpack.c.l.b16 %v456
    %v2253 = vunpack.c.h.b16 %v456
    %v2254 = vunpack.c.l.b16 %v457
    %v2255 = vunpack.c.l.b16 %v458
    %v2256 = vunpack.c.h.b16 %v458
    %v2257 = vunpack.c.l.b16 %v459
    %v2258 = vunpack.c.h.b16 %v459
    %v2259 = vunpack.c.l.b16 %v460
    %v2260 = vunpack.c.h.b16 %v460
    %v2261 = vunpack.c.l.b16 %v461
    %v2262 = vunpack.c.h.b16 %v461
    %v2263 = vunpack.c.l.b16 %v462
    %v2264 = vunpack.c.h.b16 %v462
    %v2265 = vunpack.c.l.b16 %v463
    %v2266 = vunpack.c.h.b16 %v463
    %v2267 = vunpack.c.l.b16 %v464
    %v2268 = vunpack.c.h.b16 %v464
    %v2269 = vunpack.c.l.b16 %v465
    %v2270 = vunpack.c.l.b16 %v466
    %v2271 = vunpack.c.h.b16 %v466
    %v2272 = vunpack.c.l.b16 %v467
    %v2273 = vunpack.c.h.b16 %v467
    %v2274 = vunpack.c.l.b16 %v468
    %v2275 = vunpack.c.h.b16 %v468
    %v2276 = vunpack.c.l.b16 %v469
    %v2277 = vunpack.c.h.b16 %v469
    %v2278 = vunpack.c.l.b16 %v470
    %v2279 = vunpack.c.h.b16 %v470
    %v2280 = vunpack.c.l.b16 %v471
    %v2281 = vunpack.c.h.b16 %v471
    %v2282 = vunpack.c.l.b16 %v472
    %v2283 = vunpack.c.h.b16 %v472
    %v2284 = vunpack.c.l.b16 %v473
    %v2285 = vunpack.c.l.b16 %v474
    %v2286 = vunpack.c.h.b16 %v474
    %v2287 = vunpack.c.l.b16 %v475
    %v2288 = vunpack.c.h.b16 %v475
    %v2289 = vunpack.c.l.b16 %v476
    %v2290 = vunpack.c.h.b16 %v476
    %v2291 = vunpack.c.l.b16 %v477
    %v2292 = vunpack.c.h.b16 %v477
    %v2293 = vunpack.c.l.b16 %v478
    %v2294 = vunpack.c.h.b16 %v478
    %v2295 = vunpack.c.l.b16 %v479
    %v2296 = vunpack.c.h.b16 %v479
    %v2297 = vunpack.c.l.b16 %v480
    %v2298 = vunpack.c.h.b16 %v480
    %v2299 = vunpack.c.l.b16 %v481
    %v2300 = vunpack.c.l.b16 %v482
    %v2301 = vunpack.c.h.b16 %v482
    %v2302 = vunpack.c.l.b16 %v483
    %v2303 = vunpack.c.h.b16 %v483
    %v2304 = vunpack.c.l.b16 %v484
    %v2305 = vunpack.c.h.b16 %v484
    %v2306 = vunpack.c.l.b16 %v485
    %v2307 = vunpack.c.h.b16 %v485
    %v2308 = vunpack.c.l.b16 %v486
    %v2309 = vunpack.c.h.b16 %v486
    %v2310 = vunpack.c.l.b16 %v487
    %v2311 = vunpack.c.h.b16 %v487
    %v2312 = vunpack.c.l.b16 %v488
    %v2313 = vunpack.c.h.b16 %v488
    %v2314 = vunpack.c.l.b16 %v489
    %v2315 = vunpack.c.l.b16 %v490
    %v2316 = vunpack.c.h.b16 %v490
    %v2317 = vunpack.c.l.b16 %v491
    %v2318 = vunpack.c.h.b16 %v491
    %v2319 = vunpack.c.l.b16 %v492
    %v2320 = vunpack.c.h.b16 %v492
    %v2321 = vunpack.c.l.b16 %v493
    %v2322 = vunpack.c.h.b16 %v493
    %v2323 = vunpack.c.l.b16 %v494
    %v2324 = vunpack.c.h.b16 %v494
    %v2325 = vunpack.c.l.b16 %v495
    %v2326 = vunpack.c.h.b16 %v495
    %v2327 = vunpack.c.l.b16 %v496
    %v2328 = vunpack.c.h.b16 %v496
    %v2329 = vunpack.c.l.b16 %v497
    %v2330 = vunpack.c.l.b16 %v498
    %v2331 = vunpack.c.h.b16 %v498
    %v2332 = vunpack.c.l.b16 %v499
    %v2333 = vunpack.c.h.b16 %v499
    %v2334 = vunpack.c.l.b16 %v500
    %v2335 = vunpack.c.h.b16 %v500
    %v2336 = vunpack.c.l.b16 %v501
    %v2337 = vunpack.c.h.b16 %v501
    %v2338 = vunpack.c.l.b16 %v502
    %v2339 = vunpack.c.h.b16 %v502
    %v2340 = vunpack.c.l.b16 %v503
    %v2341 = vunpack.c.h.b16 %v503
    %v2342 = vunpack.c.l.b16 %v504
    %v2343 = vunpack.c.h.b16 %v504
    %v2344 = vunpack.c.l.b16 %v505
    %v2345 = vunpack.c.l.b16 %v506
    %v2346 = vunpack.c.h.b16 %v506
    %v2347 = vunpack.c.l.b16 %v507
    %v2348 = vunpack.c.h.b16 %v507
    %v2349 = vunpack.c.l.b16 %v508
    %v2350 = vunpack.c.h.b16 %v508
    %v2351 = vunpack.c.l.b16 %v509
    %v2352 = vunpack.c.h.b16 %v509
    %v2353 = vunpack.c.l.b16 %v510
    %v2354 = vunpack.c.h.b16 %v510
    %v2355 = vunpack.c.l.b16 %v511
    %v2356 = vunpack.c.h.b16 %v511
    %v2357 = vunpack.c.l.b16 %v512
    %v2358 = vunpack.c.h.b16 %v512
    %v2359 = vunpack.c.l.b16 %v513
    %v2360 = vunpack.c.l.b16 %v514
    %v2361 = vunpack.c.h.b16 %v514
    %v2362 = vunpack.c.l.b16 %v515
    %v2363 = vunpack.c.h.b16 %v515
    %v2364 = vunpack.c.l.b16 %v516
    %v2365 = vunpack.c.h.b16 %v516
    %v2366 = vunpack.c.l.b16 %v517
    %v2367 = vunpack.c.h.b16 %v517
    %v2368 = vunpack.c.l.b16 %v518
    %v2369 = vunpack.c.h.b16 %v518
    %v2370 = vunpack.c.l.b16 %v519
    %v2371 = vunpack.c.h.b16 %v519
    %v2372 = vunpack.c.l.b16 %v520
    %v2373 = vunpack.c.h.b16 %v520
    %v2374 = vunpack.c.l.b16 %v521
    %v2375 = vunpack.c.l.b16 %v522
    %v2376 = vunpack.c.h.b16 %v522
    %v2377 = vunpack.c.l.b16 %v523
    %v2378 = vunpack.c.h.b16 %v523
    %v2379 = vunpack.c.l.b16 %v524
    %v2380 = vunpack.c.h.b16 %v524
    %v2381 = vunpack.c.l.b16 %v525
    %v2382 = vunpack.c.h.b16 %v525
    %v2383 = vunpack.c.l.b16 %v526
    %v2384 = vunpack.c.h.b16 %v526
    %v2385 = vunpack.c.l.b16 %v527
    %v2386 = vunpack.c.h.b16 %v527
    %v2387 = vunpack.c.l.b16 %v528
    %v2388 = vunpack.c.h.b16 %v528
    %v2389 = vunpack.c.l.b16 %v529
    %v2390 = vunpack.c.l.b16 %v530
    %v2391 = vunpack.c.h.b16 %v530
    %v2392 = vunpack.c.l.b16 %v531
    %v2393 = vunpack.c.h.b16 %v531
    %v2394 = vunpack.c.l.b16 %v532
    %v2395 = vunpack.c.h.b16 %v532
    %v2396 = vunpack.c.l.b16 %v533
    %v2397 = vunpack.c.h.b16 %v533
    %v2398 = vunpack.c.l.b16 %v534
    %v2399 = vunpack.c.h.b16 %v534
    %v2400 = vunpack.c.l.b16 %v535
    %v2401 = vunpack.c.h.b16 %v535
    %v2402 = vunpack.c.l.b16 %v536
    %v2403 = vunpack.c.h.b16 %v536
    %v2404 = vunpack.c.l.b16 %v537
    %v2405 = vunpack.c.l.b16 %v538
    %v2406 = vunpack.c.h.b16 %v538
    %v2407 = vunpack.c.l.b16 %v539
    %v2408 = vunpack.c.h.b16 %v539
    %v2409 = vunpack.c.l.b16 %v540
    %v2410 = vunpack.c.h.b16 %v540
    %v2411 = vunpack.c.l.b16 %v541
    %v2412 = vunpack.c.h.b16 %v541
    %v2413 = vunpack.c.l.b16 %v542
    %v2414 = vunpack.c.h.b16 %v542
    %v2415 = vunpack.c.l.b16 %v543
    %v2416 = vunpack.c.h.b16 %v543
    %v2417 = vunpack.c.l.b16 %v544
    %v2418 = vunpack.c.h.b16 %v544
    %v2419 = vunpack.c.l.b16 %v545
    %v2420 = vunpack.c.l.b16 %v546
    %v2421 = vunpack.c.h.b16 %v546
    %v2422 = vunpack.c.l.b16 %v547
    %v2423 = vunpack.c.h.b16 %v547
    %v2424 = vunpack.c.l.b16 %v548
    %v2425 = vunpack.c.h.b16 %v548
    %v2426 = vunpack.c.l.b16 %v549
    %v2427 = vunpack.c.h.b16 %v549
    %v2428 = vunpack.c.l.b16 %v550
    %v2429 = vunpack.c.h.b16 %v550
    %v2430 = vunpack.c.l.b16 %v551
    %v2431 = vunpack.c.h.b16 %v551
    %v2432 = vunpack.c.l.b16 %v552
    %v2433 = vunpack.c.h.b16 %v552
    %v2434 = vunpack.c.l.b16 %v553
    %v2435 = vunpack.c.l.b16 %v554
    %v2436 = vunpack.c.h.b16 %v554
    %v2437 = vunpack.c.l.b16 %v555
    %v2438 = vunpack.c.h.b16 %v555
    %v2439 = vunpack.c.l.b16 %v556
    %v2440 = vunpack.c.h.b16 %v556
    %v2441 = vunpack.c.l.b16 %v557
    %v2442 = vunpack.c.h.b16 %v557
    %v2443 = vunpack.c.l.b16 %v558
    %v2444 = vunpack.c.h.b16 %v558
    %v2445 = vunpack.c.l.b16 %v559
    %v2446 = vunpack.c.h.b16 %v559
    %v2447 = vunpack.c.l.b16 %v560
    %v2448 = vunpack.c.h.b16 %v560
    %v2449 = vunpack.c.l.b16 %v561
    %v2450 = vunpack.c.l.b16 %v562
    %v2451 = vunpack.c.h.b16 %v562
    %v2452 = vunpack.c.l.b16 %v563
    %v2453 = vunpack.c.h.b16 %v563
    %v2454 = vunpack.c.l.b16 %v564
    %v2455 = vunpack.c.h.b16 %v564
    %v2456 = vunpack.c.l.b16 %v565
    %v2457 = vunpack.c.h.b16 %v565
    %v2458 = vunpack.c.l.b16 %v566
    %v2459 = vunpack.c.h.b16 %v566
    %v2460 = vunpack.c.l.b16 %v567
    %v2461 = vunpack.c.h.b16 %v567
    %v2462 = vunpack.c.l.b16 %v568
    %v2463 = vunpack.c.h.b16 %v568
    %v2464 = vunpack.c.l.b16 %v569
    %v2465 = vpack.c.b16 %v1520, %v1505
    %v2466 = vpack.c.b16 %v1521, %v1506
    %v2467 = vpack.c.b16 %v1522, %v1507
    %v2468 = vpack.c.b16 %v1523, %v1508
    %v2469 = vpack.c.b16 %v1524, %v1509
    %v2470 = vpack.c.b16 %v1525, %v1510
    %v2471 = vpack.c.b16 %v1526, %v1511
    %v2472 = vpack.c.b16 %v1527, %v1512
    %v2473 = vpack.c.b16 %v1528, %v1513
    %v2474 = vpack.c.b16 %v1529, %v1514
    %v2475 = vpack.c.b16 %v1530, %v1515
    %v2476 = vpack.c.b16 %v1531, %v1516
    %v2477 = vpack.c.b16 %v1532, %v1517
    %v2478 = vpack.c.b16 %v1533, %v1518
    %v2479 = vpack.c.b16 %v1534, %v1519
    %v2480 = vpack.c.b16 %v1550, %v1535
    %v2481 = vpack.c.b16 %v1551, %v1536
    %v2482 = vpack.c.b16 %v1552, %v1537
    %v2483 = vpack.c.b16 %v1553, %v1538
    %v2484 = vpack.c.b16 %v1554, %v1539
    %v2485 = vpack.c.b16 %v1555, %v1540
    %v2486 = vpack.c.b16 %v1556, %v1541
    %v2487 = vpack.c.b16 %v1557, %v1542
    %v2488 = vpack.c.b16 %v1558, %v1543
    %v2489 = vpack.c.b16 %v1559, %v1544
    %v2490 = vpack.c.b16 %v1560, %v1545
    %v2491 = vpack.c.b16 %v1561, %v1546
    %v2492 = vpack.c.b16 %v1562, %v1547
    %v2493 = vpack.c.b16 %v1563, %v1548
    %v2494 = vpack.c.b16 %v1564, %v1549
    %v2495 = vpack.c.b16 %v1580, %v1565
    %v2496 = vpack.c.b16 %v1581, %v1566
    %v2497 = vpack.c.b16 %v1582, %v1567
    %v2498 = vpack.c.b16 %v1583, %v1568
    %v2499 = vpack.c.b16 %v1584, %v1569
    %v2500 = vpack.c.b16 %v1585, %v1570
    %v2501 = vpack.c.b16 %v1586, %v1571
    %v2502 = vpack.c.b16 %v1587, %v1572
    %v2503 = vpack.c.b16 %v1588, %v1573
    %v2504 = vpack.c.b16 %v1589, %v1574
    %v2505 = vpack.c.b16 %v1590, %v1575
    %v2506 = vpack.c.b16 %v1591, %v1576
    %v2507 = vpack.c.b16 %v1592, %v1577
    %v2508 = vpack.c.b16 %v1593, %v1578
    %v2509 = vpack.c.b16 %v1594, %v1579
    %v2510 = vpack.c.b16 %v1610, %v1595
    %v2511 = vpack.c.b16 %v1611, %v1596
    %v2512 = vpack.c.b16 %v1612, %v1597
    %v2513 = vpack.c.b16 %v1613, %v1598
    %v2514 = vpack.c.b16 %v1614, %v1599
    %v2515 = vpack.c.b16 %v1615, %v1600
    %v2516 = vpack.c.b16 %v1616, %v1601
    %v2517 = vpack.c.b16 %v1617, %v1602
    %v2518 = vpack.c.b16 %v1618, %v1603
    %v2519 = vpack.c.b16 %v1619, %v1604
    %v2520 = vpack.c.b16 %v1620, %v1605
    %v2521 = vpack.c.b16 %v1621, %v1606
    %v2522 = vpack.c.b16 %v1622, %v1607
    %v2523 = vpack.c.b16 %v1623, %v1608
    %v2524 = vpack.c.b16 %v1624, %v1609
    %v2525 = vpack.c.b16 %v1640, %v1625
    %v2526 = vpack.c.b16 %v1641, %v1626
    %v2527 = vpack.c.b16 %v1642, %v1627
    %v2528 = vpack.c.b16 %v1643, %v1628
    %v2529 = vpack.c.b16 %v1644, %v1629
    %v2530 = vpack.c.b16 %v1645, %v1630
    %v2531 = vpack.c.b16 %v1646, %v1631
    %v2532 = vpack.c.b16 %v1647, %v1632
    %v2533 = vpack.c.b16 %v1648, %v1633
    %v2534 = vpack.c.b16 %v1649, %v1634
    %v2535 = vpack.c.b16 %v1650, %v1635
    %v2536 = vpack.c.b16 %v1651, %v1636
    %v2537 = vpack.c.b16 %v1652, %v1637
    %v2538 = vpack.c.b16 %v1653, %v1638
    %v2539 = vpack.c.b16 %v1654, %v1639
    %v2540 = vpack.c.b16 %v1670, %v1655
    %v2541 = vpack.c.b16 %v1671, %v1656
    %v2542 = vpack.c.b16 %v1672, %v1657
    %v2543 = vpack.c.b16 %v1673, %v1658
    %v2544 = vpack.c.b16 %v1674, %v1659
    %v2545 = vpack.c.b16 %v1675, %v1660
    %v2546 = vpack.c.b16 %v1676, %v1661
    %v2547 = vpack.c.b16 %v1677, %v1662
    %v2548 = vpack.c.b16 %v1678, %v1663
    %v2549 = vpack.c.b16 %v1679, %v1664
    %v2550 = vpack.c.b16 %v1680, %v1665
    %v2551 = vpack.c.b16 %v1681, %v1666
    %v2552 = vpack.c.b16 %v1682, %v1667
    %v2553 = vpack.c.b16 %v1683, %v1668
    %v2554 = vpack.c.b16 %v1684, %v1669
    %v2555 = vpack.c.b16 %v1700, %v1685
    %v2556 = vpack.c.b16 %v1701, %v1686
    %v2557 = vpack.c.b16 %v1702, %v1687
    %v2558 = vpack.c.b16 %v1703, %v1688
    %v2559 = vpack.c.b16 %v1704, %v1689
    %v2560 = vpack.c.b16 %v1705, %v1690
    %v2561 = vpack.c.b16 %v1706, %v1691
    %v2562 = vpack.c.b16 %v1707, %v1692
    %v2563 = vpack.c.b16 %v1708, %v1693
    %v2564 = vpack.c.b16 %v1709, %v1694
    %v2565 = vpack.c.b16 %v1710, %v1695
    %v2566 = vpack.c.b16 %v1711, %v1696
    %v2567 = vpack.c.b16 %v1712, %v1697
    %v2568 = vpack.c.b16 %v1713, %v1698
    %v2569 = vpack.c.b16 %v1714, %v1699
    %v2570 = vpack.c.b16 %v1730, %v1715
    %v2571 = vpack.c.b16 %v1731, %v1716
    %v2572 = vpack.c.b16 %v1732, %v1717
    %v2573 = vpack.c.b16 %v1733, %v1718
    %v2574 = vpack.c.b16 %v1734, %v1719
    %v2575 = vpack.c.b16 %v1735, %v1720
    %v2576 = vpack.c.b16 %v1736, %v1721
    %v2577 = vpack.c.b16 %v1737, %v1722
    %v2578 = vpack.c.b16 %v1738, %v1723
    %v2579 = vpack.c.b16 %v1739, %v1724
    %v2580 = vpack.c.b16 %v1740, %v1725
    %v2581 = vpack.c.b16 %v1741, %v1726
    %v2582 = vpack.c.b16 %v1742, %v1727
    %v2583 = vpack.c.b16 %v1743, %v1728
    %v2584 = vpack.c.b16 %v1744, %v1729
    %v2585 = vpack.c.b16 %v1760, %v1745
    %v2586 = vpack.c.b16 %v1761, %v1746
    %v2587 = vpack.c.b16 %v1762, %v1747
    %v2588 = vpack.c.b16 %v1763, %v1748
    %v2589 = vpack.c.b16 %v1764, %v1749
    %v2590 = vpack.c.b16 %v1765, %v1750
    %v2591 = vpack.c.b16 %v1766, %v1751
    %v2592 = vpack.c.b16 %v1767, %v1752
    %v2593 = vpack.c.b16 %v1768, %v1753
    %v2594 = vpack.c.b16 %v1769, %v1754
    %v2595 = vpack.c.b16 %v1770, %v1755
    %v2596 = vpack.c.b16 %v1771, %v1756
    %v2597 = vpack.c.b16 %v1772, %v1757
    %v2598 = vpack.c.b16 %v1773, %v1758
    %v2599 = vpack.c.b16 %v1774, %v1759
    %v2600 = vpack.c.b16 %v1790, %v1775
    %v2601 = vpack.c.b16 %v1791, %v1776
    %v2602 = vpack.c.b16 %v1792, %v1777
    %v2603 = vpack.c.b16 %v1793, %v1778
    %v2604 = vpack.c.b16 %v1794, %v1779
    %v2605 = vpack.c.b16 %v1795, %v1780
    %v2606 = vpack.c.b16 %v1796, %v1781
    %v2607 = vpack.c.b16 %v1797, %v1782
    %v2608 = vpack.c.b16 %v1798, %v1783
    %v2609 = vpack.c.b16 %v1799, %v1784
    %v2610 = vpack.c.b16 %v1800, %v1785
    %v2611 = vpack.c.b16 %v1801, %v1786
    %v2612 = vpack.c.b16 %v1802, %v1787
    %v2613 = vpack.c.b16 %v1803, %v1788
    %v2614 = vpack.c.b16 %v1804, %v1789
    %v2615 = vpack.c.b16 %v1820, %v1805
    %v2616 = vpack.c.b16 %v1821, %v1806
    %v2617 = vpack.c.b16 %v1822, %v1807
    %v2618 = vpack.c.b16 %v1823, %v1808
    %v2619 = vpack.c.b16 %v1824, %v1809
    %v2620 = vpack.c.b16 %v1825, %v1810
    %v2621 = vpack.c.b16 %v1826, %v1811
    %v2622 = vpack.c.b16 %v1827, %v1812
    %v2623 = vpack.c.b16 %v1828, %v1813
    %v2624 = vpack.c.b16 %v1829, %v1814
    %v2625 = vpack.c.b16 %v1830, %v1815
    %v2626 = vpack.c.b16 %v1831, %v1816
    %v2627 = vpack.c.b16 %v1832, %v1817
    %v2628 = vpack.c.b16 %v1833, %v1818
    %v2629 = vpack.c.b16 %v1834, %v1819
    %v2630 = vpack.c.b16 %v1850, %v1835
    %v2631 = vpack.c.b16 %v1851, %v1836
    %v2632 = vpack.c.b16 %v1852, %v1837
    %v2633 = vpack.c.b16 %v1853, %v1838
    %v2634 = vpack.c.b16 %v1854, %v1839
    %v2635 = vpack.c.b16 %v1855, %v1840
    %v2636 = vpack.c.b16 %v1856, %v1841
    %v2637 = vpack.c.b16 %v1857, %v1842
    %v2638 = vpack.c.b16 %v1858, %v1843
    %v2639 = vpack.c.b16 %v1859, %v1844
    %v2640 = vpack.c.b16 %v1860, %v1845
    %v2641 = vpack.c.b16 %v1861, %v1846
    %v2642 = vpack.c.b16 %v1862, %v1847
    %v2643 = vpack.c.b16 %v1863, %v1848
    %v2644 = vpack.c.b16 %v1864, %v1849
    %v2645 = vpack.c.b16 %v1880, %v1865
    %v2646 = vpack.c.b16 %v1881, %v1866
    %v2647 = vpack.c.b16 %v1882, %v1867
    %v2648 = vpack.c.b16 %v1883, %v1868
    %v2649 = vpack.c.b16 %v1884, %v1869
    %v2650 = vpack.c.b16 %v1885, %v1870
    %v2651 = vpack.c.b16 %v1886, %v1871
    %v2652 = vpack.c.b16 %v1887, %v1872
    %v2653 = vpack.c.b16 %v1888, %v1873
    %v2654 = vpack.c.b16 %v1889, %v1874
    %v2655 = vpack.c.b16 %v1890, %v1875
    %v2656 = vpack.c.b16 %v1891, %v1876
    %v2657 = vpack.c.b16 %v1892, %v1877
    %v2658 = vpack.c.b16 %v1893, %v1878
    %v2659 = vpack.c.b16 %v1894, %v1879
    %v2660 = vpack.c.b16 %v1910, %v1895
    %v2661 = vpack.c.b16 %v1911, %v1896
    %v2662 = vpack.c.b16 %v1912, %v1897
    %v2663 = vpack.c.b16 %v1913, %v1898
    %v2664 = vpack.c.b16 %v1914, %v1899
    %v2665 = vpack.c.b16 %v1915, %v1900
    %v2666 = vpack.c.b16 %v1916, %v1901
    %v2667 = vpack.c.b16 %v1917, %v1902
    %v2668 = vpack.c.b16 %v1918, %v1903
    %v2669 = vpack.c.b16 %v1919, %v1904
    %v2670 = vpack.c.b16 %v1920, %v1905
    %v2671 = vpack.c.b16 %v1921, %v1906
    %v2672 = vpack.c.b16 %v1922, %v1907
    %v2673 = vpack.c.b16 %v1923, %v1908
    %v2674 = vpack.c.b16 %v1924, %v1909
    %v2675 = vpack.c.b16 %v1940, %v1925
    %v2676 = vpack.c.b16 %v1941, %v1926
    %v2677 = vpack.c.b16 %v1942, %v1927
    %v2678 = vpack.c.b16 %v1943, %v1928
    %v2679 = vpack.c.b16 %v1944, %v1929
    %v2680 = vpack.c.b16 %v1945, %v1930
    %v2681 = vpack.c.b16 %v1946, %v1931
    %v2682 = vpack.c.b16 %v1947, %v1932
    %v2683 = vpack.c.b16 %v1948, %v1933
    %v2684 = vpack.c.b16 %v1949, %v1934
    %v2685 = vpack.c.b16 %v1950, %v1935
    %v2686 = vpack.c.b16 %v1951, %v1936
    %v2687 = vpack.c.b16 %v1952, %v1937
    %v2688 = vpack.c.b16 %v1953, %v1938
    %v2689 = vpack.c.b16 %v1954, %v1939
    %v2690 = vpack.c.b16 %v1970, %v1955
    %v2691 = vpack.c.b16 %v1971, %v1956
    %v2692 = vpack.c.b16 %v1972, %v1957
    %v2693 = vpack.c.b16 %v1973, %v1958
    %v2694 = vpack.c.b16 %v1974, %v1959
    %v2695 = vpack.c.b16 %v1975, %v1960
    %v2696 = vpack.c.b16 %v1976, %v1961
    %v2697 = vpack.c.b16 %v1977, %v1962
    %v2698 = vpack.c.b16 %v1978, %v1963
    %v2699 = vpack.c.b16 %v1979, %v1964
    %v2700 = vpack.c.b16 %v1980, %v1965
    %v2701 = vpack.c.b16 %v1981, %v1966
    %v2702 = vpack.c.b16 %v1982, %v1967
    %v2703 = vpack.c.b16 %v1983, %v1968
    %v2704 = vpack.c.b16 %v1984, %v1969
    %v2705 = vpack.c.b16 %v2000, %v1985
    %v2706 = vpack.c.b16 %v2001, %v1986
    %v2707 = vpack.c.b16 %v2002, %v1987
    %v2708 = vpack.c.b16 %v2003, %v1988
    %v2709 = vpack.c.b16 %v2004, %v1989
    %v2710 = vpack.c.b16 %v2005, %v1990
    %v2711 = vpack.c.b16 %v2006, %v1991
    %v2712 = vpack.c.b16 %v2007, %v1992
    %v2713 = vpack.c.b16 %v2008, %v1993
    %v2714 = vpack.c.b16 %v2009, %v1994
    %v2715 = vpack.c.b16 %v2010, %v1995
    %v2716 = vpack.c.b16 %v2011, %v1996
    %v2717 = vpack.c.b16 %v2012, %v1997
    %v2718 = vpack.c.b16 %v2013, %v1998
    %v2719 = vpack.c.b16 %v2014, %v1999
    %v2720 = vpack.c.b16 %v2030, %v2015
    %v2721 = vpack.c.b16 %v2031, %v2016
    %v2722 = vpack.c.b16 %v2032, %v2017
    %v2723 = vpack.c.b16 %v2033, %v2018
    %v2724 = vpack.c.b16 %v2034, %v2019
    %v2725 = vpack.c.b16 %v2035, %v2020
    %v2726 = vpack.c.b16 %v2036, %v2021
    %v2727 = vpack.c.b16 %v2037, %v2022
    %v2728 = vpack.c.b16 %v2038, %v2023
    %v2729 = vpack.c.b16 %v2039, %v2024
    %v2730 = vpack.c.b16 %v2040, %v2025
    %v2731 = vpack.c.b16 %v2041, %v2026
    %v2732 = vpack.c.b16 %v2042, %v2027
    %v2733 = vpack.c.b16 %v2043, %v2028
    %v2734 = vpack.c.b16 %v2044, %v2029
    %v2735 = vpack.c.b16 %v2060, %v2045
    %v2736 = vpack.c.b16 %v2061, %v2046
    %v2737 = vpack.c.b16 %v2062, %v2047
    %v2738 = vpack.c.b16 %v2063, %v2048
    %v2739 = vpack.c.b16 %v2064, %v2049
    %v2740 = vpack.c.b16 %v2065, %v2050
    %v2741 = vpack.c.b16 %v2066, %v2051
    %v2742 = vpack.c.b16 %v2067, %v2052
    %v2743 = vpack.c.b16 %v2068, %v2053
    %v2744 = vpack.c.b16 %v2069, %v2054
    %v2745 = vpack.c.b16 %v2070, %v2055
    %v2746 = vpack.c.b16 %v2071, %v2056
    %v2747 = vpack.c.b16 %v2072, %v2057
    %v2748 = vpack.c.b16 %v2073, %v2058
    %v2749 = vpack.c.b16 %v2074, %v2059
    %v2750 = vpack.c.b16 %v2090, %v2075
    %v2751 = vpack.c.b16 %v2091, %v2076
    %v2752 = vpack.c.b16 %v2092, %v2077
    %v2753 = vpack.c.b16 %v2093, %v2078
    %v2754 = vpack.c.b16 %v2094, %v2079
    %v2755 = vpack.c.b16 %v2095, %v2080
    %v2756 = vpack.c.b16 %v2096, %v2081
    %v2757 = vpack.c.b16 %v2097, %v2082
    %v2758 = vpack.c.b16 %v2098, %v2083
    %v2759 = vpack.c.b16 %v2099, %v2084
    %v2760 = vpack.c.b16 %v2100, %v2085
    %v2761 = vpack.c.b16 %v2101, %v2086
    %v2762 = vpack.c.b16 %v2102, %v2087
    %v2763 = vpack.c.b16 %v2103, %v2088
    %v2764 = vpack.c.b16 %v2104, %v2089
    %v2765 = vpack.c.b16 %v2120, %v2105
    %v2766 = vpack.c.b16 %v2121, %v2106
    %v2767 = vpack.c.b16 %v2122, %v2107
    %v2768 = vpack.c.b16 %v2123, %v2108
    %v2769 = vpack.c.b16 %v2124, %v2109
    %v2770 = vpack.c.b16 %v2125, %v2110
    %v2771 = vpack.c.b16 %v2126, %v2111
    %v2772 = vpack.c.b16 %v2127, %v2112
    %v2773 = vpack.c.b16 %v2128, %v2113
    %v2774 = vpack.c.b16 %v2129, %v2114
    %v2775 = vpack.c.b16 %v2130, %v2115
    %v2776 = vpack.c.b16 %v2131, %v2116
    %v2777 = vpack.c.b16 %v2132, %v2117
    %v2778 = vpack.c.b16 %v2133, %v2118
    %v2779 = vpack.c.b16 %v2134, %v2119
    %v2780 = vpack.c.b16 %v2150, %v2135
    %v2781 = vpack.c.b16 %v2151, %v2136
    %v2782 = vpack.c.b16 %v2152, %v2137
    %v2783 = vpack.c.b16 %v2153, %v2138
    %v2784 = vpack.c.b16 %v2154, %v2139
    %v2785 = vpack.c.b16 %v2155, %v2140
    %v2786 = vpack.c.b16 %v2156, %v2141
    %v2787 = vpack.c.b16 %v2157, %v2142
    %v2788 = vpack.c.b16 %v2158, %v2143
    %v2789 = vpack.c.b16 %v2159, %v2144
    %v2790 = vpack.c.b16 %v2160, %v2145
    %v2791 = vpack.c.b16 %v2161, %v2146
    %v2792 = vpack.c.b16 %v2162, %v2147
    %v2793 = vpack.c.b16 %v2163, %v2148
    %v2794 = vpack.c.b16 %v2164, %v2149
    %v2795 = vpack.c.b16 %v2180, %v2165
    %v2796 = vpack.c.b16 %v2181, %v2166
    %v2797 = vpack.c.b16 %v2182, %v2167
    %v2798 = vpack.c.b16 %v2183, %v2168
    %v2799 = vpack.c.b16 %v2184, %v2169
    %v2800 = vpack.c.b16 %v2185, %v2170
    %v2801 = vpack.c.b16 %v2186, %v2171
    %v2802 = vpack.c.b16 %v2187, %v2172
    %v2803 = vpack.c.b16 %v2188, %v2173
    %v2804 = vpack.c.b16 %v2189, %v2174
    %v2805 = vpack.c.b16 %v2190, %v2175
    %v2806 = vpack.c.b16 %v2191, %v2176
    %v2807 = vpack.c.b16 %v2192, %v2177
    %v2808 = vpack.c.b16 %v2193, %v2178
    %v2809 = vpack.c.b16 %v2194, %v2179
    %v2810 = vpack.c.b16 %v2210, %v2195
    %v2811 = vpack.c.b16 %v2211, %v2196
    %v2812 = vpack.c.b16 %v2212, %v2197
    %v2813 = vpack.c.b16 %v2213, %v2198
    %v2814 = vpack.c.b16 %v2214, %v2199
    %v2815 = vpack.c.b16 %v2215, %v2200
    %v2816 = vpack.c.b16 %v2216, %v2201
    %v2817 = vpack.c.b16 %v2217, %v2202
    %v2818 = vpack.c.b16 %v2218, %v2203
    %v2819 = vpack.c.b16 %v2219, %v2204
    %v2820 = vpack.c.b16 %v2220, %v2205
    %v2821 = vpack.c.b16 %v2221, %v2206
    %v2822 = vpack.c.b16 %v2222, %v2207
    %v2823 = vpack.c.b16 %v2223, %v2208
    %v2824 = vpack.c.b16 %v2224, %v2209
    %v2825 = vpack.c.b16 %v2240, %v2225
    %v2826 = vpack.c.b16 %v2241, %v2226
    %v2827 = vpack.c.b16 %v2242, %v2227
    %v2828 = vpack.c.b16 %v2243, %v2228
    %v2829 = vpack.c.b16 %v2244, %v2229
    %v2830 = vpack.c.b16 %v2245, %v2230
    %v2831 = vpack.c.b16 %v2246, %v2231
    %v2832 = vpack.c.b16 %v2247, %v2232
    %v2833 = vpack.c.b16 %v2248, %v2233
    %v2834 = vpack.c.b16 %v2249, %v2234
    %v2835 = vpack.c.b16 %v2250, %v2235
    %v2836 = vpack.c.b16 %v2251, %v2236
    %v2837 = vpack.c.b16 %v2252, %v2237
    %v2838 = vpack.c.b16 %v2253, %v2238
    %v2839 = vpack.c.b16 %v2254, %v2239
    %v2840 = vpack.c.b16 %v2270, %v2255
    %v2841 = vpack.c.b16 %v2271, %v2256
    %v2842 = vpack.c.b16 %v2272, %v2257
    %v2843 = vpack.c.b16 %v2273, %v2258
    %v2844 = vpack.c.b16 %v2274, %v2259
    %v2845 = vpack.c.b16 %v2275, %v2260
    %v2846 = vpack.c.b16 %v2276, %v2261
    %v2847 = vpack.c.b16 %v2277, %v2262
    %v2848 = vpack.c.b16 %v2278, %v2263
    %v2849 = vpack.c.b16 %v2279, %v2264
    %v2850 = vpack.c.b16 %v2280, %v2265
    %v2851 = vpack.c.b16 %v2281, %v2266
    %v2852 = vpack.c.b16 %v2282, %v2267
    %v2853 = vpack.c.b16 %v2283, %v2268
    %v2854 = vpack.c.b16 %v2284, %v2269
    %v2855 = vpack.c.b16 %v2300, %v2285
    %v2856 = vpack.c.b16 %v2301, %v2286
    %v2857 = vpack.c.b16 %v2302, %v2287
    %v2858 = vpack.c.b16 %v2303, %v2288
    %v2859 = vpack.c.b16 %v2304, %v2289
    %v2860 = vpack.c.b16 %v2305, %v2290
    %v2861 = vpack.c.b16 %v2306, %v2291
    %v2862 = vpack.c.b16 %v2307, %v2292
    %v2863 = vpack.c.b16 %v2308, %v2293
    %v2864 = vpack.c.b16 %v2309, %v2294
    %v2865 = vpack.c.b16 %v2310, %v2295
    %v2866 = vpack.c.b16 %v2311, %v2296
    %v2867 = vpack.c.b16 %v2312, %v2297
    %v2868 = vpack.c.b16 %v2313, %v2298
    %v2869 = vpack.c.b16 %v2314, %v2299
    %v2870 = vpack.c.b16 %v2330, %v2315
    %v2871 = vpack.c.b16 %v2331, %v2316
    %v2872 = vpack.c.b16 %v2332, %v2317
    %v2873 = vpack.c.b16 %v2333, %v2318
    %v2874 = vpack.c.b16 %v2334, %v2319
    %v2875 = vpack.c.b16 %v2335, %v2320
    %v2876 = vpack.c.b16 %v2336, %v2321
    %v2877 = vpack.c.b16 %v2337, %v2322
    %v2878 = vpack.c.b16 %v2338, %v2323
    %v2879 = vpack.c.b16 %v2339, %v2324
    %v2880 = vpack.c.b16 %v2340, %v2325
    %v2881 = vpack.c.b16 %v2341, %v2326
    %v2882 = vpack.c.b16 %v2342, %v2327
    %v2883 = vpack.c.b16 %v2343, %v2328
    %v2884 = vpack.c.b16 %v2344, %v2329
    %v2885 = vpack.c.b16 %v2360, %v2345
    %v2886 = vpack.c.b16 %v2361, %v2346
    %v2887 = vpack.c.b16 %v2362, %v2347
    %v2888 = vpack.c.b16 %v2363, %v2348
    %v2889 = vpack.c.b16 %v2364, %v2349
    %v2890 = vpack.c.b16 %v2365, %v2350
    %v2891 = vpack.c.b16 %v2366, %v2351
    %v2892 = vpack.c.b16 %v2367, %v2352
    %v2893 = vpack.c.b16 %v2368, %v2353
    %v2894 = vpack.c.b16 %v2369, %v2354
    %v2895 = vpack.c.b16 %v2370, %v2355
    %v2896 = vpack.c.b16 %v2371, %v2356
    %v2897 = vpack.c.b16 %v2372, %v2357
    %v2898 = vpack.c.b16 %v2373, %v2358
    %v2899 = vpack.c.b16 %v2374, %v2359
    %v2900 = vpack.c.b16 %v2390, %v2375
    %v2901 = vpack.c.b16 %v2391, %v2376
    %v2902 = vpack.c.b16 %v2392, %v2377
    %v2903 = vpack.c.b16 %v2393, %v2378
    %v2904 = vpack.c.b16 %v2394, %v2379
    %v2905 = vpack.c.b16 %v2395, %v2380
    %v2906 = vpack.c.b16 %v2396, %v2381
    %v2907 = vpack.c.b16 %v2397, %v2382
    %v2908 = vpack.c.b16 %v2398, %v2383
    %v2909 = vpack.c.b16 %v2399, %v2384
    %v2910 = vpack.c.b16 %v2400, %v2385
    %v2911 = vpack.c.b16 %v2401, %v2386
    %v2912 = vpack.c.b16 %v2402, %v2387
    %v2913 = vpack.c.b16 %v2403, %v2388
    %v2914 = vpack.c.b16 %v2404, %v2389
    %v2915 = vpack.c.b16 %v2420, %v2405
    %v2916 = vpack.c.b16 %v2421, %v2406
    %v2917 = vpack.c.b16 %v2422, %v2407
    %v2918 = vpack.c.b16 %v2423, %v2408
    %v2919 = vpack.c.b16 %v2424, %v2409
    %v2920 = vpack.c.b16 %v2425, %v2410
    %v2921 = vpack.c.b16 %v2426, %v2411
    %v2922 = vpack.c.b16 %v2427, %v2412
    %v2923 = vpack.c.b16 %v2428, %v2413
    %v2924 = vpack.c.b16 %v2429, %v2414
    %v2925 = vpack.c.b16 %v2430, %v2415
    %v2926 = vpack.c.b16 %v2431, %v2416
    %v2927 = vpack.c.b16 %v2432, %v2417
    %v2928 = vpack.c.b16 %v2433, %v2418
    %v2929 = vpack.c.b16 %v2434, %v2419
    %v2930 = vpack.c.b16 %v2450, %v2435
    %v2931 = vpack.c.b16 %v2451, %v2436
    %v2932 = vpack.c.b16 %v2452, %v2437
    %v2933 = vpack.c.b16 %v2453, %v2438
    %v2934 = vpack.c.b16 %v2454, %v2439
    %v2935 = vpack.c.b16 %v2455, %v2440
    %v2936 = vpack.c.b16 %v2456, %v2441
    %v2937 = vpack.c.b16 %v2457, %v2442
    %v2938 = vpack.c.b16 %v2458, %v2443
    %v2939 = vpack.c.b16 %v2459, %v2444
    %v2940 = vpack.c.b16 %v2460, %v2445
    %v2941 = vpack.c.b16 %v2461, %v2446
    %v2942 = vpack.c.b16 %v2462, %v2447
    %v2943 = vpack.c.b16 %v2463, %v2448
    %v2944 = vpack.c.b16 %v2464, %v2449
    %3425 = vmatpush.bf16.msra.mxu0 %v2570
    %3426 = vmatpush.bf16.msra.mxu0 %v2555
    %3427 = vmatpush.bf16.msra.mxu0 %v2540
    %3428 = vmatpush.bf16.msra.mxu0 %v2525
    %3429 = vmatpush.bf16.msra.mxu0 %v2510
    %3430 = vmatpush.bf16.msra.mxu0 %v2495
    %3431 = vmatpush.bf16.msra.mxu0 %v2480
    %3432 = vmatpush.bf16.msra.mxu0 %v2465
    %3433 = vmatmul.bf16.gmra.mxu0 %v985
    %v3434 = vpop.f32.mrf.mxu0
    %v3435 = vadd.f32 %v773, %v3434
    %v3436 = vpop.f32.mrf.mxu0
    %v3437 = vadd.f32 %v775, %v3436
    %3438 = vdwg.mxu0
    %3439 = vmatpush.bf16.msra.mxu0 %v2690
    %3440 = vmatpush.bf16.msra.mxu0 %v2675
    %3441 = vmatpush.bf16.msra.mxu0 %v2660
    %3442 = vmatpush.bf16.msra.mxu0 %v2645
    %3443 = vmatpush.bf16.msra.mxu0 %v2630
    %3444 = vmatpush.bf16.msra.mxu0 %v2615
    %3445 = vmatpush.bf16.msra.mxu0 %v2600
    %3446 = vmatpush.bf16.msra.mxu0 %v2585
    %3447 = vmatmul.bf16.gmra.mxu0 %v986
    %v3448 = vpop.f32.mrf.mxu0
    %v3449 = vadd.f32 %v3435, %v3448
    %v3450 = vpop.f32.mrf.mxu0
    %v3451 = vadd.f32 %v3437, %v3450
    %3452 = vdwg.mxu0
    %3453 = vmatpush.bf16.msra.mxu0 %v2810
    %3454 = vmatpush.bf16.msra.mxu0 %v2795
    %3455 = vmatpush.bf16.msra.mxu0 %v2780
    %3456 = vmatpush.bf16.msra.mxu0 %v2765
    %3457 = vmatpush.bf16.msra.mxu0 %v2750
    %3458 = vmatpush.bf16.msra.mxu0 %v2735
    %3459 = vmatpush.bf16.msra.mxu0 %v2720
    %3460 = vmatpush.bf16.msra.mxu0 %v2705
    %3461 = vmatmul.bf16.gmra.mxu0 %v987
    %v3462 = vpop.f32.mrf.mxu0
    %v3463 = vadd.f32 %v3449, %v3462
    %v3464 = vpop.f32.mrf.mxu0
    %v3465 = vadd.f32 %v3451, %v3464
    %3466 = vdwg.mxu0
    %3467 = vmatpush.bf16.msra.mxu0 %v2930
    %3468 = vmatpush.bf16.msra.mxu0 %v2915
    %3469 = vmatpush.bf16.msra.mxu0 %v2900
    %3470 = vmatpush.bf16.msra.mxu0 %v2885
    %3471 = vmatpush.bf16.msra.mxu0 %v2870
    %3472 = vmatpush.bf16.msra.mxu0 %v2855
    %3473 = vmatpush.bf16.msra.mxu0 %v2840
    %3474 = vmatpush.bf16.msra.mxu0 %v2825
    %3475 = vmatmul.bf16.gmra.mxu0 %v988
    %v3476 = vpop.f32.mrf.mxu0
    %v3477 = vadd.f32 %v3463, %v3476
    %v3478 = vpop.f32.mrf.mxu0
    %v3479 = vadd.f32 %v3465, %v3478
    %3480 = vdwg.mxu0
    %3481 = vmatpush.bf16.msra.mxu0 %v2571
    %3482 = vmatpush.bf16.msra.mxu0 %v2556
    %3483 = vmatpush.bf16.msra.mxu0 %v2541
    %3484 = vmatpush.bf16.msra.mxu0 %v2526
    %3485 = vmatpush.bf16.msra.mxu0 %v2511
    %3486 = vmatpush.bf16.msra.mxu0 %v2496
    %3487 = vmatpush.bf16.msra.mxu0 %v2481
    %3488 = vmatpush.bf16.msra.mxu0 %v2466
    %3489 = vmatmul.bf16.gmra.mxu0 %v985
    %v3490 = vpop.f32.mrf.mxu0
    %v3491 = vadd.f32 %v787, %v3490
    %v3492 = vpop.f32.mrf.mxu0
    %v3493 = vadd.f32 %v789, %v3492
    %3494 = vdwg.mxu0
    %3495 = vmatpush.bf16.msra.mxu0 %v2691
    %3496 = vmatpush.bf16.msra.mxu0 %v2676
    %3497 = vmatpush.bf16.msra.mxu0 %v2661
    %3498 = vmatpush.bf16.msra.mxu0 %v2646
    %3499 = vmatpush.bf16.msra.mxu0 %v2631
    %3500 = vmatpush.bf16.msra.mxu0 %v2616
    %3501 = vmatpush.bf16.msra.mxu0 %v2601
    %3502 = vmatpush.bf16.msra.mxu0 %v2586
    %3503 = vmatmul.bf16.gmra.mxu0 %v986
    %v3504 = vpop.f32.mrf.mxu0
    %v3505 = vadd.f32 %v3491, %v3504
    %v3506 = vpop.f32.mrf.mxu0
    %v3507 = vadd.f32 %v3493, %v3506
    %3508 = vdwg.mxu0
    %3509 = vmatpush.bf16.msra.mxu0 %v2811
    %3510 = vmatpush.bf16.msra.mxu0 %v2796
    %3511 = vmatpush.bf16.msra.mxu0 %v2781
    %3512 = vmatpush.bf16.msra.mxu0 %v2766
    %3513 = vmatpush.bf16.msra.mxu0 %v2751
    %3514 = vmatpush.bf16.msra.mxu0 %v2736
    %3515 = vmatpush.bf16.msra.mxu0 %v2721
    %3516 = vmatpush.bf16.msra.mxu0 %v2706
    %3517 = vmatmul.bf16.gmra.mxu0 %v987
    %v3518 = vpop.f32.mrf.mxu0
    %v3519 = vadd.f32 %v3505, %v3518
    %v3520 = vpop.f32.mrf.mxu0
    %v3521 = vadd.f32 %v3507, %v3520
    %3522 = vdwg.mxu0
    %3523 = vmatpush.bf16.msra.mxu0 %v2931
    %3524 = vmatpush.bf16.msra.mxu0 %v2916
    %3525 = vmatpush.bf16.msra.mxu0 %v2901
    %3526 = vmatpush.bf16.msra.mxu0 %v2886
    %3527 = vmatpush.bf16.msra.mxu0 %v2871
    %3528 = vmatpush.bf16.msra.mxu0 %v2856
    %3529 = vmatpush.bf16.msra.mxu0 %v2841
    %3530 = vmatpush.bf16.msra.mxu0 %v2826
    %3531 = vmatmul.bf16.gmra.mxu0 %v988
    %v3532 = vpop.f32.mrf.mxu0
    %v3533 = vadd.f32 %v3519, %v3532
    %v3534 = vpop.f32.mrf.mxu0
    %v3535 = vadd.f32 %v3521, %v3534
    %3536 = vdwg.mxu0
    %3537 = vmatpush.bf16.msra.mxu0 %v2572
    %3538 = vmatpush.bf16.msra.mxu0 %v2557
    %3539 = vmatpush.bf16.msra.mxu0 %v2542
    %3540 = vmatpush.bf16.msra.mxu0 %v2527
    %3541 = vmatpush.bf16.msra.mxu0 %v2512
    %3542 = vmatpush.bf16.msra.mxu0 %v2497
    %3543 = vmatpush.bf16.msra.mxu0 %v2482
    %3544 = vmatpush.bf16.msra.mxu0 %v2467
    %3545 = vmatmul.bf16.gmra.mxu0 %v985
    %v3546 = vpop.f32.mrf.mxu0
    %v3547 = vadd.f32 %v801, %v3546
    %v3548 = vpop.f32.mrf.mxu0
    %v3549 = vadd.f32 %v803, %v3548
    %3550 = vdwg.mxu0
    %3551 = vmatpush.bf16.msra.mxu0 %v2692
    %3552 = vmatpush.bf16.msra.mxu0 %v2677
    %3553 = vmatpush.bf16.msra.mxu0 %v2662
    %3554 = vmatpush.bf16.msra.mxu0 %v2647
    %3555 = vmatpush.bf16.msra.mxu0 %v2632
    %3556 = vmatpush.bf16.msra.mxu0 %v2617
    %3557 = vmatpush.bf16.msra.mxu0 %v2602
    %3558 = vmatpush.bf16.msra.mxu0 %v2587
    %3559 = vmatmul.bf16.gmra.mxu0 %v986
    %v3560 = vpop.f32.mrf.mxu0
    %v3561 = vadd.f32 %v3547, %v3560
    %v3562 = vpop.f32.mrf.mxu0
    %v3563 = vadd.f32 %v3549, %v3562
    %3564 = vdwg.mxu0
    %3565 = vmatpush.bf16.msra.mxu0 %v2812
    %3566 = vmatpush.bf16.msra.mxu0 %v2797
    %3567 = vmatpush.bf16.msra.mxu0 %v2782
    %3568 = vmatpush.bf16.msra.mxu0 %v2767
    %3569 = vmatpush.bf16.msra.mxu0 %v2752
    %3570 = vmatpush.bf16.msra.mxu0 %v2737
    %3571 = vmatpush.bf16.msra.mxu0 %v2722
    %3572 = vmatpush.bf16.msra.mxu0 %v2707
    %3573 = vmatmul.bf16.gmra.mxu0 %v987
    %v3574 = vpop.f32.mrf.mxu0
    %v3575 = vadd.f32 %v3561, %v3574
    %v3576 = vpop.f32.mrf.mxu0
    %v3577 = vadd.f32 %v3563, %v3576
    %3578 = vdwg.mxu0
    %3579 = vmatpush.bf16.msra.mxu0 %v2932
    %3580 = vmatpush.bf16.msra.mxu0 %v2917
    %3581 = vmatpush.bf16.msra.mxu0 %v2902
    %3582 = vmatpush.bf16.msra.mxu0 %v2887
    %3583 = vmatpush.bf16.msra.mxu0 %v2872
    %3584 = vmatpush.bf16.msra.mxu0 %v2857
    %3585 = vmatpush.bf16.msra.mxu0 %v2842
    %3586 = vmatpush.bf16.msra.mxu0 %v2827
    %3587 = vmatmul.bf16.gmra.mxu0 %v988
    %v3588 = vpop.f32.mrf.mxu0
    %v3589 = vadd.f32 %v3575, %v3588
    %v3590 = vpop.f32.mrf.mxu0
    %v3591 = vadd.f32 %v3577, %v3590
    %3592 = vdwg.mxu0
    %3593 = vmatpush.bf16.msra.mxu0 %v2573
    %3594 = vmatpush.bf16.msra.mxu0 %v2558
    %3595 = vmatpush.bf16.msra.mxu0 %v2543
    %3596 = vmatpush.bf16.msra.mxu0 %v2528
    %3597 = vmatpush.bf16.msra.mxu0 %v2513
    %3598 = vmatpush.bf16.msra.mxu0 %v2498
    %3599 = vmatpush.bf16.msra.mxu0 %v2483
    %3600 = vmatpush.bf16.msra.mxu0 %v2468
    %3601 = vmatmul.bf16.gmra.mxu0 %v985
    %v3602 = vpop.f32.mrf.mxu0
    %v3603 = vadd.f32 %v815, %v3602
    %v3604 = vpop.f32.mrf.mxu0
    %v3605 = vadd.f32 %v817, %v3604
    %3606 = vdwg.mxu0
    %3607 = vmatpush.bf16.msra.mxu0 %v2693
    %3608 = vmatpush.bf16.msra.mxu0 %v2678
    %3609 = vmatpush.bf16.msra.mxu0 %v2663
    %3610 = vmatpush.bf16.msra.mxu0 %v2648
    %3611 = vmatpush.bf16.msra.mxu0 %v2633
    %3612 = vmatpush.bf16.msra.mxu0 %v2618
    %3613 = vmatpush.bf16.msra.mxu0 %v2603
    %3614 = vmatpush.bf16.msra.mxu0 %v2588
    %3615 = vmatmul.bf16.gmra.mxu0 %v986
    %v3616 = vpop.f32.mrf.mxu0
    %v3617 = vadd.f32 %v3603, %v3616
    %v3618 = vpop.f32.mrf.mxu0
    %v3619 = vadd.f32 %v3605, %v3618
    %3620 = vdwg.mxu0
    %3621 = vmatpush.bf16.msra.mxu0 %v2813
    %3622 = vmatpush.bf16.msra.mxu0 %v2798
    %3623 = vmatpush.bf16.msra.mxu0 %v2783
    %3624 = vmatpush.bf16.msra.mxu0 %v2768
    %3625 = vmatpush.bf16.msra.mxu0 %v2753
    %3626 = vmatpush.bf16.msra.mxu0 %v2738
    %3627 = vmatpush.bf16.msra.mxu0 %v2723
    %3628 = vmatpush.bf16.msra.mxu0 %v2708
    %3629 = vmatmul.bf16.gmra.mxu0 %v987
    %v3630 = vpop.f32.mrf.mxu0
    %v3631 = vadd.f32 %v3617, %v3630
    %v3632 = vpop.f32.mrf.mxu0
    %v3633 = vadd.f32 %v3619, %v3632
    %3634 = vdwg.mxu0
    %3635 = vmatpush.bf16.msra.mxu0 %v2933
    %3636 = vmatpush.bf16.msra.mxu0 %v2918
    %3637 = vmatpush.bf16.msra.mxu0 %v2903
    %3638 = vmatpush.bf16.msra.mxu0 %v2888
    %3639 = vmatpush.bf16.msra.mxu0 %v2873
    %3640 = vmatpush.bf16.msra.mxu0 %v2858
    %3641 = vmatpush.bf16.msra.mxu0 %v2843
    %3642 = vmatpush.bf16.msra.mxu0 %v2828
    %3643 = vmatmul.bf16.gmra.mxu0 %v988
    %v3644 = vpop.f32.mrf.mxu0
    %v3645 = vadd.f32 %v3631, %v3644
    %v3646 = vpop.f32.mrf.mxu0
    %v3647 = vadd.f32 %v3633, %v3646
    %3648 = vdwg.mxu0
    %3649 = vmatpush.bf16.msra.mxu0 %v2574
    %3650 = vmatpush.bf16.msra.mxu0 %v2559
    %3651 = vmatpush.bf16.msra.mxu0 %v2544
    %3652 = vmatpush.bf16.msra.mxu0 %v2529
    %3653 = vmatpush.bf16.msra.mxu0 %v2514
    %3654 = vmatpush.bf16.msra.mxu0 %v2499
    %3655 = vmatpush.bf16.msra.mxu0 %v2484
    %3656 = vmatpush.bf16.msra.mxu0 %v2469
    %3657 = vmatmul.bf16.gmra.mxu0 %v985
    %v3658 = vpop.f32.mrf.mxu0
    %v3659 = vadd.f32 %v829, %v3658
    %v3660 = vpop.f32.mrf.mxu0
    %v3661 = vadd.f32 %v831, %v3660
    %3662 = vdwg.mxu0
    %3663 = vmatpush.bf16.msra.mxu0 %v2694
    %3664 = vmatpush.bf16.msra.mxu0 %v2679
    %3665 = vmatpush.bf16.msra.mxu0 %v2664
    %3666 = vmatpush.bf16.msra.mxu0 %v2649
    %3667 = vmatpush.bf16.msra.mxu0 %v2634
    %3668 = vmatpush.bf16.msra.mxu0 %v2619
    %3669 = vmatpush.bf16.msra.mxu0 %v2604
    %3670 = vmatpush.bf16.msra.mxu0 %v2589
    %3671 = vmatmul.bf16.gmra.mxu0 %v986
    %v3672 = vpop.f32.mrf.mxu0
    %v3673 = vadd.f32 %v3659, %v3672
    %v3674 = vpop.f32.mrf.mxu0
    %v3675 = vadd.f32 %v3661, %v3674
    %3676 = vdwg.mxu0
    %3677 = vmatpush.bf16.msra.mxu0 %v2814
    %3678 = vmatpush.bf16.msra.mxu0 %v2799
    %3679 = vmatpush.bf16.msra.mxu0 %v2784
    %3680 = vmatpush.bf16.msra.mxu0 %v2769
    %3681 = vmatpush.bf16.msra.mxu0 %v2754
    %3682 = vmatpush.bf16.msra.mxu0 %v2739
    %3683 = vmatpush.bf16.msra.mxu0 %v2724
    %3684 = vmatpush.bf16.msra.mxu0 %v2709
    %3685 = vmatmul.bf16.gmra.mxu0 %v987
    %v3686 = vpop.f32.mrf.mxu0
    %v3687 = vadd.f32 %v3673, %v3686
    %v3688 = vpop.f32.mrf.mxu0
    %v3689 = vadd.f32 %v3675, %v3688
    %3690 = vdwg.mxu0
    %3691 = vmatpush.bf16.msra.mxu0 %v2934
    %3692 = vmatpush.bf16.msra.mxu0 %v2919
    %3693 = vmatpush.bf16.msra.mxu0 %v2904
    %3694 = vmatpush.bf16.msra.mxu0 %v2889
    %3695 = vmatpush.bf16.msra.mxu0 %v2874
    %3696 = vmatpush.bf16.msra.mxu0 %v2859
    %3697 = vmatpush.bf16.msra.mxu0 %v2844
    %3698 = vmatpush.bf16.msra.mxu0 %v2829
    %3699 = vmatmul.bf16.gmra.mxu0 %v988
    %v3700 = vpop.f32.mrf.mxu0
    %v3701 = vadd.f32 %v3687, %v3700
    %v3702 = vpop.f32.mrf.mxu0
    %v3703 = vadd.f32 %v3689, %v3702
    %3704 = vdwg.mxu0
    %3705 = vmatpush.bf16.msra.mxu0 %v2575
    %3706 = vmatpush.bf16.msra.mxu0 %v2560
    %3707 = vmatpush.bf16.msra.mxu0 %v2545
    %3708 = vmatpush.bf16.msra.mxu0 %v2530
    %3709 = vmatpush.bf16.msra.mxu0 %v2515
    %3710 = vmatpush.bf16.msra.mxu0 %v2500
    %3711 = vmatpush.bf16.msra.mxu0 %v2485
    %3712 = vmatpush.bf16.msra.mxu0 %v2470
    %3713 = vmatmul.bf16.gmra.mxu0 %v985
    %v3714 = vpop.f32.mrf.mxu0
    %v3715 = vadd.f32 %v843, %v3714
    %v3716 = vpop.f32.mrf.mxu0
    %v3717 = vadd.f32 %v845, %v3716
    %3718 = vdwg.mxu0
    %3719 = vmatpush.bf16.msra.mxu0 %v2695
    %3720 = vmatpush.bf16.msra.mxu0 %v2680
    %3721 = vmatpush.bf16.msra.mxu0 %v2665
    %3722 = vmatpush.bf16.msra.mxu0 %v2650
    %3723 = vmatpush.bf16.msra.mxu0 %v2635
    %3724 = vmatpush.bf16.msra.mxu0 %v2620
    %3725 = vmatpush.bf16.msra.mxu0 %v2605
    %3726 = vmatpush.bf16.msra.mxu0 %v2590
    %3727 = vmatmul.bf16.gmra.mxu0 %v986
    %v3728 = vpop.f32.mrf.mxu0
    %v3729 = vadd.f32 %v3715, %v3728
    %v3730 = vpop.f32.mrf.mxu0
    %v3731 = vadd.f32 %v3717, %v3730
    %3732 = vdwg.mxu0
    %3733 = vmatpush.bf16.msra.mxu0 %v2815
    %3734 = vmatpush.bf16.msra.mxu0 %v2800
    %3735 = vmatpush.bf16.msra.mxu0 %v2785
    %3736 = vmatpush.bf16.msra.mxu0 %v2770
    %3737 = vmatpush.bf16.msra.mxu0 %v2755
    %3738 = vmatpush.bf16.msra.mxu0 %v2740
    %3739 = vmatpush.bf16.msra.mxu0 %v2725
    %3740 = vmatpush.bf16.msra.mxu0 %v2710
    %3741 = vmatmul.bf16.gmra.mxu0 %v987
    %v3742 = vpop.f32.mrf.mxu0
    %v3743 = vadd.f32 %v3729, %v3742
    %v3744 = vpop.f32.mrf.mxu0
    %v3745 = vadd.f32 %v3731, %v3744
    %3746 = vdwg.mxu0
    %3747 = vmatpush.bf16.msra.mxu0 %v2935
    %3748 = vmatpush.bf16.msra.mxu0 %v2920
    %3749 = vmatpush.bf16.msra.mxu0 %v2905
    %3750 = vmatpush.bf16.msra.mxu0 %v2890
    %3751 = vmatpush.bf16.msra.mxu0 %v2875
    %3752 = vmatpush.bf16.msra.mxu0 %v2860
    %3753 = vmatpush.bf16.msra.mxu0 %v2845
    %3754 = vmatpush.bf16.msra.mxu0 %v2830
    %3755 = vmatmul.bf16.gmra.mxu0 %v988
    %v3756 = vpop.f32.mrf.mxu0
    %v3757 = vadd.f32 %v3743, %v3756
    %v3758 = vpop.f32.mrf.mxu0
    %v3759 = vadd.f32 %v3745, %v3758
    %3760 = vdwg.mxu0
    %3761 = vmatpush.bf16.msra.mxu0 %v2576
    %3762 = vmatpush.bf16.msra.mxu0 %v2561
    %3763 = vmatpush.bf16.msra.mxu0 %v2546
    %3764 = vmatpush.bf16.msra.mxu0 %v2531
    %3765 = vmatpush.bf16.msra.mxu0 %v2516
    %3766 = vmatpush.bf16.msra.mxu0 %v2501
    %3767 = vmatpush.bf16.msra.mxu0 %v2486
    %3768 = vmatpush.bf16.msra.mxu0 %v2471
    %3769 = vmatmul.bf16.gmra.mxu0 %v985
    %v3770 = vpop.f32.mrf.mxu0
    %v3771 = vadd.f32 %v857, %v3770
    %v3772 = vpop.f32.mrf.mxu0
    %v3773 = vadd.f32 %v859, %v3772
    %3774 = vdwg.mxu0
    %3775 = vmatpush.bf16.msra.mxu0 %v2696
    %3776 = vmatpush.bf16.msra.mxu0 %v2681
    %3777 = vmatpush.bf16.msra.mxu0 %v2666
    %3778 = vmatpush.bf16.msra.mxu0 %v2651
    %3779 = vmatpush.bf16.msra.mxu0 %v2636
    %3780 = vmatpush.bf16.msra.mxu0 %v2621
    %3781 = vmatpush.bf16.msra.mxu0 %v2606
    %3782 = vmatpush.bf16.msra.mxu0 %v2591
    %3783 = vmatmul.bf16.gmra.mxu0 %v986
    %v3784 = vpop.f32.mrf.mxu0
    %v3785 = vadd.f32 %v3771, %v3784
    %v3786 = vpop.f32.mrf.mxu0
    %v3787 = vadd.f32 %v3773, %v3786
    %3788 = vdwg.mxu0
    %3789 = vmatpush.bf16.msra.mxu0 %v2816
    %3790 = vmatpush.bf16.msra.mxu0 %v2801
    %3791 = vmatpush.bf16.msra.mxu0 %v2786
    %3792 = vmatpush.bf16.msra.mxu0 %v2771
    %3793 = vmatpush.bf16.msra.mxu0 %v2756
    %3794 = vmatpush.bf16.msra.mxu0 %v2741
    %3795 = vmatpush.bf16.msra.mxu0 %v2726
    %3796 = vmatpush.bf16.msra.mxu0 %v2711
    %3797 = vmatmul.bf16.gmra.mxu0 %v987
    %v3798 = vpop.f32.mrf.mxu0
    %v3799 = vadd.f32 %v3785, %v3798
    %v3800 = vpop.f32.mrf.mxu0
    %v3801 = vadd.f32 %v3787, %v3800
    %3802 = vdwg.mxu0
    %3803 = vmatpush.bf16.msra.mxu0 %v2936
    %3804 = vmatpush.bf16.msra.mxu0 %v2921
    %3805 = vmatpush.bf16.msra.mxu0 %v2906
    %3806 = vmatpush.bf16.msra.mxu0 %v2891
    %3807 = vmatpush.bf16.msra.mxu0 %v2876
    %3808 = vmatpush.bf16.msra.mxu0 %v2861
    %3809 = vmatpush.bf16.msra.mxu0 %v2846
    %3810 = vmatpush.bf16.msra.mxu0 %v2831
    %3811 = vmatmul.bf16.gmra.mxu0 %v988
    %v3812 = vpop.f32.mrf.mxu0
    %v3813 = vadd.f32 %v3799, %v3812
    %v3814 = vpop.f32.mrf.mxu0
    %v3815 = vadd.f32 %v3801, %v3814
    %3816 = vdwg.mxu0
    %3817 = vmatpush.bf16.msra.mxu0 %v2577
    %3818 = vmatpush.bf16.msra.mxu0 %v2562
    %3819 = vmatpush.bf16.msra.mxu0 %v2547
    %3820 = vmatpush.bf16.msra.mxu0 %v2532
    %3821 = vmatpush.bf16.msra.mxu0 %v2517
    %3822 = vmatpush.bf16.msra.mxu0 %v2502
    %3823 = vmatpush.bf16.msra.mxu0 %v2487
    %3824 = vmatpush.bf16.msra.mxu0 %v2472
    %3825 = vmatmul.bf16.gmra.mxu0 %v985
    %v3826 = vpop.f32.mrf.mxu0
    %v3827 = vadd.f32 %v871, %v3826
    %v3828 = vpop.f32.mrf.mxu0
    %v3829 = vadd.f32 %v873, %v3828
    %3830 = vdwg.mxu0
    %3831 = vmatpush.bf16.msra.mxu0 %v2697
    %3832 = vmatpush.bf16.msra.mxu0 %v2682
    %3833 = vmatpush.bf16.msra.mxu0 %v2667
    %3834 = vmatpush.bf16.msra.mxu0 %v2652
    %3835 = vmatpush.bf16.msra.mxu0 %v2637
    %3836 = vmatpush.bf16.msra.mxu0 %v2622
    %3837 = vmatpush.bf16.msra.mxu0 %v2607
    %3838 = vmatpush.bf16.msra.mxu0 %v2592
    %3839 = vmatmul.bf16.gmra.mxu0 %v986
    %v3840 = vpop.f32.mrf.mxu0
    %v3841 = vadd.f32 %v3827, %v3840
    %v3842 = vpop.f32.mrf.mxu0
    %v3843 = vadd.f32 %v3829, %v3842
    %3844 = vdwg.mxu0
    %3845 = vmatpush.bf16.msra.mxu0 %v2817
    %3846 = vmatpush.bf16.msra.mxu0 %v2802
    %3847 = vmatpush.bf16.msra.mxu0 %v2787
    %3848 = vmatpush.bf16.msra.mxu0 %v2772
    %3849 = vmatpush.bf16.msra.mxu0 %v2757
    %3850 = vmatpush.bf16.msra.mxu0 %v2742
    %3851 = vmatpush.bf16.msra.mxu0 %v2727
    %3852 = vmatpush.bf16.msra.mxu0 %v2712
    %3853 = vmatmul.bf16.gmra.mxu0 %v987
    %v3854 = vpop.f32.mrf.mxu0
    %v3855 = vadd.f32 %v3841, %v3854
    %v3856 = vpop.f32.mrf.mxu0
    %v3857 = vadd.f32 %v3843, %v3856
    %3858 = vdwg.mxu0
    %3859 = vmatpush.bf16.msra.mxu0 %v2937
    %3860 = vmatpush.bf16.msra.mxu0 %v2922
    %3861 = vmatpush.bf16.msra.mxu0 %v2907
    %3862 = vmatpush.bf16.msra.mxu0 %v2892
    %3863 = vmatpush.bf16.msra.mxu0 %v2877
    %3864 = vmatpush.bf16.msra.mxu0 %v2862
    %3865 = vmatpush.bf16.msra.mxu0 %v2847
    %3866 = vmatpush.bf16.msra.mxu0 %v2832
    %3867 = vmatmul.bf16.gmra.mxu0 %v988
    %v3868 = vpop.f32.mrf.mxu0
    %v3869 = vadd.f32 %v3855, %v3868
    %v3870 = vpop.f32.mrf.mxu0
    %v3871 = vadd.f32 %v3857, %v3870
    %3872 = vdwg.mxu0
    %3873 = vmatpush.bf16.msra.mxu0 %v2578
    %3874 = vmatpush.bf16.msra.mxu0 %v2563
    %3875 = vmatpush.bf16.msra.mxu0 %v2548
    %3876 = vmatpush.bf16.msra.mxu0 %v2533
    %3877 = vmatpush.bf16.msra.mxu0 %v2518
    %3878 = vmatpush.bf16.msra.mxu0 %v2503
    %3879 = vmatpush.bf16.msra.mxu0 %v2488
    %3880 = vmatpush.bf16.msra.mxu0 %v2473
    %3881 = vmatmul.bf16.gmra.mxu0 %v985
    %v3882 = vpop.f32.mrf.mxu0
    %v3883 = vadd.f32 %v885, %v3882
    %v3884 = vpop.f32.mrf.mxu0
    %v3885 = vadd.f32 %v887, %v3884
    %3886 = vdwg.mxu0
    %3887 = vmatpush.bf16.msra.mxu0 %v2698
    %3888 = vmatpush.bf16.msra.mxu0 %v2683
    %3889 = vmatpush.bf16.msra.mxu0 %v2668
    %3890 = vmatpush.bf16.msra.mxu0 %v2653
    %3891 = vmatpush.bf16.msra.mxu0 %v2638
    %3892 = vmatpush.bf16.msra.mxu0 %v2623
    %3893 = vmatpush.bf16.msra.mxu0 %v2608
    %3894 = vmatpush.bf16.msra.mxu0 %v2593
    %3895 = vmatmul.bf16.gmra.mxu0 %v986
    %v3896 = vpop.f32.mrf.mxu0
    %v3897 = vadd.f32 %v3883, %v3896
    %v3898 = vpop.f32.mrf.mxu0
    %v3899 = vadd.f32 %v3885, %v3898
    %3900 = vdwg.mxu0
    %3901 = vmatpush.bf16.msra.mxu0 %v2818
    %3902 = vmatpush.bf16.msra.mxu0 %v2803
    %3903 = vmatpush.bf16.msra.mxu0 %v2788
    %3904 = vmatpush.bf16.msra.mxu0 %v2773
    %3905 = vmatpush.bf16.msra.mxu0 %v2758
    %3906 = vmatpush.bf16.msra.mxu0 %v2743
    %3907 = vmatpush.bf16.msra.mxu0 %v2728
    %3908 = vmatpush.bf16.msra.mxu0 %v2713
    %3909 = vmatmul.bf16.gmra.mxu0 %v987
    %v3910 = vpop.f32.mrf.mxu0
    %v3911 = vadd.f32 %v3897, %v3910
    %v3912 = vpop.f32.mrf.mxu0
    %v3913 = vadd.f32 %v3899, %v3912
    %3914 = vdwg.mxu0
    %3915 = vmatpush.bf16.msra.mxu0 %v2938
    %3916 = vmatpush.bf16.msra.mxu0 %v2923
    %3917 = vmatpush.bf16.msra.mxu0 %v2908
    %3918 = vmatpush.bf16.msra.mxu0 %v2893
    %3919 = vmatpush.bf16.msra.mxu0 %v2878
    %3920 = vmatpush.bf16.msra.mxu0 %v2863
    %3921 = vmatpush.bf16.msra.mxu0 %v2848
    %3922 = vmatpush.bf16.msra.mxu0 %v2833
    %3923 = vmatmul.bf16.gmra.mxu0 %v988
    %v3924 = vpop.f32.mrf.mxu0
    %v3925 = vadd.f32 %v3911, %v3924
    %v3926 = vpop.f32.mrf.mxu0
    %v3927 = vadd.f32 %v3913, %v3926
    %3928 = vdwg.mxu0
    %3929 = vmatpush.bf16.msra.mxu0 %v2579
    %3930 = vmatpush.bf16.msra.mxu0 %v2564
    %3931 = vmatpush.bf16.msra.mxu0 %v2549
    %3932 = vmatpush.bf16.msra.mxu0 %v2534
    %3933 = vmatpush.bf16.msra.mxu0 %v2519
    %3934 = vmatpush.bf16.msra.mxu0 %v2504
    %3935 = vmatpush.bf16.msra.mxu0 %v2489
    %3936 = vmatpush.bf16.msra.mxu0 %v2474
    %3937 = vmatmul.bf16.gmra.mxu0 %v985
    %v3938 = vpop.f32.mrf.mxu0
    %v3939 = vadd.f32 %v899, %v3938
    %v3940 = vpop.f32.mrf.mxu0
    %v3941 = vadd.f32 %v901, %v3940
    %3942 = vdwg.mxu0
    %3943 = vmatpush.bf16.msra.mxu0 %v2699
    %3944 = vmatpush.bf16.msra.mxu0 %v2684
    %3945 = vmatpush.bf16.msra.mxu0 %v2669
    %3946 = vmatpush.bf16.msra.mxu0 %v2654
    %3947 = vmatpush.bf16.msra.mxu0 %v2639
    %3948 = vmatpush.bf16.msra.mxu0 %v2624
    %3949 = vmatpush.bf16.msra.mxu0 %v2609
    %3950 = vmatpush.bf16.msra.mxu0 %v2594
    %3951 = vmatmul.bf16.gmra.mxu0 %v986
    %v3952 = vpop.f32.mrf.mxu0
    %v3953 = vadd.f32 %v3939, %v3952
    %v3954 = vpop.f32.mrf.mxu0
    %v3955 = vadd.f32 %v3941, %v3954
    %3956 = vdwg.mxu0
    %3957 = vmatpush.bf16.msra.mxu0 %v2819
    %3958 = vmatpush.bf16.msra.mxu0 %v2804
    %3959 = vmatpush.bf16.msra.mxu0 %v2789
    %3960 = vmatpush.bf16.msra.mxu0 %v2774
    %3961 = vmatpush.bf16.msra.mxu0 %v2759
    %3962 = vmatpush.bf16.msra.mxu0 %v2744
    %3963 = vmatpush.bf16.msra.mxu0 %v2729
    %3964 = vmatpush.bf16.msra.mxu0 %v2714
    %3965 = vmatmul.bf16.gmra.mxu0 %v987
    %v3966 = vpop.f32.mrf.mxu0
    %v3967 = vadd.f32 %v3953, %v3966
    %v3968 = vpop.f32.mrf.mxu0
    %v3969 = vadd.f32 %v3955, %v3968
    %3970 = vdwg.mxu0
    %3971 = vmatpush.bf16.msra.mxu0 %v2939
    %3972 = vmatpush.bf16.msra.mxu0 %v2924
    %3973 = vmatpush.bf16.msra.mxu0 %v2909
    %3974 = vmatpush.bf16.msra.mxu0 %v2894
    %3975 = vmatpush.bf16.msra.mxu0 %v2879
    %3976 = vmatpush.bf16.msra.mxu0 %v2864
    %3977 = vmatpush.bf16.msra.mxu0 %v2849
    %3978 = vmatpush.bf16.msra.mxu0 %v2834
    %3979 = vmatmul.bf16.gmra.mxu0 %v988
    %v3980 = vpop.f32.mrf.mxu0
    %v3981 = vadd.f32 %v3967, %v3980
    %v3982 = vpop.f32.mrf.mxu0
    %v3983 = vadd.f32 %v3969, %v3982
    %3984 = vdwg.mxu0
    %3985 = vmatpush.bf16.msra.mxu0 %v2580
    %3986 = vmatpush.bf16.msra.mxu0 %v2565
    %3987 = vmatpush.bf16.msra.mxu0 %v2550
    %3988 = vmatpush.bf16.msra.mxu0 %v2535
    %3989 = vmatpush.bf16.msra.mxu0 %v2520
    %3990 = vmatpush.bf16.msra.mxu0 %v2505
    %3991 = vmatpush.bf16.msra.mxu0 %v2490
    %3992 = vmatpush.bf16.msra.mxu0 %v2475
    %3993 = vmatmul.bf16.gmra.mxu0 %v985
    %v3994 = vpop.f32.mrf.mxu0
    %v3995 = vadd.f32 %v913, %v3994
    %v3996 = vpop.f32.mrf.mxu0
    %v3997 = vadd.f32 %v915, %v3996
    %3998 = vdwg.mxu0
    %3999 = vmatpush.bf16.msra.mxu0 %v2700
    %4000 = vmatpush.bf16.msra.mxu0 %v2685
    %4001 = vmatpush.bf16.msra.mxu0 %v2670
    %4002 = vmatpush.bf16.msra.mxu0 %v2655
    %4003 = vmatpush.bf16.msra.mxu0 %v2640
    %4004 = vmatpush.bf16.msra.mxu0 %v2625
    %4005 = vmatpush.bf16.msra.mxu0 %v2610
    %4006 = vmatpush.bf16.msra.mxu0 %v2595
    %4007 = vmatmul.bf16.gmra.mxu0 %v986
    %v4008 = vpop.f32.mrf.mxu0
    %v4009 = vadd.f32 %v3995, %v4008
    %v4010 = vpop.f32.mrf.mxu0
    %v4011 = vadd.f32 %v3997, %v4010
    %4012 = vdwg.mxu0
    %4013 = vmatpush.bf16.msra.mxu0 %v2820
    %4014 = vmatpush.bf16.msra.mxu0 %v2805
    %4015 = vmatpush.bf16.msra.mxu0 %v2790
    %4016 = vmatpush.bf16.msra.mxu0 %v2775
    %4017 = vmatpush.bf16.msra.mxu0 %v2760
    %4018 = vmatpush.bf16.msra.mxu0 %v2745
    %4019 = vmatpush.bf16.msra.mxu0 %v2730
    %4020 = vmatpush.bf16.msra.mxu0 %v2715
    %4021 = vmatmul.bf16.gmra.mxu0 %v987
    %v4022 = vpop.f32.mrf.mxu0
    %v4023 = vadd.f32 %v4009, %v4022
    %v4024 = vpop.f32.mrf.mxu0
    %v4025 = vadd.f32 %v4011, %v4024
    %4026 = vdwg.mxu0
    %4027 = vmatpush.bf16.msra.mxu0 %v2940
    %4028 = vmatpush.bf16.msra.mxu0 %v2925
    %4029 = vmatpush.bf16.msra.mxu0 %v2910
    %4030 = vmatpush.bf16.msra.mxu0 %v2895
    %4031 = vmatpush.bf16.msra.mxu0 %v2880
    %4032 = vmatpush.bf16.msra.mxu0 %v2865
    %4033 = vmatpush.bf16.msra.mxu0 %v2850
    %4034 = vmatpush.bf16.msra.mxu0 %v2835
    %4035 = vmatmul.bf16.gmra.mxu0 %v988
    %v4036 = vpop.f32.mrf.mxu0
    %v4037 = vadd.f32 %v4023, %v4036
    %v4038 = vpop.f32.mrf.mxu0
    %v4039 = vadd.f32 %v4025, %v4038
    %4040 = vdwg.mxu0
    %4041 = vmatpush.bf16.msra.mxu0 %v2581
    %4042 = vmatpush.bf16.msra.mxu0 %v2566
    %4043 = vmatpush.bf16.msra.mxu0 %v2551
    %4044 = vmatpush.bf16.msra.mxu0 %v2536
    %4045 = vmatpush.bf16.msra.mxu0 %v2521
    %4046 = vmatpush.bf16.msra.mxu0 %v2506
    %4047 = vmatpush.bf16.msra.mxu0 %v2491
    %4048 = vmatpush.bf16.msra.mxu0 %v2476
    %4049 = vmatmul.bf16.gmra.mxu0 %v985
    %v4050 = vpop.f32.mrf.mxu0
    %v4051 = vadd.f32 %v927, %v4050
    %v4052 = vpop.f32.mrf.mxu0
    %v4053 = vadd.f32 %v929, %v4052
    %4054 = vdwg.mxu0
    %4055 = vmatpush.bf16.msra.mxu0 %v2701
    %4056 = vmatpush.bf16.msra.mxu0 %v2686
    %4057 = vmatpush.bf16.msra.mxu0 %v2671
    %4058 = vmatpush.bf16.msra.mxu0 %v2656
    %4059 = vmatpush.bf16.msra.mxu0 %v2641
    %4060 = vmatpush.bf16.msra.mxu0 %v2626
    %4061 = vmatpush.bf16.msra.mxu0 %v2611
    %4062 = vmatpush.bf16.msra.mxu0 %v2596
    %4063 = vmatmul.bf16.gmra.mxu0 %v986
    %v4064 = vpop.f32.mrf.mxu0
    %v4065 = vadd.f32 %v4051, %v4064
    %v4066 = vpop.f32.mrf.mxu0
    %v4067 = vadd.f32 %v4053, %v4066
    %4068 = vdwg.mxu0
    %4069 = vmatpush.bf16.msra.mxu0 %v2821
    %4070 = vmatpush.bf16.msra.mxu0 %v2806
    %4071 = vmatpush.bf16.msra.mxu0 %v2791
    %4072 = vmatpush.bf16.msra.mxu0 %v2776
    %4073 = vmatpush.bf16.msra.mxu0 %v2761
    %4074 = vmatpush.bf16.msra.mxu0 %v2746
    %4075 = vmatpush.bf16.msra.mxu0 %v2731
    %4076 = vmatpush.bf16.msra.mxu0 %v2716
    %4077 = vmatmul.bf16.gmra.mxu0 %v987
    %v4078 = vpop.f32.mrf.mxu0
    %v4079 = vadd.f32 %v4065, %v4078
    %v4080 = vpop.f32.mrf.mxu0
    %v4081 = vadd.f32 %v4067, %v4080
    %4082 = vdwg.mxu0
    %4083 = vmatpush.bf16.msra.mxu0 %v2941
    %4084 = vmatpush.bf16.msra.mxu0 %v2926
    %4085 = vmatpush.bf16.msra.mxu0 %v2911
    %4086 = vmatpush.bf16.msra.mxu0 %v2896
    %4087 = vmatpush.bf16.msra.mxu0 %v2881
    %4088 = vmatpush.bf16.msra.mxu0 %v2866
    %4089 = vmatpush.bf16.msra.mxu0 %v2851
    %4090 = vmatpush.bf16.msra.mxu0 %v2836
    %4091 = vmatmul.bf16.gmra.mxu0 %v988
    %v4092 = vpop.f32.mrf.mxu0
    %v4093 = vadd.f32 %v4079, %v4092
    %v4094 = vpop.f32.mrf.mxu0
    %v4095 = vadd.f32 %v4081, %v4094
    %4096 = vdwg.mxu0
    %4097 = vmatpush.bf16.msra.mxu0 %v2582
    %4098 = vmatpush.bf16.msra.mxu0 %v2567
    %4099 = vmatpush.bf16.msra.mxu0 %v2552
    %4100 = vmatpush.bf16.msra.mxu0 %v2537
    %4101 = vmatpush.bf16.msra.mxu0 %v2522
    %4102 = vmatpush.bf16.msra.mxu0 %v2507
    %4103 = vmatpush.bf16.msra.mxu0 %v2492
    %4104 = vmatpush.bf16.msra.mxu0 %v2477
    %4105 = vmatmul.bf16.gmra.mxu0 %v985
    %v4106 = vpop.f32.mrf.mxu0
    %v4107 = vadd.f32 %v941, %v4106
    %v4108 = vpop.f32.mrf.mxu0
    %v4109 = vadd.f32 %v943, %v4108
    %4110 = vdwg.mxu0
    %4111 = vmatpush.bf16.msra.mxu0 %v2702
    %4112 = vmatpush.bf16.msra.mxu0 %v2687
    %4113 = vmatpush.bf16.msra.mxu0 %v2672
    %4114 = vmatpush.bf16.msra.mxu0 %v2657
    %4115 = vmatpush.bf16.msra.mxu0 %v2642
    %4116 = vmatpush.bf16.msra.mxu0 %v2627
    %4117 = vmatpush.bf16.msra.mxu0 %v2612
    %4118 = vmatpush.bf16.msra.mxu0 %v2597
    %4119 = vmatmul.bf16.gmra.mxu0 %v986
    %v4120 = vpop.f32.mrf.mxu0
    %v4121 = vadd.f32 %v4107, %v4120
    %v4122 = vpop.f32.mrf.mxu0
    %v4123 = vadd.f32 %v4109, %v4122
    %4124 = vdwg.mxu0
    %4125 = vmatpush.bf16.msra.mxu0 %v2822
    %4126 = vmatpush.bf16.msra.mxu0 %v2807
    %4127 = vmatpush.bf16.msra.mxu0 %v2792
    %4128 = vmatpush.bf16.msra.mxu0 %v2777
    %4129 = vmatpush.bf16.msra.mxu0 %v2762
    %4130 = vmatpush.bf16.msra.mxu0 %v2747
    %4131 = vmatpush.bf16.msra.mxu0 %v2732
    %4132 = vmatpush.bf16.msra.mxu0 %v2717
    %4133 = vmatmul.bf16.gmra.mxu0 %v987
    %v4134 = vpop.f32.mrf.mxu0
    %v4135 = vadd.f32 %v4121, %v4134
    %v4136 = vpop.f32.mrf.mxu0
    %v4137 = vadd.f32 %v4123, %v4136
    %4138 = vdwg.mxu0
    %4139 = vmatpush.bf16.msra.mxu0 %v2942
    %4140 = vmatpush.bf16.msra.mxu0 %v2927
    %4141 = vmatpush.bf16.msra.mxu0 %v2912
    %4142 = vmatpush.bf16.msra.mxu0 %v2897
    %4143 = vmatpush.bf16.msra.mxu0 %v2882
    %4144 = vmatpush.bf16.msra.mxu0 %v2867
    %4145 = vmatpush.bf16.msra.mxu0 %v2852
    %4146 = vmatpush.bf16.msra.mxu0 %v2837
    %4147 = vmatmul.bf16.gmra.mxu0 %v988
    %v4148 = vpop.f32.mrf.mxu0
    %v4149 = vadd.f32 %v4135, %v4148
    %v4150 = vpop.f32.mrf.mxu0
    %v4151 = vadd.f32 %v4137, %v4150
    %4152 = vdwg.mxu0
    %4153 = vmatpush.bf16.msra.mxu0 %v2583
    %4154 = vmatpush.bf16.msra.mxu0 %v2568
    %4155 = vmatpush.bf16.msra.mxu0 %v2553
    %4156 = vmatpush.bf16.msra.mxu0 %v2538
    %4157 = vmatpush.bf16.msra.mxu0 %v2523
    %4158 = vmatpush.bf16.msra.mxu0 %v2508
    %4159 = vmatpush.bf16.msra.mxu0 %v2493
    %4160 = vmatpush.bf16.msra.mxu0 %v2478
    %4161 = vmatmul.bf16.gmra.mxu0 %v985
    %v4162 = vpop.f32.mrf.mxu0
    %v4163 = vadd.f32 %v955, %v4162
    %v4164 = vpop.f32.mrf.mxu0
    %v4165 = vadd.f32 %v957, %v4164
    %4166 = vdwg.mxu0
    %4167 = vmatpush.bf16.msra.mxu0 %v2703
    %4168 = vmatpush.bf16.msra.mxu0 %v2688
    %4169 = vmatpush.bf16.msra.mxu0 %v2673
    %4170 = vmatpush.bf16.msra.mxu0 %v2658
    %4171 = vmatpush.bf16.msra.mxu0 %v2643
    %4172 = vmatpush.bf16.msra.mxu0 %v2628
    %4173 = vmatpush.bf16.msra.mxu0 %v2613
    %4174 = vmatpush.bf16.msra.mxu0 %v2598
    %4175 = vmatmul.bf16.gmra.mxu0 %v986
    %v4176 = vpop.f32.mrf.mxu0
    %v4177 = vadd.f32 %v4163, %v4176
    %v4178 = vpop.f32.mrf.mxu0
    %v4179 = vadd.f32 %v4165, %v4178
    %4180 = vdwg.mxu0
    %4181 = vmatpush.bf16.msra.mxu0 %v2823
    %4182 = vmatpush.bf16.msra.mxu0 %v2808
    %4183 = vmatpush.bf16.msra.mxu0 %v2793
    %4184 = vmatpush.bf16.msra.mxu0 %v2778
    %4185 = vmatpush.bf16.msra.mxu0 %v2763
    %4186 = vmatpush.bf16.msra.mxu0 %v2748
    %4187 = vmatpush.bf16.msra.mxu0 %v2733
    %4188 = vmatpush.bf16.msra.mxu0 %v2718
    %4189 = vmatmul.bf16.gmra.mxu0 %v987
    %v4190 = vpop.f32.mrf.mxu0
    %v4191 = vadd.f32 %v4177, %v4190
    %v4192 = vpop.f32.mrf.mxu0
    %v4193 = vadd.f32 %v4179, %v4192
    %4194 = vdwg.mxu0
    %4195 = vmatpush.bf16.msra.mxu0 %v2943
    %4196 = vmatpush.bf16.msra.mxu0 %v2928
    %4197 = vmatpush.bf16.msra.mxu0 %v2913
    %4198 = vmatpush.bf16.msra.mxu0 %v2898
    %4199 = vmatpush.bf16.msra.mxu0 %v2883
    %4200 = vmatpush.bf16.msra.mxu0 %v2868
    %4201 = vmatpush.bf16.msra.mxu0 %v2853
    %4202 = vmatpush.bf16.msra.mxu0 %v2838
    %4203 = vmatmul.bf16.gmra.mxu0 %v988
    %v4204 = vpop.f32.mrf.mxu0
    %v4205 = vadd.f32 %v4191, %v4204
    %v4206 = vpop.f32.mrf.mxu0
    %v4207 = vadd.f32 %v4193, %v4206
    %4208 = vdwg.mxu0
    %4209 = vmatpush.bf16.msra.mxu0 %v2584
    %4210 = vmatpush.bf16.msra.mxu0 %v2569
    %4211 = vmatpush.bf16.msra.mxu0 %v2554
    %4212 = vmatpush.bf16.msra.mxu0 %v2539
    %4213 = vmatpush.bf16.msra.mxu0 %v2524
    %4214 = vmatpush.bf16.msra.mxu0 %v2509
    %4215 = vmatpush.bf16.msra.mxu0 %v2494
    %4216 = vmatpush.bf16.msra.mxu0 %v2479
    %4217 = vmatmul.bf16.gmra.mxu0 %v985
    %v4218 = vpop.f32.mrf.mxu0
    %v4219 = vadd.f32 %v969, %v4218
    %v4220 = vpop.f32.mrf.mxu0
    %v4221 = vadd.f32 %v971, %v4220
    %4222 = vdwg.mxu0
    %4223 = vmatpush.bf16.msra.mxu0 %v2704
    %4224 = vmatpush.bf16.msra.mxu0 %v2689
    %4225 = vmatpush.bf16.msra.mxu0 %v2674
    %4226 = vmatpush.bf16.msra.mxu0 %v2659
    %4227 = vmatpush.bf16.msra.mxu0 %v2644
    %4228 = vmatpush.bf16.msra.mxu0 %v2629
    %4229 = vmatpush.bf16.msra.mxu0 %v2614
    %4230 = vmatpush.bf16.msra.mxu0 %v2599
    %4231 = vmatmul.bf16.gmra.mxu0 %v986
    %v4232 = vpop.f32.mrf.mxu0
    %v4233 = vadd.f32 %v4219, %v4232
    %v4234 = vpop.f32.mrf.mxu0
    %v4235 = vadd.f32 %v4221, %v4234
    %4236 = vdwg.mxu0
    %4237 = vmatpush.bf16.msra.mxu0 %v2824
    %4238 = vmatpush.bf16.msra.mxu0 %v2809
    %4239 = vmatpush.bf16.msra.mxu0 %v2794
    %4240 = vmatpush.bf16.msra.mxu0 %v2779
    %4241 = vmatpush.bf16.msra.mxu0 %v2764
    %4242 = vmatpush.bf16.msra.mxu0 %v2749
    %4243 = vmatpush.bf16.msra.mxu0 %v2734
    %4244 = vmatpush.bf16.msra.mxu0 %v2719
    %4245 = vmatmul.bf16.gmra.mxu0 %v987
    %v4246 = vpop.f32.mrf.mxu0
    %v4247 = vadd.f32 %v4233, %v4246
    %v4248 = vpop.f32.mrf.mxu0
    %v4249 = vadd.f32 %v4235, %v4248
    %4250 = vdwg.mxu0
    %4251 = vmatpush.bf16.msra.mxu0 %v2944
    %4252 = vmatpush.bf16.msra.mxu0 %v2929
    %4253 = vmatpush.bf16.msra.mxu0 %v2914
    %4254 = vmatpush.bf16.msra.mxu0 %v2899
    %4255 = vmatpush.bf16.msra.mxu0 %v2884
    %4256 = vmatpush.bf16.msra.mxu0 %v2869
    %4257 = vmatpush.bf16.msra.mxu0 %v2854
    %4258 = vmatpush.bf16.msra.mxu0 %v2839
    %4259 = vmatmul.bf16.gmra.mxu0 %v988
    %v4260 = vpop.f32.mrf.mxu0
    %v4261 = vadd.f32 %v4247, %v4260
    %v4262 = vpop.f32.mrf.mxu0
    %v4263 = vadd.f32 %v4249, %v4262
    %4264 = vdwg.mxu0
    %v4265 = vld [vmem:[%s4] sm:$0xff]
    %v4266 = vld [vmem:[%s4 + $0x8] sm:$0xff]
    %v4269 = vperm.slane %v4265, 0
    %v4270 = vperm.slane %v4265, 1
    %v4271 = vperm.slane %v4265, 2
    %v4272 = vperm.slane %v4265, 3
    %v4273 = vperm.slane %v4265, 4
    %v4274 = vperm.slane %v4265, 5
    %v4275 = vperm.slane %v4265, 6
    %v4276 = vperm.slane %v4265, 7
    %v4277 = vperm.slane %v4266, 0
    %v4278 = vperm.slane %v4266, 1
    %v4279 = vperm.slane %v4266, 2
    %v4280 = vperm.slane %v4266, 3
    %v4281 = vperm.slane %v4266, 4
    %v4282 = vperm.slane %v4266, 5
    %v4283 = vperm.slane %v4266, 6
    %v4299 = vadd.f32 %v3477, %v4269
    %v4300 = vadd.f32 %v3533, %v4270
    %v4301 = vadd.f32 %v3589, %v4271
    %v4302 = vadd.f32 %v3645, %v4272
    %v4303 = vadd.f32 %v3701, %v4273
    %v4304 = vadd.f32 %v3757, %v4274
    %v4305 = vadd.f32 %v3813, %v4275
    %v4306 = vadd.f32 %v3869, %v4276
    %v4307 = vadd.f32 %v3925, %v4277
    %v4308 = vadd.f32 %v3981, %v4278
    %v4309 = vadd.f32 %v4037, %v4279
    %v4310 = vadd.f32 %v4093, %v4280
    %v4311 = vadd.f32 %v4149, %v4281
    %v4312 = vadd.f32 %v4205, %v4282
    %v4313 = vadd.f32 %v4261, %v4283
    %v4314 = vadd.f32 %v3479, %v4269
    %v4315 = vadd.f32 %v3535, %v4270
    %v4316 = vadd.f32 %v3591, %v4271
    %v4317 = vadd.f32 %v3647, %v4272
    %v4318 = vadd.f32 %v3703, %v4273
    %v4319 = vadd.f32 %v3759, %v4274
    %v4320 = vadd.f32 %v3815, %v4275
    %v4321 = vadd.f32 %v3871, %v4276
    %v4322 = vadd.f32 %v3927, %v4277
    %v4323 = vadd.f32 %v3983, %v4278
    %v4324 = vadd.f32 %v4039, %v4279
    %v4325 = vadd.f32 %v4095, %v4280
    %v4326 = vadd.f32 %v4151, %v4281
    %v4327 = vadd.f32 %v4207, %v4282
    %v4328 = vadd.f32 %v4263, %v4283
    %vm4329 = vcmp.gt.f32.partialorder %v4299, 0.0
    %vm4330 = vcmp.gt.f32.partialorder %v4300, 0.0
    %vm4331 = vcmp.gt.f32.partialorder %v4301, 0.0
    %vm4332 = vcmp.gt.f32.partialorder %v4302, 0.0
    %vm4333 = vcmp.gt.f32.partialorder %v4303, 0.0
    %vm4334 = vcmp.gt.f32.partialorder %v4304, 0.0
    %vm4335 = vcmp.gt.f32.partialorder %v4305, 0.0
    %vm4336 = vcmp.gt.f32.partialorder %v4306, 0.0
    %vm4337 = vcmp.gt.f32.partialorder %v4314, 0.0
    %vm4338 = vcmp.gt.f32.partialorder %v4315, 0.0
    %vm4339 = vcmp.gt.f32.partialorder %v4316, 0.0
    %vm4340 = vcmp.gt.f32.partialorder %v4317, 0.0
    %vm4341 = vcmp.gt.f32.partialorder %v4318, 0.0
    %vm4342 = vcmp.gt.f32.partialorder %v4319, 0.0
    %vm4343 = vcmp.gt.f32.partialorder %v4320, 0.0
    %vm4344 = vcmp.gt.f32.partialorder %v4321, 0.0
    %v4345 = vmul.f32 %v4299, 0.2
    %v4346 = vmul.f32 %v4300, 0.2
    %v4347 = vmul.f32 %v4301, 0.2
    %v4348 = vmul.f32 %v4302, 0.2
    %v4349 = vmul.f32 %v4303, 0.2
    %v4350 = vmul.f32 %v4304, 0.2
    %v4351 = vmul.f32 %v4305, 0.2
    %v4352 = vmul.f32 %v4306, 0.2
    %v4353 = vmul.f32 %v4314, 0.2
    %v4354 = vmul.f32 %v4315, 0.2
    %v4355 = vmul.f32 %v4316, 0.2
    %v4356 = vmul.f32 %v4317, 0.2
    %v4357 = vmul.f32 %v4318, 0.2
    %v4358 = vmul.f32 %v4319, 0.2
    %v4359 = vmul.f32 %v4320, 0.2
    %v4360 = vmul.f32 %v4321, 0.2
    %v4361 = vsel %vm4329, %v4299, %v4345
    %v4362 = vsel %vm4330, %v4300, %v4346
    %v4363 = vsel %vm4331, %v4301, %v4347
    %v4364 = vsel %vm4332, %v4302, %v4348
    %v4365 = vsel %vm4333, %v4303, %v4349
    %v4366 = vsel %vm4334, %v4304, %v4350
    %v4367 = vsel %vm4335, %v4305, %v4351
    %v4368 = vsel %vm4336, %v4306, %v4352
    %v4369 = vsel %vm4337, %v4314, %v4353
    %v4370 = vsel %vm4338, %v4315, %v4354
    %v4371 = vsel %vm4339, %v4316, %v4355
    %v4372 = vsel %vm4340, %v4317, %v4356
    %v4373 = vsel %vm4341, %v4318, %v4357
    %v4374 = vsel %vm4342, %v4319, %v4358
    %v4375 = vsel %vm4343, %v4320, %v4359
    %v4376 = vsel %vm4344, %v4321, %v4360
    %v4377 = vpack.c.bf16 %v4369, %v4361
    %v4378 = vpack.c.bf16 %v4370, %v4362
    %v4379 = vpack.c.bf16 %v4371, %v4363
    %v4380 = vpack.c.bf16 %v4372, %v4364
    %v4381 = vpack.c.bf16 %v4373, %v4365
    %v4382 = vpack.c.bf16 %v4374, %v4366
    %v4383 = vpack.c.bf16 %v4375, %v4367
    %v4384 = vpack.c.bf16 %v4376, %v4368
    %v4385 = vld [vmem:[#allocation2] sm:$0xff]
    %v4386 = vld [vmem:[#allocation2 + $0x8] sm:$0xff]
    %v4387 = vld [vmem:[#allocation2 + $0x10] sm:$0xff]
    %v4388 = vld [vmem:[#allocation2 + $0x18] sm:$0xff]
    %v4389 = vld [vmem:[#allocation2 + $0x20] sm:$0xff]
    %v4390 = vld [vmem:[#allocation2 + $0x28] sm:$0xff]
    %v4391 = vld [vmem:[#allocation2 + $0x30] sm:$0xff]
    %v4392 = vld [vmem:[#allocation2 + $0x38] sm:$0xff]
    %v4393 = vld [vmem:[#allocation2 + $0x40] sm:$0xff]
    %v4394 = vld [vmem:[#allocation2 + $0x48] sm:$0xff]
    %v4395 = vld [vmem:[#allocation2 + $0x50] sm:$0xff]
    %v4396 = vld [vmem:[#allocation2 + $0x58] sm:$0xff]
    %v4397 = vld [vmem:[#allocation2 + $0x60] sm:$0xff]
    %v4398 = vld [vmem:[#allocation2 + $0x68] sm:$0xff]
    %v4399 = vld [vmem:[#allocation2 + $0x70] sm:$0xff]
    %v4400 = vld [vmem:[#allocation2 + $0x78] sm:$0xff]
    %v4401 = vld [vmem:[#allocation2 + $0x80] sm:$0xff]
    %v4402 = vld [vmem:[#allocation2 + $0x88] sm:$0xff]
    %v4403 = vld [vmem:[#allocation2 + $0x90] sm:$0xff]
    %v4404 = vld [vmem:[#allocation2 + $0x98] sm:$0xff]
    %v4405 = vld [vmem:[#allocation2 + $0xa0] sm:$0xff]
    %v4406 = vld [vmem:[#allocation2 + $0xa8] sm:$0xff]
    %v4407 = vld [vmem:[#allocation2 + $0xb0] sm:$0xff]
    %v4408 = vld [vmem:[#allocation2 + $0xb8] sm:$0xff]
    %v4409 = vld [vmem:[#allocation2 + $0xc0] sm:$0xff]
    %v4410 = vld [vmem:[#allocation2 + $0xc8] sm:$0xff]
    %v4411 = vld [vmem:[#allocation2 + $0xd0] sm:$0xff]
    %v4412 = vld [vmem:[#allocation2 + $0xd8] sm:$0xff]
    %v4413 = vld [vmem:[#allocation2 + $0xe0] sm:$0xff]
    %v4414 = vld [vmem:[#allocation2 + $0xe8] sm:$0xff]
    %v4415 = vld [vmem:[#allocation2 + $0xf0] sm:$0xff]
    %v4416 = vld [vmem:[#allocation2 + $0xf8] sm:$0xff]
    %v4417 = vld [vmem:[#allocation2 + $0x100] sm:$0xff]
    %v4418 = vld [vmem:[#allocation2 + $0x108] sm:$0xff]
    %v4419 = vld [vmem:[#allocation2 + $0x110] sm:$0xff]
    %v4420 = vld [vmem:[#allocation2 + $0x118] sm:$0xff]
    %v4421 = vld [vmem:[#allocation2 + $0x120] sm:$0xff]
    %v4422 = vld [vmem:[#allocation2 + $0x128] sm:$0xff]
    %v4423 = vld [vmem:[#allocation2 + $0x130] sm:$0xff]
    %v4424 = vld [vmem:[#allocation2 + $0x138] sm:$0xff]
    %v4425 = vld [vmem:[#allocation2 + $0x140] sm:$0xff]
    %v4426 = vld [vmem:[#allocation2 + $0x148] sm:$0xff]
    %v4427 = vld [vmem:[#allocation2 + $0x150] sm:$0xff]
    %v4428 = vld [vmem:[#allocation2 + $0x158] sm:$0xff]
    %v4429 = vld [vmem:[#allocation2 + $0x160] sm:$0xff]
    %v4430 = vld [vmem:[#allocation2 + $0x168] sm:$0xff]
    %v4431 = vld [vmem:[#allocation2 + $0x170] sm:$0xff]
    %v4432 = vld [vmem:[#allocation2 + $0x178] sm:$0xff]
    %v4433 = vld [vmem:[#allocation2 + $0x180] sm:$0xff]
    %v4434 = vld [vmem:[#allocation2 + $0x188] sm:$0xff]
    %v4435 = vld [vmem:[#allocation2 + $0x190] sm:$0xff]
    %v4436 = vld [vmem:[#allocation2 + $0x198] sm:$0xff]
    %v4437 = vld [vmem:[#allocation2 + $0x1a0] sm:$0xff]
    %v4438 = vld [vmem:[#allocation2 + $0x1a8] sm:$0xff]
    %v4439 = vld [vmem:[#allocation2 + $0x1b0] sm:$0xff]
    %v4440 = vld [vmem:[#allocation2 + $0x1b8] sm:$0xff]
    %v4441 = vld [vmem:[#allocation2 + $0x1c0] sm:$0xff]
    %v4442 = vld [vmem:[#allocation2 + $0x1c8] sm:$0xff]
    %v4443 = vld [vmem:[#allocation2 + $0x1d0] sm:$0xff]
    %v4444 = vld [vmem:[#allocation2 + $0x1d8] sm:$0xff]
    %v4445 = vld [vmem:[#allocation2 + $0x1e0] sm:$0xff]
    %v4446 = vld [vmem:[#allocation2 + $0x1e8] sm:$0xff]
    %v4447 = vld [vmem:[#allocation2 + $0x1f0] sm:$0xff]
    %v4448 = vld [vmem:[#allocation2 + $0x1f8] sm:$0xff]
    %v4449 = vld [vmem:[#allocation2 + $0x200] sm:$0xff]
    %v4450 = vld [vmem:[#allocation2 + $0x208] sm:$0xff]
    %v4451 = vld [vmem:[#allocation2 + $0x210] sm:$0xff]
    %v4452 = vld [vmem:[#allocation2 + $0x218] sm:$0xff]
    %v4453 = vld [vmem:[#allocation2 + $0x220] sm:$0xff]
    %v4454 = vld [vmem:[#allocation2 + $0x228] sm:$0xff]
    %v4455 = vld [vmem:[#allocation2 + $0x230] sm:$0xff]
    %v4456 = vld [vmem:[#allocation2 + $0x238] sm:$0xff]
    %v4457 = vld [vmem:[#allocation2 + $0x240] sm:$0xff]
    %v4458 = vld [vmem:[#allocation2 + $0x248] sm:$0xff]
    %v4459 = vld [vmem:[#allocation2 + $0x250] sm:$0xff]
    %v4460 = vld [vmem:[#allocation2 + $0x258] sm:$0xff]
    %v4461 = vld [vmem:[#allocation2 + $0x260] sm:$0xff]
    %v4462 = vld [vmem:[#allocation2 + $0x268] sm:$0xff]
    %v4463 = vld [vmem:[#allocation2 + $0x270] sm:$0xff]
    %v4464 = vld [vmem:[#allocation2 + $0x278] sm:$0xff]
    %v4465 = vld [vmem:[#allocation2 + $0x280] sm:$0xff]
    %v4466 = vld [vmem:[#allocation2 + $0x288] sm:$0xff]
    %v4467 = vld [vmem:[#allocation2 + $0x290] sm:$0xff]
    %v4468 = vld [vmem:[#allocation2 + $0x298] sm:$0xff]
    %v4469 = vld [vmem:[#allocation2 + $0x2a0] sm:$0xff]
    %v4470 = vld [vmem:[#allocation2 + $0x2a8] sm:$0xff]
    %v4471 = vld [vmem:[#allocation2 + $0x2b0] sm:$0xff]
    %v4472 = vld [vmem:[#allocation2 + $0x2b8] sm:$0xff]
    %v4473 = vld [vmem:[#allocation2 + $0x2c0] sm:$0xff]
    %v4474 = vld [vmem:[#allocation2 + $0x2c8] sm:$0xff]
    %v4475 = vld [vmem:[#allocation2 + $0x2d0] sm:$0xff]
    %v4476 = vld [vmem:[#allocation2 + $0x2d8] sm:$0xff]
    %v4477 = vld [vmem:[#allocation2 + $0x2e0] sm:$0xff]
    %v4478 = vld [vmem:[#allocation2 + $0x2e8] sm:$0xff]
    %v4479 = vld [vmem:[#allocation2 + $0x2f0] sm:$0xff]
    %v4480 = vld [vmem:[#allocation2 + $0x2f8] sm:$0xff]
    %v4481 = vld [vmem:[#allocation2 + $0x300] sm:$0xff]
    %v4482 = vld [vmem:[#allocation2 + $0x308] sm:$0xff]
    %v4483 = vld [vmem:[#allocation2 + $0x310] sm:$0xff]
    %v4484 = vld [vmem:[#allocation2 + $0x318] sm:$0xff]
    %v4485 = vld [vmem:[#allocation2 + $0x320] sm:$0xff]
    %v4486 = vld [vmem:[#allocation2 + $0x328] sm:$0xff]
    %v4487 = vld [vmem:[#allocation2 + $0x330] sm:$0xff]
    %v4488 = vld [vmem:[#allocation2 + $0x338] sm:$0xff]
    %v4489 = vld [vmem:[#allocation2 + $0x340] sm:$0xff]
    %v4490 = vld [vmem:[#allocation2 + $0x348] sm:$0xff]
    %v4491 = vld [vmem:[#allocation2 + $0x350] sm:$0xff]
    %v4492 = vld [vmem:[#allocation2 + $0x358] sm:$0xff]
    %v4493 = vld [vmem:[#allocation2 + $0x360] sm:$0xff]
    %v4494 = vld [vmem:[#allocation2 + $0x368] sm:$0xff]
    %v4495 = vld [vmem:[#allocation2 + $0x370] sm:$0xff]
    %v4496 = vld [vmem:[#allocation2 + $0x378] sm:$0xff]
    %v4497 = vld [vmem:[#allocation2 + $0x380] sm:$0xff]
    %v4498 = vld [vmem:[#allocation2 + $0x388] sm:$0xff]
    %v4499 = vld [vmem:[#allocation2 + $0x390] sm:$0xff]
    %v4500 = vld [vmem:[#allocation2 + $0x398] sm:$0xff]
    %v4501 = vld [vmem:[#allocation2 + $0x3a0] sm:$0xff]
    %v4502 = vld [vmem:[#allocation2 + $0x3a8] sm:$0xff]
    %v4503 = vld [vmem:[#allocation2 + $0x3b0] sm:$0xff]
    %v4504 = vld [vmem:[#allocation2 + $0x3b8] sm:$0xff]
    %v4505 = vld [vmem:[#allocation2 + $0x3c0] sm:$0xff]
    %v4506 = vld [vmem:[#allocation2 + $0x3c8] sm:$0xff]
    %v4507 = vld [vmem:[#allocation2 + $0x3d0] sm:$0xff]
    %v4508 = vld [vmem:[#allocation2 + $0x3d8] sm:$0xff]
    %v4509 = vld [vmem:[#allocation2 + $0x3e0] sm:$0xff]
    %v4510 = vld [vmem:[#allocation2 + $0x3e8] sm:$0xff]
    %v4511 = vld [vmem:[#allocation2 + $0x3f0] sm:$0xff]
    %v4512 = vld [vmem:[#allocation2 + $0x3f8] sm:$0xff]
    %v4513 = vld [vmem:[#allocation2 + $0x400] sm:$0xff]
    %v4514 = vld [vmem:[#allocation2 + $0x408] sm:$0xff]
    %v4515 = vld [vmem:[#allocation2 + $0x410] sm:$0xff]
    %v4516 = vld [vmem:[#allocation2 + $0x418] sm:$0xff]
    %v4517 = vld [vmem:[#allocation2 + $0x420] sm:$0xff]
    %v4518 = vld [vmem:[#allocation2 + $0x428] sm:$0xff]
    %v4519 = vld [vmem:[#allocation2 + $0x430] sm:$0xff]
    %v4520 = vld [vmem:[#allocation2 + $0x438] sm:$0xff]
    %v4521 = vld [vmem:[#allocation2 + $0x440] sm:$0xff]
    %v4522 = vld [vmem:[#allocation2 + $0x448] sm:$0xff]
    %v4523 = vld [vmem:[#allocation2 + $0x450] sm:$0xff]
    %v4524 = vld [vmem:[#allocation2 + $0x458] sm:$0xff]
    %v4525 = vld [vmem:[#allocation2 + $0x460] sm:$0xff]
    %v4526 = vld [vmem:[#allocation2 + $0x468] sm:$0xff]
    %v4527 = vld [vmem:[#allocation2 + $0x470] sm:$0xff]
    %v4528 = vld [vmem:[#allocation2 + $0x478] sm:$0xff]
    %v4529 = vld [vmem:[#allocation2 + $0x480] sm:$0xff]
    %v4530 = vld [vmem:[#allocation2 + $0x488] sm:$0xff]
    %v4531 = vld [vmem:[#allocation2 + $0x490] sm:$0xff]
    %v4532 = vld [vmem:[#allocation2 + $0x498] sm:$0xff]
    %v4533 = vld [vmem:[#allocation2 + $0x4a0] sm:$0xff]
    %v4534 = vld [vmem:[#allocation2 + $0x4a8] sm:$0xff]
    %v4535 = vld [vmem:[#allocation2 + $0x4b0] sm:$0xff]
    %v4536 = vld [vmem:[#allocation2 + $0x4b8] sm:$0xff]
    %v4537 = vld [vmem:[#allocation2 + $0x4c0] sm:$0xff]
    %v4538 = vld [vmem:[#allocation2 + $0x4c8] sm:$0xff]
    %v4539 = vld [vmem:[#allocation2 + $0x4d0] sm:$0xff]
    %v4540 = vld [vmem:[#allocation2 + $0x4d8] sm:$0xff]
    %v4541 = vld [vmem:[#allocation2 + $0x4e0] sm:$0xff]
    %v4542 = vld [vmem:[#allocation2 + $0x4e8] sm:$0xff]
    %v4543 = vld [vmem:[#allocation2 + $0x4f0] sm:$0xff]
    %v4544 = vld [vmem:[#allocation2 + $0x4f8] sm:$0xff]
    %v4545 = vld [vmem:[#allocation2 + $0x500] sm:$0xff]
    %v4546 = vld [vmem:[#allocation2 + $0x508] sm:$0xff]
    %v4547 = vld [vmem:[#allocation2 + $0x510] sm:$0xff]
    %v4548 = vld [vmem:[#allocation2 + $0x518] sm:$0xff]
    %v4549 = vld [vmem:[#allocation2 + $0x520] sm:$0xff]
    %v4550 = vld [vmem:[#allocation2 + $0x528] sm:$0xff]
    %v4551 = vld [vmem:[#allocation2 + $0x530] sm:$0xff]
    %v4552 = vld [vmem:[#allocation2 + $0x538] sm:$0xff]
    %v4553 = vld [vmem:[#allocation2 + $0x540] sm:$0xff]
    %v4554 = vld [vmem:[#allocation2 + $0x548] sm:$0xff]
    %v4555 = vld [vmem:[#allocation2 + $0x550] sm:$0xff]
    %v4556 = vld [vmem:[#allocation2 + $0x558] sm:$0xff]
    %v4557 = vld [vmem:[#allocation2 + $0x560] sm:$0xff]
    %v4558 = vld [vmem:[#allocation2 + $0x568] sm:$0xff]
    %v4559 = vld [vmem:[#allocation2 + $0x570] sm:$0xff]
    %v4560 = vld [vmem:[#allocation2 + $0x578] sm:$0xff]
    %v4561 = vld [vmem:[#allocation2 + $0x580] sm:$0xff]
    %v4562 = vld [vmem:[#allocation2 + $0x588] sm:$0xff]
    %v4563 = vld [vmem:[#allocation2 + $0x590] sm:$0xff]
    %v4564 = vld [vmem:[#allocation2 + $0x598] sm:$0xff]
    %v4565 = vld [vmem:[#allocation2 + $0x5a0] sm:$0xff]
    %v4566 = vld [vmem:[#allocation2 + $0x5a8] sm:$0xff]
    %v4567 = vld [vmem:[#allocation2 + $0x5b0] sm:$0xff]
    %v4568 = vld [vmem:[#allocation2 + $0x5b8] sm:$0xff]
    %v4569 = vld [vmem:[#allocation2 + $0x5c0] sm:$0xff]
    %v4570 = vld [vmem:[#allocation2 + $0x5c8] sm:$0xff]
    %v4571 = vld [vmem:[#allocation2 + $0x5d0] sm:$0xff]
    %v4572 = vld [vmem:[#allocation2 + $0x5d8] sm:$0xff]
    %v4573 = vld [vmem:[#allocation2 + $0x5e0] sm:$0xff]
    %v4574 = vld [vmem:[#allocation2 + $0x5e8] sm:$0xff]
    %v4575 = vld [vmem:[#allocation2 + $0x5f0] sm:$0xff]
    %v4576 = vld [vmem:[#allocation2 + $0x5f8] sm:$0xff]
    %v4577 = vld [vmem:[#allocation2 + $0x600] sm:$0xff]
    %v4578 = vld [vmem:[#allocation2 + $0x608] sm:$0xff]
    %v4579 = vld [vmem:[#allocation2 + $0x610] sm:$0xff]
    %v4580 = vld [vmem:[#allocation2 + $0x618] sm:$0xff]
    %v4581 = vld [vmem:[#allocation2 + $0x620] sm:$0xff]
    %v4582 = vld [vmem:[#allocation2 + $0x628] sm:$0xff]
    %v4583 = vld [vmem:[#allocation2 + $0x630] sm:$0xff]
    %v4584 = vld [vmem:[#allocation2 + $0x638] sm:$0xff]
    %v4585 = vld [vmem:[#allocation2 + $0x640] sm:$0xff]
    %v4586 = vld [vmem:[#allocation2 + $0x648] sm:$0xff]
    %v4587 = vld [vmem:[#allocation2 + $0x650] sm:$0xff]
    %v4588 = vld [vmem:[#allocation2 + $0x658] sm:$0xff]
    %v4589 = vld [vmem:[#allocation2 + $0x660] sm:$0xff]
    %v4590 = vld [vmem:[#allocation2 + $0x668] sm:$0xff]
    %v4591 = vld [vmem:[#allocation2 + $0x670] sm:$0xff]
    %v4592 = vld [vmem:[#allocation2 + $0x678] sm:$0xff]
    %v4593 = vld [vmem:[#allocation2 + $0x680] sm:$0xff]
    %v4594 = vld [vmem:[#allocation2 + $0x688] sm:$0xff]
    %v4595 = vld [vmem:[#allocation2 + $0x690] sm:$0xff]
    %v4596 = vld [vmem:[#allocation2 + $0x698] sm:$0xff]
    %v4597 = vld [vmem:[#allocation2 + $0x6a0] sm:$0xff]
    %v4598 = vld [vmem:[#allocation2 + $0x6a8] sm:$0xff]
    %v4599 = vld [vmem:[#allocation2 + $0x6b0] sm:$0xff]
    %v4600 = vld [vmem:[#allocation2 + $0x6b8] sm:$0xff]
    %v4601 = vld [vmem:[#allocation2 + $0x6c0] sm:$0xff]
    %v4602 = vld [vmem:[#allocation2 + $0x6c8] sm:$0xff]
    %v4603 = vld [vmem:[#allocation2 + $0x6d0] sm:$0xff]
    %v4604 = vld [vmem:[#allocation2 + $0x6d8] sm:$0xff]
    %v4605 = vld [vmem:[#allocation2 + $0x6e0] sm:$0xff]
    %v4606 = vld [vmem:[#allocation2 + $0x6e8] sm:$0xff]
    %v4607 = vld [vmem:[#allocation2 + $0x6f0] sm:$0xff]
    %v4608 = vld [vmem:[#allocation2 + $0x6f8] sm:$0xff]
    %v4609 = vld [vmem:[#allocation2 + $0x700] sm:$0xff]
    %v4610 = vld [vmem:[#allocation2 + $0x708] sm:$0xff]
    %v4611 = vld [vmem:[#allocation2 + $0x710] sm:$0xff]
    %v4612 = vld [vmem:[#allocation2 + $0x718] sm:$0xff]
    %v4613 = vld [vmem:[#allocation2 + $0x720] sm:$0xff]
    %v4614 = vld [vmem:[#allocation2 + $0x728] sm:$0xff]
    %v4615 = vld [vmem:[#allocation2 + $0x730] sm:$0xff]
    %v4616 = vld [vmem:[#allocation2 + $0x738] sm:$0xff]
    %v4617 = vld [vmem:[#allocation2 + $0x740] sm:$0xff]
    %v4618 = vld [vmem:[#allocation2 + $0x748] sm:$0xff]
    %v4619 = vld [vmem:[#allocation2 + $0x750] sm:$0xff]
    %v4620 = vld [vmem:[#allocation2 + $0x758] sm:$0xff]
    %v4621 = vld [vmem:[#allocation2 + $0x760] sm:$0xff]
    %v4622 = vld [vmem:[#allocation2 + $0x768] sm:$0xff]
    %v4623 = vld [vmem:[#allocation2 + $0x770] sm:$0xff]
    %v4624 = vld [vmem:[#allocation2 + $0x778] sm:$0xff]
    %v4625 = vld [vmem:[#allocation2 + $0x780] sm:$0xff]
    %v4626 = vld [vmem:[#allocation2 + $0x788] sm:$0xff]
    %v4627 = vld [vmem:[#allocation2 + $0x790] sm:$0xff]
    %v4628 = vld [vmem:[#allocation2 + $0x798] sm:$0xff]
    %v4629 = vld [vmem:[#allocation2 + $0x7a0] sm:$0xff]
    %v4630 = vld [vmem:[#allocation2 + $0x7a8] sm:$0xff]
    %v4631 = vld [vmem:[#allocation2 + $0x7b0] sm:$0xff]
    %v4632 = vld [vmem:[#allocation2 + $0x7b8] sm:$0xff]
    %v4633 = vld [vmem:[#allocation2 + $0x7c0] sm:$0xff]
    %v4634 = vld [vmem:[#allocation2 + $0x7c8] sm:$0xff]
    %v4635 = vld [vmem:[#allocation2 + $0x7d0] sm:$0xff]
    %v4636 = vld [vmem:[#allocation2 + $0x7d8] sm:$0xff]
    %v4637 = vld [vmem:[#allocation2 + $0x7e0] sm:$0xff]
    %v4638 = vld [vmem:[#allocation2 + $0x7e8] sm:$0xff]
    %v4639 = vld [vmem:[#allocation2 + $0x7f0] sm:$0xff]
    %v4640 = vld [vmem:[#allocation2 + $0x7f8] sm:$0xff]
    %v4897 = vunpack.c.l.b16 %v4385
    %v4898 = vunpack.c.h.b16 %v4385
    %v4899 = vunpack.c.l.b16 %v4386
    %v4900 = vunpack.c.h.b16 %v4386
    %v4901 = vunpack.c.l.b16 %v4387
    %v4902 = vunpack.c.h.b16 %v4387
    %v4903 = vunpack.c.l.b16 %v4388
    %v4904 = vunpack.c.h.b16 %v4388
    %v4905 = vunpack.c.l.b16 %v4389
    %v4906 = vunpack.c.h.b16 %v4389
    %v4907 = vunpack.c.l.b16 %v4390
    %v4908 = vunpack.c.h.b16 %v4390
    %v4909 = vunpack.c.l.b16 %v4391
    %v4910 = vunpack.c.h.b16 %v4391
    %v4911 = vunpack.c.l.b16 %v4392
    %v4912 = vunpack.c.h.b16 %v4392
    %v4913 = vunpack.c.l.b16 %v4393
    %v4914 = vunpack.c.h.b16 %v4393
    %v4915 = vunpack.c.l.b16 %v4394
    %v4916 = vunpack.c.h.b16 %v4394
    %v4917 = vunpack.c.l.b16 %v4395
    %v4918 = vunpack.c.h.b16 %v4395
    %v4919 = vunpack.c.l.b16 %v4396
    %v4920 = vunpack.c.h.b16 %v4396
    %v4921 = vunpack.c.l.b16 %v4397
    %v4922 = vunpack.c.h.b16 %v4397
    %v4923 = vunpack.c.l.b16 %v4398
    %v4924 = vunpack.c.h.b16 %v4398
    %v4925 = vunpack.c.l.b16 %v4399
    %v4926 = vunpack.c.h.b16 %v4399
    %v4927 = vunpack.c.l.b16 %v4400
    %v4928 = vunpack.c.h.b16 %v4400
    %v4929 = vunpack.c.l.b16 %v4401
    %v4930 = vunpack.c.h.b16 %v4401
    %v4931 = vunpack.c.l.b16 %v4402
    %v4932 = vunpack.c.h.b16 %v4402
    %v4933 = vunpack.c.l.b16 %v4403
    %v4934 = vunpack.c.h.b16 %v4403
    %v4935 = vunpack.c.l.b16 %v4404
    %v4936 = vunpack.c.h.b16 %v4404
    %v4937 = vunpack.c.l.b16 %v4405
    %v4938 = vunpack.c.h.b16 %v4405
    %v4939 = vunpack.c.l.b16 %v4406
    %v4940 = vunpack.c.h.b16 %v4406
    %v4941 = vunpack.c.l.b16 %v4407
    %v4942 = vunpack.c.h.b16 %v4407
    %v4943 = vunpack.c.l.b16 %v4408
    %v4944 = vunpack.c.h.b16 %v4408
    %v4945 = vunpack.c.l.b16 %v4409
    %v4946 = vunpack.c.h.b16 %v4409
    %v4947 = vunpack.c.l.b16 %v4410
    %v4948 = vunpack.c.h.b16 %v4410
    %v4949 = vunpack.c.l.b16 %v4411
    %v4950 = vunpack.c.h.b16 %v4411
    %v4951 = vunpack.c.l.b16 %v4412
    %v4952 = vunpack.c.h.b16 %v4412
    %v4953 = vunpack.c.l.b16 %v4413
    %v4954 = vunpack.c.h.b16 %v4413
    %v4955 = vunpack.c.l.b16 %v4414
    %v4956 = vunpack.c.h.b16 %v4414
    %v4957 = vunpack.c.l.b16 %v4415
    %v4958 = vunpack.c.h.b16 %v4415
    %v4959 = vunpack.c.l.b16 %v4416
    %v4960 = vunpack.c.h.b16 %v4416
    %v4961 = vunpack.c.l.b16 %v4417
    %v4962 = vunpack.c.h.b16 %v4417
    %v4963 = vunpack.c.l.b16 %v4418
    %v4964 = vunpack.c.h.b16 %v4418
    %v4965 = vunpack.c.l.b16 %v4419
    %v4966 = vunpack.c.h.b16 %v4419
    %v4967 = vunpack.c.l.b16 %v4420
    %v4968 = vunpack.c.h.b16 %v4420
    %v4969 = vunpack.c.l.b16 %v4421
    %v4970 = vunpack.c.h.b16 %v4421
    %v4971 = vunpack.c.l.b16 %v4422
    %v4972 = vunpack.c.h.b16 %v4422
    %v4973 = vunpack.c.l.b16 %v4423
    %v4974 = vunpack.c.h.b16 %v4423
    %v4975 = vunpack.c.l.b16 %v4424
    %v4976 = vunpack.c.h.b16 %v4424
    %v4977 = vunpack.c.l.b16 %v4425
    %v4978 = vunpack.c.h.b16 %v4425
    %v4979 = vunpack.c.l.b16 %v4426
    %v4980 = vunpack.c.h.b16 %v4426
    %v4981 = vunpack.c.l.b16 %v4427
    %v4982 = vunpack.c.h.b16 %v4427
    %v4983 = vunpack.c.l.b16 %v4428
    %v4984 = vunpack.c.h.b16 %v4428
    %v4985 = vunpack.c.l.b16 %v4429
    %v4986 = vunpack.c.h.b16 %v4429
    %v4987 = vunpack.c.l.b16 %v4430
    %v4988 = vunpack.c.h.b16 %v4430
    %v4989 = vunpack.c.l.b16 %v4431
    %v4990 = vunpack.c.h.b16 %v4431
    %v4991 = vunpack.c.l.b16 %v4432
    %v4992 = vunpack.c.h.b16 %v4432
    %v4993 = vunpack.c.l.b16 %v4433
    %v4994 = vunpack.c.h.b16 %v4433
    %v4995 = vunpack.c.l.b16 %v4434
    %v4996 = vunpack.c.h.b16 %v4434
    %v4997 = vunpack.c.l.b16 %v4435
    %v4998 = vunpack.c.h.b16 %v4435
    %v4999 = vunpack.c.l.b16 %v4436
    %v5000 = vunpack.c.h.b16 %v4436
    %v5001 = vunpack.c.l.b16 %v4437
    %v5002 = vunpack.c.h.b16 %v4437
    %v5003 = vunpack.c.l.b16 %v4438
    %v5004 = vunpack.c.h.b16 %v4438
    %v5005 = vunpack.c.l.b16 %v4439
    %v5006 = vunpack.c.h.b16 %v4439
    %v5007 = vunpack.c.l.b16 %v4440
    %v5008 = vunpack.c.h.b16 %v4440
    %v5009 = vunpack.c.l.b16 %v4441
    %v5010 = vunpack.c.h.b16 %v4441
    %v5011 = vunpack.c.l.b16 %v4442
    %v5012 = vunpack.c.h.b16 %v4442
    %v5013 = vunpack.c.l.b16 %v4443
    %v5014 = vunpack.c.h.b16 %v4443
    %v5015 = vunpack.c.l.b16 %v4444
    %v5016 = vunpack.c.h.b16 %v4444
    %v5017 = vunpack.c.l.b16 %v4445
    %v5018 = vunpack.c.h.b16 %v4445
    %v5019 = vunpack.c.l.b16 %v4446
    %v5020 = vunpack.c.h.b16 %v4446
    %v5021 = vunpack.c.l.b16 %v4447
    %v5022 = vunpack.c.h.b16 %v4447
    %v5023 = vunpack.c.l.b16 %v4448
    %v5024 = vunpack.c.h.b16 %v4448
    %v5025 = vunpack.c.l.b16 %v4449
    %v5026 = vunpack.c.h.b16 %v4449
    %v5027 = vunpack.c.l.b16 %v4450
    %v5028 = vunpack.c.h.b16 %v4450
    %v5029 = vunpack.c.l.b16 %v4451
    %v5030 = vunpack.c.h.b16 %v4451
    %v5031 = vunpack.c.l.b16 %v4452
    %v5032 = vunpack.c.h.b16 %v4452
    %v5033 = vunpack.c.l.b16 %v4453
    %v5034 = vunpack.c.h.b16 %v4453
    %v5035 = vunpack.c.l.b16 %v4454
    %v5036 = vunpack.c.h.b16 %v4454
    %v5037 = vunpack.c.l.b16 %v4455
    %v5038 = vunpack.c.h.b16 %v4455
    %v5039 = vunpack.c.l.b16 %v4456
    %v5040 = vunpack.c.h.b16 %v4456
    %v5041 = vunpack.c.l.b16 %v4457
    %v5042 = vunpack.c.h.b16 %v4457
    %v5043 = vunpack.c.l.b16 %v4458
    %v5044 = vunpack.c.h.b16 %v4458
    %v5045 = vunpack.c.l.b16 %v4459
    %v5046 = vunpack.c.h.b16 %v4459
    %v5047 = vunpack.c.l.b16 %v4460
    %v5048 = vunpack.c.h.b16 %v4460
    %v5049 = vunpack.c.l.b16 %v4461
    %v5050 = vunpack.c.h.b16 %v4461
    %v5051 = vunpack.c.l.b16 %v4462
    %v5052 = vunpack.c.h.b16 %v4462
    %v5053 = vunpack.c.l.b16 %v4463
    %v5054 = vunpack.c.h.b16 %v4463
    %v5055 = vunpack.c.l.b16 %v4464
    %v5056 = vunpack.c.h.b16 %v4464
    %v5057 = vunpack.c.l.b16 %v4465
    %v5058 = vunpack.c.h.b16 %v4465
    %v5059 = vunpack.c.l.b16 %v4466
    %v5060 = vunpack.c.h.b16 %v4466
    %v5061 = vunpack.c.l.b16 %v4467
    %v5062 = vunpack.c.h.b16 %v4467
    %v5063 = vunpack.c.l.b16 %v4468
    %v5064 = vunpack.c.h.b16 %v4468
    %v5065 = vunpack.c.l.b16 %v4469
    %v5066 = vunpack.c.h.b16 %v4469
    %v5067 = vunpack.c.l.b16 %v4470
    %v5068 = vunpack.c.h.b16 %v4470
    %v5069 = vunpack.c.l.b16 %v4471
    %v5070 = vunpack.c.h.b16 %v4471
    %v5071 = vunpack.c.l.b16 %v4472
    %v5072 = vunpack.c.h.b16 %v4472
    %v5073 = vunpack.c.l.b16 %v4473
    %v5074 = vunpack.c.h.b16 %v4473
    %v5075 = vunpack.c.l.b16 %v4474
    %v5076 = vunpack.c.h.b16 %v4474
    %v5077 = vunpack.c.l.b16 %v4475
    %v5078 = vunpack.c.h.b16 %v4475
    %v5079 = vunpack.c.l.b16 %v4476
    %v5080 = vunpack.c.h.b16 %v4476
    %v5081 = vunpack.c.l.b16 %v4477
    %v5082 = vunpack.c.h.b16 %v4477
    %v5083 = vunpack.c.l.b16 %v4478
    %v5084 = vunpack.c.h.b16 %v4478
    %v5085 = vunpack.c.l.b16 %v4479
    %v5086 = vunpack.c.h.b16 %v4479
    %v5087 = vunpack.c.l.b16 %v4480
    %v5088 = vunpack.c.h.b16 %v4480
    %v5089 = vunpack.c.l.b16 %v4481
    %v5090 = vunpack.c.h.b16 %v4481
    %v5091 = vunpack.c.l.b16 %v4482
    %v5092 = vunpack.c.h.b16 %v4482
    %v5093 = vunpack.c.l.b16 %v4483
    %v5094 = vunpack.c.h.b16 %v4483
    %v5095 = vunpack.c.l.b16 %v4484
    %v5096 = vunpack.c.h.b16 %v4484
    %v5097 = vunpack.c.l.b16 %v4485
    %v5098 = vunpack.c.h.b16 %v4485
    %v5099 = vunpack.c.l.b16 %v4486
    %v5100 = vunpack.c.h.b16 %v4486
    %v5101 = vunpack.c.l.b16 %v4487
    %v5102 = vunpack.c.h.b16 %v4487
    %v5103 = vunpack.c.l.b16 %v4488
    %v5104 = vunpack.c.h.b16 %v4488
    %v5105 = vunpack.c.l.b16 %v4489
    %v5106 = vunpack.c.h.b16 %v4489
    %v5107 = vunpack.c.l.b16 %v4490
    %v5108 = vunpack.c.h.b16 %v4490
    %v5109 = vunpack.c.l.b16 %v4491
    %v5110 = vunpack.c.h.b16 %v4491
    %v5111 = vunpack.c.l.b16 %v4492
    %v5112 = vunpack.c.h.b16 %v4492
    %v5113 = vunpack.c.l.b16 %v4493
    %v5114 = vunpack.c.h.b16 %v4493
    %v5115 = vunpack.c.l.b16 %v4494
    %v5116 = vunpack.c.h.b16 %v4494
    %v5117 = vunpack.c.l.b16 %v4495
    %v5118 = vunpack.c.h.b16 %v4495
    %v5119 = vunpack.c.l.b16 %v4496
    %v5120 = vunpack.c.h.b16 %v4496
    %v5121 = vunpack.c.l.b16 %v4497
    %v5122 = vunpack.c.h.b16 %v4497
    %v5123 = vunpack.c.l.b16 %v4498
    %v5124 = vunpack.c.h.b16 %v4498
    %v5125 = vunpack.c.l.b16 %v4499
    %v5126 = vunpack.c.h.b16 %v4499
    %v5127 = vunpack.c.l.b16 %v4500
    %v5128 = vunpack.c.h.b16 %v4500
    %v5129 = vunpack.c.l.b16 %v4501
    %v5130 = vunpack.c.h.b16 %v4501
    %v5131 = vunpack.c.l.b16 %v4502
    %v5132 = vunpack.c.h.b16 %v4502
    %v5133 = vunpack.c.l.b16 %v4503
    %v5134 = vunpack.c.h.b16 %v4503
    %v5135 = vunpack.c.l.b16 %v4504
    %v5136 = vunpack.c.h.b16 %v4504
    %v5137 = vunpack.c.l.b16 %v4505
    %v5138 = vunpack.c.h.b16 %v4505
    %v5139 = vunpack.c.l.b16 %v4506
    %v5140 = vunpack.c.h.b16 %v4506
    %v5141 = vunpack.c.l.b16 %v4507
    %v5142 = vunpack.c.h.b16 %v4507
    %v5143 = vunpack.c.l.b16 %v4508
    %v5144 = vunpack.c.h.b16 %v4508
    %v5145 = vunpack.c.l.b16 %v4509
    %v5146 = vunpack.c.h.b16 %v4509
    %v5147 = vunpack.c.l.b16 %v4510
    %v5148 = vunpack.c.h.b16 %v4510
    %v5149 = vunpack.c.l.b16 %v4511
    %v5150 = vunpack.c.h.b16 %v4511
    %v5151 = vunpack.c.l.b16 %v4512
    %v5152 = vunpack.c.h.b16 %v4512
    %v5153 = vunpack.c.l.b16 %v4513
    %v5154 = vunpack.c.h.b16 %v4513
    %v5155 = vunpack.c.l.b16 %v4514
    %v5156 = vunpack.c.h.b16 %v4514
    %v5157 = vunpack.c.l.b16 %v4515
    %v5158 = vunpack.c.h.b16 %v4515
    %v5159 = vunpack.c.l.b16 %v4516
    %v5160 = vunpack.c.h.b16 %v4516
    %v5161 = vunpack.c.l.b16 %v4517
    %v5162 = vunpack.c.h.b16 %v4517
    %v5163 = vunpack.c.l.b16 %v4518
    %v5164 = vunpack.c.h.b16 %v4518
    %v5165 = vunpack.c.l.b16 %v4519
    %v5166 = vunpack.c.h.b16 %v4519
    %v5167 = vunpack.c.l.b16 %v4520
    %v5168 = vunpack.c.h.b16 %v4520
    %v5169 = vunpack.c.l.b16 %v4521
    %v5170 = vunpack.c.h.b16 %v4521
    %v5171 = vunpack.c.l.b16 %v4522
    %v5172 = vunpack.c.h.b16 %v4522
    %v5173 = vunpack.c.l.b16 %v4523
    %v5174 = vunpack.c.h.b16 %v4523
    %v5175 = vunpack.c.l.b16 %v4524
    %v5176 = vunpack.c.h.b16 %v4524
    %v5177 = vunpack.c.l.b16 %v4525
    %v5178 = vunpack.c.h.b16 %v4525
    %v5179 = vunpack.c.l.b16 %v4526
    %v5180 = vunpack.c.h.b16 %v4526
    %v5181 = vunpack.c.l.b16 %v4527
    %v5182 = vunpack.c.h.b16 %v4527
    %v5183 = vunpack.c.l.b16 %v4528
    %v5184 = vunpack.c.h.b16 %v4528
    %v5185 = vunpack.c.l.b16 %v4529
    %v5186 = vunpack.c.h.b16 %v4529
    %v5187 = vunpack.c.l.b16 %v4530
    %v5188 = vunpack.c.h.b16 %v4530
    %v5189 = vunpack.c.l.b16 %v4531
    %v5190 = vunpack.c.h.b16 %v4531
    %v5191 = vunpack.c.l.b16 %v4532
    %v5192 = vunpack.c.h.b16 %v4532
    %v5193 = vunpack.c.l.b16 %v4533
    %v5194 = vunpack.c.h.b16 %v4533
    %v5195 = vunpack.c.l.b16 %v4534
    %v5196 = vunpack.c.h.b16 %v4534
    %v5197 = vunpack.c.l.b16 %v4535
    %v5198 = vunpack.c.h.b16 %v4535
    %v5199 = vunpack.c.l.b16 %v4536
    %v5200 = vunpack.c.h.b16 %v4536
    %v5201 = vunpack.c.l.b16 %v4537
    %v5202 = vunpack.c.h.b16 %v4537
    %v5203 = vunpack.c.l.b16 %v4538
    %v5204 = vunpack.c.h.b16 %v4538
    %v5205 = vunpack.c.l.b16 %v4539
    %v5206 = vunpack.c.h.b16 %v4539
    %v5207 = vunpack.c.l.b16 %v4540
    %v5208 = vunpack.c.h.b16 %v4540
    %v5209 = vunpack.c.l.b16 %v4541
    %v5210 = vunpack.c.h.b16 %v4541
    %v5211 = vunpack.c.l.b16 %v4542
    %v5212 = vunpack.c.h.b16 %v4542
    %v5213 = vunpack.c.l.b16 %v4543
    %v5214 = vunpack.c.h.b16 %v4543
    %v5215 = vunpack.c.l.b16 %v4544
    %v5216 = vunpack.c.h.b16 %v4544
    %v5217 = vunpack.c.l.b16 %v4545
    %v5218 = vunpack.c.h.b16 %v4545
    %v5219 = vunpack.c.l.b16 %v4546
    %v5220 = vunpack.c.h.b16 %v4546
    %v5221 = vunpack.c.l.b16 %v4547
    %v5222 = vunpack.c.h.b16 %v4547
    %v5223 = vunpack.c.l.b16 %v4548
    %v5224 = vunpack.c.h.b16 %v4548
    %v5225 = vunpack.c.l.b16 %v4549
    %v5226 = vunpack.c.h.b16 %v4549
    %v5227 = vunpack.c.l.b16 %v4550
    %v5228 = vunpack.c.h.b16 %v4550
    %v5229 = vunpack.c.l.b16 %v4551
    %v5230 = vunpack.c.h.b16 %v4551
    %v5231 = vunpack.c.l.b16 %v4552
    %v5232 = vunpack.c.h.b16 %v4552
    %v5233 = vunpack.c.l.b16 %v4553
    %v5234 = vunpack.c.h.b16 %v4553
    %v5235 = vunpack.c.l.b16 %v4554
    %v5236 = vunpack.c.h.b16 %v4554
    %v5237 = vunpack.c.l.b16 %v4555
    %v5238 = vunpack.c.h.b16 %v4555
    %v5239 = vunpack.c.l.b16 %v4556
    %v5240 = vunpack.c.h.b16 %v4556
    %v5241 = vunpack.c.l.b16 %v4557
    %v5242 = vunpack.c.h.b16 %v4557
    %v5243 = vunpack.c.l.b16 %v4558
    %v5244 = vunpack.c.h.b16 %v4558
    %v5245 = vunpack.c.l.b16 %v4559
    %v5246 = vunpack.c.h.b16 %v4559
    %v5247 = vunpack.c.l.b16 %v4560
    %v5248 = vunpack.c.h.b16 %v4560
    %v5249 = vunpack.c.l.b16 %v4561
    %v5250 = vunpack.c.h.b16 %v4561
    %v5251 = vunpack.c.l.b16 %v4562
    %v5252 = vunpack.c.h.b16 %v4562
    %v5253 = vunpack.c.l.b16 %v4563
    %v5254 = vunpack.c.h.b16 %v4563
    %v5255 = vunpack.c.l.b16 %v4564
    %v5256 = vunpack.c.h.b16 %v4564
    %v5257 = vunpack.c.l.b16 %v4565
    %v5258 = vunpack.c.h.b16 %v4565
    %v5259 = vunpack.c.l.b16 %v4566
    %v5260 = vunpack.c.h.b16 %v4566
    %v5261 = vunpack.c.l.b16 %v4567
    %v5262 = vunpack.c.h.b16 %v4567
    %v5263 = vunpack.c.l.b16 %v4568
    %v5264 = vunpack.c.h.b16 %v4568
    %v5265 = vunpack.c.l.b16 %v4569
    %v5266 = vunpack.c.h.b16 %v4569
    %v5267 = vunpack.c.l.b16 %v4570
    %v5268 = vunpack.c.h.b16 %v4570
    %v5269 = vunpack.c.l.b16 %v4571
    %v5270 = vunpack.c.h.b16 %v4571
    %v5271 = vunpack.c.l.b16 %v4572
    %v5272 = vunpack.c.h.b16 %v4572
    %v5273 = vunpack.c.l.b16 %v4573
    %v5274 = vunpack.c.h.b16 %v4573
    %v5275 = vunpack.c.l.b16 %v4574
    %v5276 = vunpack.c.h.b16 %v4574
    %v5277 = vunpack.c.l.b16 %v4575
    %v5278 = vunpack.c.h.b16 %v4575
    %v5279 = vunpack.c.l.b16 %v4576
    %v5280 = vunpack.c.h.b16 %v4576
    %v5281 = vunpack.c.l.b16 %v4577
    %v5282 = vunpack.c.h.b16 %v4577
    %v5283 = vunpack.c.l.b16 %v4578
    %v5284 = vunpack.c.h.b16 %v4578
    %v5285 = vunpack.c.l.b16 %v4579
    %v5286 = vunpack.c.h.b16 %v4579
    %v5287 = vunpack.c.l.b16 %v4580
    %v5288 = vunpack.c.h.b16 %v4580
    %v5289 = vunpack.c.l.b16 %v4581
    %v5290 = vunpack.c.h.b16 %v4581
    %v5291 = vunpack.c.l.b16 %v4582
    %v5292 = vunpack.c.h.b16 %v4582
    %v5293 = vunpack.c.l.b16 %v4583
    %v5294 = vunpack.c.h.b16 %v4583
    %v5295 = vunpack.c.l.b16 %v4584
    %v5296 = vunpack.c.h.b16 %v4584
    %v5297 = vunpack.c.l.b16 %v4585
    %v5298 = vunpack.c.h.b16 %v4585
    %v5299 = vunpack.c.l.b16 %v4586
    %v5300 = vunpack.c.h.b16 %v4586
    %v5301 = vunpack.c.l.b16 %v4587
    %v5302 = vunpack.c.h.b16 %v4587
    %v5303 = vunpack.c.l.b16 %v4588
    %v5304 = vunpack.c.h.b16 %v4588
    %v5305 = vunpack.c.l.b16 %v4589
    %v5306 = vunpack.c.h.b16 %v4589
    %v5307 = vunpack.c.l.b16 %v4590
    %v5308 = vunpack.c.h.b16 %v4590
    %v5309 = vunpack.c.l.b16 %v4591
    %v5310 = vunpack.c.h.b16 %v4591
    %v5311 = vunpack.c.l.b16 %v4592
    %v5312 = vunpack.c.h.b16 %v4592
    %v5313 = vunpack.c.l.b16 %v4593
    %v5314 = vunpack.c.h.b16 %v4593
    %v5315 = vunpack.c.l.b16 %v4594
    %v5316 = vunpack.c.h.b16 %v4594
    %v5317 = vunpack.c.l.b16 %v4595
    %v5318 = vunpack.c.h.b16 %v4595
    %v5319 = vunpack.c.l.b16 %v4596
    %v5320 = vunpack.c.h.b16 %v4596
    %v5321 = vunpack.c.l.b16 %v4597
    %v5322 = vunpack.c.h.b16 %v4597
    %v5323 = vunpack.c.l.b16 %v4598
    %v5324 = vunpack.c.h.b16 %v4598
    %v5325 = vunpack.c.l.b16 %v4599
    %v5326 = vunpack.c.h.b16 %v4599
    %v5327 = vunpack.c.l.b16 %v4600
    %v5328 = vunpack.c.h.b16 %v4600
    %v5329 = vunpack.c.l.b16 %v4601
    %v5330 = vunpack.c.h.b16 %v4601
    %v5331 = vunpack.c.l.b16 %v4602
    %v5332 = vunpack.c.h.b16 %v4602
    %v5333 = vunpack.c.l.b16 %v4603
    %v5334 = vunpack.c.h.b16 %v4603
    %v5335 = vunpack.c.l.b16 %v4604
    %v5336 = vunpack.c.h.b16 %v4604
    %v5337 = vunpack.c.l.b16 %v4605
    %v5338 = vunpack.c.h.b16 %v4605
    %v5339 = vunpack.c.l.b16 %v4606
    %v5340 = vunpack.c.h.b16 %v4606
    %v5341 = vunpack.c.l.b16 %v4607
    %v5342 = vunpack.c.h.b16 %v4607
    %v5343 = vunpack.c.l.b16 %v4608
    %v5344 = vunpack.c.h.b16 %v4608
    %v5345 = vunpack.c.l.b16 %v4609
    %v5346 = vunpack.c.h.b16 %v4609
    %v5347 = vunpack.c.l.b16 %v4610
    %v5348 = vunpack.c.h.b16 %v4610
    %v5349 = vunpack.c.l.b16 %v4611
    %v5350 = vunpack.c.h.b16 %v4611
    %v5351 = vunpack.c.l.b16 %v4612
    %v5352 = vunpack.c.h.b16 %v4612
    %v5353 = vunpack.c.l.b16 %v4613
    %v5354 = vunpack.c.h.b16 %v4613
    %v5355 = vunpack.c.l.b16 %v4614
    %v5356 = vunpack.c.h.b16 %v4614
    %v5357 = vunpack.c.l.b16 %v4615
    %v5358 = vunpack.c.h.b16 %v4615
    %v5359 = vunpack.c.l.b16 %v4616
    %v5360 = vunpack.c.h.b16 %v4616
    %v5361 = vunpack.c.l.b16 %v4617
    %v5362 = vunpack.c.h.b16 %v4617
    %v5363 = vunpack.c.l.b16 %v4618
    %v5364 = vunpack.c.h.b16 %v4618
    %v5365 = vunpack.c.l.b16 %v4619
    %v5366 = vunpack.c.h.b16 %v4619
    %v5367 = vunpack.c.l.b16 %v4620
    %v5368 = vunpack.c.h.b16 %v4620
    %v5369 = vunpack.c.l.b16 %v4621
    %v5370 = vunpack.c.h.b16 %v4621
    %v5371 = vunpack.c.l.b16 %v4622
    %v5372 = vunpack.c.h.b16 %v4622
    %v5373 = vunpack.c.l.b16 %v4623
    %v5374 = vunpack.c.h.b16 %v4623
    %v5375 = vunpack.c.l.b16 %v4624
    %v5376 = vunpack.c.h.b16 %v4624
    %v5377 = vunpack.c.l.b16 %v4625
    %v5378 = vunpack.c.h.b16 %v4625
    %v5379 = vunpack.c.l.b16 %v4626
    %v5380 = vunpack.c.h.b16 %v4626
    %v5381 = vunpack.c.l.b16 %v4627
    %v5382 = vunpack.c.h.b16 %v4627
    %v5383 = vunpack.c.l.b16 %v4628
    %v5384 = vunpack.c.h.b16 %v4628
    %v5385 = vunpack.c.l.b16 %v4629
    %v5386 = vunpack.c.h.b16 %v4629
    %v5387 = vunpack.c.l.b16 %v4630
    %v5388 = vunpack.c.h.b16 %v4630
    %v5389 = vunpack.c.l.b16 %v4631
    %v5390 = vunpack.c.h.b16 %v4631
    %v5391 = vunpack.c.l.b16 %v4632
    %v5392 = vunpack.c.h.b16 %v4632
    %v5393 = vunpack.c.l.b16 %v4633
    %v5394 = vunpack.c.h.b16 %v4633
    %v5395 = vunpack.c.l.b16 %v4634
    %v5396 = vunpack.c.h.b16 %v4634
    %v5397 = vunpack.c.l.b16 %v4635
    %v5398 = vunpack.c.h.b16 %v4635
    %v5399 = vunpack.c.l.b16 %v4636
    %v5400 = vunpack.c.h.b16 %v4636
    %v5401 = vunpack.c.l.b16 %v4637
    %v5402 = vunpack.c.h.b16 %v4637
    %v5403 = vunpack.c.l.b16 %v4638
    %v5404 = vunpack.c.h.b16 %v4638
    %v5405 = vunpack.c.l.b16 %v4639
    %v5406 = vunpack.c.h.b16 %v4639
    %v5407 = vunpack.c.l.b16 %v4640
    %v5408 = vunpack.c.h.b16 %v4640
    %v5409 = vpack.c.b16 %v4901, %v4897
    %v5410 = vpack.c.b16 %v4902, %v4898
    %v5411 = vpack.c.b16 %v4903, %v4899
    %v5412 = vpack.c.b16 %v4904, %v4900
    %v5413 = vpack.c.b16 %v4909, %v4905
    %v5414 = vpack.c.b16 %v4910, %v4906
    %v5415 = vpack.c.b16 %v4911, %v4907
    %v5416 = vpack.c.b16 %v4912, %v4908
    %v5417 = vpack.c.b16 %v4917, %v4913
    %v5418 = vpack.c.b16 %v4918, %v4914
    %v5419 = vpack.c.b16 %v4919, %v4915
    %v5420 = vpack.c.b16 %v4920, %v4916
    %v5421 = vpack.c.b16 %v4925, %v4921
    %v5422 = vpack.c.b16 %v4926, %v4922
    %v5423 = vpack.c.b16 %v4927, %v4923
    %v5424 = vpack.c.b16 %v4928, %v4924
    %v5425 = vpack.c.b16 %v4933, %v4929
    %v5426 = vpack.c.b16 %v4934, %v4930
    %v5427 = vpack.c.b16 %v4935, %v4931
    %v5428 = vpack.c.b16 %v4936, %v4932
    %v5429 = vpack.c.b16 %v4941, %v4937
    %v5430 = vpack.c.b16 %v4942, %v4938
    %v5431 = vpack.c.b16 %v4943, %v4939
    %v5432 = vpack.c.b16 %v4944, %v4940
    %v5433 = vpack.c.b16 %v4949, %v4945
    %v5434 = vpack.c.b16 %v4950, %v4946
    %v5435 = vpack.c.b16 %v4951, %v4947
    %v5436 = vpack.c.b16 %v4952, %v4948
    %v5437 = vpack.c.b16 %v4957, %v4953
    %v5438 = vpack.c.b16 %v4958, %v4954
    %v5439 = vpack.c.b16 %v4959, %v4955
    %v5440 = vpack.c.b16 %v4960, %v4956
    %v5441 = vpack.c.b16 %v4965, %v4961
    %v5442 = vpack.c.b16 %v4966, %v4962
    %v5443 = vpack.c.b16 %v4967, %v4963
    %v5444 = vpack.c.b16 %v4968, %v4964
    %v5445 = vpack.c.b16 %v4973, %v4969
    %v5446 = vpack.c.b16 %v4974, %v4970
    %v5447 = vpack.c.b16 %v4975, %v4971
    %v5448 = vpack.c.b16 %v4976, %v4972
    %v5449 = vpack.c.b16 %v4981, %v4977
    %v5450 = vpack.c.b16 %v4982, %v4978
    %v5451 = vpack.c.b16 %v4983, %v4979
    %v5452 = vpack.c.b16 %v4984, %v4980
    %v5453 = vpack.c.b16 %v4989, %v4985
    %v5454 = vpack.c.b16 %v4990, %v4986
    %v5455 = vpack.c.b16 %v4991, %v4987
    %v5456 = vpack.c.b16 %v4992, %v4988
    %v5457 = vpack.c.b16 %v4997, %v4993
    %v5458 = vpack.c.b16 %v4998, %v4994
    %v5459 = vpack.c.b16 %v4999, %v4995
    %v5460 = vpack.c.b16 %v5000, %v4996
    %v5461 = vpack.c.b16 %v5005, %v5001
    %v5462 = vpack.c.b16 %v5006, %v5002
    %v5463 = vpack.c.b16 %v5007, %v5003
    %v5464 = vpack.c.b16 %v5008, %v5004
    %v5465 = vpack.c.b16 %v5013, %v5009
    %v5466 = vpack.c.b16 %v5014, %v5010
    %v5467 = vpack.c.b16 %v5015, %v5011
    %v5468 = vpack.c.b16 %v5016, %v5012
    %v5469 = vpack.c.b16 %v5021, %v5017
    %v5470 = vpack.c.b16 %v5022, %v5018
    %v5471 = vpack.c.b16 %v5023, %v5019
    %v5472 = vpack.c.b16 %v5024, %v5020
    %v5473 = vpack.c.b16 %v5029, %v5025
    %v5474 = vpack.c.b16 %v5030, %v5026
    %v5475 = vpack.c.b16 %v5031, %v5027
    %v5476 = vpack.c.b16 %v5032, %v5028
    %v5477 = vpack.c.b16 %v5037, %v5033
    %v5478 = vpack.c.b16 %v5038, %v5034
    %v5479 = vpack.c.b16 %v5039, %v5035
    %v5480 = vpack.c.b16 %v5040, %v5036
    %v5481 = vpack.c.b16 %v5045, %v5041
    %v5482 = vpack.c.b16 %v5046, %v5042
    %v5483 = vpack.c.b16 %v5047, %v5043
    %v5484 = vpack.c.b16 %v5048, %v5044
    %v5485 = vpack.c.b16 %v5053, %v5049
    %v5486 = vpack.c.b16 %v5054, %v5050
    %v5487 = vpack.c.b16 %v5055, %v5051
    %v5488 = vpack.c.b16 %v5056, %v5052
    %v5489 = vpack.c.b16 %v5061, %v5057
    %v5490 = vpack.c.b16 %v5062, %v5058
    %v5491 = vpack.c.b16 %v5063, %v5059
    %v5492 = vpack.c.b16 %v5064, %v5060
    %v5493 = vpack.c.b16 %v5069, %v5065
    %v5494 = vpack.c.b16 %v5070, %v5066
    %v5495 = vpack.c.b16 %v5071, %v5067
    %v5496 = vpack.c.b16 %v5072, %v5068
    %v5497 = vpack.c.b16 %v5077, %v5073
    %v5498 = vpack.c.b16 %v5078, %v5074
    %v5499 = vpack.c.b16 %v5079, %v5075
    %v5500 = vpack.c.b16 %v5080, %v5076
    %v5501 = vpack.c.b16 %v5085, %v5081
    %v5502 = vpack.c.b16 %v5086, %v5082
    %v5503 = vpack.c.b16 %v5087, %v5083
    %v5504 = vpack.c.b16 %v5088, %v5084
    %v5505 = vpack.c.b16 %v5093, %v5089
    %v5506 = vpack.c.b16 %v5094, %v5090
    %v5507 = vpack.c.b16 %v5095, %v5091
    %v5508 = vpack.c.b16 %v5096, %v5092
    %v5509 = vpack.c.b16 %v5101, %v5097
    %v5510 = vpack.c.b16 %v5102, %v5098
    %v5511 = vpack.c.b16 %v5103, %v5099
    %v5512 = vpack.c.b16 %v5104, %v5100
    %v5513 = vpack.c.b16 %v5109, %v5105
    %v5514 = vpack.c.b16 %v5110, %v5106
    %v5515 = vpack.c.b16 %v5111, %v5107
    %v5516 = vpack.c.b16 %v5112, %v5108
    %v5517 = vpack.c.b16 %v5117, %v5113
    %v5518 = vpack.c.b16 %v5118, %v5114
    %v5519 = vpack.c.b16 %v5119, %v5115
    %v5520 = vpack.c.b16 %v5120, %v5116
    %v5521 = vpack.c.b16 %v5125, %v5121
    %v5522 = vpack.c.b16 %v5126, %v5122
    %v5523 = vpack.c.b16 %v5127, %v5123
    %v5524 = vpack.c.b16 %v5128, %v5124
    %v5525 = vpack.c.b16 %v5133, %v5129
    %v5526 = vpack.c.b16 %v5134, %v5130
    %v5527 = vpack.c.b16 %v5135, %v5131
    %v5528 = vpack.c.b16 %v5136, %v5132
    %v5529 = vpack.c.b16 %v5141, %v5137
    %v5530 = vpack.c.b16 %v5142, %v5138
    %v5531 = vpack.c.b16 %v5143, %v5139
    %v5532 = vpack.c.b16 %v5144, %v5140
    %v5533 = vpack.c.b16 %v5149, %v5145
    %v5534 = vpack.c.b16 %v5150, %v5146
    %v5535 = vpack.c.b16 %v5151, %v5147
    %v5536 = vpack.c.b16 %v5152, %v5148
    %v5537 = vpack.c.b16 %v5157, %v5153
    %v5538 = vpack.c.b16 %v5158, %v5154
    %v5539 = vpack.c.b16 %v5159, %v5155
    %v5540 = vpack.c.b16 %v5160, %v5156
    %v5541 = vpack.c.b16 %v5165, %v5161
    %v5542 = vpack.c.b16 %v5166, %v5162
    %v5543 = vpack.c.b16 %v5167, %v5163
    %v5544 = vpack.c.b16 %v5168, %v5164
    %v5545 = vpack.c.b16 %v5173, %v5169
    %v5546 = vpack.c.b16 %v5174, %v5170
    %v5547 = vpack.c.b16 %v5175, %v5171
    %v5548 = vpack.c.b16 %v5176, %v5172
    %v5549 = vpack.c.b16 %v5181, %v5177
    %v5550 = vpack.c.b16 %v5182, %v5178
    %v5551 = vpack.c.b16 %v5183, %v5179
    %v5552 = vpack.c.b16 %v5184, %v5180
    %v5553 = vpack.c.b16 %v5189, %v5185
    %v5554 = vpack.c.b16 %v5190, %v5186
    %v5555 = vpack.c.b16 %v5191, %v5187
    %v5556 = vpack.c.b16 %v5192, %v5188
    %v5557 = vpack.c.b16 %v5197, %v5193
    %v5558 = vpack.c.b16 %v5198, %v5194
    %v5559 = vpack.c.b16 %v5199, %v5195
    %v5560 = vpack.c.b16 %v5200, %v5196
    %v5561 = vpack.c.b16 %v5205, %v5201
    %v5562 = vpack.c.b16 %v5206, %v5202
    %v5563 = vpack.c.b16 %v5207, %v5203
    %v5564 = vpack.c.b16 %v5208, %v5204
    %v5565 = vpack.c.b16 %v5213, %v5209
    %v5566 = vpack.c.b16 %v5214, %v5210
    %v5567 = vpack.c.b16 %v5215, %v5211
    %v5568 = vpack.c.b16 %v5216, %v5212
    %v5569 = vpack.c.b16 %v5221, %v5217
    %v5570 = vpack.c.b16 %v5222, %v5218
    %v5571 = vpack.c.b16 %v5223, %v5219
    %v5572 = vpack.c.b16 %v5224, %v5220
    %v5573 = vpack.c.b16 %v5229, %v5225
    %v5574 = vpack.c.b16 %v5230, %v5226
    %v5575 = vpack.c.b16 %v5231, %v5227
    %v5576 = vpack.c.b16 %v5232, %v5228
    %v5577 = vpack.c.b16 %v5237, %v5233
    %v5578 = vpack.c.b16 %v5238, %v5234
    %v5579 = vpack.c.b16 %v5239, %v5235
    %v5580 = vpack.c.b16 %v5240, %v5236
    %v5581 = vpack.c.b16 %v5245, %v5241
    %v5582 = vpack.c.b16 %v5246, %v5242
    %v5583 = vpack.c.b16 %v5247, %v5243
    %v5584 = vpack.c.b16 %v5248, %v5244
    %v5585 = vpack.c.b16 %v5253, %v5249
    %v5586 = vpack.c.b16 %v5254, %v5250
    %v5587 = vpack.c.b16 %v5255, %v5251
    %v5588 = vpack.c.b16 %v5256, %v5252
    %v5589 = vpack.c.b16 %v5261, %v5257
    %v5590 = vpack.c.b16 %v5262, %v5258
    %v5591 = vpack.c.b16 %v5263, %v5259
    %v5592 = vpack.c.b16 %v5264, %v5260
    %v5593 = vpack.c.b16 %v5269, %v5265
    %v5594 = vpack.c.b16 %v5270, %v5266
    %v5595 = vpack.c.b16 %v5271, %v5267
    %v5596 = vpack.c.b16 %v5272, %v5268
    %v5597 = vpack.c.b16 %v5277, %v5273
    %v5598 = vpack.c.b16 %v5278, %v5274
    %v5599 = vpack.c.b16 %v5279, %v5275
    %v5600 = vpack.c.b16 %v5280, %v5276
    %v5601 = vpack.c.b16 %v5285, %v5281
    %v5602 = vpack.c.b16 %v5286, %v5282
    %v5603 = vpack.c.b16 %v5287, %v5283
    %v5604 = vpack.c.b16 %v5288, %v5284
    %v5605 = vpack.c.b16 %v5293, %v5289
    %v5606 = vpack.c.b16 %v5294, %v5290
    %v5607 = vpack.c.b16 %v5295, %v5291
    %v5608 = vpack.c.b16 %v5296, %v5292
    %v5609 = vpack.c.b16 %v5301, %v5297
    %v5610 = vpack.c.b16 %v5302, %v5298
    %v5611 = vpack.c.b16 %v5303, %v5299
    %v5612 = vpack.c.b16 %v5304, %v5300
    %v5613 = vpack.c.b16 %v5309, %v5305
    %v5614 = vpack.c.b16 %v5310, %v5306
    %v5615 = vpack.c.b16 %v5311, %v5307
    %v5616 = vpack.c.b16 %v5312, %v5308
    %v5617 = vpack.c.b16 %v5317, %v5313
    %v5618 = vpack.c.b16 %v5318, %v5314
    %v5619 = vpack.c.b16 %v5319, %v5315
    %v5620 = vpack.c.b16 %v5320, %v5316
    %v5621 = vpack.c.b16 %v5325, %v5321
    %v5622 = vpack.c.b16 %v5326, %v5322
    %v5623 = vpack.c.b16 %v5327, %v5323
    %v5624 = vpack.c.b16 %v5328, %v5324
    %v5625 = vpack.c.b16 %v5333, %v5329
    %v5626 = vpack.c.b16 %v5334, %v5330
    %v5627 = vpack.c.b16 %v5335, %v5331
    %v5628 = vpack.c.b16 %v5336, %v5332
    %v5629 = vpack.c.b16 %v5341, %v5337
    %v5630 = vpack.c.b16 %v5342, %v5338
    %v5631 = vpack.c.b16 %v5343, %v5339
    %v5632 = vpack.c.b16 %v5344, %v5340
    %v5633 = vpack.c.b16 %v5349, %v5345
    %v5634 = vpack.c.b16 %v5350, %v5346
    %v5635 = vpack.c.b16 %v5351, %v5347
    %v5636 = vpack.c.b16 %v5352, %v5348
    %v5637 = vpack.c.b16 %v5357, %v5353
    %v5638 = vpack.c.b16 %v5358, %v5354
    %v5639 = vpack.c.b16 %v5359, %v5355
    %v5640 = vpack.c.b16 %v5360, %v5356
    %v5641 = vpack.c.b16 %v5365, %v5361
    %v5642 = vpack.c.b16 %v5366, %v5362
    %v5643 = vpack.c.b16 %v5367, %v5363
    %v5644 = vpack.c.b16 %v5368, %v5364
    %v5645 = vpack.c.b16 %v5373, %v5369
    %v5646 = vpack.c.b16 %v5374, %v5370
    %v5647 = vpack.c.b16 %v5375, %v5371
    %v5648 = vpack.c.b16 %v5376, %v5372
    %v5649 = vpack.c.b16 %v5381, %v5377
    %v5650 = vpack.c.b16 %v5382, %v5378
    %v5651 = vpack.c.b16 %v5383, %v5379
    %v5652 = vpack.c.b16 %v5384, %v5380
    %v5653 = vpack.c.b16 %v5389, %v5385
    %v5654 = vpack.c.b16 %v5390, %v5386
    %v5655 = vpack.c.b16 %v5391, %v5387
    %v5656 = vpack.c.b16 %v5392, %v5388
    %v5657 = vpack.c.b16 %v5397, %v5393
    %v5658 = vpack.c.b16 %v5398, %v5394
    %v5659 = vpack.c.b16 %v5399, %v5395
    %v5660 = vpack.c.b16 %v5400, %v5396
    %v5661 = vpack.c.b16 %v5405, %v5401
    %v5662 = vpack.c.b16 %v5406, %v5402
    %v5663 = vpack.c.b16 %v5407, %v5403
    %v5664 = vpack.c.b16 %v5408, %v5404
    %5921 = vmatpush.bf16.msra.mxu0 %v5437
    %5922 = vmatpush.bf16.msra.mxu0 %v5433
    %5923 = vmatpush.bf16.msra.mxu0 %v5429
    %5924 = vmatpush.bf16.msra.mxu0 %v5425
    %5925 = vmatpush.bf16.msra.mxu0 %v5421
    %5926 = vmatpush.bf16.msra.mxu0 %v5417
    %5927 = vmatpush.bf16.msra.mxu0 %v5413
    %5928 = vmatpush.bf16.msra.mxu0 %v5409
    %5929 = vmatmul.bf16.gmra.mxu0 %v4377
    %v5930 = vpop.f32.mrf.mxu0
    %v5931 = vadd.f32 0.0, %v5930
    %v5932 = vpop.f32.mrf.mxu0
    %v5933 = vadd.f32 0.0, %v5932
    %5934 = vdwg.mxu0
    %5935 = vmatpush.bf16.msra.mxu0 %v5469
    %5936 = vmatpush.bf16.msra.mxu0 %v5465
    %5937 = vmatpush.bf16.msra.mxu0 %v5461
    %5938 = vmatpush.bf16.msra.mxu0 %v5457
    %5939 = vmatpush.bf16.msra.mxu0 %v5453
    %5940 = vmatpush.bf16.msra.mxu0 %v5449
    %5941 = vmatpush.bf16.msra.mxu0 %v5445
    %5942 = vmatpush.bf16.msra.mxu0 %v5441
    %5943 = vmatmul.bf16.gmra.mxu0 %v4378
    %v5944 = vpop.f32.mrf.mxu0
    %v5945 = vadd.f32 %v5931, %v5944
    %v5946 = vpop.f32.mrf.mxu0
    %v5947 = vadd.f32 %v5933, %v5946
    %5948 = vdwg.mxu0
    %5949 = vmatpush.bf16.msra.mxu0 %v5501
    %5950 = vmatpush.bf16.msra.mxu0 %v5497
    %5951 = vmatpush.bf16.msra.mxu0 %v5493
    %5952 = vmatpush.bf16.msra.mxu0 %v5489
    %5953 = vmatpush.bf16.msra.mxu0 %v5485
    %5954 = vmatpush.bf16.msra.mxu0 %v5481
    %5955 = vmatpush.bf16.msra.mxu0 %v5477
    %5956 = vmatpush.bf16.msra.mxu0 %v5473
    %5957 = vmatmul.bf16.gmra.mxu0 %v4379
    %v5958 = vpop.f32.mrf.mxu0
    %v5959 = vadd.f32 %v5945, %v5958
    %v5960 = vpop.f32.mrf.mxu0
    %v5961 = vadd.f32 %v5947, %v5960
    %5962 = vdwg.mxu0
    %5963 = vmatpush.bf16.msra.mxu0 %v5533
    %5964 = vmatpush.bf16.msra.mxu0 %v5529
    %5965 = vmatpush.bf16.msra.mxu0 %v5525
    %5966 = vmatpush.bf16.msra.mxu0 %v5521
    %5967 = vmatpush.bf16.msra.mxu0 %v5517
    %5968 = vmatpush.bf16.msra.mxu0 %v5513
    %5969 = vmatpush.bf16.msra.mxu0 %v5509
    %5970 = vmatpush.bf16.msra.mxu0 %v5505
    %5971 = vmatmul.bf16.gmra.mxu0 %v4380
    %v5972 = vpop.f32.mrf.mxu0
    %v5973 = vadd.f32 %v5959, %v5972
    %v5974 = vpop.f32.mrf.mxu0
    %v5975 = vadd.f32 %v5961, %v5974
    %5976 = vdwg.mxu0
    %5977 = vmatpush.bf16.msra.mxu0 %v5565
    %5978 = vmatpush.bf16.msra.mxu0 %v5561
    %5979 = vmatpush.bf16.msra.mxu0 %v5557
    %5980 = vmatpush.bf16.msra.mxu0 %v5553
    %5981 = vmatpush.bf16.msra.mxu0 %v5549
    %5982 = vmatpush.bf16.msra.mxu0 %v5545
    %5983 = vmatpush.bf16.msra.mxu0 %v5541
    %5984 = vmatpush.bf16.msra.mxu0 %v5537
    %5985 = vmatmul.bf16.gmra.mxu0 %v4381
    %v5986 = vpop.f32.mrf.mxu0
    %v5987 = vadd.f32 %v5973, %v5986
    %v5988 = vpop.f32.mrf.mxu0
    %v5989 = vadd.f32 %v5975, %v5988
    %5990 = vdwg.mxu0
    %5991 = vmatpush.bf16.msra.mxu0 %v5597
    %5992 = vmatpush.bf16.msra.mxu0 %v5593
    %5993 = vmatpush.bf16.msra.mxu0 %v5589
    %5994 = vmatpush.bf16.msra.mxu0 %v5585
    %5995 = vmatpush.bf16.msra.mxu0 %v5581
    %5996 = vmatpush.bf16.msra.mxu0 %v5577
    %5997 = vmatpush.bf16.msra.mxu0 %v5573
    %5998 = vmatpush.bf16.msra.mxu0 %v5569
    %5999 = vmatmul.bf16.gmra.mxu0 %v4382
    %v6000 = vpop.f32.mrf.mxu0
    %v6001 = vadd.f32 %v5987, %v6000
    %v6002 = vpop.f32.mrf.mxu0
    %v6003 = vadd.f32 %v5989, %v6002
    %6004 = vdwg.mxu0
    %6005 = vmatpush.bf16.msra.mxu0 %v5629
    %6006 = vmatpush.bf16.msra.mxu0 %v5625
    %6007 = vmatpush.bf16.msra.mxu0 %v5621
    %6008 = vmatpush.bf16.msra.mxu0 %v5617
    %6009 = vmatpush.bf16.msra.mxu0 %v5613
    %6010 = vmatpush.bf16.msra.mxu0 %v5609
    %6011 = vmatpush.bf16.msra.mxu0 %v5605
    %6012 = vmatpush.bf16.msra.mxu0 %v5601
    %6013 = vmatmul.bf16.gmra.mxu0 %v4383
    %v6014 = vpop.f32.mrf.mxu0
    %v6015 = vadd.f32 %v6001, %v6014
    %v6016 = vpop.f32.mrf.mxu0
    %v6017 = vadd.f32 %v6003, %v6016
    %6018 = vdwg.mxu0
    %6019 = vmatpush.bf16.msra.mxu0 %v5661
    %6020 = vmatpush.bf16.msra.mxu0 %v5657
    %6021 = vmatpush.bf16.msra.mxu0 %v5653
    %6022 = vmatpush.bf16.msra.mxu0 %v5649
    %6023 = vmatpush.bf16.msra.mxu0 %v5645
    %6024 = vmatpush.bf16.msra.mxu0 %v5641
    %6025 = vmatpush.bf16.msra.mxu0 %v5637
    %6026 = vmatpush.bf16.msra.mxu0 %v5633
    %6027 = vmatmul.bf16.gmra.mxu0 %v4384
    %v6028 = vpop.f32.mrf.mxu0
    %v6029 = vadd.f32 %v6015, %v6028
    %v6030 = vpop.f32.mrf.mxu0
    %v6031 = vadd.f32 %v6017, %v6030
    %6032 = vdwg.mxu0
    %6033 = vmatpush.bf16.msra.mxu0 %v5438
    %6034 = vmatpush.bf16.msra.mxu0 %v5434
    %6035 = vmatpush.bf16.msra.mxu0 %v5430
    %6036 = vmatpush.bf16.msra.mxu0 %v5426
    %6037 = vmatpush.bf16.msra.mxu0 %v5422
    %6038 = vmatpush.bf16.msra.mxu0 %v5418
    %6039 = vmatpush.bf16.msra.mxu0 %v5414
    %6040 = vmatpush.bf16.msra.mxu0 %v5410
    %6041 = vmatmul.bf16.gmra.mxu0 %v4377
    %v6042 = vpop.f32.mrf.mxu0
    %v6043 = vadd.f32 0.0, %v6042
    %v6044 = vpop.f32.mrf.mxu0
    %v6045 = vadd.f32 0.0, %v6044
    %6046 = vdwg.mxu0
    %6047 = vmatpush.bf16.msra.mxu0 %v5470
    %6048 = vmatpush.bf16.msra.mxu0 %v5466
    %6049 = vmatpush.bf16.msra.mxu0 %v5462
    %6050 = vmatpush.bf16.msra.mxu0 %v5458
    %6051 = vmatpush.bf16.msra.mxu0 %v5454
    %6052 = vmatpush.bf16.msra.mxu0 %v5450
    %6053 = vmatpush.bf16.msra.mxu0 %v5446
    %6054 = vmatpush.bf16.msra.mxu0 %v5442
    %6055 = vmatmul.bf16.gmra.mxu0 %v4378
    %v6056 = vpop.f32.mrf.mxu0
    %v6057 = vadd.f32 %v6043, %v6056
    %v6058 = vpop.f32.mrf.mxu0
    %v6059 = vadd.f32 %v6045, %v6058
    %6060 = vdwg.mxu0
    %6061 = vmatpush.bf16.msra.mxu0 %v5502
    %6062 = vmatpush.bf16.msra.mxu0 %v5498
    %6063 = vmatpush.bf16.msra.mxu0 %v5494
    %6064 = vmatpush.bf16.msra.mxu0 %v5490
    %6065 = vmatpush.bf16.msra.mxu0 %v5486
    %6066 = vmatpush.bf16.msra.mxu0 %v5482
    %6067 = vmatpush.bf16.msra.mxu0 %v5478
    %6068 = vmatpush.bf16.msra.mxu0 %v5474
    %6069 = vmatmul.bf16.gmra.mxu0 %v4379
    %v6070 = vpop.f32.mrf.mxu0
    %v6071 = vadd.f32 %v6057, %v6070
    %v6072 = vpop.f32.mrf.mxu0
    %v6073 = vadd.f32 %v6059, %v6072
    %6074 = vdwg.mxu0
    %6075 = vmatpush.bf16.msra.mxu0 %v5534
    %6076 = vmatpush.bf16.msra.mxu0 %v5530
    %6077 = vmatpush.bf16.msra.mxu0 %v5526
    %6078 = vmatpush.bf16.msra.mxu0 %v5522
    %6079 = vmatpush.bf16.msra.mxu0 %v5518
    %6080 = vmatpush.bf16.msra.mxu0 %v5514
    %6081 = vmatpush.bf16.msra.mxu0 %v5510
    %6082 = vmatpush.bf16.msra.mxu0 %v5506
    %6083 = vmatmul.bf16.gmra.mxu0 %v4380
    %v6084 = vpop.f32.mrf.mxu0
    %v6085 = vadd.f32 %v6071, %v6084
    %v6086 = vpop.f32.mrf.mxu0
    %v6087 = vadd.f32 %v6073, %v6086
    %6088 = vdwg.mxu0
    %6089 = vmatpush.bf16.msra.mxu0 %v5566
    %6090 = vmatpush.bf16.msra.mxu0 %v5562
    %6091 = vmatpush.bf16.msra.mxu0 %v5558
    %6092 = vmatpush.bf16.msra.mxu0 %v5554
    %6093 = vmatpush.bf16.msra.mxu0 %v5550
    %6094 = vmatpush.bf16.msra.mxu0 %v5546
    %6095 = vmatpush.bf16.msra.mxu0 %v5542
    %6096 = vmatpush.bf16.msra.mxu0 %v5538
    %6097 = vmatmul.bf16.gmra.mxu0 %v4381
    %v6098 = vpop.f32.mrf.mxu0
    %v6099 = vadd.f32 %v6085, %v6098
    %v6100 = vpop.f32.mrf.mxu0
    %v6101 = vadd.f32 %v6087, %v6100
    %6102 = vdwg.mxu0
    %6103 = vmatpush.bf16.msra.mxu0 %v5598
    %6104 = vmatpush.bf16.msra.mxu0 %v5594
    %6105 = vmatpush.bf16.msra.mxu0 %v5590
    %6106 = vmatpush.bf16.msra.mxu0 %v5586
    %6107 = vmatpush.bf16.msra.mxu0 %v5582
    %6108 = vmatpush.bf16.msra.mxu0 %v5578
    %6109 = vmatpush.bf16.msra.mxu0 %v5574
    %6110 = vmatpush.bf16.msra.mxu0 %v5570
    %6111 = vmatmul.bf16.gmra.mxu0 %v4382
    %v6112 = vpop.f32.mrf.mxu0
    %v6113 = vadd.f32 %v6099, %v6112
    %v6114 = vpop.f32.mrf.mxu0
    %v6115 = vadd.f32 %v6101, %v6114
    %6116 = vdwg.mxu0
    %6117 = vmatpush.bf16.msra.mxu0 %v5630
    %6118 = vmatpush.bf16.msra.mxu0 %v5626
    %6119 = vmatpush.bf16.msra.mxu0 %v5622
    %6120 = vmatpush.bf16.msra.mxu0 %v5618
    %6121 = vmatpush.bf16.msra.mxu0 %v5614
    %6122 = vmatpush.bf16.msra.mxu0 %v5610
    %6123 = vmatpush.bf16.msra.mxu0 %v5606
    %6124 = vmatpush.bf16.msra.mxu0 %v5602
    %6125 = vmatmul.bf16.gmra.mxu0 %v4383
    %v6126 = vpop.f32.mrf.mxu0
    %v6127 = vadd.f32 %v6113, %v6126
    %v6128 = vpop.f32.mrf.mxu0
    %v6129 = vadd.f32 %v6115, %v6128
    %6130 = vdwg.mxu0
    %6131 = vmatpush.bf16.msra.mxu0 %v5662
    %6132 = vmatpush.bf16.msra.mxu0 %v5658
    %6133 = vmatpush.bf16.msra.mxu0 %v5654
    %6134 = vmatpush.bf16.msra.mxu0 %v5650
    %6135 = vmatpush.bf16.msra.mxu0 %v5646
    %6136 = vmatpush.bf16.msra.mxu0 %v5642
    %6137 = vmatpush.bf16.msra.mxu0 %v5638
    %6138 = vmatpush.bf16.msra.mxu0 %v5634
    %6139 = vmatmul.bf16.gmra.mxu0 %v4384
    %v6140 = vpop.f32.mrf.mxu0
    %v6141 = vadd.f32 %v6127, %v6140
    %v6142 = vpop.f32.mrf.mxu0
    %v6143 = vadd.f32 %v6129, %v6142
    %6144 = vdwg.mxu0
    %6145 = vmatpush.bf16.msra.mxu0 %v5439
    %6146 = vmatpush.bf16.msra.mxu0 %v5435
    %6147 = vmatpush.bf16.msra.mxu0 %v5431
    %6148 = vmatpush.bf16.msra.mxu0 %v5427
    %6149 = vmatpush.bf16.msra.mxu0 %v5423
    %6150 = vmatpush.bf16.msra.mxu0 %v5419
    %6151 = vmatpush.bf16.msra.mxu0 %v5415
    %6152 = vmatpush.bf16.msra.mxu0 %v5411
    %6153 = vmatmul.bf16.gmra.mxu0 %v4377
    %v6154 = vpop.f32.mrf.mxu0
    %v6155 = vadd.f32 0.0, %v6154
    %v6156 = vpop.f32.mrf.mxu0
    %v6157 = vadd.f32 0.0, %v6156
    %6158 = vdwg.mxu0
    %6159 = vmatpush.bf16.msra.mxu0 %v5471
    %6160 = vmatpush.bf16.msra.mxu0 %v5467
    %6161 = vmatpush.bf16.msra.mxu0 %v5463
    %6162 = vmatpush.bf16.msra.mxu0 %v5459
    %6163 = vmatpush.bf16.msra.mxu0 %v5455
    %6164 = vmatpush.bf16.msra.mxu0 %v5451
    %6165 = vmatpush.bf16.msra.mxu0 %v5447
    %6166 = vmatpush.bf16.msra.mxu0 %v5443
    %6167 = vmatmul.bf16.gmra.mxu0 %v4378
    %v6168 = vpop.f32.mrf.mxu0
    %v6169 = vadd.f32 %v6155, %v6168
    %v6170 = vpop.f32.mrf.mxu0
    %v6171 = vadd.f32 %v6157, %v6170
    %6172 = vdwg.mxu0
    %6173 = vmatpush.bf16.msra.mxu0 %v5503
    %6174 = vmatpush.bf16.msra.mxu0 %v5499
    %6175 = vmatpush.bf16.msra.mxu0 %v5495
    %6176 = vmatpush.bf16.msra.mxu0 %v5491
    %6177 = vmatpush.bf16.msra.mxu0 %v5487
    %6178 = vmatpush.bf16.msra.mxu0 %v5483
    %6179 = vmatpush.bf16.msra.mxu0 %v5479
    %6180 = vmatpush.bf16.msra.mxu0 %v5475
    %6181 = vmatmul.bf16.gmra.mxu0 %v4379
    %v6182 = vpop.f32.mrf.mxu0
    %v6183 = vadd.f32 %v6169, %v6182
    %v6184 = vpop.f32.mrf.mxu0
    %v6185 = vadd.f32 %v6171, %v6184
    %6186 = vdwg.mxu0
    %6187 = vmatpush.bf16.msra.mxu0 %v5535
    %6188 = vmatpush.bf16.msra.mxu0 %v5531
    %6189 = vmatpush.bf16.msra.mxu0 %v5527
    %6190 = vmatpush.bf16.msra.mxu0 %v5523
    %6191 = vmatpush.bf16.msra.mxu0 %v5519
    %6192 = vmatpush.bf16.msra.mxu0 %v5515
    %6193 = vmatpush.bf16.msra.mxu0 %v5511
    %6194 = vmatpush.bf16.msra.mxu0 %v5507
    %6195 = vmatmul.bf16.gmra.mxu0 %v4380
    %v6196 = vpop.f32.mrf.mxu0
    %v6197 = vadd.f32 %v6183, %v6196
    %v6198 = vpop.f32.mrf.mxu0
    %v6199 = vadd.f32 %v6185, %v6198
    %6200 = vdwg.mxu0
    %6201 = vmatpush.bf16.msra.mxu0 %v5567
    %6202 = vmatpush.bf16.msra.mxu0 %v5563
    %6203 = vmatpush.bf16.msra.mxu0 %v5559
    %6204 = vmatpush.bf16.msra.mxu0 %v5555
    %6205 = vmatpush.bf16.msra.mxu0 %v5551
    %6206 = vmatpush.bf16.msra.mxu0 %v5547
    %6207 = vmatpush.bf16.msra.mxu0 %v5543
    %6208 = vmatpush.bf16.msra.mxu0 %v5539
    %6209 = vmatmul.bf16.gmra.mxu0 %v4381
    %v6210 = vpop.f32.mrf.mxu0
    %v6211 = vadd.f32 %v6197, %v6210
    %v6212 = vpop.f32.mrf.mxu0
    %v6213 = vadd.f32 %v6199, %v6212
    %6214 = vdwg.mxu0
    %6215 = vmatpush.bf16.msra.mxu0 %v5599
    %6216 = vmatpush.bf16.msra.mxu0 %v5595
    %6217 = vmatpush.bf16.msra.mxu0 %v5591
    %6218 = vmatpush.bf16.msra.mxu0 %v5587
    %6219 = vmatpush.bf16.msra.mxu0 %v5583
    %6220 = vmatpush.bf16.msra.mxu0 %v5579
    %6221 = vmatpush.bf16.msra.mxu0 %v5575
    %6222 = vmatpush.bf16.msra.mxu0 %v5571
    %6223 = vmatmul.bf16.gmra.mxu0 %v4382
    %v6224 = vpop.f32.mrf.mxu0
    %v6225 = vadd.f32 %v6211, %v6224
    %v6226 = vpop.f32.mrf.mxu0
    %v6227 = vadd.f32 %v6213, %v6226
    %6228 = vdwg.mxu0
    %6229 = vmatpush.bf16.msra.mxu0 %v5631
    %6230 = vmatpush.bf16.msra.mxu0 %v5627
    %6231 = vmatpush.bf16.msra.mxu0 %v5623
    %6232 = vmatpush.bf16.msra.mxu0 %v5619
    %6233 = vmatpush.bf16.msra.mxu0 %v5615
    %6234 = vmatpush.bf16.msra.mxu0 %v5611
    %6235 = vmatpush.bf16.msra.mxu0 %v5607
    %6236 = vmatpush.bf16.msra.mxu0 %v5603
    %6237 = vmatmul.bf16.gmra.mxu0 %v4383
    %v6238 = vpop.f32.mrf.mxu0
    %v6239 = vadd.f32 %v6225, %v6238
    %v6240 = vpop.f32.mrf.mxu0
    %v6241 = vadd.f32 %v6227, %v6240
    %6242 = vdwg.mxu0
    %6243 = vmatpush.bf16.msra.mxu0 %v5663
    %6244 = vmatpush.bf16.msra.mxu0 %v5659
    %6245 = vmatpush.bf16.msra.mxu0 %v5655
    %6246 = vmatpush.bf16.msra.mxu0 %v5651
    %6247 = vmatpush.bf16.msra.mxu0 %v5647
    %6248 = vmatpush.bf16.msra.mxu0 %v5643
    %6249 = vmatpush.bf16.msra.mxu0 %v5639
    %6250 = vmatpush.bf16.msra.mxu0 %v5635
    %6251 = vmatmul.bf16.gmra.mxu0 %v4384
    %v6252 = vpop.f32.mrf.mxu0
    %v6253 = vadd.f32 %v6239, %v6252
    %v6254 = vpop.f32.mrf.mxu0
    %v6255 = vadd.f32 %v6241, %v6254
    %6256 = vdwg.mxu0
    %6257 = vmatpush.bf16.msra.mxu0 %v5440
    %6258 = vmatpush.bf16.msra.mxu0 %v5436
    %6259 = vmatpush.bf16.msra.mxu0 %v5432
    %6260 = vmatpush.bf16.msra.mxu0 %v5428
    %6261 = vmatpush.bf16.msra.mxu0 %v5424
    %6262 = vmatpush.bf16.msra.mxu0 %v5420
    %6263 = vmatpush.bf16.msra.mxu0 %v5416
    %6264 = vmatpush.bf16.msra.mxu0 %v5412
    %6265 = vmatmul.bf16.gmra.mxu0 %v4377
    %v6266 = vpop.f32.mrf.mxu0
    %v6267 = vadd.f32 0.0, %v6266
    %v6268 = vpop.f32.mrf.mxu0
    %v6269 = vadd.f32 0.0, %v6268
    %6270 = vdwg.mxu0
    %6271 = vmatpush.bf16.msra.mxu0 %v5472
    %6272 = vmatpush.bf16.msra.mxu0 %v5468
    %6273 = vmatpush.bf16.msra.mxu0 %v5464
    %6274 = vmatpush.bf16.msra.mxu0 %v5460
    %6275 = vmatpush.bf16.msra.mxu0 %v5456
    %6276 = vmatpush.bf16.msra.mxu0 %v5452
    %6277 = vmatpush.bf16.msra.mxu0 %v5448
    %6278 = vmatpush.bf16.msra.mxu0 %v5444
    %6279 = vmatmul.bf16.gmra.mxu0 %v4378
    %v6280 = vpop.f32.mrf.mxu0
    %v6281 = vadd.f32 %v6267, %v6280
    %v6282 = vpop.f32.mrf.mxu0
    %v6283 = vadd.f32 %v6269, %v6282
    %6284 = vdwg.mxu0
    %6285 = vmatpush.bf16.msra.mxu0 %v5504
    %6286 = vmatpush.bf16.msra.mxu0 %v5500
    %6287 = vmatpush.bf16.msra.mxu0 %v5496
    %6288 = vmatpush.bf16.msra.mxu0 %v5492
    %6289 = vmatpush.bf16.msra.mxu0 %v5488
    %6290 = vmatpush.bf16.msra.mxu0 %v5484
    %6291 = vmatpush.bf16.msra.mxu0 %v5480
    %6292 = vmatpush.bf16.msra.mxu0 %v5476
    %6293 = vmatmul.bf16.gmra.mxu0 %v4379
    %v6294 = vpop.f32.mrf.mxu0
    %v6295 = vadd.f32 %v6281, %v6294
    %v6296 = vpop.f32.mrf.mxu0
    %v6297 = vadd.f32 %v6283, %v6296
    %6298 = vdwg.mxu0
    %6299 = vmatpush.bf16.msra.mxu0 %v5536
    %6300 = vmatpush.bf16.msra.mxu0 %v5532
    %6301 = vmatpush.bf16.msra.mxu0 %v5528
    %6302 = vmatpush.bf16.msra.mxu0 %v5524
    %6303 = vmatpush.bf16.msra.mxu0 %v5520
    %6304 = vmatpush.bf16.msra.mxu0 %v5516
    %6305 = vmatpush.bf16.msra.mxu0 %v5512
    %6306 = vmatpush.bf16.msra.mxu0 %v5508
    %6307 = vmatmul.bf16.gmra.mxu0 %v4380
    %v6308 = vpop.f32.mrf.mxu0
    %v6309 = vadd.f32 %v6295, %v6308
    %v6310 = vpop.f32.mrf.mxu0
    %v6311 = vadd.f32 %v6297, %v6310
    %6312 = vdwg.mxu0
    %6313 = vmatpush.bf16.msra.mxu0 %v5568
    %6314 = vmatpush.bf16.msra.mxu0 %v5564
    %6315 = vmatpush.bf16.msra.mxu0 %v5560
    %6316 = vmatpush.bf16.msra.mxu0 %v5556
    %6317 = vmatpush.bf16.msra.mxu0 %v5552
    %6318 = vmatpush.bf16.msra.mxu0 %v5548
    %6319 = vmatpush.bf16.msra.mxu0 %v5544
    %6320 = vmatpush.bf16.msra.mxu0 %v5540
    %6321 = vmatmul.bf16.gmra.mxu0 %v4381
    %v6322 = vpop.f32.mrf.mxu0
    %v6323 = vadd.f32 %v6309, %v6322
    %v6324 = vpop.f32.mrf.mxu0
    %v6325 = vadd.f32 %v6311, %v6324
    %6326 = vdwg.mxu0
    %6327 = vmatpush.bf16.msra.mxu0 %v5600
    %6328 = vmatpush.bf16.msra.mxu0 %v5596
    %6329 = vmatpush.bf16.msra.mxu0 %v5592
    %6330 = vmatpush.bf16.msra.mxu0 %v5588
    %6331 = vmatpush.bf16.msra.mxu0 %v5584
    %6332 = vmatpush.bf16.msra.mxu0 %v5580
    %6333 = vmatpush.bf16.msra.mxu0 %v5576
    %6334 = vmatpush.bf16.msra.mxu0 %v5572
    %6335 = vmatmul.bf16.gmra.mxu0 %v4382
    %v6336 = vpop.f32.mrf.mxu0
    %v6337 = vadd.f32 %v6323, %v6336
    %v6338 = vpop.f32.mrf.mxu0
    %v6339 = vadd.f32 %v6325, %v6338
    %6340 = vdwg.mxu0
    %6341 = vmatpush.bf16.msra.mxu0 %v5632
    %6342 = vmatpush.bf16.msra.mxu0 %v5628
    %6343 = vmatpush.bf16.msra.mxu0 %v5624
    %6344 = vmatpush.bf16.msra.mxu0 %v5620
    %6345 = vmatpush.bf16.msra.mxu0 %v5616
    %6346 = vmatpush.bf16.msra.mxu0 %v5612
    %6347 = vmatpush.bf16.msra.mxu0 %v5608
    %6348 = vmatpush.bf16.msra.mxu0 %v5604
    %6349 = vmatmul.bf16.gmra.mxu0 %v4383
    %v6350 = vpop.f32.mrf.mxu0
    %v6351 = vadd.f32 %v6337, %v6350
    %v6352 = vpop.f32.mrf.mxu0
    %v6353 = vadd.f32 %v6339, %v6352
    %6354 = vdwg.mxu0
    %6355 = vmatpush.bf16.msra.mxu0 %v5664
    %6356 = vmatpush.bf16.msra.mxu0 %v5660
    %6357 = vmatpush.bf16.msra.mxu0 %v5656
    %6358 = vmatpush.bf16.msra.mxu0 %v5652
    %6359 = vmatpush.bf16.msra.mxu0 %v5648
    %6360 = vmatpush.bf16.msra.mxu0 %v5644
    %6361 = vmatpush.bf16.msra.mxu0 %v5640
    %6362 = vmatpush.bf16.msra.mxu0 %v5636
    %6363 = vmatmul.bf16.gmra.mxu0 %v4384
    %v6364 = vpop.f32.mrf.mxu0
    %v6365 = vadd.f32 %v6351, %v6364
    %v6366 = vpop.f32.mrf.mxu0
    %v6367 = vadd.f32 %v6353, %v6366
    %6368 = vdwg.mxu0
    %v6369 = vadd.f32 %v4307, %v6029
    %v6370 = vadd.f32 %v4308, %v6141
    %v6371 = vadd.f32 %v4309, %v6253
    %v6372 = vadd.f32 %v4310, %v6365
    %v6373 = vadd.f32 %v4322, %v6031
    %v6374 = vadd.f32 %v4323, %v6143
    %v6375 = vadd.f32 %v4324, %v6255
    %v6376 = vadd.f32 %v4325, %v6367
    %vm6377 = vcmp.gt.f32.partialorder %v6369, 0.0
    %vm6378 = vcmp.gt.f32.partialorder %v6370, 0.0
    %vm6379 = vcmp.gt.f32.partialorder %v6371, 0.0
    %vm6380 = vcmp.gt.f32.partialorder %v6372, 0.0
    %vm6381 = vcmp.gt.f32.partialorder %v6373, 0.0
    %vm6382 = vcmp.gt.f32.partialorder %v6374, 0.0
    %vm6383 = vcmp.gt.f32.partialorder %v6375, 0.0
    %vm6384 = vcmp.gt.f32.partialorder %v6376, 0.0
    %v6385 = vmul.f32 %v6369, 0.2
    %v6386 = vmul.f32 %v6370, 0.2
    %v6387 = vmul.f32 %v6371, 0.2
    %v6388 = vmul.f32 %v6372, 0.2
    %v6389 = vmul.f32 %v6373, 0.2
    %v6390 = vmul.f32 %v6374, 0.2
    %v6391 = vmul.f32 %v6375, 0.2
    %v6392 = vmul.f32 %v6376, 0.2
    %v6393 = vsel %vm6377, %v6369, %v6385
    %v6394 = vsel %vm6378, %v6370, %v6386
    %v6395 = vsel %vm6379, %v6371, %v6387
    %v6396 = vsel %vm6380, %v6372, %v6388
    %v6397 = vsel %vm6381, %v6373, %v6389
    %v6398 = vsel %vm6382, %v6374, %v6390
    %v6399 = vsel %vm6383, %v6375, %v6391
    %v6400 = vsel %vm6384, %v6376, %v6392
    %v6401 = vpack.c.bf16 %v6397, %v6393
    %v6402 = vpack.c.bf16 %v6398, %v6394
    %v6403 = vpack.c.bf16 %v6399, %v6395
    %v6404 = vpack.c.bf16 %v6400, %v6396
    %v6405 = vld [vmem:[%s6] sm:$0xff]
    %v6406 = vld [vmem:[%s6 + $0x8] sm:$0xff]
    %v6407 = vld [vmem:[%s6 + $0x10] sm:$0xff]
    %v6408 = vld [vmem:[%s6 + $0x18] sm:$0xff]
    %v6409 = vld [vmem:[%s6 + $0x20] sm:$0xff]
    %v6410 = vld [vmem:[%s6 + $0x28] sm:$0xff]
    %v6411 = vld [vmem:[%s6 + $0x30] sm:$0xff]
    %v6412 = vld [vmem:[%s6 + $0x38] sm:$0xff]
    %v6413 = vld [vmem:[%s6 + $0x40] sm:$0xff]
    %v6414 = vld [vmem:[%s6 + $0x48] sm:$0xff]
    %v6415 = vld [vmem:[%s6 + $0x50] sm:$0xff]
    %v6416 = vld [vmem:[%s6 + $0x58] sm:$0xff]
    %v6417 = vld [vmem:[%s6 + $0x60] sm:$0xff]
    %v6418 = vld [vmem:[%s6 + $0x68] sm:$0xff]
    %v6419 = vld [vmem:[%s6 + $0x70] sm:$0xff]
    %v6420 = vld [vmem:[%s6 + $0x78] sm:$0xff]
    %v6421 = vld [vmem:[%s6 + $0x80] sm:$0xff]
    %v6422 = vld [vmem:[%s6 + $0x88] sm:$0xff]
    %v6423 = vld [vmem:[%s6 + $0x90] sm:$0xff]
    %v6424 = vld [vmem:[%s6 + $0x98] sm:$0xff]
    %v6425 = vld [vmem:[%s6 + $0xa0] sm:$0xff]
    %v6426 = vld [vmem:[%s6 + $0xa8] sm:$0xff]
    %v6427 = vld [vmem:[%s6 + $0xb0] sm:$0xff]
    %v6428 = vld [vmem:[%s6 + $0xb8] sm:$0xff]
    %v6429 = vld [vmem:[%s6 + $0xc0] sm:$0xff]
    %v6430 = vld [vmem:[%s6 + $0xc8] sm:$0xff]
    %v6431 = vld [vmem:[%s6 + $0xd0] sm:$0xff]
    %v6432 = vld [vmem:[%s6 + $0xd8] sm:$0xff]
    %v6433 = vld [vmem:[%s6 + $0xe0] sm:$0xff]
    %v6434 = vld [vmem:[%s6 + $0xe8] sm:$0xff]
    %v6435 = vld [vmem:[%s6 + $0xf0] sm:$0xff]
    %v6436 = vld [vmem:[%s6 + $0xf8] sm:$0xff]
    %v6437 = vld [vmem:[%s6 + $0x100] sm:$0xff]
    %v6438 = vld [vmem:[%s6 + $0x108] sm:$0xff]
    %v6439 = vld [vmem:[%s6 + $0x110] sm:$0xff]
    %v6440 = vld [vmem:[%s6 + $0x118] sm:$0xff]
    %v6441 = vld [vmem:[%s6 + $0x120] sm:$0xff]
    %v6442 = vld [vmem:[%s6 + $0x128] sm:$0xff]
    %v6443 = vld [vmem:[%s6 + $0x130] sm:$0xff]
    %v6444 = vld [vmem:[%s6 + $0x138] sm:$0xff]
    %v6445 = vld [vmem:[%s6 + $0x140] sm:$0xff]
    %v6446 = vld [vmem:[%s6 + $0x148] sm:$0xff]
    %v6447 = vld [vmem:[%s6 + $0x150] sm:$0xff]
    %v6448 = vld [vmem:[%s6 + $0x158] sm:$0xff]
    %v6449 = vld [vmem:[%s6 + $0x160] sm:$0xff]
    %v6450 = vld [vmem:[%s6 + $0x168] sm:$0xff]
    %v6451 = vld [vmem:[%s6 + $0x170] sm:$0xff]
    %v6452 = vld [vmem:[%s6 + $0x178] sm:$0xff]
    %v6453 = vld [vmem:[%s6 + $0x180] sm:$0xff]
    %v6454 = vld [vmem:[%s6 + $0x188] sm:$0xff]
    %v6455 = vld [vmem:[%s6 + $0x190] sm:$0xff]
    %v6456 = vld [vmem:[%s6 + $0x198] sm:$0xff]
    %v6457 = vld [vmem:[%s6 + $0x1a0] sm:$0xff]
    %v6458 = vld [vmem:[%s6 + $0x1a8] sm:$0xff]
    %v6459 = vld [vmem:[%s6 + $0x1b0] sm:$0xff]
    %v6460 = vld [vmem:[%s6 + $0x1b8] sm:$0xff]
    %v6461 = vld [vmem:[%s6 + $0x1c0] sm:$0xff]
    %v6462 = vld [vmem:[%s6 + $0x1c8] sm:$0xff]
    %v6463 = vld [vmem:[%s6 + $0x1d0] sm:$0xff]
    %v6464 = vld [vmem:[%s6 + $0x1d8] sm:$0xff]
    %v6465 = vld [vmem:[%s6 + $0x1e0] sm:$0xff]
    %v6466 = vld [vmem:[%s6 + $0x1e8] sm:$0xff]
    %v6467 = vld [vmem:[%s6 + $0x1f0] sm:$0xff]
    %v6468 = vld [vmem:[%s6 + $0x1f8] sm:$0xff]
    %v6533 = vunpack.c.l.b16 %v6405
    %v6534 = vunpack.c.h.b16 %v6405
    %v6535 = vunpack.c.l.b16 %v6406
    %v6536 = vunpack.c.h.b16 %v6406
    %v6537 = vunpack.c.l.b16 %v6407
    %v6538 = vunpack.c.h.b16 %v6407
    %v6539 = vunpack.c.l.b16 %v6408
    %v6540 = vunpack.c.h.b16 %v6408
    %v6541 = vunpack.c.l.b16 %v6409
    %v6542 = vunpack.c.h.b16 %v6409
    %v6543 = vunpack.c.l.b16 %v6410
    %v6544 = vunpack.c.h.b16 %v6410
    %v6545 = vunpack.c.l.b16 %v6411
    %v6546 = vunpack.c.h.b16 %v6411
    %v6547 = vunpack.c.l.b16 %v6412
    %v6548 = vunpack.c.h.b16 %v6412
    %v6549 = vunpack.c.l.b16 %v6413
    %v6550 = vunpack.c.h.b16 %v6413
    %v6551 = vunpack.c.l.b16 %v6414
    %v6552 = vunpack.c.h.b16 %v6414
    %v6553 = vunpack.c.l.b16 %v6415
    %v6554 = vunpack.c.h.b16 %v6415
    %v6555 = vunpack.c.l.b16 %v6416
    %v6556 = vunpack.c.h.b16 %v6416
    %v6557 = vunpack.c.l.b16 %v6417
    %v6558 = vunpack.c.h.b16 %v6417
    %v6559 = vunpack.c.l.b16 %v6418
    %v6560 = vunpack.c.h.b16 %v6418
    %v6561 = vunpack.c.l.b16 %v6419
    %v6562 = vunpack.c.h.b16 %v6419
    %v6563 = vunpack.c.l.b16 %v6420
    %v6564 = vunpack.c.h.b16 %v6420
    %v6565 = vunpack.c.l.b16 %v6421
    %v6566 = vunpack.c.h.b16 %v6421
    %v6567 = vunpack.c.l.b16 %v6422
    %v6568 = vunpack.c.h.b16 %v6422
    %v6569 = vunpack.c.l.b16 %v6423
    %v6570 = vunpack.c.h.b16 %v6423
    %v6571 = vunpack.c.l.b16 %v6424
    %v6572 = vunpack.c.h.b16 %v6424
    %v6573 = vunpack.c.l.b16 %v6425
    %v6574 = vunpack.c.h.b16 %v6425
    %v6575 = vunpack.c.l.b16 %v6426
    %v6576 = vunpack.c.h.b16 %v6426
    %v6577 = vunpack.c.l.b16 %v6427
    %v6578 = vunpack.c.h.b16 %v6427
    %v6579 = vunpack.c.l.b16 %v6428
    %v6580 = vunpack.c.h.b16 %v6428
    %v6581 = vunpack.c.l.b16 %v6429
    %v6582 = vunpack.c.h.b16 %v6429
    %v6583 = vunpack.c.l.b16 %v6430
    %v6584 = vunpack.c.h.b16 %v6430
    %v6585 = vunpack.c.l.b16 %v6431
    %v6586 = vunpack.c.h.b16 %v6431
    %v6587 = vunpack.c.l.b16 %v6432
    %v6588 = vunpack.c.h.b16 %v6432
    %v6589 = vunpack.c.l.b16 %v6433
    %v6590 = vunpack.c.h.b16 %v6433
    %v6591 = vunpack.c.l.b16 %v6434
    %v6592 = vunpack.c.h.b16 %v6434
    %v6593 = vunpack.c.l.b16 %v6435
    %v6594 = vunpack.c.h.b16 %v6435
    %v6595 = vunpack.c.l.b16 %v6436
    %v6596 = vunpack.c.h.b16 %v6436
    %v6597 = vunpack.c.l.b16 %v6437
    %v6598 = vunpack.c.h.b16 %v6437
    %v6599 = vunpack.c.l.b16 %v6438
    %v6600 = vunpack.c.h.b16 %v6438
    %v6601 = vunpack.c.l.b16 %v6439
    %v6602 = vunpack.c.h.b16 %v6439
    %v6603 = vunpack.c.l.b16 %v6440
    %v6604 = vunpack.c.h.b16 %v6440
    %v6605 = vunpack.c.l.b16 %v6441
    %v6606 = vunpack.c.h.b16 %v6441
    %v6607 = vunpack.c.l.b16 %v6442
    %v6608 = vunpack.c.h.b16 %v6442
    %v6609 = vunpack.c.l.b16 %v6443
    %v6610 = vunpack.c.h.b16 %v6443
    %v6611 = vunpack.c.l.b16 %v6444
    %v6612 = vunpack.c.h.b16 %v6444
    %v6613 = vunpack.c.l.b16 %v6445
    %v6614 = vunpack.c.h.b16 %v6445
    %v6615 = vunpack.c.l.b16 %v6446
    %v6616 = vunpack.c.h.b16 %v6446
    %v6617 = vunpack.c.l.b16 %v6447
    %v6618 = vunpack.c.h.b16 %v6447
    %v6619 = vunpack.c.l.b16 %v6448
    %v6620 = vunpack.c.h.b16 %v6448
    %v6621 = vunpack.c.l.b16 %v6449
    %v6622 = vunpack.c.h.b16 %v6449
    %v6623 = vunpack.c.l.b16 %v6450
    %v6624 = vunpack.c.h.b16 %v6450
    %v6625 = vunpack.c.l.b16 %v6451
    %v6626 = vunpack.c.h.b16 %v6451
    %v6627 = vunpack.c.l.b16 %v6452
    %v6628 = vunpack.c.h.b16 %v6452
    %v6629 = vunpack.c.l.b16 %v6453
    %v6630 = vunpack.c.h.b16 %v6453
    %v6631 = vunpack.c.l.b16 %v6454
    %v6632 = vunpack.c.h.b16 %v6454
    %v6633 = vunpack.c.l.b16 %v6455
    %v6634 = vunpack.c.h.b16 %v6455
    %v6635 = vunpack.c.l.b16 %v6456
    %v6636 = vunpack.c.h.b16 %v6456
    %v6637 = vunpack.c.l.b16 %v6457
    %v6638 = vunpack.c.h.b16 %v6457
    %v6639 = vunpack.c.l.b16 %v6458
    %v6640 = vunpack.c.h.b16 %v6458
    %v6641 = vunpack.c.l.b16 %v6459
    %v6642 = vunpack.c.h.b16 %v6459
    %v6643 = vunpack.c.l.b16 %v6460
    %v6644 = vunpack.c.h.b16 %v6460
    %v6645 = vunpack.c.l.b16 %v6461
    %v6646 = vunpack.c.h.b16 %v6461
    %v6647 = vunpack.c.l.b16 %v6462
    %v6648 = vunpack.c.h.b16 %v6462
    %v6649 = vunpack.c.l.b16 %v6463
    %v6650 = vunpack.c.h.b16 %v6463
    %v6651 = vunpack.c.l.b16 %v6464
    %v6652 = vunpack.c.h.b16 %v6464
    %v6653 = vunpack.c.l.b16 %v6465
    %v6654 = vunpack.c.h.b16 %v6465
    %v6655 = vunpack.c.l.b16 %v6466
    %v6656 = vunpack.c.h.b16 %v6466
    %v6657 = vunpack.c.l.b16 %v6467
    %v6658 = vunpack.c.h.b16 %v6467
    %v6659 = vunpack.c.l.b16 %v6468
    %v6660 = vunpack.c.h.b16 %v6468
    %v6661 = vpack.c.b16 %v6535, %v6533
    %v6662 = vpack.c.b16 %v6536, %v6534
    %v6663 = vpack.c.b16 %v6539, %v6537
    %v6664 = vpack.c.b16 %v6540, %v6538
    %v6665 = vpack.c.b16 %v6543, %v6541
    %v6666 = vpack.c.b16 %v6544, %v6542
    %v6667 = vpack.c.b16 %v6547, %v6545
    %v6668 = vpack.c.b16 %v6548, %v6546
    %v6669 = vpack.c.b16 %v6551, %v6549
    %v6670 = vpack.c.b16 %v6552, %v6550
    %v6671 = vpack.c.b16 %v6555, %v6553
    %v6672 = vpack.c.b16 %v6556, %v6554
    %v6673 = vpack.c.b16 %v6559, %v6557
    %v6674 = vpack.c.b16 %v6560, %v6558
    %v6675 = vpack.c.b16 %v6563, %v6561
    %v6676 = vpack.c.b16 %v6564, %v6562
    %v6677 = vpack.c.b16 %v6567, %v6565
    %v6678 = vpack.c.b16 %v6568, %v6566
    %v6679 = vpack.c.b16 %v6571, %v6569
    %v6680 = vpack.c.b16 %v6572, %v6570
    %v6681 = vpack.c.b16 %v6575, %v6573
    %v6682 = vpack.c.b16 %v6576, %v6574
    %v6683 = vpack.c.b16 %v6579, %v6577
    %v6684 = vpack.c.b16 %v6580, %v6578
    %v6685 = vpack.c.b16 %v6583, %v6581
    %v6686 = vpack.c.b16 %v6584, %v6582
    %v6687 = vpack.c.b16 %v6587, %v6585
    %v6688 = vpack.c.b16 %v6588, %v6586
    %v6689 = vpack.c.b16 %v6591, %v6589
    %v6690 = vpack.c.b16 %v6592, %v6590
    %v6691 = vpack.c.b16 %v6595, %v6593
    %v6692 = vpack.c.b16 %v6596, %v6594
    %v6693 = vpack.c.b16 %v6599, %v6597
    %v6694 = vpack.c.b16 %v6600, %v6598
    %v6695 = vpack.c.b16 %v6603, %v6601
    %v6696 = vpack.c.b16 %v6604, %v6602
    %v6697 = vpack.c.b16 %v6607, %v6605
    %v6698 = vpack.c.b16 %v6608, %v6606
    %v6699 = vpack.c.b16 %v6611, %v6609
    %v6700 = vpack.c.b16 %v6612, %v6610
    %v6701 = vpack.c.b16 %v6615, %v6613
    %v6702 = vpack.c.b16 %v6616, %v6614
    %v6703 = vpack.c.b16 %v6619, %v6617
    %v6704 = vpack.c.b16 %v6620, %v6618
    %v6705 = vpack.c.b16 %v6623, %v6621
    %v6706 = vpack.c.b16 %v6624, %v6622
    %v6707 = vpack.c.b16 %v6627, %v6625
    %v6708 = vpack.c.b16 %v6628, %v6626
    %v6709 = vpack.c.b16 %v6631, %v6629
    %v6710 = vpack.c.b16 %v6632, %v6630
    %v6711 = vpack.c.b16 %v6635, %v6633
    %v6712 = vpack.c.b16 %v6636, %v6634
    %v6713 = vpack.c.b16 %v6639, %v6637
    %v6714 = vpack.c.b16 %v6640, %v6638
    %v6715 = vpack.c.b16 %v6643, %v6641
    %v6716 = vpack.c.b16 %v6644, %v6642
    %v6717 = vpack.c.b16 %v6647, %v6645
    %v6718 = vpack.c.b16 %v6648, %v6646
    %v6719 = vpack.c.b16 %v6651, %v6649
    %v6720 = vpack.c.b16 %v6652, %v6650
    %v6721 = vpack.c.b16 %v6655, %v6653
    %v6722 = vpack.c.b16 %v6656, %v6654
    %v6723 = vpack.c.b16 %v6659, %v6657
    %v6724 = vpack.c.b16 %v6660, %v6658
    %6789 = vmatpush.bf16.msra.mxu0 %v6675
    %6790 = vmatpush.bf16.msra.mxu0 %v6673
    %6791 = vmatpush.bf16.msra.mxu0 %v6671
    %6792 = vmatpush.bf16.msra.mxu0 %v6669
    %6793 = vmatpush.bf16.msra.mxu0 %v6667
    %6794 = vmatpush.bf16.msra.mxu0 %v6665
    %6795 = vmatpush.bf16.msra.mxu0 %v6663
    %6796 = vmatpush.bf16.msra.mxu0 %v6661
    %6797 = vmatmul.bf16.gmra.mxu0 %v6401
    %v6798 = vpop.f32.mrf.mxu0
    %v6799 = vadd.f32 0.0, %v6798
    %v6800 = vpop.f32.mrf.mxu0
    %v6801 = vadd.f32 0.0, %v6800
    %6802 = vdwg.mxu0
    %6803 = vmatpush.bf16.msra.mxu0 %v6691
    %6804 = vmatpush.bf16.msra.mxu0 %v6689
    %6805 = vmatpush.bf16.msra.mxu0 %v6687
    %6806 = vmatpush.bf16.msra.mxu0 %v6685
    %6807 = vmatpush.bf16.msra.mxu0 %v6683
    %6808 = vmatpush.bf16.msra.mxu0 %v6681
    %6809 = vmatpush.bf16.msra.mxu0 %v6679
    %6810 = vmatpush.bf16.msra.mxu0 %v6677
    %6811 = vmatmul.bf16.gmra.mxu0 %v6402
    %v6812 = vpop.f32.mrf.mxu0
    %v6813 = vadd.f32 %v6799, %v6812
    %v6814 = vpop.f32.mrf.mxu0
    %v6815 = vadd.f32 %v6801, %v6814
    %6816 = vdwg.mxu0
    %6817 = vmatpush.bf16.msra.mxu0 %v6707
    %6818 = vmatpush.bf16.msra.mxu0 %v6705
    %6819 = vmatpush.bf16.msra.mxu0 %v6703
    %6820 = vmatpush.bf16.msra.mxu0 %v6701
    %6821 = vmatpush.bf16.msra.mxu0 %v6699
    %6822 = vmatpush.bf16.msra.mxu0 %v6697
    %6823 = vmatpush.bf16.msra.mxu0 %v6695
    %6824 = vmatpush.bf16.msra.mxu0 %v6693
    %6825 = vmatmul.bf16.gmra.mxu0 %v6403
    %v6826 = vpop.f32.mrf.mxu0
    %v6827 = vadd.f32 %v6813, %v6826
    %v6828 = vpop.f32.mrf.mxu0
    %v6829 = vadd.f32 %v6815, %v6828
    %6830 = vdwg.mxu0
    %6831 = vmatpush.bf16.msra.mxu0 %v6723
    %6832 = vmatpush.bf16.msra.mxu0 %v6721
    %6833 = vmatpush.bf16.msra.mxu0 %v6719
    %6834 = vmatpush.bf16.msra.mxu0 %v6717
    %6835 = vmatpush.bf16.msra.mxu0 %v6715
    %6836 = vmatpush.bf16.msra.mxu0 %v6713
    %6837 = vmatpush.bf16.msra.mxu0 %v6711
    %6838 = vmatpush.bf16.msra.mxu0 %v6709
    %6839 = vmatmul.bf16.gmra.mxu0 %v6404
    %v6840 = vpop.f32.mrf.mxu0
    %v6841 = vadd.f32 %v6827, %v6840
    %v6842 = vpop.f32.mrf.mxu0
    %v6843 = vadd.f32 %v6829, %v6842
    %6844 = vdwg.mxu0
    %6845 = vmatpush.bf16.msra.mxu0 %v6676
    %6846 = vmatpush.bf16.msra.mxu0 %v6674
    %6847 = vmatpush.bf16.msra.mxu0 %v6672
    %6848 = vmatpush.bf16.msra.mxu0 %v6670
    %6849 = vmatpush.bf16.msra.mxu0 %v6668
    %6850 = vmatpush.bf16.msra.mxu0 %v6666
    %6851 = vmatpush.bf16.msra.mxu0 %v6664
    %6852 = vmatpush.bf16.msra.mxu0 %v6662
    %6853 = vmatmul.bf16.gmra.mxu0 %v6401
    %v6854 = vpop.f32.mrf.mxu0
    %v6855 = vadd.f32 0.0, %v6854
    %v6856 = vpop.f32.mrf.mxu0
    %v6857 = vadd.f32 0.0, %v6856
    %6858 = vdwg.mxu0
    %6859 = vmatpush.bf16.msra.mxu0 %v6692
    %6860 = vmatpush.bf16.msra.mxu0 %v6690
    %6861 = vmatpush.bf16.msra.mxu0 %v6688
    %6862 = vmatpush.bf16.msra.mxu0 %v6686
    %6863 = vmatpush.bf16.msra.mxu0 %v6684
    %6864 = vmatpush.bf16.msra.mxu0 %v6682
    %6865 = vmatpush.bf16.msra.mxu0 %v6680
    %6866 = vmatpush.bf16.msra.mxu0 %v6678
    %6867 = vmatmul.bf16.gmra.mxu0 %v6402
    %v6868 = vpop.f32.mrf.mxu0
    %v6869 = vadd.f32 %v6855, %v6868
    %v6870 = vpop.f32.mrf.mxu0
    %v6871 = vadd.f32 %v6857, %v6870
    %6872 = vdwg.mxu0
    %6873 = vmatpush.bf16.msra.mxu0 %v6708
    %6874 = vmatpush.bf16.msra.mxu0 %v6706
    %6875 = vmatpush.bf16.msra.mxu0 %v6704
    %6876 = vmatpush.bf16.msra.mxu0 %v6702
    %6877 = vmatpush.bf16.msra.mxu0 %v6700
    %6878 = vmatpush.bf16.msra.mxu0 %v6698
    %6879 = vmatpush.bf16.msra.mxu0 %v6696
    %6880 = vmatpush.bf16.msra.mxu0 %v6694
    %6881 = vmatmul.bf16.gmra.mxu0 %v6403
    %v6882 = vpop.f32.mrf.mxu0
    %v6883 = vadd.f32 %v6869, %v6882
    %v6884 = vpop.f32.mrf.mxu0
    %v6885 = vadd.f32 %v6871, %v6884
    %6886 = vdwg.mxu0
    %6887 = vmatpush.bf16.msra.mxu0 %v6724
    %6888 = vmatpush.bf16.msra.mxu0 %v6722
    %6889 = vmatpush.bf16.msra.mxu0 %v6720
    %6890 = vmatpush.bf16.msra.mxu0 %v6718
    %6891 = vmatpush.bf16.msra.mxu0 %v6716
    %6892 = vmatpush.bf16.msra.mxu0 %v6714
    %6893 = vmatpush.bf16.msra.mxu0 %v6712
    %6894 = vmatpush.bf16.msra.mxu0 %v6710
    %6895 = vmatmul.bf16.gmra.mxu0 %v6404
    %v6896 = vpop.f32.mrf.mxu0
    %v6897 = vadd.f32 %v6883, %v6896
    %v6898 = vpop.f32.mrf.mxu0
    %v6899 = vadd.f32 %v6885, %v6898
    %6900 = vdwg.mxu0
    %v6901 = vadd.f32 %v4311, %v6841
    %v6902 = vadd.f32 %v4312, %v6897
    %v6903 = vadd.f32 %v4326, %v6843
    %v6904 = vadd.f32 %v4327, %v6899
    %vm6905 = vcmp.gt.f32.partialorder %v6901, 0.0
    %vm6906 = vcmp.gt.f32.partialorder %v6902, 0.0
    %vm6907 = vcmp.gt.f32.partialorder %v6903, 0.0
    %vm6908 = vcmp.gt.f32.partialorder %v6904, 0.0
    %v6909 = vmul.f32 %v6901, 0.2
    %v6910 = vmul.f32 %v6902, 0.2
    %v6911 = vmul.f32 %v6903, 0.2
    %v6912 = vmul.f32 %v6904, 0.2
    %v6913 = vsel %vm6905, %v6901, %v6909
    %v6914 = vsel %vm6906, %v6902, %v6910
    %v6915 = vsel %vm6907, %v6903, %v6911
    %v6916 = vsel %vm6908, %v6904, %v6912
    %v6917 = vpack.c.bf16 %v6915, %v6913
    %v6918 = vpack.c.bf16 %v6916, %v6914
    %v6919 = vld [vmem:[%s7] sm:$0xf]
    %v6920 = vld [vmem:[%s7 + $0x4] sm:$0xf]
    %v6921 = vld [vmem:[%s7 + $0x8] sm:$0xf]
    %v6922 = vld [vmem:[%s7 + $0xc] sm:$0xf]
    %v6923 = vld [vmem:[%s7 + $0x10] sm:$0xf]
    %v6924 = vld [vmem:[%s7 + $0x14] sm:$0xf]
    %v6925 = vld [vmem:[%s7 + $0x18] sm:$0xf]
    %v6926 = vld [vmem:[%s7 + $0x1c] sm:$0xf]
    %v6927 = vld [vmem:[%s7 + $0x20] sm:$0xf]
    %v6928 = vld [vmem:[%s7 + $0x24] sm:$0xf]
    %v6929 = vld [vmem:[%s7 + $0x28] sm:$0xf]
    %v6930 = vld [vmem:[%s7 + $0x2c] sm:$0xf]
    %v6931 = vld [vmem:[%s7 + $0x30] sm:$0xf]
    %v6932 = vld [vmem:[%s7 + $0x34] sm:$0xf]
    %v6933 = vld [vmem:[%s7 + $0x38] sm:$0xf]
    %v6934 = vld [vmem:[%s7 + $0x3c] sm:$0xf]
    %v6935 = vld [vmem:[%s7 + $0x40] sm:$0xf]
    %v6936 = vld [vmem:[%s7 + $0x44] sm:$0xf]
    %v6937 = vld [vmem:[%s7 + $0x48] sm:$0xf]
    %v6938 = vld [vmem:[%s7 + $0x4c] sm:$0xf]
    %v6939 = vld [vmem:[%s7 + $0x50] sm:$0xf]
    %v6940 = vld [vmem:[%s7 + $0x54] sm:$0xf]
    %v6941 = vld [vmem:[%s7 + $0x58] sm:$0xf]
    %v6942 = vld [vmem:[%s7 + $0x5c] sm:$0xf]
    %v6943 = vld [vmem:[%s7 + $0x60] sm:$0xf]
    %v6944 = vld [vmem:[%s7 + $0x64] sm:$0xf]
    %v6945 = vld [vmem:[%s7 + $0x68] sm:$0xf]
    %v6946 = vld [vmem:[%s7 + $0x6c] sm:$0xf]
    %v6947 = vld [vmem:[%s7 + $0x70] sm:$0xf]
    %v6948 = vld [vmem:[%s7 + $0x74] sm:$0xf]
    %v6949 = vld [vmem:[%s7 + $0x78] sm:$0xf]
    %v6950 = vld [vmem:[%s7 + $0x7c] sm:$0xf]
    %v6983 = vunpack.c.l.b16 %v6919
    %v6984 = vunpack.c.l.b16 %v6920
    %v6985 = vunpack.c.l.b16 %v6921
    %v6986 = vunpack.c.l.b16 %v6922
    %v6987 = vunpack.c.l.b16 %v6923
    %v6988 = vunpack.c.l.b16 %v6924
    %v6989 = vunpack.c.l.b16 %v6925
    %v6990 = vunpack.c.l.b16 %v6926
    %v6991 = vunpack.c.l.b16 %v6927
    %v6992 = vunpack.c.l.b16 %v6928
    %v6993 = vunpack.c.l.b16 %v6929
    %v6994 = vunpack.c.l.b16 %v6930
    %v6995 = vunpack.c.l.b16 %v6931
    %v6996 = vunpack.c.l.b16 %v6932
    %v6997 = vunpack.c.l.b16 %v6933
    %v6998 = vunpack.c.l.b16 %v6934
    %v6999 = vunpack.c.l.b16 %v6935
    %v7000 = vunpack.c.l.b16 %v6936
    %v7001 = vunpack.c.l.b16 %v6937
    %v7002 = vunpack.c.l.b16 %v6938
    %v7003 = vunpack.c.l.b16 %v6939
    %v7004 = vunpack.c.l.b16 %v6940
    %v7005 = vunpack.c.l.b16 %v6941
    %v7006 = vunpack.c.l.b16 %v6942
    %v7007 = vunpack.c.l.b16 %v6943
    %v7008 = vunpack.c.l.b16 %v6944
    %v7009 = vunpack.c.l.b16 %v6945
    %v7010 = vunpack.c.l.b16 %v6946
    %v7011 = vunpack.c.l.b16 %v6947
    %v7012 = vunpack.c.l.b16 %v6948
    %v7013 = vunpack.c.l.b16 %v6949
    %v7014 = vunpack.c.l.b16 %v6950
    %v7015 = vpack.c.b16 %v6984, %v6983
    %v7016 = vpack.c.b16 %v6986, %v6985
    %v7017 = vpack.c.b16 %v6988, %v6987
    %v7018 = vpack.c.b16 %v6990, %v6989
    %v7019 = vpack.c.b16 %v6992, %v6991
    %v7020 = vpack.c.b16 %v6994, %v6993
    %v7021 = vpack.c.b16 %v6996, %v6995
    %v7022 = vpack.c.b16 %v6998, %v6997
    %v7023 = vpack.c.b16 %v7000, %v6999
    %v7024 = vpack.c.b16 %v7002, %v7001
    %v7025 = vpack.c.b16 %v7004, %v7003
    %v7026 = vpack.c.b16 %v7006, %v7005
    %v7027 = vpack.c.b16 %v7008, %v7007
    %v7028 = vpack.c.b16 %v7010, %v7009
    %v7029 = vpack.c.b16 %v7012, %v7011
    %v7030 = vpack.c.b16 %v7014, %v7013
    %7047 = vmatpush.bf16.msra.mxu0 %v7022
    %7048 = vmatpush.bf16.msra.mxu0 %v7021
    %7049 = vmatpush.bf16.msra.mxu0 %v7020
    %7050 = vmatpush.bf16.msra.mxu0 %v7019
    %7051 = vmatpush.bf16.msra.mxu0 %v7018
    %7052 = vmatpush.bf16.msra.mxu0 %v7017
    %7053 = vmatpush.bf16.msra.mxu0 %v7016
    %7054 = vmatpush.bf16.msra.mxu0 %v7015
    %7055 = vmatmul.bf16.gmra.mxu0 %v6917
    %v7056 = vpop.f32.mrf.mxu0
    %v7057 = vadd.f32 0.0, %v7056
    %v7058 = vpop.f32.mrf.mxu0
    %v7059 = vadd.f32 0.0, %v7058
    %7060 = vdwg.mxu0
    %7061 = vmatpush.bf16.msra.mxu0 %v7030
    %7062 = vmatpush.bf16.msra.mxu0 %v7029
    %7063 = vmatpush.bf16.msra.mxu0 %v7028
    %7064 = vmatpush.bf16.msra.mxu0 %v7027
    %7065 = vmatpush.bf16.msra.mxu0 %v7026
    %7066 = vmatpush.bf16.msra.mxu0 %v7025
    %7067 = vmatpush.bf16.msra.mxu0 %v7024
    %7068 = vmatpush.bf16.msra.mxu0 %v7023
    %7069 = vmatmul.bf16.gmra.mxu0 %v6918
    %v7070 = vpop.f32.mrf.mxu0
    %v7071 = vadd.f32 %v7057, %v7070
    %v7072 = vpop.f32.mrf.mxu0
    %v7073 = vadd.f32 %v7059, %v7072
    %7074 = vdwg.mxu0
    %v7075 = vadd.f32 %v4313, %v7071
    %v7076 = vadd.f32 %v4328, %v7073
    %vm7077 = vcmp.gt.f32.partialorder %v7075, 0.0
    %vm7078 = vcmp.gt.f32.partialorder %v7076, 0.0
    %v7079 = vmul.f32 %v7075, 0.2
    %v7080 = vmul.f32 %v7076, 0.2
    %v7081 = vsel %vm7077, %v7075, %v7079
    %v7082 = vsel %vm7078, %v7076, %v7080
    %v7083 = vpack.c.bf16 %v7082, %v7081
    %v7084 = vld [vmem:[%s8] sm:$0xf]
    %v7085 = vld [vmem:[%s8 + $0x4] sm:$0xf]
    %v7086 = vld [vmem:[%s8 + $0x8] sm:$0xf]
    %v7087 = vld [vmem:[%s8 + $0xc] sm:$0xf]
    %v7088 = vld [vmem:[%s8 + $0x10] sm:$0xf]
    %v7089 = vld [vmem:[%s8 + $0x14] sm:$0xf]
    %v7090 = vld [vmem:[%s8 + $0x18] sm:$0xf]
    %v7091 = vld [vmem:[%s8 + $0x1c] sm:$0xf]
    %v7092 = vld [vmem:[%s8 + $0x20] sm:$0xf]
    %v7093 = vld [vmem:[%s8 + $0x24] sm:$0xf]
    %v7094 = vld [vmem:[%s8 + $0x28] sm:$0xf]
    %v7095 = vld [vmem:[%s8 + $0x2c] sm:$0xf]
    %v7096 = vld [vmem:[%s8 + $0x30] sm:$0xf]
    %v7097 = vld [vmem:[%s8 + $0x34] sm:$0xf]
    %v7098 = vld [vmem:[%s8 + $0x38] sm:$0xf]
    %v7099 = vld [vmem:[%s8 + $0x3c] sm:$0xf]
    %v7100 = vld [vmem:[%s9] sm:$0x1]
    %v7102 = vperm.slane %v7100, 0
    %v7120 = vunpack.c.l.b16 %v7084
    %v7121 = vunpack.c.l.b16 %v7085
    %v7122 = vunpack.c.l.b16 %v7086
    %v7123 = vunpack.c.l.b16 %v7087
    %v7124 = vunpack.c.l.b16 %v7088
    %v7125 = vunpack.c.l.b16 %v7089
    %v7126 = vunpack.c.l.b16 %v7090
    %v7127 = vunpack.c.l.b16 %v7091
    %v7128 = vunpack.c.l.b16 %v7092
    %v7129 = vunpack.c.l.b16 %v7093
    %v7130 = vunpack.c.l.b16 %v7094
    %v7131 = vunpack.c.l.b16 %v7095
    %v7132 = vunpack.c.l.b16 %v7096
    %v7133 = vunpack.c.l.b16 %v7097
    %v7134 = vunpack.c.l.b16 %v7098
    %v7135 = vunpack.c.l.b16 %v7099
    %v7136 = vpack.c.b16 %v7121, %v7120
    %v7137 = vpack.c.b16 %v7123, %v7122
    %v7138 = vpack.c.b16 %v7125, %v7124
    %v7139 = vpack.c.b16 %v7127, %v7126
    %v7140 = vpack.c.b16 %v7129, %v7128
    %v7141 = vpack.c.b16 %v7131, %v7130
    %v7142 = vpack.c.b16 %v7133, %v7132
    %v7143 = vpack.c.b16 %v7135, %v7134
    %7152 = vmatpush.bf16.msra.mxu0 %v7143
    %7153 = vmatpush.bf16.msra.mxu0 %v7142
    %7154 = vmatpush.bf16.msra.mxu0 %v7141
    %7155 = vmatpush.bf16.msra.mxu0 %v7140
    %7156 = vmatpush.bf16.msra.mxu0 %v7139
    %7157 = vmatpush.bf16.msra.mxu0 %v7138
    %7158 = vmatpush.bf16.msra.mxu0 %v7137
    %7159 = vmatpush.bf16.msra.mxu0 %v7136
    %7160 = vmatmul.bf16.gmra.mxu0 %v7083
    %v7161 = vpop.f32.mrf.mxu0
    %v7162 = vadd.f32 %v7102, %v7161
    %v7163 = vpop.f32.mrf.mxu0
    %v7164 = vadd.f32 %v7102, %v7163
    %7165 = vdwg.mxu0
    %v7166 = vxor.u32 %v7162, 2147483648
    %v7167 = vxor.u32 %v7164, 2147483648
    %v7168 = vmul.f32 %v7166, 1.442695
    %v7169 = vpow.pop %v7168
    %v7170 = vmul.f32 %v7167, 1.442695
    %v7171 = vpow.pop %v7170
    %v7172 = vadd.f32 %v7169, 1.0
    %v7173 = vadd.f32 %v7171, 1.0
    %v7174 = vrcp.pop %v7172
    %v7175 = vmul.f32 %v7172, %v7174
    %v7176 = vsub.f32 1.0, %v7175
    %v7177 = vmul.f32 %v7174, %v7176
    %v7178 = vadd.f32 %v7174, %v7177
    %vm7179 = vweird.f32 %v7172
    %vm7180 = vweird.f32 %v7174
    %vm7181 = vmor %vm7179, %vm7180
    %v7182 = vsel %vm7181, %v7174, %v7178
    %v7183 = vand.u32 2147483647, %v7172
    %vm7184 = vcmp.eq.f32.partialorder %v7183, 8.507059e+37
    %v7185 = vand.u32 %v7172, 2147483648
    %v7186 = vor.u32 1.1754944e-38, %v7185
    %v7187 = vsel %vm7184, %v7186, %v7182
    %v7188 = vmul.f32 1.0, %v7187
    %v7189 = vrcp.pop %v7173
    %v7190 = vmul.f32 %v7173, %v7189
    %v7191 = vsub.f32 1.0, %v7190
    %v7192 = vmul.f32 %v7189, %v7191
    %v7193 = vadd.f32 %v7189, %v7192
    %vm7194 = vweird.f32 %v7173
    %vm7195 = vweird.f32 %v7189
    %vm7196 = vmor %vm7194, %vm7195
    %v7197 = vsel %vm7196, %v7189, %v7193
    %v7198 = vand.u32 2147483647, %v7173
    %vm7199 = vcmp.eq.f32.partialorder %v7198, 8.507059e+37
    %v7200 = vand.u32 %v7173, 2147483648
    %v7201 = vor.u32 1.1754944e-38, %v7200
    %v7202 = vsel %vm7199, %v7201, %v7197
    %v7203 = vmul.f32 1.0, %v7202
    %7204 = vst [vmem:[%s10] sm:$0xff] %v7188
    %7205 = vst [vmem:[%s10 + $0x8] sm:$0xff] %v7203
    // Predicated region
    $region46: #{tex_pamir_net_forward.5} parent=1 // pred_check
      _
    $region47: #{tex_pamir_net_forward.5} parent=1 // pred_check_branch
      %7207 = sbr.rel (0) target = $region49
    $region48: #{tex_pamir_net_forward.5} parent=1 // pred_region
      _
    $region49: #{tex_pamir_net_forward.5} parent=1 // pred_fallthru
      _
    // Predicated region
    $region50: #{tex_pamir_net_forward.5} parent=1 // pred_check
      _
    $region51: #{tex_pamir_net_forward.5} parent=1 // pred_check_branch
      %7209 = sbr.rel (0) target = $region53
    $region52: #{tex_pamir_net_forward.5} parent=1 // pred_region
      _
    $region53: #{tex_pamir_net_forward.5} parent=1 // pred_fallthru
      _
    %7210 = vsyncpa [#allocation3], 1

</llo_original>
